<compile_context>
chip_gen: v7x
topology: tpu7x:2x2x1
jax: 0.10.0
libtpu: 0.0.40
codegen_flags: <defaults>
</compile_context>

<pallas_src>
import functools

import jax
import jax.numpy as jnp
from jax import lax
from jax.experimental import pallas as pl
from jax.experimental.pallas import tpu as pltpu

_PHASES = ((0, 0), (0, 1), (1, 0), (1, 1))        # sub-pixel phases (row, col)
_K_OF = {(0, 0): 1, (1, 0): 2, (1, 1): 0}         # (out phase, tap delta) -> deconv kernel idx


# --------------------------------------------------------------------------- #
# In-kernel helpers: spatial taps on a row-flattened (M = H2*W2, C) plane
# --------------------------------------------------------------------------- #
def _col_masks(M, W2):
    row = lax.broadcasted_iota(jnp.int32, (M, 1), 0)
    col = (row & (W2 - 1)) if (W2 & (W2 - 1)) == 0 else (row % W2)
    m_pos = (col >= 1).astype(jnp.float32)         # valid when a tap reads column j-1
    m_neg = (col <= W2 - 2).astype(jnp.float32)    # valid when a tap reads column j+1
    return m_pos, m_neg


def _make_tap(M, W2, m_pos, m_neg):
    """tap(x, sh, sw)[i*W2+j] = x[(i-sh)*W2 + (j-sw)], zero outside the image."""
    def tap(x, sh, sw):
        s = sh * W2 + sw
        C = x.shape[1]
        if s > 0:
            y = jnp.concatenate([jnp.zeros((s, C), x.dtype), x[:M - s, :]], axis=0)
        elif s < 0:
            y = jnp.concatenate([x[-s:, :], jnp.zeros((-s, C), x.dtype)], axis=0)
        else:
            y = x
        if sw == 1:
            y = y * m_pos
        elif sw == -1:
            y = y * m_neg
        return y
    return tap


# --------------------------------------------------------------------------- #
# Fused single-stream SNN recurrence kernel (one grid step = one batch element)
# --------------------------------------------------------------------------- #
def _branch_kernel(xph_ref, wx_ref, bx_ref, wtr_ref, ws1_ref, bs1_ref,
                   ws2_ref, bs2_ref, out_ref,
                   u1_scr, us1_scr, us2_scr, s2_scr, acc_scr,
                   *, H2, W2, T, vth, leaky):
    f32 = jnp.float32
    M = H2 * W2
    m_pos, m_neg = _col_masks(M, W2)
    tap = _make_tap(M, W2, m_pos, m_neg)

    def lif(u_ref, cur):
        u = leaky * u_ref[...] + cur
        spk = (u >= vth).astype(f32)
        u_ref[...] = u - vth * spk                 # soft reset
        return spk

    # constant feed-forward current: 3x3/s1 conv of x + folded BN, phase layout
    xph = xph_ref[...]                             # (M, 4*c_in)
    p0 = jnp.concatenate([tap(xph, sh, sw)
                          for sh in (-1, 0, 1) for sw in (-1, 0, 1)], axis=-1)
    cur_x = jnp.dot(p0, wx_ref[...], preferred_element_type=f32) + bx_ref[...]

    # weights stay VMEM-resident for the whole recurrence
    w_tr = wtr_ref[...]
    w_s1, b_s1 = ws1_ref[...], bs1_ref[...]
    w_s2, b_s2 = ws2_ref[...], bs2_ref[...]

    # reset state (scratch persists across grid steps -> re-init per batch elem)
    u1_scr[...] = jnp.zeros_like(u1_scr)
    us1_scr[...] = jnp.zeros_like(us1_scr)
    us2_scr[...] = jnp.zeros_like(us2_scr)
    s2_scr[...] = jnp.zeros_like(s2_scr)
    acc_scr[...] = jnp.zeros_like(acc_scr)

    @pl.loop(0, T, unroll=T <= 8)
    def _step(t):
        # (1) ConvTranspose2d feedback + constant input current + LIF (layer 1)
        s2v = s2_scr[...]
        p1 = jnp.concatenate([tap(s2v, -dh, -dw) for dh, dw in _PHASES], axis=-1)
        cur1 = jnp.dot(p1, w_tr, preferred_element_type=f32) + cur_x
        s1p = lif(u1_scr, cur1)                    # (M, 4*c_hidden), phase layout
        # (2) 3x3 stride-2 conv + BN + LIF (layer s1): 2x2 phase taps
        p2 = jnp.concatenate([tap(s1p, sh, sw) for sh, sw in _PHASES], axis=-1)
        cur2 = jnp.dot(p2, w_s1, preferred_element_type=f32) + b_s1
        ss1 = lif(us1_scr, cur2)                   # (M, c_s1)
        # (3) 3x3 same-resolution conv + BN + LIF (layer s2)
        p3 = jnp.concatenate([tap(ss1, 1 - dh, 1 - dw)
                              for dh in range(3) for dw in range(3)], axis=-1)
        cur3 = jnp.dot(p3, w_s2, preferred_element_type=f32) + b_s2
        spk = lif(us2_scr, cur3)                   # (M, c_s2)
        s2_scr[...] = spk
        acc_scr[...] = acc_scr[...] + spk

    out_ref[...] = acc_scr[...] * (1.0 / T)        # average firing rate


# --------------------------------------------------------------------------- #
# Fused head kernel: downsamp(3x3/s2)+BN+DBReLU, + z1, incre(1x1)+BN+DBReLU
# --------------------------------------------------------------------------- #
def _head_kernel(z0ph_ref, z1_ref, wd_ref, bd_ref, wi_ref, bi_ref, out_ref,
                 *, H2, W2, vth):
    f32 = jnp.float32
    M = H2 * W2
    m_pos, m_neg = _col_masks(M, W2)
    tap = _make_tap(M, W2, m_pos, m_neg)

    z0 = z0ph_ref[...]                             # (M, 4*c_s2), phase layout
    p = jnp.concatenate([tap(z0, sh, sw) for sh, sw in _PHASES], axis=-1)
    y = jnp.dot(p, wd_ref[...], preferred_element_type=f32) + bd_ref[...]
    y = jnp.clip(y, 0.0, vth)                      # DBReLU
    y = y + z1_ref[...]
    y = jnp.dot(y, wi_ref[...], preferred_element_type=f32) + bi_ref[...]
    out_ref[...] = jnp.clip(y, 0.0, vth)


# --------------------------------------------------------------------------- #
# Trace-time weight folding into the phase layout (plain JAX, done once)
# --------------------------------------------------------------------------- #
def _to_phase(x):
    """NHWC (B,H,W,C) -> (B, (H//2)*(W//2), 4*C); column = (2*py+px)*C + c."""
    B, H, W, C = x.shape
    return (x.reshape(B, H // 2, 2, W // 2, 2, C)
             .transpose(0, 1, 3, 2, 4, 5)
             .reshape(B, (H // 2) * (W // 2), 4 * C))


def _build_x_weight(w, scale, shift):
    """3x3/s1/p1 conv + folded BN as a phase-layout matmul.
    w: (3,3,cin,cout) HWIO.  Returns ((9*4*cin, 4*cout), (1, 4*cout))."""
    _, _, cin, cout = w.shape
    ws = (w * scale.reshape(1, 1, 1, cout)).astype(jnp.float32)
    zero = jnp.zeros((cin, cout), jnp.float32)
    blocks = []
    for sh in (-1, 0, 1):
        for sw in (-1, 0, 1):
            rows = []
            for pyi, pxi in _PHASES:               # input phase
                cols = []
                for pyo, pxo in _PHASES:           # output phase
                    kh = pyi - pyo + 1 - 2 * sh
                    kw = pxi - pxo + 1 - 2 * sw
                    cols.append(ws[kh, kw] if 0 <= kh <= 2 and 0 <= kw <= 2 else zero)
                rows.append(jnp.concatenate(cols, axis=1))
            blocks.append(jnp.concatenate(rows, axis=0))
    wph = jnp.concatenate(blocks, axis=0)
    bph = jnp.tile(shift.reshape(1, cout).astype(jnp.float32), (1, 4))
    return wph, bph


def _build_trans_weight(w_t):
    """ConvTranspose2d(3x3, s2, p1, op1) as a phase-layout matmul.
    w_t: PyTorch layout (cin, cout, 3, 3).  Returns (4*cin, 4*cout)."""
    cin, cout = w_t.shape[0], w_t.shape[1]
    zero = jnp.zeros((cin, cout), jnp.float32)
    cols = []
    for py, px in _PHASES:                         # output phase
        rows = []
        for dh, dw in _PHASES:                     # input tap at (i+dh, j+dw)
            kh = _K_OF.get((py, dh))
            kw = _K_OF.get((px, dw))
            rows.append(zero if kh is None or kw is None else w_t[:, :, kh, kw])
        cols.append(jnp.concatenate(rows, axis=0))
    return jnp.concatenate(cols, axis=1).astype(jnp.float32)


def _build_s1_weight(w, scale, shift):
    """3x3/s2/p1 conv + folded BN consuming a phase-layout input.
    w: (3,3,cin,cout) HWIO.  Returns ((4*4*cin, cout), (1, cout))."""
    _, _, cin, cout = w.shape
    ws = (w * scale.reshape(1, 1, 1, cout)).astype(jnp.float32)
    zero = jnp.zeros((cin, cout), jnp.float32)
    blocks = []
    for sh, sw in _PHASES:                         # 2x2 half-res taps
        rows = []
        for py, px in _PHASES:                     # input phase
            kh = py + 1 - 2 * sh
            kw = px + 1 - 2 * sw
            rows.append(ws[kh, kw] if 0 <= kh <= 2 and 0 <= kw <= 2 else zero)
        blocks.append(jnp.concatenate(rows, axis=0))
    return jnp.concatenate(blocks, axis=0), shift.reshape(1, cout).astype(jnp.float32)


def _build_s2_weight(w, scale, shift):
    """3x3/s1/p1 conv + folded BN.  Returns ((9*cin, cout), (1, cout))."""
    _, _, cin, cout = w.shape
    ws = (w * scale.reshape(1, 1, 1, cout)).astype(jnp.float32)
    wf = jnp.concatenate([ws[dh, dw] for dh in range(3) for dw in range(3)], axis=0)
    return wf, shift.reshape(1, cout).astype(jnp.float32)


# --------------------------------------------------------------------------- #
# Wrappers
# --------------------------------------------------------------------------- #
def run_branch(x_nhwc, p_x, p_s1, p_s2, p_tr, cfg):
    vth = float(cfg["vth"])
    leaky = float(cfg["leaky"]) if cfg.get("leaky") is not None else 1.0
    T = int(cfg["time_step"])
    c_in, ch, cs1, cs2 = cfg["c_in"], cfg["c_hidden"], cfg["c_s1"], cfg["c_s2"]
    B, H, W, _ = x_nhwc.shape
    assert H % 2 == 0 and W % 2 == 0
    assert cfg["kernel_size_x"] == 3 and cfg["kernel_size_s"] == 3 \
        and cfg["padding_x"] == 1, "phase-decomposed recurrence assumes 3x3 / pad 1"
    H2, W2 = H // 2, W // 2
    M = H2 * W2

    xph = _to_phase(x_nhwc).astype(jnp.float32)                     # (B, M, 4*c_in)
    w_x, b_x = _build_x_weight(p_x["w"], p_x["scale"], p_x["shift"])
    w_tr = _build_trans_weight(p_tr["w"])
    w_s1, b_s1 = _build_s1_weight(p_s1["w"], p_s1["scale"], p_s1["shift"])
    w_s2, b_s2 = _build_s2_weight(p_s2["w"], p_s2["scale"], p_s2["shift"])

    def _full(a):
        nd = a.ndim
        return pl.BlockSpec(a.shape, lambda b: (0,) * nd)

    kern = functools.partial(_branch_kernel, H2=H2, W2=W2, T=T, vth=vth, leaky=leaky)
    out = pl.pallas_call(
        kern,
        grid=(B,),
        out_shape=jax.ShapeDtypeStruct((B, M, cs2), jnp.float32),
        in_specs=[
            pl.BlockSpec((None, M, 4 * c_in), lambda b: (b, 0, 0)),
            _full(w_x), _full(b_x), _full(w_tr),
            _full(w_s1), _full(b_s1), _full(w_s2), _full(b_s2),
        ],
        out_specs=pl.BlockSpec((None, M, cs2), lambda b: (b, 0, 0)),
        scratch_shapes=[
            pltpu.VMEM((M, 4 * ch), jnp.float32),    # u1 (full-res membrane, phase layout)
            pltpu.VMEM((M, cs1), jnp.float32),       # u_s1
            pltpu.VMEM((M, cs2), jnp.float32),       # u_s2
            pltpu.VMEM((M, cs2), jnp.float32),       # s2 feedback spikes
            pltpu.VMEM((M, cs2), jnp.float32),       # firing-rate accumulator
        ],
        compiler_params=pltpu.CompilerParams(dimension_semantics=("parallel",)),
    )(xph, w_x, b_x, w_tr, w_s1, b_s1, w_s2, b_s2)
    return out.reshape(B, H2, W2, cs2)


def run_head(z0, z1, p_down, p_incre, cfg):
    vth = float(cfg["vth"])
    cs2 = cfg["c_s2"]
    B, Hz, Wz, _ = z0.shape
    H2, W2 = Hz // 2, Wz // 2
    M = H2 * W2
    z0ph = _to_phase(z0)                                            # (B, M, 4*cs2)
    z1f = z1.reshape(B, M, cs2)
    w_d, b_d = _build_s1_weight(p_down["w"], p_down["scale"], p_down["shift"])
    w_i = (p_incre["w"].reshape(cs2, cs2) *
           p_incre["scale"].reshape(1, cs2)).astype(jnp.float32)
    b_i = p_incre["shift"].reshape(1, cs2).astype(jnp.float32)

    def _full(a):
        nd = a.ndim
        return pl.BlockSpec(a.shape, lambda b: (0,) * nd)

    kern = functools.partial(_head_kernel, H2=H2, W2=W2, vth=vth)
    return pl.pallas_call(
        kern,
        grid=(B,),
        out_shape=jax.ShapeDtypeStruct((B, M, cs2), jnp.float32),
        in_specs=[
            pl.BlockSpec((None, M, 4 * cs2), lambda b: (b, 0, 0)),
            pl.BlockSpec((None, M, cs2), lambda b: (b, 0, 0)),
            _full(w_d), _full(b_d), _full(w_i), _full(b_i),
        ],
        out_specs=pl.BlockSpec((None, M, cs2), lambda b: (b, 0, 0)),
        compiler_params=pltpu.CompilerParams(dimension_semantics=("parallel",)),
    )(z0ph, z1f, w_d, b_d, w_i, b_i)


# --------------------------------------------------------------------------- #
# Deterministic parameter init (shapes follow MPIS_neuro.__init__)
# --------------------------------------------------------------------------- #
def _conv_bn_params(key, cin, cout, k, bias=True, eps=1e-5):
    k1, k2, k3, k4, k5, k6 = jax.random.split(key, 6)
    w = jax.random.normal(k1, (k, k, cin, cout), jnp.float32) / jnp.sqrt(k * k * cin)
    b = 0.1 * jax.random.normal(k2, (cout,)) if bias else jnp.zeros((cout,))
    gamma = 1.0 + 0.1 * jax.random.normal(k3, (cout,))
    beta = 0.1 * jax.random.normal(k4, (cout,))
    mean = 0.1 * jax.random.normal(k5, (cout,))
    var = 1.0 + 0.1 * jax.random.uniform(k6, (cout,))
    scale = gamma / jnp.sqrt(var + eps)              # eval-mode BN folded into conv
    shift = (b - mean) * scale + beta
    return dict(w=w, scale=scale, shift=shift)


def _trans_params(key, cin, cout, k=3):
    # SNNConvTranspose: bias=False, no BN; PyTorch weight layout (cin, cout, k, k)
    w = jax.random.normal(key, (cin, cout, k, k), jnp.float32) / jnp.sqrt(k * k * cin)
    return dict(w=w)


def init_params(key, cfg):
    ks = jax.random.split(key, 12)
    c_in, ch, cs1, cs2 = cfg["c_in"], cfg["c_hidden"], cfg["c_s1"], cfg["c_s2"]
    D = cs2 * cfg["h_hidden"] * cfg["w_hidden"]
    return {
        "net_x":   _conv_bn_params(ks[0], c_in, ch, cfg["kernel_size_x"]),
        "net_x_n": _conv_bn_params(ks[1], c_in, ch, cfg["kernel_size_x"]),
        "s1":      _conv_bn_params(ks[2], ch, cs1, cfg["kernel_size_s"]),
        "s2":      _conv_bn_params(ks[3], cs1, cs2, cfg["kernel_size_s"]),
        "s1_n":    _conv_bn_params(ks[4], ch, cs1, cfg["kernel_size_s"]),
        "s2_n":    _conv_bn_params(ks[5], cs1, cs2, cfg["kernel_size_s"]),
        "trans":   _trans_params(ks[6], cs2, ch),
        "trans_n": _trans_params(ks[7], cs2, ch),
        "down":    _conv_bn_params(ks[8], cs2, cs2, 3, bias=True),
        "incre":   _conv_bn_params(ks[9], cs2, cs2, 1, bias=False),
        "cls": dict(
            w=0.05 * jax.random.normal(ks[10], (cfg["num_classes"], D), jnp.float32),
            b=0.05 * jax.random.normal(ks[11], (cfg["num_classes"],), jnp.float32)),
    }


# --------------------------------------------------------------------------- #
# MPIS_neuro forward (input_type='constant')
# --------------------------------------------------------------------------- #
def mpis_neuro_forward(params, x_nchw, cfg):
    B = x_nchw.shape[0]
    x = jnp.transpose(x_nchw, (0, 2, 3, 1)).astype(jnp.float32)     # NCHW -> NHWC
    H, W = x.shape[1], x.shape[2]

    # stream 1: full resolution
    z0 = run_branch(x, params["net_x"], params["s1"], params["s2"],
                    params["trans"], cfg)
    # stream "_n": half resolution input
    # TODO(synk): SNNLIFFuncNeuro source missing -- x_n reconstructed as 2x2 mean pool.
    x_n = x.reshape(B, H // 2, 2, W // 2, 2, cfg["c_in"]).mean(axis=(2, 4))
    z1 = run_branch(x_n, params["net_x_n"], params["s1_n"], params["s2_n"],
                    params["trans_n"], cfg)

    # head: downsamp(z0) + z1 -> incre -> flatten (NCHW order) -> classifier
    zh = run_head(z0, z1, params["down"], params["incre"], cfg)     # (B, M, cs2)
    feat = jnp.transpose(zh, (0, 2, 1)).reshape(B, -1)              # PyTorch NCHW flatten
    # tiny GEMV: plain XLA (a pallas launch here is pure overhead -- review item 9)
    return feat @ params["cls"]["w"].T + params["cls"]["b"]


# --------------------------------------------------------------------------- #
if __name__ == "__main__":
    CFG = dict(
        c_in=4, c_hidden=8, c_s1=16, c_s2=16,
        h_hidden=4, w_hidden=4, num_classes=10,
        kernel_size_x=3, stride_x=2, padding_x=1, pooling_x=False,
        kernel_size_s=3, threshold=2.0, time_step=4, vth=1.0,
        dropout=0.0, leaky=0.99,
    )
    key = jax.random.PRNGKey(0)
    kp, kx = jax.random.split(key)
    params = init_params(kp, CFG)

    B, H, W = 2, 16, 16
    x = jax.random.normal(kx, (B, CFG["c_in"], H, W), jnp.float32)  # NCHW like PyTorch

    fwd = jax.jit(functools.partial(mpis_neuro_forward, cfg=CFG))
    y = jax.block_until_ready(fwd(params, x))
    assert y.shape == (B, CFG["num_classes"])
    print("KERNEL_OK")
</pallas_src>

<mosaic_0001>
module attributes {stable_mosaic.version = 11 : i64} {
  func.func @_branch_kernel(%arg0: i32, %arg1: memref<1x16x16xf32, #tpu.memory_space<vmem>>, %arg2: memref<144x32xf32, #tpu.memory_space<vmem>>, %arg3: memref<1x32xf32, #tpu.memory_space<vmem>>, %arg4: memref<64x32xf32, #tpu.memory_space<vmem>>, %arg5: memref<128x16xf32, #tpu.memory_space<vmem>>, %arg6: memref<1x16xf32, #tpu.memory_space<vmem>>, %arg7: memref<144x16xf32, #tpu.memory_space<vmem>>, %arg8: memref<1x16xf32, #tpu.memory_space<vmem>>, %arg9: memref<1x16x16xf32, #tpu.memory_space<vmem>>, %arg10: memref<16x32xf32, #tpu.memory_space<vmem>>, %arg11: memref<16x16xf32, #tpu.memory_space<vmem>>, %arg12: memref<16x16xf32, #tpu.memory_space<vmem>>, %arg13: memref<16x16xf32, #tpu.memory_space<vmem>>, %arg14: memref<16x16xf32, #tpu.memory_space<vmem>>) attributes {dimension_semantics = [#tpu.dimension_semantics<parallel>], iteration_bounds = array<i64: 2>, scalar_prefetch = 0 : i64, scratch_operands = 5 : i64, tpu.core_type = #tpu.core_type<tc>, window_params = [{transform_indices = @transform_0, window_bounds = array<i64: 1, 16, 16>}, {pipeline_mode = #tpu.pipeline_mode<synchronous>, transform_indices = @transform_1, window_bounds = array<i64: 144, 32>}, {pipeline_mode = #tpu.pipeline_mode<synchronous>, transform_indices = @transform_2, window_bounds = array<i64: 1, 32>}, {pipeline_mode = #tpu.pipeline_mode<synchronous>, transform_indices = @transform_3, window_bounds = array<i64: 64, 32>}, {pipeline_mode = #tpu.pipeline_mode<synchronous>, transform_indices = @transform_4, window_bounds = array<i64: 128, 16>}, {pipeline_mode = #tpu.pipeline_mode<synchronous>, transform_indices = @transform_5, window_bounds = array<i64: 1, 16>}, {pipeline_mode = #tpu.pipeline_mode<synchronous>, transform_indices = @transform_6, window_bounds = array<i64: 144, 16>}, {pipeline_mode = #tpu.pipeline_mode<synchronous>, transform_indices = @transform_7, window_bounds = array<i64: 1, 16>}, {transform_indices = @transform_8, window_bounds = array<i64: 1, 16, 16>}]} {
    %0 = tpu.iota {dimensions = array<i32: 0>} : vector<16x1xi32>
    %c3_i32 = arith.constant 3 : i32
    %1 = vector.broadcast %c3_i32 : i32 to vector<16x1xi32>
    %2 = arith.andi %0, %1 : vector<16x1xi32>
    %c1_i32 = arith.constant 1 : i32
    %3 = vector.broadcast %c1_i32 : i32 to vector<16x1xi32>
    %4 = arith.cmpi sge, %2, %3 : vector<16x1xi32>
    %5 = arith.extui %4 : vector<16x1xi1> to vector<16x1xi32>
    %6 = arith.sitofp %5 : vector<16x1xi32> to vector<16x1xf32>
    %c2_i32 = arith.constant 2 : i32
    %7 = vector.broadcast %c2_i32 : i32 to vector<16x1xi32>
    %8 = arith.cmpi sle, %2, %7 : vector<16x1xi32>
    %9 = arith.extui %8 : vector<16x1xi1> to vector<16x1xi32>
    %10 = arith.sitofp %9 : vector<16x1xi32> to vector<16x1xf32>
    %c0 = arith.constant 0 : index
    %c0_0 = arith.constant 0 : index
    %c0_1 = arith.constant 0 : index
    %11 = vector.load %arg1[%c0, %c0_0, %c0_1] : memref<1x16x16xf32, #tpu.memory_space<vmem>>, vector<1x16x16xf32>
    %12 = vector.shape_cast %11 : vector<1x16x16xf32> to vector<16x16xf32>
    %13 = vector.extract_strided_slice %12 {offsets = [5, 0], sizes = [11, 16], strides = [1, 1]} : vector<16x16xf32> to vector<11x16xf32>
    %cst = arith.constant 0.000000e+00 : f32
    %14 = vector.broadcast %cst : f32 to vector<5x16xf32>
    %15 = tpu.concatenate %13, %14 in 0 : vector<11x16xf32>, vector<5x16xf32> -> vector<16x16xf32>
    %16 = vector.broadcast %10 : vector<16x1xf32> to vector<16x16xf32>
    %17 = arith.mulf %15, %16 : vector<16x16xf32>
    %18 = vector.extract_strided_slice %12 {offsets = [4, 0], sizes = [12, 16], strides = [1, 1]} : vector<16x16xf32> to vector<12x16xf32>
    %cst_2 = arith.constant 0.000000e+00 : f32
    %19 = vector.broadcast %cst_2 : f32 to vector<4x16xf32>
    %20 = tpu.concatenate %18, %19 in 0 : vector<12x16xf32>, vector<4x16xf32> -> vector<16x16xf32>
    %21 = vector.extract_strided_slice %12 {offsets = [3, 0], sizes = [13, 16], strides = [1, 1]} : vector<16x16xf32> to vector<13x16xf32>
    %cst_3 = arith.constant 0.000000e+00 : f32
    %22 = vector.broadcast %cst_3 : f32 to vector<3x16xf32>
    %23 = tpu.concatenate %21, %22 in 0 : vector<13x16xf32>, vector<3x16xf32> -> vector<16x16xf32>
    %24 = vector.broadcast %6 : vector<16x1xf32> to vector<16x16xf32>
    %25 = arith.mulf %23, %24 : vector<16x16xf32>
    %26 = vector.extract_strided_slice %12 {offsets = [1, 0], sizes = [15, 16], strides = [1, 1]} : vector<16x16xf32> to vector<15x16xf32>
    %cst_4 = arith.constant 0.000000e+00 : f32
    %27 = vector.broadcast %cst_4 : f32 to vector<1x16xf32>
    %28 = tpu.concatenate %26, %27 in 0 : vector<15x16xf32>, vector<1x16xf32> -> vector<16x16xf32>
    %29 = vector.broadcast %10 : vector<16x1xf32> to vector<16x16xf32>
    %30 = arith.mulf %28, %29 : vector<16x16xf32>
    %cst_5 = arith.constant 0.000000e+00 : f32
    %31 = vector.broadcast %cst_5 : f32 to vector<1x16xf32>
    %32 = vector.extract_strided_slice %12 {offsets = [0, 0], sizes = [15, 16], strides = [1, 1]} : vector<16x16xf32> to vector<15x16xf32>
    %33 = tpu.concatenate %31, %32 in 0 : vector<1x16xf32>, vector<15x16xf32> -> vector<16x16xf32>
    %34 = vector.broadcast %6 : vector<16x1xf32> to vector<16x16xf32>
    %35 = arith.mulf %33, %34 : vector<16x16xf32>
    %cst_6 = arith.constant 0.000000e+00 : f32
    %36 = vector.broadcast %cst_6 : f32 to vector<3x16xf32>
    %37 = vector.extract_strided_slice %12 {offsets = [0, 0], sizes = [13, 16], strides = [1, 1]} : vector<16x16xf32> to vector<13x16xf32>
    %38 = tpu.concatenate %36, %37 in 0 : vector<3x16xf32>, vector<13x16xf32> -> vector<16x16xf32>
    %39 = vector.broadcast %10 : vector<16x1xf32> to vector<16x16xf32>
    %40 = arith.mulf %38, %39 : vector<16x16xf32>
    %cst_7 = arith.constant 0.000000e+00 : f32
    %41 = vector.broadcast %cst_7 : f32 to vector<4x16xf32>
    %42 = vector.extract_strided_slice %12 {offsets = [0, 0], sizes = [12, 16], strides = [1, 1]} : vector<16x16xf32> to vector<12x16xf32>
    %43 = tpu.concatenate %41, %42 in 0 : vector<4x16xf32>, vector<12x16xf32> -> vector<16x16xf32>
    %cst_8 = arith.constant 0.000000e+00 : f32
    %44 = vector.broadcast %cst_8 : f32 to vector<5x16xf32>
    %45 = vector.extract_strided_slice %12 {offsets = [0, 0], sizes = [11, 16], strides = [1, 1]} : vector<16x16xf32> to vector<11x16xf32>
    %46 = tpu.concatenate %44, %45 in 0 : vector<5x16xf32>, vector<11x16xf32> -> vector<16x16xf32>
    %47 = vector.broadcast %6 : vector<16x1xf32> to vector<16x16xf32>
    %48 = arith.mulf %46, %47 : vector<16x16xf32>
    %49 = tpu.concatenate %17, %20, %25, %30, %12, %35, %40, %43, %48 in 1 : vector<16x16xf32>, vector<16x16xf32>, vector<16x16xf32>, vector<16x16xf32>, vector<16x16xf32>, vector<16x16xf32>, vector<16x16xf32>, vector<16x16xf32>, vector<16x16xf32> -> vector<16x144xf32>
    %c0_9 = arith.constant 0 : index
    %c0_10 = arith.constant 0 : index
    %50 = vector.load %arg2[%c0_9, %c0_10] : memref<144x32xf32, #tpu.memory_space<vmem>>, vector<144x32xf32>
    %cst_11 = arith.constant dense<0.000000e+00> : vector<16x32xf32>
    %51 = tpu.matmul %49, %50, %cst_11 {dimension_numbers = #tpu.dot_dimension_numbers<[1], [0], [0], [1], [0, 0, 1, 1], [], []>} : vector<16x144xf32>, vector<144x32xf32>, vector<16x32xf32> -> vector<16x32xf32>
    %c0_12 = arith.constant 0 : index
    %c0_13 = arith.constant 0 : index
    %52 = vector.load %arg3[%c0_12, %c0_13] : memref<1x32xf32, #tpu.memory_space<vmem>>, vector<1x32xf32>
    %53 = vector.broadcast %52 : vector<1x32xf32> to vector<16x32xf32>
    %54 = arith.addf %51, %53 : vector<16x32xf32>
    %c0_14 = arith.constant 0 : index
    %c0_15 = arith.constant 0 : index
    %55 = vector.load %arg4[%c0_14, %c0_15] : memref<64x32xf32, #tpu.memory_space<vmem>>, vector<64x32xf32>
    %c0_16 = arith.constant 0 : index
    %c0_17 = arith.constant 0 : index
    %56 = vector.load %arg5[%c0_16, %c0_17] : memref<128x16xf32, #tpu.memory_space<vmem>>, vector<128x16xf32>
    %c0_18 = arith.constant 0 : index
    %c0_19 = arith.constant 0 : index
    %57 = vector.load %arg6[%c0_18, %c0_19] : memref<1x16xf32, #tpu.memory_space<vmem>>, vector<1x16xf32>
    %c0_20 = arith.constant 0 : index
    %c0_21 = arith.constant 0 : index
    %58 = vector.load %arg7[%c0_20, %c0_21] : memref<144x16xf32, #tpu.memory_space<vmem>>, vector<144x16xf32>
    %c0_22 = arith.constant 0 : index
    %c0_23 = arith.constant 0 : index
    %59 = vector.load %arg8[%c0_22, %c0_23] : memref<1x16xf32, #tpu.memory_space<vmem>>, vector<1x16xf32>
    %cst_24 = arith.constant 0.000000e+00 : f32
    %60 = vector.broadcast %cst_24 : f32 to vector<16x32xf32>
    %c0_25 = arith.constant 0 : index
    %c0_26 = arith.constant 0 : index
    %61 = vector.load %arg10[%c0_25, %c0_26] : memref<16x32xf32, #tpu.memory_space<vmem>>, vector<16x32xf32>
    tpu.vector_store %arg10[%c0_25, %c0_26], %60 {strides = array<i32>} : memref<16x32xf32, #tpu.memory_space<vmem>>, vector<16x32xf32>,
    %cst_27 = arith.constant 0.000000e+00 : f32
    %62 = vector.broadcast %cst_27 : f32 to vector<16x16xf32>
    %c0_28 = arith.constant 0 : index
    %c0_29 = arith.constant 0 : index
    %63 = vector.load %arg11[%c0_28, %c0_29] : memref<16x16xf32, #tpu.memory_space<vmem>>, vector<16x16xf32>
    tpu.vector_store %arg11[%c0_28, %c0_29], %62 {strides = array<i32>} : memref<16x16xf32, #tpu.memory_space<vmem>>, vector<16x16xf32>,
    %cst_30 = arith.constant 0.000000e+00 : f32
    %64 = vector.broadcast %cst_30 : f32 to vector<16x16xf32>
    %c0_31 = arith.constant 0 : index
    %c0_32 = arith.constant 0 : index
    %65 = vector.load %arg12[%c0_31, %c0_32] : memref<16x16xf32, #tpu.memory_space<vmem>>, vector<16x16xf32>
    tpu.vector_store %arg12[%c0_31, %c0_32], %64 {strides = array<i32>} : memref<16x16xf32, #tpu.memory_space<vmem>>, vector<16x16xf32>,
    %cst_33 = arith.constant 0.000000e+00 : f32
    %66 = vector.broadcast %cst_33 : f32 to vector<16x16xf32>
    %c0_34 = arith.constant 0 : index
    %c0_35 = arith.constant 0 : index
    %67 = vector.load %arg13[%c0_34, %c0_35] : memref<16x16xf32, #tpu.memory_space<vmem>>, vector<16x16xf32>
    tpu.vector_store %arg13[%c0_34, %c0_35], %66 {strides = array<i32>} : memref<16x16xf32, #tpu.memory_space<vmem>>, vector<16x16xf32>,
    %cst_36 = arith.constant 0.000000e+00 : f32
    %68 = vector.broadcast %cst_36 : f32 to vector<16x16xf32>
    %c0_37 = arith.constant 0 : index
    %c0_38 = arith.constant 0 : index
    %69 = vector.load %arg14[%c0_37, %c0_38] : memref<16x16xf32, #tpu.memory_space<vmem>>, vector<16x16xf32>
    tpu.vector_store %arg14[%c0_37, %c0_38], %68 {strides = array<i32>} : memref<16x16xf32, #tpu.memory_space<vmem>>, vector<16x16xf32>,
    %c0_i32 = arith.constant 0 : i32
    %c0_39 = arith.constant 0 : index
    %c0_40 = arith.constant 0 : index
    %70 = vector.load %arg13[%c0_39, %c0_40] : memref<16x16xf32, #tpu.memory_space<vmem>>, vector<16x16xf32>
    %71 = vector.extract_strided_slice %70 {offsets = [1, 0], sizes = [15, 16], strides = [1, 1]} : vector<16x16xf32> to vector<15x16xf32>
    %cst_41 = arith.constant 0.000000e+00 : f32
    %72 = vector.broadcast %cst_41 : f32 to vector<1x16xf32>
    %73 = tpu.concatenate %71, %72 in 0 : vector<15x16xf32>, vector<1x16xf32> -> vector<16x16xf32>
    %74 = vector.broadcast %10 : vector<16x1xf32> to vector<16x16xf32>
    %75 = arith.mulf %73, %74 : vector<16x16xf32>
    %76 = vector.extract_strided_slice %70 {offsets = [4, 0], sizes = [12, 16], strides = [1, 1]} : vector<16x16xf32> to vector<12x16xf32>
    %cst_42 = arith.constant 0.000000e+00 : f32
    %77 = vector.broadcast %cst_42 : f32 to vector<4x16xf32>
    %78 = tpu.concatenate %76, %77 in 0 : vector<12x16xf32>, vector<4x16xf32> -> vector<16x16xf32>
    %79 = vector.extract_strided_slice %70 {offsets = [5, 0], sizes = [11, 16], strides = [1, 1]} : vector<16x16xf32> to vector<11x16xf32>
    %cst_43 = arith.constant 0.000000e+00 : f32
    %80 = vector.broadcast %cst_43 : f32 to vector<5x16xf32>
    %81 = tpu.concatenate %79, %80 in 0 : vector<11x16xf32>, vector<5x16xf32> -> vector<16x16xf32>
    %82 = vector.broadcast %10 : vector<16x1xf32> to vector<16x16xf32>
    %83 = arith.mulf %81, %82 : vector<16x16xf32>
    %84 = tpu.concatenate %70, %75, %78, %83 in 1 : vector<16x16xf32>, vector<16x16xf32>, vector<16x16xf32>, vector<16x16xf32> -> vector<16x64xf32>
    %cst_44 = arith.constant dense<0.000000e+00> : vector<16x32xf32>
    %85 = tpu.matmul %84, %55, %cst_44 {dimension_numbers = #tpu.dot_dimension_numbers<[1], [0], [0], [1], [0, 0, 1, 1], [], []>} : vector<16x64xf32>, vector<64x32xf32>, vector<16x32xf32> -> vector<16x32xf32>
    %86 = arith.addf %85, %54 : vector<16x32xf32>
    %c0_45 = arith.constant 0 : index
    %c0_46 = arith.constant 0 : index
    %87 = vector.load %arg10[%c0_45, %c0_46] : memref<16x32xf32, #tpu.memory_space<vmem>>, vector<16x32xf32>
    %cst_47 = arith.constant 9.900000e-01 : f32
    %88 = vector.broadcast %cst_47 : f32 to vector<16x32xf32>
    %89 = arith.mulf %88, %87 : vector<16x32xf32>
    %90 = arith.addf %89, %86 : vector<16x32xf32>
    %cst_48 = arith.constant 1.000000e+00 : f32
    %91 = vector.broadcast %cst_48 : f32 to vector<16x32xf32>
    %92 = arith.cmpf oge, %90, %91 : vector<16x32xf32>
    %93 = arith.extui %92 : vector<16x32xi1> to vector<16x32xi32>
    %94 = arith.sitofp %93 : vector<16x32xi32> to vector<16x32xf32>
    %cst_49 = arith.constant 1.000000e+00 : f32
    %95 = vector.broadcast %cst_49 : f32 to vector<16x32xf32>
    %96 = arith.mulf %95, %94 : vector<16x32xf32>
    %97 = arith.subf %90, %96 : vector<16x32xf32>
    %c0_50 = arith.constant 0 : index
    %c0_51 = arith.constant 0 : index
    %98 = vector.load %arg10[%c0_50, %c0_51] : memref<16x32xf32, #tpu.memory_space<vmem>>, vector<16x32xf32>
    tpu.vector_store %arg10[%c0_50, %c0_51], %97 {strides = array<i32>} : memref<16x32xf32, #tpu.memory_space<vmem>>, vector<16x32xf32>,
    %cst_52 = arith.constant 0.000000e+00 : f32
    %99 = vector.broadcast %cst_52 : f32 to vector<1x32xf32>
    %100 = vector.extract_strided_slice %94 {offsets = [0, 0], sizes = [15, 32], strides = [1, 1]} : vector<16x32xf32> to vector<15x32xf32>
    %101 = tpu.concatenate %99, %100 in 0 : vector<1x32xf32>, vector<15x32xf32> -> vector<16x32xf32>
    %102 = vector.broadcast %6 : vector<16x1xf32> to vector<16x32xf32>
    %103 = arith.mulf %101, %102 : vector<16x32xf32>
    %cst_53 = arith.constant 0.000000e+00 : f32
    %104 = vector.broadcast %cst_53 : f32 to vector<4x32xf32>
    %105 = vector.extract_strided_slice %94 {offsets = [0, 0], sizes = [12, 32], strides = [1, 1]} : vector<16x32xf32> to vector<12x32xf32>
    %106 = tpu.concatenate %104, %105 in 0 : vector<4x32xf32>, vector<12x32xf32> -> vector<16x32xf32>
    %cst_54 = arith.constant 0.000000e+00 : f32
    %107 = vector.broadcast %cst_54 : f32 to vector<5x32xf32>
    %108 = vector.extract_strided_slice %94 {offsets = [0, 0], sizes = [11, 32], strides = [1, 1]} : vector<16x32xf32> to vector<11x32xf32>
    %109 = tpu.concatenate %107, %108 in 0 : vector<5x32xf32>, vector<11x32xf32> -> vector<16x32xf32>
    %110 = vector.broadcast %6 : vector<16x1xf32> to vector<16x32xf32>
    %111 = arith.mulf %109, %110 : vector<16x32xf32>
    %112 = tpu.concatenate %94, %103, %106, %111 in 1 : vector<16x32xf32>, vector<16x32xf32>, vector<16x32xf32>, vector<16x32xf32> -> vector<16x128xf32>
    %cst_55 = arith.constant dense<0.000000e+00> : vector<16x16xf32>
    %113 = tpu.matmul %112, %56, %cst_55 {dimension_numbers = #tpu.dot_dimension_numbers<[1], [0], [0], [1], [0, 0, 1, 1], [], []>} : vector<16x128xf32>, vector<128x16xf32>, vector<16x16xf32> -> vector<16x16xf32>
    %114 = vector.broadcast %57 : vector<1x16xf32> to vector<16x16xf32>
    %115 = arith.addf %113, %114 : vector<16x16xf32>
    %c0_56 = arith.constant 0 : index
    %c0_57 = arith.constant 0 : index
    %116 = vector.load %arg11[%c0_56, %c0_57] : memref<16x16xf32, #tpu.memory_space<vmem>>, vector<16x16xf32>
    %cst_58 = arith.constant 9.900000e-01 : f32
    %117 = vector.broadcast %cst_58 : f32 to vector<16x16xf32>
    %118 = arith.mulf %117, %116 : vector<16x16xf32>
    %119 = arith.addf %118, %115 : vector<16x16xf32>
    %cst_59 = arith.constant 1.000000e+00 : f32
    %120 = vector.broadcast %cst_59 : f32 to vector<16x16xf32>
    %121 = arith.cmpf oge, %119, %120 : vector<16x16xf32>
    %122 = arith.extui %121 : vector<16x16xi1> to vector<16x16xi32>
    %123 = arith.sitofp %122 : vector<16x16xi32> to vector<16x16xf32>
    %cst_60 = arith.constant 1.000000e+00 : f32
    %124 = vector.broadcast %cst_60 : f32 to vector<16x16xf32>
    %125 = arith.mulf %124, %123 : vector<16x16xf32>
    %126 = arith.subf %119, %125 : vector<16x16xf32>
    %c0_61 = arith.constant 0 : index
    %c0_62 = arith.constant 0 : index
    %127 = vector.load %arg11[%c0_61, %c0_62] : memref<16x16xf32, #tpu.memory_space<vmem>>, vector<16x16xf32>
    tpu.vector_store %arg11[%c0_61, %c0_62], %126 {strides = array<i32>} : memref<16x16xf32, #tpu.memory_space<vmem>>, vector<16x16xf32>,
    %cst_63 = arith.constant 0.000000e+00 : f32
    %128 = vector.broadcast %cst_63 : f32 to vector<5x16xf32>
    %129 = vector.extract_strided_slice %123 {offsets = [0, 0], sizes = [11, 16], strides = [1, 1]} : vector<16x16xf32> to vector<11x16xf32>
    %130 = tpu.concatenate %128, %129 in 0 : vector<5x16xf32>, vector<11x16xf32> -> vector<16x16xf32>
    %131 = vector.broadcast %6 : vector<16x1xf32> to vector<16x16xf32>
    %132 = arith.mulf %130, %131 : vector<16x16xf32>
    %cst_64 = arith.constant 0.000000e+00 : f32
    %133 = vector.broadcast %cst_64 : f32 to vector<4x16xf32>
    %134 = vector.extract_strided_slice %123 {offsets = [0, 0], sizes = [12, 16], strides = [1, 1]} : vector<16x16xf32> to vector<12x16xf32>
    %135 = tpu.concatenate %133, %134 in 0 : vector<4x16xf32>, vector<12x16xf32> -> vector<16x16xf32>
    %cst_65 = arith.constant 0.000000e+00 : f32
    %136 = vector.broadcast %cst_65 : f32 to vector<3x16xf32>
    %137 = vector.extract_strided_slice %123 {offsets = [0, 0], sizes = [13, 16], strides = [1, 1]} : vector<16x16xf32> to vector<13x16xf32>
    %138 = tpu.concatenate %136, %137 in 0 : vector<3x16xf32>, vector<13x16xf32> -> vector<16x16xf32>
    %139 = vector.broadcast %10 : vector<16x1xf32> to vector<16x16xf32>
    %140 = arith.mulf %138, %139 : vector<16x16xf32>
    %cst_66 = arith.constant 0.000000e+00 : f32
    %141 = vector.broadcast %cst_66 : f32 to vector<1x16xf32>
    %142 = vector.extract_strided_slice %123 {offsets = [0, 0], sizes = [15, 16], strides = [1, 1]} : vector<16x16xf32> to vector<15x16xf32>
    %143 = tpu.concatenate %141, %142 in 0 : vector<1x16xf32>, vector<15x16xf32> -> vector<16x16xf32>
    %144 = vector.broadcast %6 : vector<16x1xf32> to vector<16x16xf32>
    %145 = arith.mulf %143, %144 : vector<16x16xf32>
    %146 = vector.extract_strided_slice %123 {offsets = [1, 0], sizes = [15, 16], strides = [1, 1]} : vector<16x16xf32> to vector<15x16xf32>
    %cst_67 = arith.constant 0.000000e+00 : f32
    %147 = vector.broadcast %cst_67 : f32 to vector<1x16xf32>
    %148 = tpu.concatenate %146, %147 in 0 : vector<15x16xf32>, vector<1x16xf32> -> vector<16x16xf32>
    %149 = vector.broadcast %10 : vector<16x1xf32> to vector<16x16xf32>
    %150 = arith.mulf %148, %149 : vector<16x16xf32>
    %151 = vector.extract_strided_slice %123 {offsets = [3, 0], sizes = [13, 16], strides = [1, 1]} : vector<16x16xf32> to vector<13x16xf32>
    %cst_68 = arith.constant 0.000000e+00 : f32
    %152 = vector.broadcast %cst_68 : f32 to vector<3x16xf32>
    %153 = tpu.concatenate %151, %152 in 0 : vector<13x16xf32>, vector<3x16xf32> -> vector<16x16xf32>
    %154 = vector.broadcast %6 : vector<16x1xf32> to vector<16x16xf32>
    %155 = arith.mulf %153, %154 : vector<16x16xf32>
    %156 = vector.extract_strided_slice %123 {offsets = [4, 0], sizes = [12, 16], strides = [1, 1]} : vector<16x16xf32> to vector<12x16xf32>
    %cst_69 = arith.constant 0.000000e+00 : f32
    %157 = vector.broadcast %cst_69 : f32 to vector<4x16xf32>
    %158 = tpu.concatenate %156, %157 in 0 : vector<12x16xf32>, vector<4x16xf32> -> vector<16x16xf32>
    %159 = vector.extract_strided_slice %123 {offsets = [5, 0], sizes = [11, 16], strides = [1, 1]} : vector<16x16xf32> to vector<11x16xf32>
    %cst_70 = arith.constant 0.000000e+00 : f32
    %160 = vector.broadcast %cst_70 : f32 to vector<5x16xf32>
    %161 = tpu.concatenate %159, %160 in 0 : vector<11x16xf32>, vector<5x16xf32> -> vector<16x16xf32>
    %162 = vector.broadcast %10 : vector<16x1xf32> to vector<16x16xf32>
    %163 = arith.mulf %161, %162 : vector<16x16xf32>
    %164 = tpu.concatenate %132, %135, %140, %145, %123, %150, %155, %158, %163 in 1 : vector<16x16xf32>, vector<16x16xf32>, vector<16x16xf32>, vector<16x16xf32>, vector<16x16xf32>, vector<16x16xf32>, vector<16x16xf32>, vector<16x16xf32>, vector<16x16xf32> -> vector<16x144xf32>
    %cst_71 = arith.constant dense<0.000000e+00> : vector<16x16xf32>
    %165 = tpu.matmul %164, %58, %cst_71 {dimension_numbers = #tpu.dot_dimension_numbers<[1], [0], [0], [1], [0, 0, 1, 1], [], []>} : vector<16x144xf32>, vector<144x16xf32>, vector<16x16xf32> -> vector<16x16xf32>
    %166 = vector.broadcast %59 : vector<1x16xf32> to vector<16x16xf32>
    %167 = arith.addf %165, %166 : vector<16x16xf32>
    %c0_72 = arith.constant 0 : index
    %c0_73 = arith.constant 0 : index
    %168 = vector.load %arg12[%c0_72, %c0_73] : memref<16x16xf32, #tpu.memory_space<vmem>>, vector<16x16xf32>
    %cst_74 = arith.constant 9.900000e-01 : f32
    %169 = vector.broadcast %cst_74 : f32 to vector<16x16xf32>
    %170 = arith.mulf %169, %168 : vector<16x16xf32>
    %171 = arith.addf %170, %167 : vector<16x16xf32>
    %cst_75 = arith.constant 1.000000e+00 : f32
    %172 = vector.broadcast %cst_75 : f32 to vector<16x16xf32>
    %173 = arith.cmpf oge, %171, %172 : vector<16x16xf32>
    %174 = arith.extui %173 : vector<16x16xi1> to vector<16x16xi32>
    %175 = arith.sitofp %174 : vector<16x16xi32> to vector<16x16xf32>
    %cst_76 = arith.constant 1.000000e+00 : f32
    %176 = vector.broadcast %cst_76 : f32 to vector<16x16xf32>
    %177 = arith.mulf %176, %175 : vector<16x16xf32>
    %178 = arith.subf %171, %177 : vector<16x16xf32>
    %c0_77 = arith.constant 0 : index
    %c0_78 = arith.constant 0 : index
    %179 = vector.load %arg12[%c0_77, %c0_78] : memref<16x16xf32, #tpu.memory_space<vmem>>, vector<16x16xf32>
    tpu.vector_store %arg12[%c0_77, %c0_78], %178 {strides = array<i32>} : memref<16x16xf32, #tpu.memory_space<vmem>>, vector<16x16xf32>,
    %c0_79 = arith.constant 0 : index
    %c0_80 = arith.constant 0 : index
    %180 = vector.load %arg13[%c0_79, %c0_80] : memref<16x16xf32, #tpu.memory_space<vmem>>, vector<16x16xf32>
    tpu.vector_store %arg13[%c0_79, %c0_80], %175 {strides = array<i32>} : memref<16x16xf32, #tpu.memory_space<vmem>>, vector<16x16xf32>,
    %c0_81 = arith.constant 0 : index
    %c0_82 = arith.constant 0 : index
    %181 = vector.load %arg14[%c0_81, %c0_82] : memref<16x16xf32, #tpu.memory_space<vmem>>, vector<16x16xf32>
    %182 = arith.addf %181, %175 : vector<16x16xf32>
    %c0_83 = arith.constant 0 : index
    %c0_84 = arith.constant 0 : index
    %183 = vector.load %arg14[%c0_83, %c0_84] : memref<16x16xf32, #tpu.memory_space<vmem>>, vector<16x16xf32>
    tpu.vector_store %arg14[%c0_83, %c0_84], %182 {strides = array<i32>} : memref<16x16xf32, #tpu.memory_space<vmem>>, vector<16x16xf32>,
    %c1_i32_85 = arith.constant 1 : i32
    %c0_86 = arith.constant 0 : index
    %c0_87 = arith.constant 0 : index
    %184 = vector.load %arg13[%c0_86, %c0_87] : memref<16x16xf32, #tpu.memory_space<vmem>>, vector<16x16xf32>
    %185 = vector.extract_strided_slice %184 {offsets = [1, 0], sizes = [15, 16], strides = [1, 1]} : vector<16x16xf32> to vector<15x16xf32>
    %cst_88 = arith.constant 0.000000e+00 : f32
    %186 = vector.broadcast %cst_88 : f32 to vector<1x16xf32>
    %187 = tpu.concatenate %185, %186 in 0 : vector<15x16xf32>, vector<1x16xf32> -> vector<16x16xf32>
    %188 = vector.broadcast %10 : vector<16x1xf32> to vector<16x16xf32>
    %189 = arith.mulf %187, %188 : vector<16x16xf32>
    %190 = vector.extract_strided_slice %184 {offsets = [4, 0], sizes = [12, 16], strides = [1, 1]} : vector<16x16xf32> to vector<12x16xf32>
    %cst_89 = arith.constant 0.000000e+00 : f32
    %191 = vector.broadcast %cst_89 : f32 to vector<4x16xf32>
    %192 = tpu.concatenate %190, %191 in 0 : vector<12x16xf32>, vector<4x16xf32> -> vector<16x16xf32>
    %193 = vector.extract_strided_slice %184 {offsets = [5, 0], sizes = [11, 16], strides = [1, 1]} : vector<16x16xf32> to vector<11x16xf32>
    %cst_90 = arith.constant 0.000000e+00 : f32
    %194 = vector.broadcast %cst_90 : f32 to vector<5x16xf32>
    %195 = tpu.concatenate %193, %194 in 0 : vector<11x16xf32>, vector<5x16xf32> -> vector<16x16xf32>
    %196 = vector.broadcast %10 : vector<16x1xf32> to vector<16x16xf32>
    %197 = arith.mulf %195, %196 : vector<16x16xf32>
    %198 = tpu.concatenate %184, %189, %192, %197 in 1 : vector<16x16xf32>, vector<16x16xf32>, vector<16x16xf32>, vector<16x16xf32> -> vector<16x64xf32>
    %cst_91 = arith.constant dense<0.000000e+00> : vector<16x32xf32>
    %199 = tpu.matmul %198, %55, %cst_91 {dimension_numbers = #tpu.dot_dimension_numbers<[1], [0], [0], [1], [0, 0, 1, 1], [], []>} : vector<16x64xf32>, vector<64x32xf32>, vector<16x32xf32> -> vector<16x32xf32>
    %200 = arith.addf %199, %54 : vector<16x32xf32>
    %c0_92 = arith.constant 0 : index
    %c0_93 = arith.constant 0 : index
    %201 = vector.load %arg10[%c0_92, %c0_93] : memref<16x32xf32, #tpu.memory_space<vmem>>, vector<16x32xf32>
    %cst_94 = arith.constant 9.900000e-01 : f32
    %202 = vector.broadcast %cst_94 : f32 to vector<16x32xf32>
    %203 = arith.mulf %202, %201 : vector<16x32xf32>
    %204 = arith.addf %203, %200 : vector<16x32xf32>
    %cst_95 = arith.constant 1.000000e+00 : f32
    %205 = vector.broadcast %cst_95 : f32 to vector<16x32xf32>
    %206 = arith.cmpf oge, %204, %205 : vector<16x32xf32>
    %207 = arith.extui %206 : vector<16x32xi1> to vector<16x32xi32>
    %208 = arith.sitofp %207 : vector<16x32xi32> to vector<16x32xf32>
    %cst_96 = arith.constant 1.000000e+00 : f32
    %209 = vector.broadcast %cst_96 : f32 to vector<16x32xf32>
    %210 = arith.mulf %209, %208 : vector<16x32xf32>
    %211 = arith.subf %204, %210 : vector<16x32xf32>
    %c0_97 = arith.constant 0 : index
    %c0_98 = arith.constant 0 : index
    %212 = vector.load %arg10[%c0_97, %c0_98] : memref<16x32xf32, #tpu.memory_space<vmem>>, vector<16x32xf32>
    tpu.vector_store %arg10[%c0_97, %c0_98], %211 {strides = array<i32>} : memref<16x32xf32, #tpu.memory_space<vmem>>, vector<16x32xf32>,
    %cst_99 = arith.constant 0.000000e+00 : f32
    %213 = vector.broadcast %cst_99 : f32 to vector<1x32xf32>
    %214 = vector.extract_strided_slice %208 {offsets = [0, 0], sizes = [15, 32], strides = [1, 1]} : vector<16x32xf32> to vector<15x32xf32>
    %215 = tpu.concatenate %213, %214 in 0 : vector<1x32xf32>, vector<15x32xf32> -> vector<16x32xf32>
    %216 = vector.broadcast %6 : vector<16x1xf32> to vector<16x32xf32>
    %217 = arith.mulf %215, %216 : vector<16x32xf32>
    %cst_100 = arith.constant 0.000000e+00 : f32
    %218 = vector.broadcast %cst_100 : f32 to vector<4x32xf32>
    %219 = vector.extract_strided_slice %208 {offsets = [0, 0], sizes = [12, 32], strides = [1, 1]} : vector<16x32xf32> to vector<12x32xf32>
    %220 = tpu.concatenate %218, %219 in 0 : vector<4x32xf32>, vector<12x32xf32> -> vector<16x32xf32>
    %cst_101 = arith.constant 0.000000e+00 : f32
    %221 = vector.broadcast %cst_101 : f32 to vector<5x32xf32>
    %222 = vector.extract_strided_slice %208 {offsets = [0, 0], sizes = [11, 32], strides = [1, 1]} : vector<16x32xf32> to vector<11x32xf32>
    %223 = tpu.concatenate %221, %222 in 0 : vector<5x32xf32>, vector<11x32xf32> -> vector<16x32xf32>
    %224 = vector.broadcast %6 : vector<16x1xf32> to vector<16x32xf32>
    %225 = arith.mulf %223, %224 : vector<16x32xf32>
    %226 = tpu.concatenate %208, %217, %220, %225 in 1 : vector<16x32xf32>, vector<16x32xf32>, vector<16x32xf32>, vector<16x32xf32> -> vector<16x128xf32>
    %cst_102 = arith.constant dense<0.000000e+00> : vector<16x16xf32>
    %227 = tpu.matmul %226, %56, %cst_102 {dimension_numbers = #tpu.dot_dimension_numbers<[1], [0], [0], [1], [0, 0, 1, 1], [], []>} : vector<16x128xf32>, vector<128x16xf32>, vector<16x16xf32> -> vector<16x16xf32>
    %228 = vector.broadcast %57 : vector<1x16xf32> to vector<16x16xf32>
    %229 = arith.addf %227, %228 : vector<16x16xf32>
    %c0_103 = arith.constant 0 : index
    %c0_104 = arith.constant 0 : index
    %230 = vector.load %arg11[%c0_103, %c0_104] : memref<16x16xf32, #tpu.memory_space<vmem>>, vector<16x16xf32>
    %cst_105 = arith.constant 9.900000e-01 : f32
    %231 = vector.broadcast %cst_105 : f32 to vector<16x16xf32>
    %232 = arith.mulf %231, %230 : vector<16x16xf32>
    %233 = arith.addf %232, %229 : vector<16x16xf32>
    %cst_106 = arith.constant 1.000000e+00 : f32
    %234 = vector.broadcast %cst_106 : f32 to vector<16x16xf32>
    %235 = arith.cmpf oge, %233, %234 : vector<16x16xf32>
    %236 = arith.extui %235 : vector<16x16xi1> to vector<16x16xi32>
    %237 = arith.sitofp %236 : vector<16x16xi32> to vector<16x16xf32>
    %cst_107 = arith.constant 1.000000e+00 : f32
    %238 = vector.broadcast %cst_107 : f32 to vector<16x16xf32>
    %239 = arith.mulf %238, %237 : vector<16x16xf32>
    %240 = arith.subf %233, %239 : vector<16x16xf32>
    %c0_108 = arith.constant 0 : index
    %c0_109 = arith.constant 0 : index
    %241 = vector.load %arg11[%c0_108, %c0_109] : memref<16x16xf32, #tpu.memory_space<vmem>>, vector<16x16xf32>
    tpu.vector_store %arg11[%c0_108, %c0_109], %240 {strides = array<i32>} : memref<16x16xf32, #tpu.memory_space<vmem>>, vector<16x16xf32>,
    %cst_110 = arith.constant 0.000000e+00 : f32
    %242 = vector.broadcast %cst_110 : f32 to vector<5x16xf32>
    %243 = vector.extract_strided_slice %237 {offsets = [0, 0], sizes = [11, 16], strides = [1, 1]} : vector<16x16xf32> to vector<11x16xf32>
    %244 = tpu.concatenate %242, %243 in 0 : vector<5x16xf32>, vector<11x16xf32> -> vector<16x16xf32>
    %245 = vector.broadcast %6 : vector<16x1xf32> to vector<16x16xf32>
    %246 = arith.mulf %244, %245 : vector<16x16xf32>
    %cst_111 = arith.constant 0.000000e+00 : f32
    %247 = vector.broadcast %cst_111 : f32 to vector<4x16xf32>
    %248 = vector.extract_strided_slice %237 {offsets = [0, 0], sizes = [12, 16], strides = [1, 1]} : vector<16x16xf32> to vector<12x16xf32>
    %249 = tpu.concatenate %247, %248 in 0 : vector<4x16xf32>, vector<12x16xf32> -> vector<16x16xf32>
    %cst_112 = arith.constant 0.000000e+00 : f32
    %250 = vector.broadcast %cst_112 : f32 to vector<3x16xf32>
    %251 = vector.extract_strided_slice %237 {offsets = [0, 0], sizes = [13, 16], strides = [1, 1]} : vector<16x16xf32> to vector<13x16xf32>
    %252 = tpu.concatenate %250, %251 in 0 : vector<3x16xf32>, vector<13x16xf32> -> vector<16x16xf32>
    %253 = vector.broadcast %10 : vector<16x1xf32> to vector<16x16xf32>
    %254 = arith.mulf %252, %253 : vector<16x16xf32>
    %cst_113 = arith.constant 0.000000e+00 : f32
    %255 = vector.broadcast %cst_113 : f32 to vector<1x16xf32>
    %256 = vector.extract_strided_slice %237 {offsets = [0, 0], sizes = [15, 16], strides = [1, 1]} : vector<16x16xf32> to vector<15x16xf32>
    %257 = tpu.concatenate %255, %256 in 0 : vector<1x16xf32>, vector<15x16xf32> -> vector<16x16xf32>
    %258 = vector.broadcast %6 : vector<16x1xf32> to vector<16x16xf32>
    %259 = arith.mulf %257, %258 : vector<16x16xf32>
    %260 = vector.extract_strided_slice %237 {offsets = [1, 0], sizes = [15, 16], strides = [1, 1]} : vector<16x16xf32> to vector<15x16xf32>
    %cst_114 = arith.constant 0.000000e+00 : f32
    %261 = vector.broadcast %cst_114 : f32 to vector<1x16xf32>
    %262 = tpu.concatenate %260, %261 in 0 : vector<15x16xf32>, vector<1x16xf32> -> vector<16x16xf32>
    %263 = vector.broadcast %10 : vector<16x1xf32> to vector<16x16xf32>
    %264 = arith.mulf %262, %263 : vector<16x16xf32>
    %265 = vector.extract_strided_slice %237 {offsets = [3, 0], sizes = [13, 16], strides = [1, 1]} : vector<16x16xf32> to vector<13x16xf32>
    %cst_115 = arith.constant 0.000000e+00 : f32
    %266 = vector.broadcast %cst_115 : f32 to vector<3x16xf32>
    %267 = tpu.concatenate %265, %266 in 0 : vector<13x16xf32>, vector<3x16xf32> -> vector<16x16xf32>
    %268 = vector.broadcast %6 : vector<16x1xf32> to vector<16x16xf32>
    %269 = arith.mulf %267, %268 : vector<16x16xf32>
    %270 = vector.extract_strided_slice %237 {offsets = [4, 0], sizes = [12, 16], strides = [1, 1]} : vector<16x16xf32> to vector<12x16xf32>
    %cst_116 = arith.constant 0.000000e+00 : f32
    %271 = vector.broadcast %cst_116 : f32 to vector<4x16xf32>
    %272 = tpu.concatenate %270, %271 in 0 : vector<12x16xf32>, vector<4x16xf32> -> vector<16x16xf32>
    %273 = vector.extract_strided_slice %237 {offsets = [5, 0], sizes = [11, 16], strides = [1, 1]} : vector<16x16xf32> to vector<11x16xf32>
    %cst_117 = arith.constant 0.000000e+00 : f32
    %274 = vector.broadcast %cst_117 : f32 to vector<5x16xf32>
    %275 = tpu.concatenate %273, %274 in 0 : vector<11x16xf32>, vector<5x16xf32> -> vector<16x16xf32>
    %276 = vector.broadcast %10 : vector<16x1xf32> to vector<16x16xf32>
    %277 = arith.mulf %275, %276 : vector<16x16xf32>
    %278 = tpu.concatenate %246, %249, %254, %259, %237, %264, %269, %272, %277 in 1 : vector<16x16xf32>, vector<16x16xf32>, vector<16x16xf32>, vector<16x16xf32>, vector<16x16xf32>, vector<16x16xf32>, vector<16x16xf32>, vector<16x16xf32>, vector<16x16xf32> -> vector<16x144xf32>
    %cst_118 = arith.constant dense<0.000000e+00> : vector<16x16xf32>
    %279 = tpu.matmul %278, %58, %cst_118 {dimension_numbers = #tpu.dot_dimension_numbers<[1], [0], [0], [1], [0, 0, 1, 1], [], []>} : vector<16x144xf32>, vector<144x16xf32>, vector<16x16xf32> -> vector<16x16xf32>
    %280 = vector.broadcast %59 : vector<1x16xf32> to vector<16x16xf32>
    %281 = arith.addf %279, %280 : vector<16x16xf32>
    %c0_119 = arith.constant 0 : index
    %c0_120 = arith.constant 0 : index
    %282 = vector.load %arg12[%c0_119, %c0_120] : memref<16x16xf32, #tpu.memory_space<vmem>>, vector<16x16xf32>
    %cst_121 = arith.constant 9.900000e-01 : f32
    %283 = vector.broadcast %cst_121 : f32 to vector<16x16xf32>
    %284 = arith.mulf %283, %282 : vector<16x16xf32>
    %285 = arith.addf %284, %281 : vector<16x16xf32>
    %cst_122 = arith.constant 1.000000e+00 : f32
    %286 = vector.broadcast %cst_122 : f32 to vector<16x16xf32>
    %287 = arith.cmpf oge, %285, %286 : vector<16x16xf32>
    %288 = arith.extui %287 : vector<16x16xi1> to vector<16x16xi32>
    %289 = arith.sitofp %288 : vector<16x16xi32> to vector<16x16xf32>
    %cst_123 = arith.constant 1.000000e+00 : f32
    %290 = vector.broadcast %cst_123 : f32 to vector<16x16xf32>
    %291 = arith.mulf %290, %289 : vector<16x16xf32>
    %292 = arith.subf %285, %291 : vector<16x16xf32>
    %c0_124 = arith.constant 0 : index
    %c0_125 = arith.constant 0 : index
    %293 = vector.load %arg12[%c0_124, %c0_125] : memref<16x16xf32, #tpu.memory_space<vmem>>, vector<16x16xf32>
    tpu.vector_store %arg12[%c0_124, %c0_125], %292 {strides = array<i32>} : memref<16x16xf32, #tpu.memory_space<vmem>>, vector<16x16xf32>,
    %c0_126 = arith.constant 0 : index
    %c0_127 = arith.constant 0 : index
    %294 = vector.load %arg13[%c0_126, %c0_127] : memref<16x16xf32, #tpu.memory_space<vmem>>, vector<16x16xf32>
    tpu.vector_store %arg13[%c0_126, %c0_127], %289 {strides = array<i32>} : memref<16x16xf32, #tpu.memory_space<vmem>>, vector<16x16xf32>,
    %c0_128 = arith.constant 0 : index
    %c0_129 = arith.constant 0 : index
    %295 = vector.load %arg14[%c0_128, %c0_129] : memref<16x16xf32, #tpu.memory_space<vmem>>, vector<16x16xf32>
    %296 = arith.addf %295, %289 : vector<16x16xf32>
    %c0_130 = arith.constant 0 : index
    %c0_131 = arith.constant 0 : index
    %297 = vector.load %arg14[%c0_130, %c0_131] : memref<16x16xf32, #tpu.memory_space<vmem>>, vector<16x16xf32>
    tpu.vector_store %arg14[%c0_130, %c0_131], %296 {strides = array<i32>} : memref<16x16xf32, #tpu.memory_space<vmem>>, vector<16x16xf32>,
    %c2_i32_132 = arith.constant 2 : i32
    %c0_133 = arith.constant 0 : index
    %c0_134 = arith.constant 0 : index
    %298 = vector.load %arg13[%c0_133, %c0_134] : memref<16x16xf32, #tpu.memory_space<vmem>>, vector<16x16xf32>
    %299 = vector.extract_strided_slice %298 {offsets = [1, 0], sizes = [15, 16], strides = [1, 1]} : vector<16x16xf32> to vector<15x16xf32>
    %cst_135 = arith.constant 0.000000e+00 : f32
    %300 = vector.broadcast %cst_135 : f32 to vector<1x16xf32>
    %301 = tpu.concatenate %299, %300 in 0 : vector<15x16xf32>, vector<1x16xf32> -> vector<16x16xf32>
    %302 = vector.broadcast %10 : vector<16x1xf32> to vector<16x16xf32>
    %303 = arith.mulf %301, %302 : vector<16x16xf32>
    %304 = vector.extract_strided_slice %298 {offsets = [4, 0], sizes = [12, 16], strides = [1, 1]} : vector<16x16xf32> to vector<12x16xf32>
    %cst_136 = arith.constant 0.000000e+00 : f32
    %305 = vector.broadcast %cst_136 : f32 to vector<4x16xf32>
    %306 = tpu.concatenate %304, %305 in 0 : vector<12x16xf32>, vector<4x16xf32> -> vector<16x16xf32>
    %307 = vector.extract_strided_slice %298 {offsets = [5, 0], sizes = [11, 16], strides = [1, 1]} : vector<16x16xf32> to vector<11x16xf32>
    %cst_137 = arith.constant 0.000000e+00 : f32
    %308 = vector.broadcast %cst_137 : f32 to vector<5x16xf32>
    %309 = tpu.concatenate %307, %308 in 0 : vector<11x16xf32>, vector<5x16xf32> -> vector<16x16xf32>
    %310 = vector.broadcast %10 : vector<16x1xf32> to vector<16x16xf32>
    %311 = arith.mulf %309, %310 : vector<16x16xf32>
    %312 = tpu.concatenate %298, %303, %306, %311 in 1 : vector<16x16xf32>, vector<16x16xf32>, vector<16x16xf32>, vector<16x16xf32> -> vector<16x64xf32>
    %cst_138 = arith.constant dense<0.000000e+00> : vector<16x32xf32>
    %313 = tpu.matmul %312, %55, %cst_138 {dimension_numbers = #tpu.dot_dimension_numbers<[1], [0], [0], [1], [0, 0, 1, 1], [], []>} : vector<16x64xf32>, vector<64x32xf32>, vector<16x32xf32> -> vector<16x32xf32>
    %314 = arith.addf %313, %54 : vector<16x32xf32>
    %c0_139 = arith.constant 0 : index
    %c0_140 = arith.constant 0 : index
    %315 = vector.load %arg10[%c0_139, %c0_140] : memref<16x32xf32, #tpu.memory_space<vmem>>, vector<16x32xf32>
    %cst_141 = arith.constant 9.900000e-01 : f32
    %316 = vector.broadcast %cst_141 : f32 to vector<16x32xf32>
    %317 = arith.mulf %316, %315 : vector<16x32xf32>
    %318 = arith.addf %317, %314 : vector<16x32xf32>
    %cst_142 = arith.constant 1.000000e+00 : f32
    %319 = vector.broadcast %cst_142 : f32 to vector<16x32xf32>
    %320 = arith.cmpf oge, %318, %319 : vector<16x32xf32>
    %321 = arith.extui %320 : vector<16x32xi1> to vector<16x32xi32>
    %322 = arith.sitofp %321 : vector<16x32xi32> to vector<16x32xf32>
    %cst_143 = arith.constant 1.000000e+00 : f32
    %323 = vector.broadcast %cst_143 : f32 to vector<16x32xf32>
    %324 = arith.mulf %323, %322 : vector<16x32xf32>
    %325 = arith.subf %318, %324 : vector<16x32xf32>
    %c0_144 = arith.constant 0 : index
    %c0_145 = arith.constant 0 : index
    %326 = vector.load %arg10[%c0_144, %c0_145] : memref<16x32xf32, #tpu.memory_space<vmem>>, vector<16x32xf32>
    tpu.vector_store %arg10[%c0_144, %c0_145], %325 {strides = array<i32>} : memref<16x32xf32, #tpu.memory_space<vmem>>, vector<16x32xf32>,
    %cst_146 = arith.constant 0.000000e+00 : f32
    %327 = vector.broadcast %cst_146 : f32 to vector<1x32xf32>
    %328 = vector.extract_strided_slice %322 {offsets = [0, 0], sizes = [15, 32], strides = [1, 1]} : vector<16x32xf32> to vector<15x32xf32>
    %329 = tpu.concatenate %327, %328 in 0 : vector<1x32xf32>, vector<15x32xf32> -> vector<16x32xf32>
    %330 = vector.broadcast %6 : vector<16x1xf32> to vector<16x32xf32>
    %331 = arith.mulf %329, %330 : vector<16x32xf32>
    %cst_147 = arith.constant 0.000000e+00 : f32
    %332 = vector.broadcast %cst_147 : f32 to vector<4x32xf32>
    %333 = vector.extract_strided_slice %322 {offsets = [0, 0], sizes = [12, 32], strides = [1, 1]} : vector<16x32xf32> to vector<12x32xf32>
    %334 = tpu.concatenate %332, %333 in 0 : vector<4x32xf32>, vector<12x32xf32> -> vector<16x32xf32>
    %cst_148 = arith.constant 0.000000e+00 : f32
    %335 = vector.broadcast %cst_148 : f32 to vector<5x32xf32>
    %336 = vector.extract_strided_slice %322 {offsets = [0, 0], sizes = [11, 32], strides = [1, 1]} : vector<16x32xf32> to vector<11x32xf32>
    %337 = tpu.concatenate %335, %336 in 0 : vector<5x32xf32>, vector<11x32xf32> -> vector<16x32xf32>
    %338 = vector.broadcast %6 : vector<16x1xf32> to vector<16x32xf32>
    %339 = arith.mulf %337, %338 : vector<16x32xf32>
    %340 = tpu.concatenate %322, %331, %334, %339 in 1 : vector<16x32xf32>, vector<16x32xf32>, vector<16x32xf32>, vector<16x32xf32> -> vector<16x128xf32>
    %cst_149 = arith.constant dense<0.000000e+00> : vector<16x16xf32>
    %341 = tpu.matmul %340, %56, %cst_149 {dimension_numbers = #tpu.dot_dimension_numbers<[1], [0], [0], [1], [0, 0, 1, 1], [], []>} : vector<16x128xf32>, vector<128x16xf32>, vector<16x16xf32> -> vector<16x16xf32>
    %342 = vector.broadcast %57 : vector<1x16xf32> to vector<16x16xf32>
    %343 = arith.addf %341, %342 : vector<16x16xf32>
    %c0_150 = arith.constant 0 : index
    %c0_151 = arith.constant 0 : index
    %344 = vector.load %arg11[%c0_150, %c0_151] : memref<16x16xf32, #tpu.memory_space<vmem>>, vector<16x16xf32>
    %cst_152 = arith.constant 9.900000e-01 : f32
    %345 = vector.broadcast %cst_152 : f32 to vector<16x16xf32>
    %346 = arith.mulf %345, %344 : vector<16x16xf32>
    %347 = arith.addf %346, %343 : vector<16x16xf32>
    %cst_153 = arith.constant 1.000000e+00 : f32
    %348 = vector.broadcast %cst_153 : f32 to vector<16x16xf32>
    %349 = arith.cmpf oge, %347, %348 : vector<16x16xf32>
    %350 = arith.extui %349 : vector<16x16xi1> to vector<16x16xi32>
    %351 = arith.sitofp %350 : vector<16x16xi32> to vector<16x16xf32>
    %cst_154 = arith.constant 1.000000e+00 : f32
    %352 = vector.broadcast %cst_154 : f32 to vector<16x16xf32>
    %353 = arith.mulf %352, %351 : vector<16x16xf32>
    %354 = arith.subf %347, %353 : vector<16x16xf32>
    %c0_155 = arith.constant 0 : index
    %c0_156 = arith.constant 0 : index
    %355 = vector.load %arg11[%c0_155, %c0_156] : memref<16x16xf32, #tpu.memory_space<vmem>>, vector<16x16xf32>
    tpu.vector_store %arg11[%c0_155, %c0_156], %354 {strides = array<i32>} : memref<16x16xf32, #tpu.memory_space<vmem>>, vector<16x16xf32>,
    %cst_157 = arith.constant 0.000000e+00 : f32
    %356 = vector.broadcast %cst_157 : f32 to vector<5x16xf32>
    %357 = vector.extract_strided_slice %351 {offsets = [0, 0], sizes = [11, 16], strides = [1, 1]} : vector<16x16xf32> to vector<11x16xf32>
    %358 = tpu.concatenate %356, %357 in 0 : vector<5x16xf32>, vector<11x16xf32> -> vector<16x16xf32>
    %359 = vector.broadcast %6 : vector<16x1xf32> to vector<16x16xf32>
    %360 = arith.mulf %358, %359 : vector<16x16xf32>
    %cst_158 = arith.constant 0.000000e+00 : f32
    %361 = vector.broadcast %cst_158 : f32 to vector<4x16xf32>
    %362 = vector.extract_strided_slice %351 {offsets = [0, 0], sizes = [12, 16], strides = [1, 1]} : vector<16x16xf32> to vector<12x16xf32>
    %363 = tpu.concatenate %361, %362 in 0 : vector<4x16xf32>, vector<12x16xf32> -> vector<16x16xf32>
    %cst_159 = arith.constant 0.000000e+00 : f32
    %364 = vector.broadcast %cst_159 : f32 to vector<3x16xf32>
    %365 = vector.extract_strided_slice %351 {offsets = [0, 0], sizes = [13, 16], strides = [1, 1]} : vector<16x16xf32> to vector<13x16xf32>
    %366 = tpu.concatenate %364, %365 in 0 : vector<3x16xf32>, vector<13x16xf32> -> vector<16x16xf32>
    %367 = vector.broadcast %10 : vector<16x1xf32> to vector<16x16xf32>
    %368 = arith.mulf %366, %367 : vector<16x16xf32>
    %cst_160 = arith.constant 0.000000e+00 : f32
    %369 = vector.broadcast %cst_160 : f32 to vector<1x16xf32>
    %370 = vector.extract_strided_slice %351 {offsets = [0, 0], sizes = [15, 16], strides = [1, 1]} : vector<16x16xf32> to vector<15x16xf32>
    %371 = tpu.concatenate %369, %370 in 0 : vector<1x16xf32>, vector<15x16xf32> -> vector<16x16xf32>
    %372 = vector.broadcast %6 : vector<16x1xf32> to vector<16x16xf32>
    %373 = arith.mulf %371, %372 : vector<16x16xf32>
    %374 = vector.extract_strided_slice %351 {offsets = [1, 0], sizes = [15, 16], strides = [1, 1]} : vector<16x16xf32> to vector<15x16xf32>
    %cst_161 = arith.constant 0.000000e+00 : f32
    %375 = vector.broadcast %cst_161 : f32 to vector<1x16xf32>
    %376 = tpu.concatenate %374, %375 in 0 : vector<15x16xf32>, vector<1x16xf32> -> vector<16x16xf32>
    %377 = vector.broadcast %10 : vector<16x1xf32> to vector<16x16xf32>
    %378 = arith.mulf %376, %377 : vector<16x16xf32>
    %379 = vector.extract_strided_slice %351 {offsets = [3, 0], sizes = [13, 16], strides = [1, 1]} : vector<16x16xf32> to vector<13x16xf32>
    %cst_162 = arith.constant 0.000000e+00 : f32
    %380 = vector.broadcast %cst_162 : f32 to vector<3x16xf32>
    %381 = tpu.concatenate %379, %380 in 0 : vector<13x16xf32>, vector<3x16xf32> -> vector<16x16xf32>
    %382 = vector.broadcast %6 : vector<16x1xf32> to vector<16x16xf32>
    %383 = arith.mulf %381, %382 : vector<16x16xf32>
    %384 = vector.extract_strided_slice %351 {offsets = [4, 0], sizes = [12, 16], strides = [1, 1]} : vector<16x16xf32> to vector<12x16xf32>
    %cst_163 = arith.constant 0.000000e+00 : f32
    %385 = vector.broadcast %cst_163 : f32 to vector<4x16xf32>
    %386 = tpu.concatenate %384, %385 in 0 : vector<12x16xf32>, vector<4x16xf32> -> vector<16x16xf32>
    %387 = vector.extract_strided_slice %351 {offsets = [5, 0], sizes = [11, 16], strides = [1, 1]} : vector<16x16xf32> to vector<11x16xf32>
    %cst_164 = arith.constant 0.000000e+00 : f32
    %388 = vector.broadcast %cst_164 : f32 to vector<5x16xf32>
    %389 = tpu.concatenate %387, %388 in 0 : vector<11x16xf32>, vector<5x16xf32> -> vector<16x16xf32>
    %390 = vector.broadcast %10 : vector<16x1xf32> to vector<16x16xf32>
    %391 = arith.mulf %389, %390 : vector<16x16xf32>
    %392 = tpu.concatenate %360, %363, %368, %373, %351, %378, %383, %386, %391 in 1 : vector<16x16xf32>, vector<16x16xf32>, vector<16x16xf32>, vector<16x16xf32>, vector<16x16xf32>, vector<16x16xf32>, vector<16x16xf32>, vector<16x16xf32>, vector<16x16xf32> -> vector<16x144xf32>
    %cst_165 = arith.constant dense<0.000000e+00> : vector<16x16xf32>
    %393 = tpu.matmul %392, %58, %cst_165 {dimension_numbers = #tpu.dot_dimension_numbers<[1], [0], [0], [1], [0, 0, 1, 1], [], []>} : vector<16x144xf32>, vector<144x16xf32>, vector<16x16xf32> -> vector<16x16xf32>
    %394 = vector.broadcast %59 : vector<1x16xf32> to vector<16x16xf32>
    %395 = arith.addf %393, %394 : vector<16x16xf32>
    %c0_166 = arith.constant 0 : index
    %c0_167 = arith.constant 0 : index
    %396 = vector.load %arg12[%c0_166, %c0_167] : memref<16x16xf32, #tpu.memory_space<vmem>>, vector<16x16xf32>
    %cst_168 = arith.constant 9.900000e-01 : f32
    %397 = vector.broadcast %cst_168 : f32 to vector<16x16xf32>
    %398 = arith.mulf %397, %396 : vector<16x16xf32>
    %399 = arith.addf %398, %395 : vector<16x16xf32>
    %cst_169 = arith.constant 1.000000e+00 : f32
    %400 = vector.broadcast %cst_169 : f32 to vector<16x16xf32>
    %401 = arith.cmpf oge, %399, %400 : vector<16x16xf32>
    %402 = arith.extui %401 : vector<16x16xi1> to vector<16x16xi32>
    %403 = arith.sitofp %402 : vector<16x16xi32> to vector<16x16xf32>
    %cst_170 = arith.constant 1.000000e+00 : f32
    %404 = vector.broadcast %cst_170 : f32 to vector<16x16xf32>
    %405 = arith.mulf %404, %403 : vector<16x16xf32>
    %406 = arith.subf %399, %405 : vector<16x16xf32>
    %c0_171 = arith.constant 0 : index
    %c0_172 = arith.constant 0 : index
    %407 = vector.load %arg12[%c0_171, %c0_172] : memref<16x16xf32, #tpu.memory_space<vmem>>, vector<16x16xf32>
    tpu.vector_store %arg12[%c0_171, %c0_172], %406 {strides = array<i32>} : memref<16x16xf32, #tpu.memory_space<vmem>>, vector<16x16xf32>,
    %c0_173 = arith.constant 0 : index
    %c0_174 = arith.constant 0 : index
    %408 = vector.load %arg13[%c0_173, %c0_174] : memref<16x16xf32, #tpu.memory_space<vmem>>, vector<16x16xf32>
    tpu.vector_store %arg13[%c0_173, %c0_174], %403 {strides = array<i32>} : memref<16x16xf32, #tpu.memory_space<vmem>>, vector<16x16xf32>,
    %c0_175 = arith.constant 0 : index
    %c0_176 = arith.constant 0 : index
    %409 = vector.load %arg14[%c0_175, %c0_176] : memref<16x16xf32, #tpu.memory_space<vmem>>, vector<16x16xf32>
    %410 = arith.addf %409, %403 : vector<16x16xf32>
    %c0_177 = arith.constant 0 : index
    %c0_178 = arith.constant 0 : index
    %411 = vector.load %arg14[%c0_177, %c0_178] : memref<16x16xf32, #tpu.memory_space<vmem>>, vector<16x16xf32>
    tpu.vector_store %arg14[%c0_177, %c0_178], %410 {strides = array<i32>} : memref<16x16xf32, #tpu.memory_space<vmem>>, vector<16x16xf32>,
    %c3_i32_179 = arith.constant 3 : i32
    %c0_180 = arith.constant 0 : index
    %c0_181 = arith.constant 0 : index
    %412 = vector.load %arg13[%c0_180, %c0_181] : memref<16x16xf32, #tpu.memory_space<vmem>>, vector<16x16xf32>
    %413 = vector.extract_strided_slice %412 {offsets = [1, 0], sizes = [15, 16], strides = [1, 1]} : vector<16x16xf32> to vector<15x16xf32>
    %cst_182 = arith.constant 0.000000e+00 : f32
    %414 = vector.broadcast %cst_182 : f32 to vector<1x16xf32>
    %415 = tpu.concatenate %413, %414 in 0 : vector<15x16xf32>, vector<1x16xf32> -> vector<16x16xf32>
    %416 = vector.broadcast %10 : vector<16x1xf32> to vector<16x16xf32>
    %417 = arith.mulf %415, %416 : vector<16x16xf32>
    %418 = vector.extract_strided_slice %412 {offsets = [4, 0], sizes = [12, 16], strides = [1, 1]} : vector<16x16xf32> to vector<12x16xf32>
    %cst_183 = arith.constant 0.000000e+00 : f32
    %419 = vector.broadcast %cst_183 : f32 to vector<4x16xf32>
    %420 = tpu.concatenate %418, %419 in 0 : vector<12x16xf32>, vector<4x16xf32> -> vector<16x16xf32>
    %421 = vector.extract_strided_slice %412 {offsets = [5, 0], sizes = [11, 16], strides = [1, 1]} : vector<16x16xf32> to vector<11x16xf32>
    %cst_184 = arith.constant 0.000000e+00 : f32
    %422 = vector.broadcast %cst_184 : f32 to vector<5x16xf32>
    %423 = tpu.concatenate %421, %422 in 0 : vector<11x16xf32>, vector<5x16xf32> -> vector<16x16xf32>
    %424 = vector.broadcast %10 : vector<16x1xf32> to vector<16x16xf32>
    %425 = arith.mulf %423, %424 : vector<16x16xf32>
    %426 = tpu.concatenate %412, %417, %420, %425 in 1 : vector<16x16xf32>, vector<16x16xf32>, vector<16x16xf32>, vector<16x16xf32> -> vector<16x64xf32>
    %cst_185 = arith.constant dense<0.000000e+00> : vector<16x32xf32>
    %427 = tpu.matmul %426, %55, %cst_185 {dimension_numbers = #tpu.dot_dimension_numbers<[1], [0], [0], [1], [0, 0, 1, 1], [], []>} : vector<16x64xf32>, vector<64x32xf32>, vector<16x32xf32> -> vector<16x32xf32>
    %428 = arith.addf %427, %54 : vector<16x32xf32>
    %c0_186 = arith.constant 0 : index
    %c0_187 = arith.constant 0 : index
    %429 = vector.load %arg10[%c0_186, %c0_187] : memref<16x32xf32, #tpu.memory_space<vmem>>, vector<16x32xf32>
    %cst_188 = arith.constant 9.900000e-01 : f32
    %430 = vector.broadcast %cst_188 : f32 to vector<16x32xf32>
    %431 = arith.mulf %430, %429 : vector<16x32xf32>
    %432 = arith.addf %431, %428 : vector<16x32xf32>
    %cst_189 = arith.constant 1.000000e+00 : f32
    %433 = vector.broadcast %cst_189 : f32 to vector<16x32xf32>
    %434 = arith.cmpf oge, %432, %433 : vector<16x32xf32>
    %435 = arith.extui %434 : vector<16x32xi1> to vector<16x32xi32>
    %436 = arith.sitofp %435 : vector<16x32xi32> to vector<16x32xf32>
    %cst_190 = arith.constant 1.000000e+00 : f32
    %437 = vector.broadcast %cst_190 : f32 to vector<16x32xf32>
    %438 = arith.mulf %437, %436 : vector<16x32xf32>
    %439 = arith.subf %432, %438 : vector<16x32xf32>
    %c0_191 = arith.constant 0 : index
    %c0_192 = arith.constant 0 : index
    %440 = vector.load %arg10[%c0_191, %c0_192] : memref<16x32xf32, #tpu.memory_space<vmem>>, vector<16x32xf32>
    tpu.vector_store %arg10[%c0_191, %c0_192], %439 {strides = array<i32>} : memref<16x32xf32, #tpu.memory_space<vmem>>, vector<16x32xf32>,
    %cst_193 = arith.constant 0.000000e+00 : f32
    %441 = vector.broadcast %cst_193 : f32 to vector<1x32xf32>
    %442 = vector.extract_strided_slice %436 {offsets = [0, 0], sizes = [15, 32], strides = [1, 1]} : vector<16x32xf32> to vector<15x32xf32>
    %443 = tpu.concatenate %441, %442 in 0 : vector<1x32xf32>, vector<15x32xf32> -> vector<16x32xf32>
    %444 = vector.broadcast %6 : vector<16x1xf32> to vector<16x32xf32>
    %445 = arith.mulf %443, %444 : vector<16x32xf32>
    %cst_194 = arith.constant 0.000000e+00 : f32
    %446 = vector.broadcast %cst_194 : f32 to vector<4x32xf32>
    %447 = vector.extract_strided_slice %436 {offsets = [0, 0], sizes = [12, 32], strides = [1, 1]} : vector<16x32xf32> to vector<12x32xf32>
    %448 = tpu.concatenate %446, %447 in 0 : vector<4x32xf32>, vector<12x32xf32> -> vector<16x32xf32>
    %cst_195 = arith.constant 0.000000e+00 : f32
    %449 = vector.broadcast %cst_195 : f32 to vector<5x32xf32>
    %450 = vector.extract_strided_slice %436 {offsets = [0, 0], sizes = [11, 32], strides = [1, 1]} : vector<16x32xf32> to vector<11x32xf32>
    %451 = tpu.concatenate %449, %450 in 0 : vector<5x32xf32>, vector<11x32xf32> -> vector<16x32xf32>
    %452 = vector.broadcast %6 : vector<16x1xf32> to vector<16x32xf32>
    %453 = arith.mulf %451, %452 : vector<16x32xf32>
    %454 = tpu.concatenate %436, %445, %448, %453 in 1 : vector<16x32xf32>, vector<16x32xf32>, vector<16x32xf32>, vector<16x32xf32> -> vector<16x128xf32>
    %cst_196 = arith.constant dense<0.000000e+00> : vector<16x16xf32>
    %455 = tpu.matmul %454, %56, %cst_196 {dimension_numbers = #tpu.dot_dimension_numbers<[1], [0], [0], [1], [0, 0, 1, 1], [], []>} : vector<16x128xf32>, vector<128x16xf32>, vector<16x16xf32> -> vector<16x16xf32>
    %456 = vector.broadcast %57 : vector<1x16xf32> to vector<16x16xf32>
    %457 = arith.addf %455, %456 : vector<16x16xf32>
    %c0_197 = arith.constant 0 : index
    %c0_198 = arith.constant 0 : index
    %458 = vector.load %arg11[%c0_197, %c0_198] : memref<16x16xf32, #tpu.memory_space<vmem>>, vector<16x16xf32>
    %cst_199 = arith.constant 9.900000e-01 : f32
    %459 = vector.broadcast %cst_199 : f32 to vector<16x16xf32>
    %460 = arith.mulf %459, %458 : vector<16x16xf32>
    %461 = arith.addf %460, %457 : vector<16x16xf32>
    %cst_200 = arith.constant 1.000000e+00 : f32
    %462 = vector.broadcast %cst_200 : f32 to vector<16x16xf32>
    %463 = arith.cmpf oge, %461, %462 : vector<16x16xf32>
    %464 = arith.extui %463 : vector<16x16xi1> to vector<16x16xi32>
    %465 = arith.sitofp %464 : vector<16x16xi32> to vector<16x16xf32>
    %cst_201 = arith.constant 1.000000e+00 : f32
    %466 = vector.broadcast %cst_201 : f32 to vector<16x16xf32>
    %467 = arith.mulf %466, %465 : vector<16x16xf32>
    %468 = arith.subf %461, %467 : vector<16x16xf32>
    %c0_202 = arith.constant 0 : index
    %c0_203 = arith.constant 0 : index
    %469 = vector.load %arg11[%c0_202, %c0_203] : memref<16x16xf32, #tpu.memory_space<vmem>>, vector<16x16xf32>
    tpu.vector_store %arg11[%c0_202, %c0_203], %468 {strides = array<i32>} : memref<16x16xf32, #tpu.memory_space<vmem>>, vector<16x16xf32>,
    %cst_204 = arith.constant 0.000000e+00 : f32
    %470 = vector.broadcast %cst_204 : f32 to vector<5x16xf32>
    %471 = vector.extract_strided_slice %465 {offsets = [0, 0], sizes = [11, 16], strides = [1, 1]} : vector<16x16xf32> to vector<11x16xf32>
    %472 = tpu.concatenate %470, %471 in 0 : vector<5x16xf32>, vector<11x16xf32> -> vector<16x16xf32>
    %473 = vector.broadcast %6 : vector<16x1xf32> to vector<16x16xf32>
    %474 = arith.mulf %472, %473 : vector<16x16xf32>
    %cst_205 = arith.constant 0.000000e+00 : f32
    %475 = vector.broadcast %cst_205 : f32 to vector<4x16xf32>
    %476 = vector.extract_strided_slice %465 {offsets = [0, 0], sizes = [12, 16], strides = [1, 1]} : vector<16x16xf32> to vector<12x16xf32>
    %477 = tpu.concatenate %475, %476 in 0 : vector<4x16xf32>, vector<12x16xf32> -> vector<16x16xf32>
    %cst_206 = arith.constant 0.000000e+00 : f32
    %478 = vector.broadcast %cst_206 : f32 to vector<3x16xf32>
    %479 = vector.extract_strided_slice %465 {offsets = [0, 0], sizes = [13, 16], strides = [1, 1]} : vector<16x16xf32> to vector<13x16xf32>
    %480 = tpu.concatenate %478, %479 in 0 : vector<3x16xf32>, vector<13x16xf32> -> vector<16x16xf32>
    %481 = vector.broadcast %10 : vector<16x1xf32> to vector<16x16xf32>
    %482 = arith.mulf %480, %481 : vector<16x16xf32>
    %cst_207 = arith.constant 0.000000e+00 : f32
    %483 = vector.broadcast %cst_207 : f32 to vector<1x16xf32>
    %484 = vector.extract_strided_slice %465 {offsets = [0, 0], sizes = [15, 16], strides = [1, 1]} : vector<16x16xf32> to vector<15x16xf32>
    %485 = tpu.concatenate %483, %484 in 0 : vector<1x16xf32>, vector<15x16xf32> -> vector<16x16xf32>
    %486 = vector.broadcast %6 : vector<16x1xf32> to vector<16x16xf32>
    %487 = arith.mulf %485, %486 : vector<16x16xf32>
    %488 = vector.extract_strided_slice %465 {offsets = [1, 0], sizes = [15, 16], strides = [1, 1]} : vector<16x16xf32> to vector<15x16xf32>
    %cst_208 = arith.constant 0.000000e+00 : f32
    %489 = vector.broadcast %cst_208 : f32 to vector<1x16xf32>
    %490 = tpu.concatenate %488, %489 in 0 : vector<15x16xf32>, vector<1x16xf32> -> vector<16x16xf32>
    %491 = vector.broadcast %10 : vector<16x1xf32> to vector<16x16xf32>
    %492 = arith.mulf %490, %491 : vector<16x16xf32>
    %493 = vector.extract_strided_slice %465 {offsets = [3, 0], sizes = [13, 16], strides = [1, 1]} : vector<16x16xf32> to vector<13x16xf32>
    %cst_209 = arith.constant 0.000000e+00 : f32
    %494 = vector.broadcast %cst_209 : f32 to vector<3x16xf32>
    %495 = tpu.concatenate %493, %494 in 0 : vector<13x16xf32>, vector<3x16xf32> -> vector<16x16xf32>
    %496 = vector.broadcast %6 : vector<16x1xf32> to vector<16x16xf32>
    %497 = arith.mulf %495, %496 : vector<16x16xf32>
    %498 = vector.extract_strided_slice %465 {offsets = [4, 0], sizes = [12, 16], strides = [1, 1]} : vector<16x16xf32> to vector<12x16xf32>
    %cst_210 = arith.constant 0.000000e+00 : f32
    %499 = vector.broadcast %cst_210 : f32 to vector<4x16xf32>
    %500 = tpu.concatenate %498, %499 in 0 : vector<12x16xf32>, vector<4x16xf32> -> vector<16x16xf32>
    %501 = vector.extract_strided_slice %465 {offsets = [5, 0], sizes = [11, 16], strides = [1, 1]} : vector<16x16xf32> to vector<11x16xf32>
    %cst_211 = arith.constant 0.000000e+00 : f32
    %502 = vector.broadcast %cst_211 : f32 to vector<5x16xf32>
    %503 = tpu.concatenate %501, %502 in 0 : vector<11x16xf32>, vector<5x16xf32> -> vector<16x16xf32>
    %504 = vector.broadcast %10 : vector<16x1xf32> to vector<16x16xf32>
    %505 = arith.mulf %503, %504 : vector<16x16xf32>
    %506 = tpu.concatenate %474, %477, %482, %487, %465, %492, %497, %500, %505 in 1 : vector<16x16xf32>, vector<16x16xf32>, vector<16x16xf32>, vector<16x16xf32>, vector<16x16xf32>, vector<16x16xf32>, vector<16x16xf32>, vector<16x16xf32>, vector<16x16xf32> -> vector<16x144xf32>
    %cst_212 = arith.constant dense<0.000000e+00> : vector<16x16xf32>
    %507 = tpu.matmul %506, %58, %cst_212 {dimension_numbers = #tpu.dot_dimension_numbers<[1], [0], [0], [1], [0, 0, 1, 1], [], []>} : vector<16x144xf32>, vector<144x16xf32>, vector<16x16xf32> -> vector<16x16xf32>
    %508 = vector.broadcast %59 : vector<1x16xf32> to vector<16x16xf32>
    %509 = arith.addf %507, %508 : vector<16x16xf32>
    %c0_213 = arith.constant 0 : index
    %c0_214 = arith.constant 0 : index
    %510 = vector.load %arg12[%c0_213, %c0_214] : memref<16x16xf32, #tpu.memory_space<vmem>>, vector<16x16xf32>
    %cst_215 = arith.constant 9.900000e-01 : f32
    %511 = vector.broadcast %cst_215 : f32 to vector<16x16xf32>
    %512 = arith.mulf %511, %510 : vector<16x16xf32>
    %513 = arith.addf %512, %509 : vector<16x16xf32>
    %cst_216 = arith.constant 1.000000e+00 : f32
    %514 = vector.broadcast %cst_216 : f32 to vector<16x16xf32>
    %515 = arith.cmpf oge, %513, %514 : vector<16x16xf32>
    %516 = arith.extui %515 : vector<16x16xi1> to vector<16x16xi32>
    %517 = arith.sitofp %516 : vector<16x16xi32> to vector<16x16xf32>
    %cst_217 = arith.constant 1.000000e+00 : f32
    %518 = vector.broadcast %cst_217 : f32 to vector<16x16xf32>
    %519 = arith.mulf %518, %517 : vector<16x16xf32>
    %520 = arith.subf %513, %519 : vector<16x16xf32>
    %c0_218 = arith.constant 0 : index
    %c0_219 = arith.constant 0 : index
    %521 = vector.load %arg12[%c0_218, %c0_219] : memref<16x16xf32, #tpu.memory_space<vmem>>, vector<16x16xf32>
    tpu.vector_store %arg12[%c0_218, %c0_219], %520 {strides = array<i32>} : memref<16x16xf32, #tpu.memory_space<vmem>>, vector<16x16xf32>,
    %c0_220 = arith.constant 0 : index
    %c0_221 = arith.constant 0 : index
    %522 = vector.load %arg13[%c0_220, %c0_221] : memref<16x16xf32, #tpu.memory_space<vmem>>, vector<16x16xf32>
    tpu.vector_store %arg13[%c0_220, %c0_221], %517 {strides = array<i32>} : memref<16x16xf32, #tpu.memory_space<vmem>>, vector<16x16xf32>,
    %c0_222 = arith.constant 0 : index
    %c0_223 = arith.constant 0 : index
    %523 = vector.load %arg14[%c0_222, %c0_223] : memref<16x16xf32, #tpu.memory_space<vmem>>, vector<16x16xf32>
    %524 = arith.addf %523, %517 : vector<16x16xf32>
    %c0_224 = arith.constant 0 : index
    %c0_225 = arith.constant 0 : index
    %525 = vector.load %arg14[%c0_224, %c0_225] : memref<16x16xf32, #tpu.memory_space<vmem>>, vector<16x16xf32>
    tpu.vector_store %arg14[%c0_224, %c0_225], %524 {strides = array<i32>} : memref<16x16xf32, #tpu.memory_space<vmem>>, vector<16x16xf32>,
    %c0_226 = arith.constant 0 : index
    %c0_227 = arith.constant 0 : index
    %526 = vector.load %arg14[%c0_226, %c0_227] : memref<16x16xf32, #tpu.memory_space<vmem>>, vector<16x16xf32>
    %cst_228 = arith.constant 2.500000e-01 : f32
    %527 = vector.broadcast %cst_228 : f32 to vector<16x16xf32>
    %528 = arith.mulf %526, %527 : vector<16x16xf32>
    %c0_229 = arith.constant 0 : index
    %c0_230 = arith.constant 0 : index
    %c0_231 = arith.constant 0 : index
    %529 = vector.load %arg9[%c0_229, %c0_230, %c0_231] : memref<1x16x16xf32, #tpu.memory_space<vmem>>, vector<1x16x16xf32>
    %530 = vector.shape_cast %529 : vector<1x16x16xf32> to vector<16x16xf32>
    %531 = vector.shape_cast %528 : vector<16x16xf32> to vector<1x16x16xf32>
    tpu.vector_store %arg9[%c0_229, %c0_230, %c0_231], %531 {strides = array<i32>} : memref<1x16x16xf32, #tpu.memory_space<vmem>>, vector<1x16x16xf32>,
    return
  }
  func.func @transform_0(%arg0: i32) -> (i32, i32, i32) {
    %c0_i32 = arith.constant 0 : i32
    %c0_i32_0 = arith.constant 0 : i32
    %c0_i32_1 = arith.constant 0 : i32
    return %arg0, %c0_i32, %c0_i32_0 : i32, i32, i32
  }
  func.func @transform_1(%arg0: i32) -> (i32, i32) {
    %c0_i32 = arith.constant 0 : i32
    %c0_i32_0 = arith.constant 0 : i32
    %c0_i32_1 = arith.constant 0 : i32
    return %c0_i32, %c0_i32_0 : i32, i32
  }
  func.func @transform_2(%arg0: i32) -> (i32, i32) {
    %c0_i32 = arith.constant 0 : i32
    %c0_i32_0 = arith.constant 0 : i32
    %c0_i32_1 = arith.constant 0 : i32
    return %c0_i32, %c0_i32_0 : i32, i32
  }
  func.func @transform_3(%arg0: i32) -> (i32, i32) {
    %c0_i32 = arith.constant 0 : i32
    %c0_i32_0 = arith.constant 0 : i32
    %c0_i32_1 = arith.constant 0 : i32
    return %c0_i32, %c0_i32_0 : i32, i32
  }
  func.func @transform_4(%arg0: i32) -> (i32, i32) {
    %c0_i32 = arith.constant 0 : i32
    %c0_i32_0 = arith.constant 0 : i32
    %c0_i32_1 = arith.constant 0 : i32
    return %c0_i32, %c0_i32_0 : i32, i32
  }
  func.func @transform_5(%arg0: i32) -> (i32, i32) {
    %c0_i32 = arith.constant 0 : i32
    %c0_i32_0 = arith.constant 0 : i32
    %c0_i32_1 = arith.constant 0 : i32
    return %c0_i32, %c0_i32_0 : i32, i32
  }
  func.func @transform_6(%arg0: i32) -> (i32, i32) {
    %c0_i32 = arith.constant 0 : i32
    %c0_i32_0 = arith.constant 0 : i32
    %c0_i32_1 = arith.constant 0 : i32
    return %c0_i32, %c0_i32_0 : i32, i32
  }
  func.func @transform_7(%arg0: i32) -> (i32, i32) {
    %c0_i32 = arith.constant 0 : i32
    %c0_i32_0 = arith.constant 0 : i32
    %c0_i32_1 = arith.constant 0 : i32
    return %c0_i32, %c0_i32_0 : i32, i32
  }
  func.func @transform_8(%arg0: i32) -> (i32, i32, i32) {
    %c0_i32 = arith.constant 0 : i32
    %c0_i32_0 = arith.constant 0 : i32
    %c0_i32_1 = arith.constant 0 : i32
    return %arg0, %c0_i32, %c0_i32_0 : i32, i32, i32
  }
}

module attributes {stable_mosaic.version = 11 : i64} {
  func.func @_branch_kernel(%arg0: i32, %arg1: memref<1x64x16xf32, #tpu.memory_space<vmem>>, %arg2: memref<144x32xf32, #tpu.memory_space<vmem>>, %arg3: memref<1x32xf32, #tpu.memory_space<vmem>>, %arg4: memref<64x32xf32, #tpu.memory_space<vmem>>, %arg5: memref<128x16xf32, #tpu.memory_space<vmem>>, %arg6: memref<1x16xf32, #tpu.memory_space<vmem>>, %arg7: memref<144x16xf32, #tpu.memory_space<vmem>>, %arg8: memref<1x16xf32, #tpu.memory_space<vmem>>, %arg9: memref<1x64x16xf32, #tpu.memory_space<vmem>>, %arg10: memref<64x32xf32, #tpu.memory_space<vmem>>, %arg11: memref<64x16xf32, #tpu.memory_space<vmem>>, %arg12: memref<64x16xf32, #tpu.memory_space<vmem>>, %arg13: memref<64x16xf32, #tpu.memory_space<vmem>>, %arg14: memref<64x16xf32, #tpu.memory_space<vmem>>) attributes {dimension_semantics = [#tpu.dimension_semantics<parallel>], iteration_bounds = array<i64: 2>, scalar_prefetch = 0 : i64, scratch_operands = 5 : i64, tpu.core_type = #tpu.core_type<tc>, window_params = [{transform_indices = @transform_0, window_bounds = array<i64: 1, 64, 16>}, {pipeline_mode = #tpu.pipeline_mode<synchronous>, transform_indices = @transform_1, window_bounds = array<i64: 144, 32>}, {pipeline_mode = #tpu.pipeline_mode<synchronous>, transform_indices = @transform_2, window_bounds = array<i64: 1, 32>}, {pipeline_mode = #tpu.pipeline_mode<synchronous>, transform_indices = @transform_3, window_bounds = array<i64: 64, 32>}, {pipeline_mode = #tpu.pipeline_mode<synchronous>, transform_indices = @transform_4, window_bounds = array<i64: 128, 16>}, {pipeline_mode = #tpu.pipeline_mode<synchronous>, transform_indices = @transform_5, window_bounds = array<i64: 1, 16>}, {pipeline_mode = #tpu.pipeline_mode<synchronous>, transform_indices = @transform_6, window_bounds = array<i64: 144, 16>}, {pipeline_mode = #tpu.pipeline_mode<synchronous>, transform_indices = @transform_7, window_bounds = array<i64: 1, 16>}, {transform_indices = @transform_8, window_bounds = array<i64: 1, 64, 16>}]} {
    %0 = tpu.iota {dimensions = array<i32: 0>} : vector<64x1xi32>
    %c7_i32 = arith.constant 7 : i32
    %1 = vector.broadcast %c7_i32 : i32 to vector<64x1xi32>
    %2 = arith.andi %0, %1 : vector<64x1xi32>
    %c1_i32 = arith.constant 1 : i32
    %3 = vector.broadcast %c1_i32 : i32 to vector<64x1xi32>
    %4 = arith.cmpi sge, %2, %3 : vector<64x1xi32>
    %5 = arith.extui %4 : vector<64x1xi1> to vector<64x1xi32>
    %6 = arith.sitofp %5 : vector<64x1xi32> to vector<64x1xf32>
    %c6_i32 = arith.constant 6 : i32
    %7 = vector.broadcast %c6_i32 : i32 to vector<64x1xi32>
    %8 = arith.cmpi sle, %2, %7 : vector<64x1xi32>
    %9 = arith.extui %8 : vector<64x1xi1> to vector<64x1xi32>
    %10 = arith.sitofp %9 : vector<64x1xi32> to vector<64x1xf32>
    %c0 = arith.constant 0 : index
    %c0_0 = arith.constant 0 : index
    %c0_1 = arith.constant 0 : index
    %11 = vector.load %arg1[%c0, %c0_0, %c0_1] : memref<1x64x16xf32, #tpu.memory_space<vmem>>, vector<1x64x16xf32>
    %12 = vector.shape_cast %11 : vector<1x64x16xf32> to vector<64x16xf32>
    %13 = vector.extract_strided_slice %12 {offsets = [9, 0], sizes = [55, 16], strides = [1, 1]} : vector<64x16xf32> to vector<55x16xf32>
    %cst = arith.constant 0.000000e+00 : f32
    %14 = vector.broadcast %cst : f32 to vector<9x16xf32>
    %15 = tpu.concatenate %13, %14 in 0 : vector<55x16xf32>, vector<9x16xf32> -> vector<64x16xf32>
    %16 = vector.broadcast %10 : vector<64x1xf32> to vector<64x16xf32>
    %17 = arith.mulf %15, %16 : vector<64x16xf32>
    %18 = vector.extract_strided_slice %12 {offsets = [8, 0], sizes = [56, 16], strides = [1, 1]} : vector<64x16xf32> to vector<56x16xf32>
    %cst_2 = arith.constant 0.000000e+00 : f32
    %19 = vector.broadcast %cst_2 : f32 to vector<8x16xf32>
    %20 = tpu.concatenate %18, %19 in 0 : vector<56x16xf32>, vector<8x16xf32> -> vector<64x16xf32>
    %21 = vector.extract_strided_slice %12 {offsets = [7, 0], sizes = [57, 16], strides = [1, 1]} : vector<64x16xf32> to vector<57x16xf32>
    %cst_3 = arith.constant 0.000000e+00 : f32
    %22 = vector.broadcast %cst_3 : f32 to vector<7x16xf32>
    %23 = tpu.concatenate %21, %22 in 0 : vector<57x16xf32>, vector<7x16xf32> -> vector<64x16xf32>
    %24 = vector.broadcast %6 : vector<64x1xf32> to vector<64x16xf32>
    %25 = arith.mulf %23, %24 : vector<64x16xf32>
    %26 = vector.extract_strided_slice %12 {offsets = [1, 0], sizes = [63, 16], strides = [1, 1]} : vector<64x16xf32> to vector<63x16xf32>
    %cst_4 = arith.constant 0.000000e+00 : f32
    %27 = vector.broadcast %cst_4 : f32 to vector<1x16xf32>
    %28 = tpu.concatenate %26, %27 in 0 : vector<63x16xf32>, vector<1x16xf32> -> vector<64x16xf32>
    %29 = vector.broadcast %10 : vector<64x1xf32> to vector<64x16xf32>
    %30 = arith.mulf %28, %29 : vector<64x16xf32>
    %cst_5 = arith.constant 0.000000e+00 : f32
    %31 = vector.broadcast %cst_5 : f32 to vector<1x16xf32>
    %32 = vector.extract_strided_slice %12 {offsets = [0, 0], sizes = [63, 16], strides = [1, 1]} : vector<64x16xf32> to vector<63x16xf32>
    %33 = tpu.concatenate %31, %32 in 0 : vector<1x16xf32>, vector<63x16xf32> -> vector<64x16xf32>
    %34 = vector.broadcast %6 : vector<64x1xf32> to vector<64x16xf32>
    %35 = arith.mulf %33, %34 : vector<64x16xf32>
    %cst_6 = arith.constant 0.000000e+00 : f32
    %36 = vector.broadcast %cst_6 : f32 to vector<7x16xf32>
    %37 = vector.extract_strided_slice %12 {offsets = [0, 0], sizes = [57, 16], strides = [1, 1]} : vector<64x16xf32> to vector<57x16xf32>
    %38 = tpu.concatenate %36, %37 in 0 : vector<7x16xf32>, vector<57x16xf32> -> vector<64x16xf32>
    %39 = vector.broadcast %10 : vector<64x1xf32> to vector<64x16xf32>
    %40 = arith.mulf %38, %39 : vector<64x16xf32>
    %cst_7 = arith.constant 0.000000e+00 : f32
    %41 = vector.broadcast %cst_7 : f32 to vector<8x16xf32>
    %42 = vector.extract_strided_slice %12 {offsets = [0, 0], sizes = [56, 16], strides = [1, 1]} : vector<64x16xf32> to vector<56x16xf32>
    %43 = tpu.concatenate %41, %42 in 0 : vector<8x16xf32>, vector<56x16xf32> -> vector<64x16xf32>
    %cst_8 = arith.constant 0.000000e+00 : f32
    %44 = vector.broadcast %cst_8 : f32 to vector<9x16xf32>
    %45 = vector.extract_strided_slice %12 {offsets = [0, 0], sizes = [55, 16], strides = [1, 1]} : vector<64x16xf32> to vector<55x16xf32>
    %46 = tpu.concatenate %44, %45 in 0 : vector<9x16xf32>, vector<55x16xf32> -> vector<64x16xf32>
    %47 = vector.broadcast %6 : vector<64x1xf32> to vector<64x16xf32>
    %48 = arith.mulf %46, %47 : vector<64x16xf32>
    %49 = tpu.concatenate %17, %20, %25, %30, %12, %35, %40, %43, %48 in 1 : vector<64x16xf32>, vector<64x16xf32>, vector<64x16xf32>, vector<64x16xf32>, vector<64x16xf32>, vector<64x16xf32>, vector<64x16xf32>, vector<64x16xf32>, vector<64x16xf32> -> vector<64x144xf32>
    %c0_9 = arith.constant 0 : index
    %c0_10 = arith.constant 0 : index
    %50 = vector.load %arg2[%c0_9, %c0_10] : memref<144x32xf32, #tpu.memory_space<vmem>>, vector<144x32xf32>
    %cst_11 = arith.constant dense<0.000000e+00> : vector<64x32xf32>
    %51 = tpu.matmul %49, %50, %cst_11 {dimension_numbers = #tpu.dot_dimension_numbers<[1], [0], [0], [1], [0, 0, 1, 1], [], []>} : vector<64x144xf32>, vector<144x32xf32>, vector<64x32xf32> -> vector<64x32xf32>
    %c0_12 = arith.constant 0 : index
    %c0_13 = arith.constant 0 : index
    %52 = vector.load %arg3[%c0_12, %c0_13] : memref<1x32xf32, #tpu.memory_space<vmem>>, vector<1x32xf32>
    %53 = vector.broadcast %52 : vector<1x32xf32> to vector<64x32xf32>
    %54 = arith.addf %51, %53 : vector<64x32xf32>
    %c0_14 = arith.constant 0 : index
    %c0_15 = arith.constant 0 : index
    %55 = vector.load %arg4[%c0_14, %c0_15] : memref<64x32xf32, #tpu.memory_space<vmem>>, vector<64x32xf32>
    %c0_16 = arith.constant 0 : index
    %c0_17 = arith.constant 0 : index
    %56 = vector.load %arg5[%c0_16, %c0_17] : memref<128x16xf32, #tpu.memory_space<vmem>>, vector<128x16xf32>
    %c0_18 = arith.constant 0 : index
    %c0_19 = arith.constant 0 : index
    %57 = vector.load %arg6[%c0_18, %c0_19] : memref<1x16xf32, #tpu.memory_space<vmem>>, vector<1x16xf32>
    %c0_20 = arith.constant 0 : index
    %c0_21 = arith.constant 0 : index
    %58 = vector.load %arg7[%c0_20, %c0_21] : memref<144x16xf32, #tpu.memory_space<vmem>>, vector<144x16xf32>
    %c0_22 = arith.constant 0 : index
    %c0_23 = arith.constant 0 : index
    %59 = vector.load %arg8[%c0_22, %c0_23] : memref<1x16xf32, #tpu.memory_space<vmem>>, vector<1x16xf32>
    %cst_24 = arith.constant 0.000000e+00 : f32
    %60 = vector.broadcast %cst_24 : f32 to vector<64x32xf32>
    %c0_25 = arith.constant 0 : index
    %c0_26 = arith.constant 0 : index
    %61 = vector.load %arg10[%c0_25, %c0_26] : memref<64x32xf32, #tpu.memory_space<vmem>>, vector<64x32xf32>
    tpu.vector_store %arg10[%c0_25, %c0_26], %60 {strides = array<i32>} : memref<64x32xf32, #tpu.memory_space<vmem>>, vector<64x32xf32>,
    %cst_27 = arith.constant 0.000000e+00 : f32
    %62 = vector.broadcast %cst_27 : f32 to vector<64x16xf32>
    %c0_28 = arith.constant 0 : index
    %c0_29 = arith.constant 0 : index
    %63 = vector.load %arg11[%c0_28, %c0_29] : memref<64x16xf32, #tpu.memory_space<vmem>>, vector<64x16xf32>
    tpu.vector_store %arg11[%c0_28, %c0_29], %62 {strides = array<i32>} : memref<64x16xf32, #tpu.memory_space<vmem>>, vector<64x16xf32>,
    %cst_30 = arith.constant 0.000000e+00 : f32
    %64 = vector.broadcast %cst_30 : f32 to vector<64x16xf32>
    %c0_31 = arith.constant 0 : index
    %c0_32 = arith.constant 0 : index
    %65 = vector.load %arg12[%c0_31, %c0_32] : memref<64x16xf32, #tpu.memory_space<vmem>>, vector<64x16xf32>
    tpu.vector_store %arg12[%c0_31, %c0_32], %64 {strides = array<i32>} : memref<64x16xf32, #tpu.memory_space<vmem>>, vector<64x16xf32>,
    %cst_33 = arith.constant 0.000000e+00 : f32
    %66 = vector.broadcast %cst_33 : f32 to vector<64x16xf32>
    %c0_34 = arith.constant 0 : index
    %c0_35 = arith.constant 0 : index
    %67 = vector.load %arg13[%c0_34, %c0_35] : memref<64x16xf32, #tpu.memory_space<vmem>>, vector<64x16xf32>
    tpu.vector_store %arg13[%c0_34, %c0_35], %66 {strides = array<i32>} : memref<64x16xf32, #tpu.memory_space<vmem>>, vector<64x16xf32>,
    %cst_36 = arith.constant 0.000000e+00 : f32
    %68 = vector.broadcast %cst_36 : f32 to vector<64x16xf32>
    %c0_37 = arith.constant 0 : index
    %c0_38 = arith.constant 0 : index
    %69 = vector.load %arg14[%c0_37, %c0_38] : memref<64x16xf32, #tpu.memory_space<vmem>>, vector<64x16xf32>
    tpu.vector_store %arg14[%c0_37, %c0_38], %68 {strides = array<i32>} : memref<64x16xf32, #tpu.memory_space<vmem>>, vector<64x16xf32>,
    %c0_i32 = arith.constant 0 : i32
    %c0_39 = arith.constant 0 : index
    %c0_40 = arith.constant 0 : index
    %70 = vector.load %arg13[%c0_39, %c0_40] : memref<64x16xf32, #tpu.memory_space<vmem>>, vector<64x16xf32>
    %71 = vector.extract_strided_slice %70 {offsets = [1, 0], sizes = [63, 16], strides = [1, 1]} : vector<64x16xf32> to vector<63x16xf32>
    %cst_41 = arith.constant 0.000000e+00 : f32
    %72 = vector.broadcast %cst_41 : f32 to vector<1x16xf32>
    %73 = tpu.concatenate %71, %72 in 0 : vector<63x16xf32>, vector<1x16xf32> -> vector<64x16xf32>
    %74 = vector.broadcast %10 : vector<64x1xf32> to vector<64x16xf32>
    %75 = arith.mulf %73, %74 : vector<64x16xf32>
    %76 = vector.extract_strided_slice %70 {offsets = [8, 0], sizes = [56, 16], strides = [1, 1]} : vector<64x16xf32> to vector<56x16xf32>
    %cst_42 = arith.constant 0.000000e+00 : f32
    %77 = vector.broadcast %cst_42 : f32 to vector<8x16xf32>
    %78 = tpu.concatenate %76, %77 in 0 : vector<56x16xf32>, vector<8x16xf32> -> vector<64x16xf32>
    %79 = vector.extract_strided_slice %70 {offsets = [9, 0], sizes = [55, 16], strides = [1, 1]} : vector<64x16xf32> to vector<55x16xf32>
    %cst_43 = arith.constant 0.000000e+00 : f32
    %80 = vector.broadcast %cst_43 : f32 to vector<9x16xf32>
    %81 = tpu.concatenate %79, %80 in 0 : vector<55x16xf32>, vector<9x16xf32> -> vector<64x16xf32>
    %82 = vector.broadcast %10 : vector<64x1xf32> to vector<64x16xf32>
    %83 = arith.mulf %81, %82 : vector<64x16xf32>
    %84 = tpu.concatenate %70, %75, %78, %83 in 1 : vector<64x16xf32>, vector<64x16xf32>, vector<64x16xf32>, vector<64x16xf32> -> vector<64x64xf32>
    %cst_44 = arith.constant dense<0.000000e+00> : vector<64x32xf32>
    %85 = tpu.matmul %84, %55, %cst_44 {dimension_numbers = #tpu.dot_dimension_numbers<[1], [0], [0], [1], [0, 0, 1, 1], [], []>} : vector<64x64xf32>, vector<64x32xf32>, vector<64x32xf32> -> vector<64x32xf32>
    %86 = arith.addf %85, %54 : vector<64x32xf32>
    %c0_45 = arith.constant 0 : index
    %c0_46 = arith.constant 0 : index
    %87 = vector.load %arg10[%c0_45, %c0_46] : memref<64x32xf32, #tpu.memory_space<vmem>>, vector<64x32xf32>
    %cst_47 = arith.constant 9.900000e-01 : f32
    %88 = vector.broadcast %cst_47 : f32 to vector<64x32xf32>
    %89 = arith.mulf %88, %87 : vector<64x32xf32>
    %90 = arith.addf %89, %86 : vector<64x32xf32>
    %cst_48 = arith.constant 1.000000e+00 : f32
    %91 = vector.broadcast %cst_48 : f32 to vector<64x32xf32>
    %92 = arith.cmpf oge, %90, %91 : vector<64x32xf32>
    %93 = arith.extui %92 : vector<64x32xi1> to vector<64x32xi32>
    %94 = arith.sitofp %93 : vector<64x32xi32> to vector<64x32xf32>
    %cst_49 = arith.constant 1.000000e+00 : f32
    %95 = vector.broadcast %cst_49 : f32 to vector<64x32xf32>
    %96 = arith.mulf %95, %94 : vector<64x32xf32>
    %97 = arith.subf %90, %96 : vector<64x32xf32>
    %c0_50 = arith.constant 0 : index
    %c0_51 = arith.constant 0 : index
    %98 = vector.load %arg10[%c0_50, %c0_51] : memref<64x32xf32, #tpu.memory_space<vmem>>, vector<64x32xf32>
    tpu.vector_store %arg10[%c0_50, %c0_51], %97 {strides = array<i32>} : memref<64x32xf32, #tpu.memory_space<vmem>>, vector<64x32xf32>,
    %cst_52 = arith.constant 0.000000e+00 : f32
    %99 = vector.broadcast %cst_52 : f32 to vector<1x32xf32>
    %100 = vector.extract_strided_slice %94 {offsets = [0, 0], sizes = [63, 32], strides = [1, 1]} : vector<64x32xf32> to vector<63x32xf32>
    %101 = tpu.concatenate %99, %100 in 0 : vector<1x32xf32>, vector<63x32xf32> -> vector<64x32xf32>
    %102 = vector.broadcast %6 : vector<64x1xf32> to vector<64x32xf32>
    %103 = arith.mulf %101, %102 : vector<64x32xf32>
    %cst_53 = arith.constant 0.000000e+00 : f32
    %104 = vector.broadcast %cst_53 : f32 to vector<8x32xf32>
    %105 = vector.extract_strided_slice %94 {offsets = [0, 0], sizes = [56, 32], strides = [1, 1]} : vector<64x32xf32> to vector<56x32xf32>
    %106 = tpu.concatenate %104, %105 in 0 : vector<8x32xf32>, vector<56x32xf32> -> vector<64x32xf32>
    %cst_54 = arith.constant 0.000000e+00 : f32
    %107 = vector.broadcast %cst_54 : f32 to vector<9x32xf32>
    %108 = vector.extract_strided_slice %94 {offsets = [0, 0], sizes = [55, 32], strides = [1, 1]} : vector<64x32xf32> to vector<55x32xf32>
    %109 = tpu.concatenate %107, %108 in 0 : vector<9x32xf32>, vector<55x32xf32> -> vector<64x32xf32>
    %110 = vector.broadcast %6 : vector<64x1xf32> to vector<64x32xf32>
    %111 = arith.mulf %109, %110 : vector<64x32xf32>
    %112 = tpu.concatenate %94, %103, %106, %111 in 1 : vector<64x32xf32>, vector<64x32xf32>, vector<64x32xf32>, vector<64x32xf32> -> vector<64x128xf32>
    %cst_55 = arith.constant dense<0.000000e+00> : vector<64x16xf32>
    %113 = tpu.matmul %112, %56, %cst_55 {dimension_numbers = #tpu.dot_dimension_numbers<[1], [0], [0], [1], [0, 0, 1, 1], [], []>} : vector<64x128xf32>, vector<128x16xf32>, vector<64x16xf32> -> vector<64x16xf32>
    %114 = vector.broadcast %57 : vector<1x16xf32> to vector<64x16xf32>
    %115 = arith.addf %113, %114 : vector<64x16xf32>
    %c0_56 = arith.constant 0 : index
    %c0_57 = arith.constant 0 : index
    %116 = vector.load %arg11[%c0_56, %c0_57] : memref<64x16xf32, #tpu.memory_space<vmem>>, vector<64x16xf32>
    %cst_58 = arith.constant 9.900000e-01 : f32
    %117 = vector.broadcast %cst_58 : f32 to vector<64x16xf32>
    %118 = arith.mulf %117, %116 : vector<64x16xf32>
    %119 = arith.addf %118, %115 : vector<64x16xf32>
    %cst_59 = arith.constant 1.000000e+00 : f32
    %120 = vector.broadcast %cst_59 : f32 to vector<64x16xf32>
    %121 = arith.cmpf oge, %119, %120 : vector<64x16xf32>
    %122 = arith.extui %121 : vector<64x16xi1> to vector<64x16xi32>
    %123 = arith.sitofp %122 : vector<64x16xi32> to vector<64x16xf32>
    %cst_60 = arith.constant 1.000000e+00 : f32
    %124 = vector.broadcast %cst_60 : f32 to vector<64x16xf32>
    %125 = arith.mulf %124, %123 : vector<64x16xf32>
    %126 = arith.subf %119, %125 : vector<64x16xf32>
    %c0_61 = arith.constant 0 : index
    %c0_62 = arith.constant 0 : index
    %127 = vector.load %arg11[%c0_61, %c0_62] : memref<64x16xf32, #tpu.memory_space<vmem>>, vector<64x16xf32>
    tpu.vector_store %arg11[%c0_61, %c0_62], %126 {strides = array<i32>} : memref<64x16xf32, #tpu.memory_space<vmem>>, vector<64x16xf32>,
    %cst_63 = arith.constant 0.000000e+00 : f32
    %128 = vector.broadcast %cst_63 : f32 to vector<9x16xf32>
    %129 = vector.extract_strided_slice %123 {offsets = [0, 0], sizes = [55, 16], strides = [1, 1]} : vector<64x16xf32> to vector<55x16xf32>
    %130 = tpu.concatenate %128, %129 in 0 : vector<9x16xf32>, vector<55x16xf32> -> vector<64x16xf32>
    %131 = vector.broadcast %6 : vector<64x1xf32> to vector<64x16xf32>
    %132 = arith.mulf %130, %131 : vector<64x16xf32>
    %cst_64 = arith.constant 0.000000e+00 : f32
    %133 = vector.broadcast %cst_64 : f32 to vector<8x16xf32>
    %134 = vector.extract_strided_slice %123 {offsets = [0, 0], sizes = [56, 16], strides = [1, 1]} : vector<64x16xf32> to vector<56x16xf32>
    %135 = tpu.concatenate %133, %134 in 0 : vector<8x16xf32>, vector<56x16xf32> -> vector<64x16xf32>
    %cst_65 = arith.constant 0.000000e+00 : f32
    %136 = vector.broadcast %cst_65 : f32 to vector<7x16xf32>
    %137 = vector.extract_strided_slice %123 {offsets = [0, 0], sizes = [57, 16], strides = [1, 1]} : vector<64x16xf32> to vector<57x16xf32>
    %138 = tpu.concatenate %136, %137 in 0 : vector<7x16xf32>, vector<57x16xf32> -> vector<64x16xf32>
    %139 = vector.broadcast %10 : vector<64x1xf32> to vector<64x16xf32>
    %140 = arith.mulf %138, %139 : vector<64x16xf32>
    %cst_66 = arith.constant 0.000000e+00 : f32
    %141 = vector.broadcast %cst_66 : f32 to vector<1x16xf32>
    %142 = vector.extract_strided_slice %123 {offsets = [0, 0], sizes = [63, 16], strides = [1, 1]} : vector<64x16xf32> to vector<63x16xf32>
    %143 = tpu.concatenate %141, %142 in 0 : vector<1x16xf32>, vector<63x16xf32> -> vector<64x16xf32>
    %144 = vector.broadcast %6 : vector<64x1xf32> to vector<64x16xf32>
    %145 = arith.mulf %143, %144 : vector<64x16xf32>
    %146 = vector.extract_strided_slice %123 {offsets = [1, 0], sizes = [63, 16], strides = [1, 1]} : vector<64x16xf32> to vector<63x16xf32>
    %cst_67 = arith.constant 0.000000e+00 : f32
    %147 = vector.broadcast %cst_67 : f32 to vector<1x16xf32>
    %148 = tpu.concatenate %146, %147 in 0 : vector<63x16xf32>, vector<1x16xf32> -> vector<64x16xf32>
    %149 = vector.broadcast %10 : vector<64x1xf32> to vector<64x16xf32>
    %150 = arith.mulf %148, %149 : vector<64x16xf32>
    %151 = vector.extract_strided_slice %123 {offsets = [7, 0], sizes = [57, 16], strides = [1, 1]} : vector<64x16xf32> to vector<57x16xf32>
    %cst_68 = arith.constant 0.000000e+00 : f32
    %152 = vector.broadcast %cst_68 : f32 to vector<7x16xf32>
    %153 = tpu.concatenate %151, %152 in 0 : vector<57x16xf32>, vector<7x16xf32> -> vector<64x16xf32>
    %154 = vector.broadcast %6 : vector<64x1xf32> to vector<64x16xf32>
    %155 = arith.mulf %153, %154 : vector<64x16xf32>
    %156 = vector.extract_strided_slice %123 {offsets = [8, 0], sizes = [56, 16], strides = [1, 1]} : vector<64x16xf32> to vector<56x16xf32>
    %cst_69 = arith.constant 0.000000e+00 : f32
    %157 = vector.broadcast %cst_69 : f32 to vector<8x16xf32>
    %158 = tpu.concatenate %156, %157 in 0 : vector<56x16xf32>, vector<8x16xf32> -> vector<64x16xf32>
    %159 = vector.extract_strided_slice %123 {offsets = [9, 0], sizes = [55, 16], strides = [1, 1]} : vector<64x16xf32> to vector<55x16xf32>
    %cst_70 = arith.constant 0.000000e+00 : f32
    %160 = vector.broadcast %cst_70 : f32 to vector<9x16xf32>
    %161 = tpu.concatenate %159, %160 in 0 : vector<55x16xf32>, vector<9x16xf32> -> vector<64x16xf32>
    %162 = vector.broadcast %10 : vector<64x1xf32> to vector<64x16xf32>
    %163 = arith.mulf %161, %162 : vector<64x16xf32>
    %164 = tpu.concatenate %132, %135, %140, %145, %123, %150, %155, %158, %163 in 1 : vector<64x16xf32>, vector<64x16xf32>, vector<64x16xf32>, vector<64x16xf32>, vector<64x16xf32>, vector<64x16xf32>, vector<64x16xf32>, vector<64x16xf32>, vector<64x16xf32> -> vector<64x144xf32>
    %cst_71 = arith.constant dense<0.000000e+00> : vector<64x16xf32>
    %165 = tpu.matmul %164, %58, %cst_71 {dimension_numbers = #tpu.dot_dimension_numbers<[1], [0], [0], [1], [0, 0, 1, 1], [], []>} : vector<64x144xf32>, vector<144x16xf32>, vector<64x16xf32> -> vector<64x16xf32>
    %166 = vector.broadcast %59 : vector<1x16xf32> to vector<64x16xf32>
    %167 = arith.addf %165, %166 : vector<64x16xf32>
    %c0_72 = arith.constant 0 : index
    %c0_73 = arith.constant 0 : index
    %168 = vector.load %arg12[%c0_72, %c0_73] : memref<64x16xf32, #tpu.memory_space<vmem>>, vector<64x16xf32>
    %cst_74 = arith.constant 9.900000e-01 : f32
    %169 = vector.broadcast %cst_74 : f32 to vector<64x16xf32>
    %170 = arith.mulf %169, %168 : vector<64x16xf32>
    %171 = arith.addf %170, %167 : vector<64x16xf32>
    %cst_75 = arith.constant 1.000000e+00 : f32
    %172 = vector.broadcast %cst_75 : f32 to vector<64x16xf32>
    %173 = arith.cmpf oge, %171, %172 : vector<64x16xf32>
    %174 = arith.extui %173 : vector<64x16xi1> to vector<64x16xi32>
    %175 = arith.sitofp %174 : vector<64x16xi32> to vector<64x16xf32>
    %cst_76 = arith.constant 1.000000e+00 : f32
    %176 = vector.broadcast %cst_76 : f32 to vector<64x16xf32>
    %177 = arith.mulf %176, %175 : vector<64x16xf32>
    %178 = arith.subf %171, %177 : vector<64x16xf32>
    %c0_77 = arith.constant 0 : index
    %c0_78 = arith.constant 0 : index
    %179 = vector.load %arg12[%c0_77, %c0_78] : memref<64x16xf32, #tpu.memory_space<vmem>>, vector<64x16xf32>
    tpu.vector_store %arg12[%c0_77, %c0_78], %178 {strides = array<i32>} : memref<64x16xf32, #tpu.memory_space<vmem>>, vector<64x16xf32>,
    %c0_79 = arith.constant 0 : index
    %c0_80 = arith.constant 0 : index
    %180 = vector.load %arg13[%c0_79, %c0_80] : memref<64x16xf32, #tpu.memory_space<vmem>>, vector<64x16xf32>
    tpu.vector_store %arg13[%c0_79, %c0_80], %175 {strides = array<i32>} : memref<64x16xf32, #tpu.memory_space<vmem>>, vector<64x16xf32>,
    %c0_81 = arith.constant 0 : index
    %c0_82 = arith.constant 0 : index
    %181 = vector.load %arg14[%c0_81, %c0_82] : memref<64x16xf32, #tpu.memory_space<vmem>>, vector<64x16xf32>
    %182 = arith.addf %181, %175 : vector<64x16xf32>
    %c0_83 = arith.constant 0 : index
    %c0_84 = arith.constant 0 : index
    %183 = vector.load %arg14[%c0_83, %c0_84] : memref<64x16xf32, #tpu.memory_space<vmem>>, vector<64x16xf32>
    tpu.vector_store %arg14[%c0_83, %c0_84], %182 {strides = array<i32>} : memref<64x16xf32, #tpu.memory_space<vmem>>, vector<64x16xf32>,
    %c1_i32_85 = arith.constant 1 : i32
    %c0_86 = arith.constant 0 : index
    %c0_87 = arith.constant 0 : index
    %184 = vector.load %arg13[%c0_86, %c0_87] : memref<64x16xf32, #tpu.memory_space<vmem>>, vector<64x16xf32>
    %185 = vector.extract_strided_slice %184 {offsets = [1, 0], sizes = [63, 16], strides = [1, 1]} : vector<64x16xf32> to vector<63x16xf32>
    %cst_88 = arith.constant 0.000000e+00 : f32
    %186 = vector.broadcast %cst_88 : f32 to vector<1x16xf32>
    %187 = tpu.concatenate %185, %186 in 0 : vector<63x16xf32>, vector<1x16xf32> -> vector<64x16xf32>
    %188 = vector.broadcast %10 : vector<64x1xf32> to vector<64x16xf32>
    %189 = arith.mulf %187, %188 : vector<64x16xf32>
    %190 = vector.extract_strided_slice %184 {offsets = [8, 0], sizes = [56, 16], strides = [1, 1]} : vector<64x16xf32> to vector<56x16xf32>
    %cst_89 = arith.constant 0.000000e+00 : f32
    %191 = vector.broadcast %cst_89 : f32 to vector<8x16xf32>
    %192 = tpu.concatenate %190, %191 in 0 : vector<56x16xf32>, vector<8x16xf32> -> vector<64x16xf32>
    %193 = vector.extract_strided_slice %184 {offsets = [9, 0], sizes = [55, 16], strides = [1, 1]} : vector<64x16xf32> to vector<55x16xf32>
    %cst_90 = arith.constant 0.000000e+00 : f32
    %194 = vector.broadcast %cst_90 : f32 to vector<9x16xf32>
    %195 = tpu.concatenate %193, %194 in 0 : vector<55x16xf32>, vector<9x16xf32> -> vector<64x16xf32>
    %196 = vector.broadcast %10 : vector<64x1xf32> to vector<64x16xf32>
    %197 = arith.mulf %195, %196 : vector<64x16xf32>
    %198 = tpu.concatenate %184, %189, %192, %197 in 1 : vector<64x16xf32>, vector<64x16xf32>, vector<64x16xf32>, vector<64x16xf32> -> vector<64x64xf32>
    %cst_91 = arith.constant dense<0.000000e+00> : vector<64x32xf32>
    %199 = tpu.matmul %198, %55, %cst_91 {dimension_numbers = #tpu.dot_dimension_numbers<[1], [0], [0], [1], [0, 0, 1, 1], [], []>} : vector<64x64xf32>, vector<64x32xf32>, vector<64x32xf32> -> vector<64x32xf32>
    %200 = arith.addf %199, %54 : vector<64x32xf32>
    %c0_92 = arith.constant 0 : index
    %c0_93 = arith.constant 0 : index
    %201 = vector.load %arg10[%c0_92, %c0_93] : memref<64x32xf32, #tpu.memory_space<vmem>>, vector<64x32xf32>
    %cst_94 = arith.constant 9.900000e-01 : f32
    %202 = vector.broadcast %cst_94 : f32 to vector<64x32xf32>
    %203 = arith.mulf %202, %201 : vector<64x32xf32>
    %204 = arith.addf %203, %200 : vector<64x32xf32>
    %cst_95 = arith.constant 1.000000e+00 : f32
    %205 = vector.broadcast %cst_95 : f32 to vector<64x32xf32>
    %206 = arith.cmpf oge, %204, %205 : vector<64x32xf32>
    %207 = arith.extui %206 : vector<64x32xi1> to vector<64x32xi32>
    %208 = arith.sitofp %207 : vector<64x32xi32> to vector<64x32xf32>
    %cst_96 = arith.constant 1.000000e+00 : f32
    %209 = vector.broadcast %cst_96 : f32 to vector<64x32xf32>
    %210 = arith.mulf %209, %208 : vector<64x32xf32>
    %211 = arith.subf %204, %210 : vector<64x32xf32>
    %c0_97 = arith.constant 0 : index
    %c0_98 = arith.constant 0 : index
    %212 = vector.load %arg10[%c0_97, %c0_98] : memref<64x32xf32, #tpu.memory_space<vmem>>, vector<64x32xf32>
    tpu.vector_store %arg10[%c0_97, %c0_98], %211 {strides = array<i32>} : memref<64x32xf32, #tpu.memory_space<vmem>>, vector<64x32xf32>,
    %cst_99 = arith.constant 0.000000e+00 : f32
    %213 = vector.broadcast %cst_99 : f32 to vector<1x32xf32>
    %214 = vector.extract_strided_slice %208 {offsets = [0, 0], sizes = [63, 32], strides = [1, 1]} : vector<64x32xf32> to vector<63x32xf32>
    %215 = tpu.concatenate %213, %214 in 0 : vector<1x32xf32>, vector<63x32xf32> -> vector<64x32xf32>
    %216 = vector.broadcast %6 : vector<64x1xf32> to vector<64x32xf32>
    %217 = arith.mulf %215, %216 : vector<64x32xf32>
    %cst_100 = arith.constant 0.000000e+00 : f32
    %218 = vector.broadcast %cst_100 : f32 to vector<8x32xf32>
    %219 = vector.extract_strided_slice %208 {offsets = [0, 0], sizes = [56, 32], strides = [1, 1]} : vector<64x32xf32> to vector<56x32xf32>
    %220 = tpu.concatenate %218, %219 in 0 : vector<8x32xf32>, vector<56x32xf32> -> vector<64x32xf32>
    %cst_101 = arith.constant 0.000000e+00 : f32
    %221 = vector.broadcast %cst_101 : f32 to vector<9x32xf32>
    %222 = vector.extract_strided_slice %208 {offsets = [0, 0], sizes = [55, 32], strides = [1, 1]} : vector<64x32xf32> to vector<55x32xf32>
    %223 = tpu.concatenate %221, %222 in 0 : vector<9x32xf32>, vector<55x32xf32> -> vector<64x32xf32>
    %224 = vector.broadcast %6 : vector<64x1xf32> to vector<64x32xf32>
    %225 = arith.mulf %223, %224 : vector<64x32xf32>
    %226 = tpu.concatenate %208, %217, %220, %225 in 1 : vector<64x32xf32>, vector<64x32xf32>, vector<64x32xf32>, vector<64x32xf32> -> vector<64x128xf32>
    %cst_102 = arith.constant dense<0.000000e+00> : vector<64x16xf32>
    %227 = tpu.matmul %226, %56, %cst_102 {dimension_numbers = #tpu.dot_dimension_numbers<[1], [0], [0], [1], [0, 0, 1, 1], [], []>} : vector<64x128xf32>, vector<128x16xf32>, vector<64x16xf32> -> vector<64x16xf32>
    %228 = vector.broadcast %57 : vector<1x16xf32> to vector<64x16xf32>
    %229 = arith.addf %227, %228 : vector<64x16xf32>
    %c0_103 = arith.constant 0 : index
    %c0_104 = arith.constant 0 : index
    %230 = vector.load %arg11[%c0_103, %c0_104] : memref<64x16xf32, #tpu.memory_space<vmem>>, vector<64x16xf32>
    %cst_105 = arith.constant 9.900000e-01 : f32
    %231 = vector.broadcast %cst_105 : f32 to vector<64x16xf32>
    %232 = arith.mulf %231, %230 : vector<64x16xf32>
    %233 = arith.addf %232, %229 : vector<64x16xf32>
    %cst_106 = arith.constant 1.000000e+00 : f32
    %234 = vector.broadcast %cst_106 : f32 to vector<64x16xf32>
    %235 = arith.cmpf oge, %233, %234 : vector<64x16xf32>
    %236 = arith.extui %235 : vector<64x16xi1> to vector<64x16xi32>
    %237 = arith.sitofp %236 : vector<64x16xi32> to vector<64x16xf32>
    %cst_107 = arith.constant 1.000000e+00 : f32
    %238 = vector.broadcast %cst_107 : f32 to vector<64x16xf32>
    %239 = arith.mulf %238, %237 : vector<64x16xf32>
    %240 = arith.subf %233, %239 : vector<64x16xf32>
    %c0_108 = arith.constant 0 : index
    %c0_109 = arith.constant 0 : index
    %241 = vector.load %arg11[%c0_108, %c0_109] : memref<64x16xf32, #tpu.memory_space<vmem>>, vector<64x16xf32>
    tpu.vector_store %arg11[%c0_108, %c0_109], %240 {strides = array<i32>} : memref<64x16xf32, #tpu.memory_space<vmem>>, vector<64x16xf32>,
    %cst_110 = arith.constant 0.000000e+00 : f32
    %242 = vector.broadcast %cst_110 : f32 to vector<9x16xf32>
    %243 = vector.extract_strided_slice %237 {offsets = [0, 0], sizes = [55, 16], strides = [1, 1]} : vector<64x16xf32> to vector<55x16xf32>
    %244 = tpu.concatenate %242, %243 in 0 : vector<9x16xf32>, vector<55x16xf32> -> vector<64x16xf32>
    %245 = vector.broadcast %6 : vector<64x1xf32> to vector<64x16xf32>
    %246 = arith.mulf %244, %245 : vector<64x16xf32>
    %cst_111 = arith.constant 0.000000e+00 : f32
    %247 = vector.broadcast %cst_111 : f32 to vector<8x16xf32>
    %248 = vector.extract_strided_slice %237 {offsets = [0, 0], sizes = [56, 16], strides = [1, 1]} : vector<64x16xf32> to vector<56x16xf32>
    %249 = tpu.concatenate %247, %248 in 0 : vector<8x16xf32>, vector<56x16xf32> -> vector<64x16xf32>
    %cst_112 = arith.constant 0.000000e+00 : f32
    %250 = vector.broadcast %cst_112 : f32 to vector<7x16xf32>
    %251 = vector.extract_strided_slice %237 {offsets = [0, 0], sizes = [57, 16], strides = [1, 1]} : vector<64x16xf32> to vector<57x16xf32>
    %252 = tpu.concatenate %250, %251 in 0 : vector<7x16xf32>, vector<57x16xf32> -> vector<64x16xf32>
    %253 = vector.broadcast %10 : vector<64x1xf32> to vector<64x16xf32>
    %254 = arith.mulf %252, %253 : vector<64x16xf32>
    %cst_113 = arith.constant 0.000000e+00 : f32
    %255 = vector.broadcast %cst_113 : f32 to vector<1x16xf32>
    %256 = vector.extract_strided_slice %237 {offsets = [0, 0], sizes = [63, 16], strides = [1, 1]} : vector<64x16xf32> to vector<63x16xf32>
    %257 = tpu.concatenate %255, %256 in 0 : vector<1x16xf32>, vector<63x16xf32> -> vector<64x16xf32>
    %258 = vector.broadcast %6 : vector<64x1xf32> to vector<64x16xf32>
    %259 = arith.mulf %257, %258 : vector<64x16xf32>
    %260 = vector.extract_strided_slice %237 {offsets = [1, 0], sizes = [63, 16], strides = [1, 1]} : vector<64x16xf32> to vector<63x16xf32>
    %cst_114 = arith.constant 0.000000e+00 : f32
    %261 = vector.broadcast %cst_114 : f32 to vector<1x16xf32>
    %262 = tpu.concatenate %260, %261 in 0 : vector<63x16xf32>, vector<1x16xf32> -> vector<64x16xf32>
    %263 = vector.broadcast %10 : vector<64x1xf32> to vector<64x16xf32>
    %264 = arith.mulf %262, %263 : vector<64x16xf32>
    %265 = vector.extract_strided_slice %237 {offsets = [7, 0], sizes = [57, 16], strides = [1, 1]} : vector<64x16xf32> to vector<57x16xf32>
    %cst_115 = arith.constant 0.000000e+00 : f32
    %266 = vector.broadcast %cst_115 : f32 to vector<7x16xf32>
    %267 = tpu.concatenate %265, %266 in 0 : vector<57x16xf32>, vector<7x16xf32> -> vector<64x16xf32>
    %268 = vector.broadcast %6 : vector<64x1xf32> to vector<64x16xf32>
    %269 = arith.mulf %267, %268 : vector<64x16xf32>
    %270 = vector.extract_strided_slice %237 {offsets = [8, 0], sizes = [56, 16], strides = [1, 1]} : vector<64x16xf32> to vector<56x16xf32>
    %cst_116 = arith.constant 0.000000e+00 : f32
    %271 = vector.broadcast %cst_116 : f32 to vector<8x16xf32>
    %272 = tpu.concatenate %270, %271 in 0 : vector<56x16xf32>, vector<8x16xf32> -> vector<64x16xf32>
    %273 = vector.extract_strided_slice %237 {offsets = [9, 0], sizes = [55, 16], strides = [1, 1]} : vector<64x16xf32> to vector<55x16xf32>
    %cst_117 = arith.constant 0.000000e+00 : f32
    %274 = vector.broadcast %cst_117 : f32 to vector<9x16xf32>
    %275 = tpu.concatenate %273, %274 in 0 : vector<55x16xf32>, vector<9x16xf32> -> vector<64x16xf32>
    %276 = vector.broadcast %10 : vector<64x1xf32> to vector<64x16xf32>
    %277 = arith.mulf %275, %276 : vector<64x16xf32>
    %278 = tpu.concatenate %246, %249, %254, %259, %237, %264, %269, %272, %277 in 1 : vector<64x16xf32>, vector<64x16xf32>, vector<64x16xf32>, vector<64x16xf32>, vector<64x16xf32>, vector<64x16xf32>, vector<64x16xf32>, vector<64x16xf32>, vector<64x16xf32> -> vector<64x144xf32>
    %cst_118 = arith.constant dense<0.000000e+00> : vector<64x16xf32>
    %279 = tpu.matmul %278, %58, %cst_118 {dimension_numbers = #tpu.dot_dimension_numbers<[1], [0], [0], [1], [0, 0, 1, 1], [], []>} : vector<64x144xf32>, vector<144x16xf32>, vector<64x16xf32> -> vector<64x16xf32>
    %280 = vector.broadcast %59 : vector<1x16xf32> to vector<64x16xf32>
    %281 = arith.addf %279, %280 : vector<64x16xf32>
    %c0_119 = arith.constant 0 : index
    %c0_120 = arith.constant 0 : index
    %282 = vector.load %arg12[%c0_119, %c0_120] : memref<64x16xf32, #tpu.memory_space<vmem>>, vector<64x16xf32>
    %cst_121 = arith.constant 9.900000e-01 : f32
    %283 = vector.broadcast %cst_121 : f32 to vector<64x16xf32>
    %284 = arith.mulf %283, %282 : vector<64x16xf32>
    %285 = arith.addf %284, %281 : vector<64x16xf32>
    %cst_122 = arith.constant 1.000000e+00 : f32
    %286 = vector.broadcast %cst_122 : f32 to vector<64x16xf32>
    %287 = arith.cmpf oge, %285, %286 : vector<64x16xf32>
    %288 = arith.extui %287 : vector<64x16xi1> to vector<64x16xi32>
    %289 = arith.sitofp %288 : vector<64x16xi32> to vector<64x16xf32>
    %cst_123 = arith.constant 1.000000e+00 : f32
    %290 = vector.broadcast %cst_123 : f32 to vector<64x16xf32>
    %291 = arith.mulf %290, %289 : vector<64x16xf32>
    %292 = arith.subf %285, %291 : vector<64x16xf32>
    %c0_124 = arith.constant 0 : index
    %c0_125 = arith.constant 0 : index
    %293 = vector.load %arg12[%c0_124, %c0_125] : memref<64x16xf32, #tpu.memory_space<vmem>>, vector<64x16xf32>
    tpu.vector_store %arg12[%c0_124, %c0_125], %292 {strides = array<i32>} : memref<64x16xf32, #tpu.memory_space<vmem>>, vector<64x16xf32>,
    %c0_126 = arith.constant 0 : index
    %c0_127 = arith.constant 0 : index
    %294 = vector.load %arg13[%c0_126, %c0_127] : memref<64x16xf32, #tpu.memory_space<vmem>>, vector<64x16xf32>
    tpu.vector_store %arg13[%c0_126, %c0_127], %289 {strides = array<i32>} : memref<64x16xf32, #tpu.memory_space<vmem>>, vector<64x16xf32>,
    %c0_128 = arith.constant 0 : index
    %c0_129 = arith.constant 0 : index
    %295 = vector.load %arg14[%c0_128, %c0_129] : memref<64x16xf32, #tpu.memory_space<vmem>>, vector<64x16xf32>
    %296 = arith.addf %295, %289 : vector<64x16xf32>
    %c0_130 = arith.constant 0 : index
    %c0_131 = arith.constant 0 : index
    %297 = vector.load %arg14[%c0_130, %c0_131] : memref<64x16xf32, #tpu.memory_space<vmem>>, vector<64x16xf32>
    tpu.vector_store %arg14[%c0_130, %c0_131], %296 {strides = array<i32>} : memref<64x16xf32, #tpu.memory_space<vmem>>, vector<64x16xf32>,
    %c2_i32 = arith.constant 2 : i32
    %c0_132 = arith.constant 0 : index
    %c0_133 = arith.constant 0 : index
    %298 = vector.load %arg13[%c0_132, %c0_133] : memref<64x16xf32, #tpu.memory_space<vmem>>, vector<64x16xf32>
    %299 = vector.extract_strided_slice %298 {offsets = [1, 0], sizes = [63, 16], strides = [1, 1]} : vector<64x16xf32> to vector<63x16xf32>
    %cst_134 = arith.constant 0.000000e+00 : f32
    %300 = vector.broadcast %cst_134 : f32 to vector<1x16xf32>
    %301 = tpu.concatenate %299, %300 in 0 : vector<63x16xf32>, vector<1x16xf32> -> vector<64x16xf32>
    %302 = vector.broadcast %10 : vector<64x1xf32> to vector<64x16xf32>
    %303 = arith.mulf %301, %302 : vector<64x16xf32>
    %304 = vector.extract_strided_slice %298 {offsets = [8, 0], sizes = [56, 16], strides = [1, 1]} : vector<64x16xf32> to vector<56x16xf32>
    %cst_135 = arith.constant 0.000000e+00 : f32
    %305 = vector.broadcast %cst_135 : f32 to vector<8x16xf32>
    %306 = tpu.concatenate %304, %305 in 0 : vector<56x16xf32>, vector<8x16xf32> -> vector<64x16xf32>
    %307 = vector.extract_strided_slice %298 {offsets = [9, 0], sizes = [55, 16], strides = [1, 1]} : vector<64x16xf32> to vector<55x16xf32>
    %cst_136 = arith.constant 0.000000e+00 : f32
    %308 = vector.broadcast %cst_136 : f32 to vector<9x16xf32>
    %309 = tpu.concatenate %307, %308 in 0 : vector<55x16xf32>, vector<9x16xf32> -> vector<64x16xf32>
    %310 = vector.broadcast %10 : vector<64x1xf32> to vector<64x16xf32>
    %311 = arith.mulf %309, %310 : vector<64x16xf32>
    %312 = tpu.concatenate %298, %303, %306, %311 in 1 : vector<64x16xf32>, vector<64x16xf32>, vector<64x16xf32>, vector<64x16xf32> -> vector<64x64xf32>
    %cst_137 = arith.constant dense<0.000000e+00> : vector<64x32xf32>
    %313 = tpu.matmul %312, %55, %cst_137 {dimension_numbers = #tpu.dot_dimension_numbers<[1], [0], [0], [1], [0, 0, 1, 1], [], []>} : vector<64x64xf32>, vector<64x32xf32>, vector<64x32xf32> -> vector<64x32xf32>
    %314 = arith.addf %313, %54 : vector<64x32xf32>
    %c0_138 = arith.constant 0 : index
    %c0_139 = arith.constant 0 : index
    %315 = vector.load %arg10[%c0_138, %c0_139] : memref<64x32xf32, #tpu.memory_space<vmem>>, vector<64x32xf32>
    %cst_140 = arith.constant 9.900000e-01 : f32
    %316 = vector.broadcast %cst_140 : f32 to vector<64x32xf32>
    %317 = arith.mulf %316, %315 : vector<64x32xf32>
    %318 = arith.addf %317, %314 : vector<64x32xf32>
    %cst_141 = arith.constant 1.000000e+00 : f32
    %319 = vector.broadcast %cst_141 : f32 to vector<64x32xf32>
    %320 = arith.cmpf oge, %318, %319 : vector<64x32xf32>
    %321 = arith.extui %320 : vector<64x32xi1> to vector<64x32xi32>
    %322 = arith.sitofp %321 : vector<64x32xi32> to vector<64x32xf32>
    %cst_142 = arith.constant 1.000000e+00 : f32
    %323 = vector.broadcast %cst_142 : f32 to vector<64x32xf32>
    %324 = arith.mulf %323, %322 : vector<64x32xf32>
    %325 = arith.subf %318, %324 : vector<64x32xf32>
    %c0_143 = arith.constant 0 : index
    %c0_144 = arith.constant 0 : index
    %326 = vector.load %arg10[%c0_143, %c0_144] : memref<64x32xf32, #tpu.memory_space<vmem>>, vector<64x32xf32>
    tpu.vector_store %arg10[%c0_143, %c0_144], %325 {strides = array<i32>} : memref<64x32xf32, #tpu.memory_space<vmem>>, vector<64x32xf32>,
    %cst_145 = arith.constant 0.000000e+00 : f32
    %327 = vector.broadcast %cst_145 : f32 to vector<1x32xf32>
    %328 = vector.extract_strided_slice %322 {offsets = [0, 0], sizes = [63, 32], strides = [1, 1]} : vector<64x32xf32> to vector<63x32xf32>
    %329 = tpu.concatenate %327, %328 in 0 : vector<1x32xf32>, vector<63x32xf32> -> vector<64x32xf32>
    %330 = vector.broadcast %6 : vector<64x1xf32> to vector<64x32xf32>
    %331 = arith.mulf %329, %330 : vector<64x32xf32>
    %cst_146 = arith.constant 0.000000e+00 : f32
    %332 = vector.broadcast %cst_146 : f32 to vector<8x32xf32>
    %333 = vector.extract_strided_slice %322 {offsets = [0, 0], sizes = [56, 32], strides = [1, 1]} : vector<64x32xf32> to vector<56x32xf32>
    %334 = tpu.concatenate %332, %333 in 0 : vector<8x32xf32>, vector<56x32xf32> -> vector<64x32xf32>
    %cst_147 = arith.constant 0.000000e+00 : f32
    %335 = vector.broadcast %cst_147 : f32 to vector<9x32xf32>
    %336 = vector.extract_strided_slice %322 {offsets = [0, 0], sizes = [55, 32], strides = [1, 1]} : vector<64x32xf32> to vector<55x32xf32>
    %337 = tpu.concatenate %335, %336 in 0 : vector<9x32xf32>, vector<55x32xf32> -> vector<64x32xf32>
    %338 = vector.broadcast %6 : vector<64x1xf32> to vector<64x32xf32>
    %339 = arith.mulf %337, %338 : vector<64x32xf32>
    %340 = tpu.concatenate %322, %331, %334, %339 in 1 : vector<64x32xf32>, vector<64x32xf32>, vector<64x32xf32>, vector<64x32xf32> -> vector<64x128xf32>
    %cst_148 = arith.constant dense<0.000000e+00> : vector<64x16xf32>
    %341 = tpu.matmul %340, %56, %cst_148 {dimension_numbers = #tpu.dot_dimension_numbers<[1], [0], [0], [1], [0, 0, 1, 1], [], []>} : vector<64x128xf32>, vector<128x16xf32>, vector<64x16xf32> -> vector<64x16xf32>
    %342 = vector.broadcast %57 : vector<1x16xf32> to vector<64x16xf32>
    %343 = arith.addf %341, %342 : vector<64x16xf32>
    %c0_149 = arith.constant 0 : index
    %c0_150 = arith.constant 0 : index
    %344 = vector.load %arg11[%c0_149, %c0_150] : memref<64x16xf32, #tpu.memory_space<vmem>>, vector<64x16xf32>
    %cst_151 = arith.constant 9.900000e-01 : f32
    %345 = vector.broadcast %cst_151 : f32 to vector<64x16xf32>
    %346 = arith.mulf %345, %344 : vector<64x16xf32>
    %347 = arith.addf %346, %343 : vector<64x16xf32>
    %cst_152 = arith.constant 1.000000e+00 : f32
    %348 = vector.broadcast %cst_152 : f32 to vector<64x16xf32>
    %349 = arith.cmpf oge, %347, %348 : vector<64x16xf32>
    %350 = arith.extui %349 : vector<64x16xi1> to vector<64x16xi32>
    %351 = arith.sitofp %350 : vector<64x16xi32> to vector<64x16xf32>
    %cst_153 = arith.constant 1.000000e+00 : f32
    %352 = vector.broadcast %cst_153 : f32 to vector<64x16xf32>
    %353 = arith.mulf %352, %351 : vector<64x16xf32>
    %354 = arith.subf %347, %353 : vector<64x16xf32>
    %c0_154 = arith.constant 0 : index
    %c0_155 = arith.constant 0 : index
    %355 = vector.load %arg11[%c0_154, %c0_155] : memref<64x16xf32, #tpu.memory_space<vmem>>, vector<64x16xf32>
    tpu.vector_store %arg11[%c0_154, %c0_155], %354 {strides = array<i32>} : memref<64x16xf32, #tpu.memory_space<vmem>>, vector<64x16xf32>,
    %cst_156 = arith.constant 0.000000e+00 : f32
    %356 = vector.broadcast %cst_156 : f32 to vector<9x16xf32>
    %357 = vector.extract_strided_slice %351 {offsets = [0, 0], sizes = [55, 16], strides = [1, 1]} : vector<64x16xf32> to vector<55x16xf32>
    %358 = tpu.concatenate %356, %357 in 0 : vector<9x16xf32>, vector<55x16xf32> -> vector<64x16xf32>
    %359 = vector.broadcast %6 : vector<64x1xf32> to vector<64x16xf32>
    %360 = arith.mulf %358, %359 : vector<64x16xf32>
    %cst_157 = arith.constant 0.000000e+00 : f32
    %361 = vector.broadcast %cst_157 : f32 to vector<8x16xf32>
    %362 = vector.extract_strided_slice %351 {offsets = [0, 0], sizes = [56, 16], strides = [1, 1]} : vector<64x16xf32> to vector<56x16xf32>
    %363 = tpu.concatenate %361, %362 in 0 : vector<8x16xf32>, vector<56x16xf32> -> vector<64x16xf32>
    %cst_158 = arith.constant 0.000000e+00 : f32
    %364 = vector.broadcast %cst_158 : f32 to vector<7x16xf32>
    %365 = vector.extract_strided_slice %351 {offsets = [0, 0], sizes = [57, 16], strides = [1, 1]} : vector<64x16xf32> to vector<57x16xf32>
    %366 = tpu.concatenate %364, %365 in 0 : vector<7x16xf32>, vector<57x16xf32> -> vector<64x16xf32>
    %367 = vector.broadcast %10 : vector<64x1xf32> to vector<64x16xf32>
    %368 = arith.mulf %366, %367 : vector<64x16xf32>
    %cst_159 = arith.constant 0.000000e+00 : f32
    %369 = vector.broadcast %cst_159 : f32 to vector<1x16xf32>
    %370 = vector.extract_strided_slice %351 {offsets = [0, 0], sizes = [63, 16], strides = [1, 1]} : vector<64x16xf32> to vector<63x16xf32>
    %371 = tpu.concatenate %369, %370 in 0 : vector<1x16xf32>, vector<63x16xf32> -> vector<64x16xf32>
    %372 = vector.broadcast %6 : vector<64x1xf32> to vector<64x16xf32>
    %373 = arith.mulf %371, %372 : vector<64x16xf32>
    %374 = vector.extract_strided_slice %351 {offsets = [1, 0], sizes = [63, 16], strides = [1, 1]} : vector<64x16xf32> to vector<63x16xf32>
    %cst_160 = arith.constant 0.000000e+00 : f32
    %375 = vector.broadcast %cst_160 : f32 to vector<1x16xf32>
    %376 = tpu.concatenate %374, %375 in 0 : vector<63x16xf32>, vector<1x16xf32> -> vector<64x16xf32>
    %377 = vector.broadcast %10 : vector<64x1xf32> to vector<64x16xf32>
    %378 = arith.mulf %376, %377 : vector<64x16xf32>
    %379 = vector.extract_strided_slice %351 {offsets = [7, 0], sizes = [57, 16], strides = [1, 1]} : vector<64x16xf32> to vector<57x16xf32>
    %cst_161 = arith.constant 0.000000e+00 : f32
    %380 = vector.broadcast %cst_161 : f32 to vector<7x16xf32>
    %381 = tpu.concatenate %379, %380 in 0 : vector<57x16xf32>, vector<7x16xf32> -> vector<64x16xf32>
    %382 = vector.broadcast %6 : vector<64x1xf32> to vector<64x16xf32>
    %383 = arith.mulf %381, %382 : vector<64x16xf32>
    %384 = vector.extract_strided_slice %351 {offsets = [8, 0], sizes = [56, 16], strides = [1, 1]} : vector<64x16xf32> to vector<56x16xf32>
    %cst_162 = arith.constant 0.000000e+00 : f32
    %385 = vector.broadcast %cst_162 : f32 to vector<8x16xf32>
    %386 = tpu.concatenate %384, %385 in 0 : vector<56x16xf32>, vector<8x16xf32> -> vector<64x16xf32>
    %387 = vector.extract_strided_slice %351 {offsets = [9, 0], sizes = [55, 16], strides = [1, 1]} : vector<64x16xf32> to vector<55x16xf32>
    %cst_163 = arith.constant 0.000000e+00 : f32
    %388 = vector.broadcast %cst_163 : f32 to vector<9x16xf32>
    %389 = tpu.concatenate %387, %388 in 0 : vector<55x16xf32>, vector<9x16xf32> -> vector<64x16xf32>
    %390 = vector.broadcast %10 : vector<64x1xf32> to vector<64x16xf32>
    %391 = arith.mulf %389, %390 : vector<64x16xf32>
    %392 = tpu.concatenate %360, %363, %368, %373, %351, %378, %383, %386, %391 in 1 : vector<64x16xf32>, vector<64x16xf32>, vector<64x16xf32>, vector<64x16xf32>, vector<64x16xf32>, vector<64x16xf32>, vector<64x16xf32>, vector<64x16xf32>, vector<64x16xf32> -> vector<64x144xf32>
    %cst_164 = arith.constant dense<0.000000e+00> : vector<64x16xf32>
    %393 = tpu.matmul %392, %58, %cst_164 {dimension_numbers = #tpu.dot_dimension_numbers<[1], [0], [0], [1], [0, 0, 1, 1], [], []>} : vector<64x144xf32>, vector<144x16xf32>, vector<64x16xf32> -> vector<64x16xf32>
    %394 = vector.broadcast %59 : vector<1x16xf32> to vector<64x16xf32>
    %395 = arith.addf %393, %394 : vector<64x16xf32>
    %c0_165 = arith.constant 0 : index
    %c0_166 = arith.constant 0 : index
    %396 = vector.load %arg12[%c0_165, %c0_166] : memref<64x16xf32, #tpu.memory_space<vmem>>, vector<64x16xf32>
    %cst_167 = arith.constant 9.900000e-01 : f32
    %397 = vector.broadcast %cst_167 : f32 to vector<64x16xf32>
    %398 = arith.mulf %397, %396 : vector<64x16xf32>
    %399 = arith.addf %398, %395 : vector<64x16xf32>
    %cst_168 = arith.constant 1.000000e+00 : f32
    %400 = vector.broadcast %cst_168 : f32 to vector<64x16xf32>
    %401 = arith.cmpf oge, %399, %400 : vector<64x16xf32>
    %402 = arith.extui %401 : vector<64x16xi1> to vector<64x16xi32>
    %403 = arith.sitofp %402 : vector<64x16xi32> to vector<64x16xf32>
    %cst_169 = arith.constant 1.000000e+00 : f32
    %404 = vector.broadcast %cst_169 : f32 to vector<64x16xf32>
    %405 = arith.mulf %404, %403 : vector<64x16xf32>
    %406 = arith.subf %399, %405 : vector<64x16xf32>
    %c0_170 = arith.constant 0 : index
    %c0_171 = arith.constant 0 : index
    %407 = vector.load %arg12[%c0_170, %c0_171] : memref<64x16xf32, #tpu.memory_space<vmem>>, vector<64x16xf32>
    tpu.vector_store %arg12[%c0_170, %c0_171], %406 {strides = array<i32>} : memref<64x16xf32, #tpu.memory_space<vmem>>, vector<64x16xf32>,
    %c0_172 = arith.constant 0 : index
    %c0_173 = arith.constant 0 : index
    %408 = vector.load %arg13[%c0_172, %c0_173] : memref<64x16xf32, #tpu.memory_space<vmem>>, vector<64x16xf32>
    tpu.vector_store %arg13[%c0_172, %c0_173], %403 {strides = array<i32>} : memref<64x16xf32, #tpu.memory_space<vmem>>, vector<64x16xf32>,
    %c0_174 = arith.constant 0 : index
    %c0_175 = arith.constant 0 : index
    %409 = vector.load %arg14[%c0_174, %c0_175] : memref<64x16xf32, #tpu.memory_space<vmem>>, vector<64x16xf32>
    %410 = arith.addf %409, %403 : vector<64x16xf32>
    %c0_176 = arith.constant 0 : index
    %c0_177 = arith.constant 0 : index
    %411 = vector.load %arg14[%c0_176, %c0_177] : memref<64x16xf32, #tpu.memory_space<vmem>>, vector<64x16xf32>
    tpu.vector_store %arg14[%c0_176, %c0_177], %410 {strides = array<i32>} : memref<64x16xf32, #tpu.memory_space<vmem>>, vector<64x16xf32>,
    %c3_i32 = arith.constant 3 : i32
    %c0_178 = arith.constant 0 : index
    %c0_179 = arith.constant 0 : index
    %412 = vector.load %arg13[%c0_178, %c0_179] : memref<64x16xf32, #tpu.memory_space<vmem>>, vector<64x16xf32>
    %413 = vector.extract_strided_slice %412 {offsets = [1, 0], sizes = [63, 16], strides = [1, 1]} : vector<64x16xf32> to vector<63x16xf32>
    %cst_180 = arith.constant 0.000000e+00 : f32
    %414 = vector.broadcast %cst_180 : f32 to vector<1x16xf32>
    %415 = tpu.concatenate %413, %414 in 0 : vector<63x16xf32>, vector<1x16xf32> -> vector<64x16xf32>
    %416 = vector.broadcast %10 : vector<64x1xf32> to vector<64x16xf32>
    %417 = arith.mulf %415, %416 : vector<64x16xf32>
    %418 = vector.extract_strided_slice %412 {offsets = [8, 0], sizes = [56, 16], strides = [1, 1]} : vector<64x16xf32> to vector<56x16xf32>
    %cst_181 = arith.constant 0.000000e+00 : f32
    %419 = vector.broadcast %cst_181 : f32 to vector<8x16xf32>
    %420 = tpu.concatenate %418, %419 in 0 : vector<56x16xf32>, vector<8x16xf32> -> vector<64x16xf32>
    %421 = vector.extract_strided_slice %412 {offsets = [9, 0], sizes = [55, 16], strides = [1, 1]} : vector<64x16xf32> to vector<55x16xf32>
    %cst_182 = arith.constant 0.000000e+00 : f32
    %422 = vector.broadcast %cst_182 : f32 to vector<9x16xf32>
    %423 = tpu.concatenate %421, %422 in 0 : vector<55x16xf32>, vector<9x16xf32> -> vector<64x16xf32>
    %424 = vector.broadcast %10 : vector<64x1xf32> to vector<64x16xf32>
    %425 = arith.mulf %423, %424 : vector<64x16xf32>
    %426 = tpu.concatenate %412, %417, %420, %425 in 1 : vector<64x16xf32>, vector<64x16xf32>, vector<64x16xf32>, vector<64x16xf32> -> vector<64x64xf32>
    %cst_183 = arith.constant dense<0.000000e+00> : vector<64x32xf32>
    %427 = tpu.matmul %426, %55, %cst_183 {dimension_numbers = #tpu.dot_dimension_numbers<[1], [0], [0], [1], [0, 0, 1, 1], [], []>} : vector<64x64xf32>, vector<64x32xf32>, vector<64x32xf32> -> vector<64x32xf32>
    %428 = arith.addf %427, %54 : vector<64x32xf32>
    %c0_184 = arith.constant 0 : index
    %c0_185 = arith.constant 0 : index
    %429 = vector.load %arg10[%c0_184, %c0_185] : memref<64x32xf32, #tpu.memory_space<vmem>>, vector<64x32xf32>
    %cst_186 = arith.constant 9.900000e-01 : f32
    %430 = vector.broadcast %cst_186 : f32 to vector<64x32xf32>
    %431 = arith.mulf %430, %429 : vector<64x32xf32>
    %432 = arith.addf %431, %428 : vector<64x32xf32>
    %cst_187 = arith.constant 1.000000e+00 : f32
    %433 = vector.broadcast %cst_187 : f32 to vector<64x32xf32>
    %434 = arith.cmpf oge, %432, %433 : vector<64x32xf32>
    %435 = arith.extui %434 : vector<64x32xi1> to vector<64x32xi32>
    %436 = arith.sitofp %435 : vector<64x32xi32> to vector<64x32xf32>
    %cst_188 = arith.constant 1.000000e+00 : f32
    %437 = vector.broadcast %cst_188 : f32 to vector<64x32xf32>
    %438 = arith.mulf %437, %436 : vector<64x32xf32>
    %439 = arith.subf %432, %438 : vector<64x32xf32>
    %c0_189 = arith.constant 0 : index
    %c0_190 = arith.constant 0 : index
    %440 = vector.load %arg10[%c0_189, %c0_190] : memref<64x32xf32, #tpu.memory_space<vmem>>, vector<64x32xf32>
    tpu.vector_store %arg10[%c0_189, %c0_190], %439 {strides = array<i32>} : memref<64x32xf32, #tpu.memory_space<vmem>>, vector<64x32xf32>,
    %cst_191 = arith.constant 0.000000e+00 : f32
    %441 = vector.broadcast %cst_191 : f32 to vector<1x32xf32>
    %442 = vector.extract_strided_slice %436 {offsets = [0, 0], sizes = [63, 32], strides = [1, 1]} : vector<64x32xf32> to vector<63x32xf32>
    %443 = tpu.concatenate %441, %442 in 0 : vector<1x32xf32>, vector<63x32xf32> -> vector<64x32xf32>
    %444 = vector.broadcast %6 : vector<64x1xf32> to vector<64x32xf32>
    %445 = arith.mulf %443, %444 : vector<64x32xf32>
    %cst_192 = arith.constant 0.000000e+00 : f32
    %446 = vector.broadcast %cst_192 : f32 to vector<8x32xf32>
    %447 = vector.extract_strided_slice %436 {offsets = [0, 0], sizes = [56, 32], strides = [1, 1]} : vector<64x32xf32> to vector<56x32xf32>
    %448 = tpu.concatenate %446, %447 in 0 : vector<8x32xf32>, vector<56x32xf32> -> vector<64x32xf32>
    %cst_193 = arith.constant 0.000000e+00 : f32
    %449 = vector.broadcast %cst_193 : f32 to vector<9x32xf32>
    %450 = vector.extract_strided_slice %436 {offsets = [0, 0], sizes = [55, 32], strides = [1, 1]} : vector<64x32xf32> to vector<55x32xf32>
    %451 = tpu.concatenate %449, %450 in 0 : vector<9x32xf32>, vector<55x32xf32> -> vector<64x32xf32>
    %452 = vector.broadcast %6 : vector<64x1xf32> to vector<64x32xf32>
    %453 = arith.mulf %451, %452 : vector<64x32xf32>
    %454 = tpu.concatenate %436, %445, %448, %453 in 1 : vector<64x32xf32>, vector<64x32xf32>, vector<64x32xf32>, vector<64x32xf32> -> vector<64x128xf32>
    %cst_194 = arith.constant dense<0.000000e+00> : vector<64x16xf32>
    %455 = tpu.matmul %454, %56, %cst_194 {dimension_numbers = #tpu.dot_dimension_numbers<[1], [0], [0], [1], [0, 0, 1, 1], [], []>} : vector<64x128xf32>, vector<128x16xf32>, vector<64x16xf32> -> vector<64x16xf32>
    %456 = vector.broadcast %57 : vector<1x16xf32> to vector<64x16xf32>
    %457 = arith.addf %455, %456 : vector<64x16xf32>
    %c0_195 = arith.constant 0 : index
    %c0_196 = arith.constant 0 : index
    %458 = vector.load %arg11[%c0_195, %c0_196] : memref<64x16xf32, #tpu.memory_space<vmem>>, vector<64x16xf32>
    %cst_197 = arith.constant 9.900000e-01 : f32
    %459 = vector.broadcast %cst_197 : f32 to vector<64x16xf32>
    %460 = arith.mulf %459, %458 : vector<64x16xf32>
    %461 = arith.addf %460, %457 : vector<64x16xf32>
    %cst_198 = arith.constant 1.000000e+00 : f32
    %462 = vector.broadcast %cst_198 : f32 to vector<64x16xf32>
    %463 = arith.cmpf oge, %461, %462 : vector<64x16xf32>
    %464 = arith.extui %463 : vector<64x16xi1> to vector<64x16xi32>
    %465 = arith.sitofp %464 : vector<64x16xi32> to vector<64x16xf32>
    %cst_199 = arith.constant 1.000000e+00 : f32
    %466 = vector.broadcast %cst_199 : f32 to vector<64x16xf32>
    %467 = arith.mulf %466, %465 : vector<64x16xf32>
    %468 = arith.subf %461, %467 : vector<64x16xf32>
    %c0_200 = arith.constant 0 : index
    %c0_201 = arith.constant 0 : index
    %469 = vector.load %arg11[%c0_200, %c0_201] : memref<64x16xf32, #tpu.memory_space<vmem>>, vector<64x16xf32>
    tpu.vector_store %arg11[%c0_200, %c0_201], %468 {strides = array<i32>} : memref<64x16xf32, #tpu.memory_space<vmem>>, vector<64x16xf32>,
    %cst_202 = arith.constant 0.000000e+00 : f32
    %470 = vector.broadcast %cst_202 : f32 to vector<9x16xf32>
    %471 = vector.extract_strided_slice %465 {offsets = [0, 0], sizes = [55, 16], strides = [1, 1]} : vector<64x16xf32> to vector<55x16xf32>
    %472 = tpu.concatenate %470, %471 in 0 : vector<9x16xf32>, vector<55x16xf32> -> vector<64x16xf32>
    %473 = vector.broadcast %6 : vector<64x1xf32> to vector<64x16xf32>
    %474 = arith.mulf %472, %473 : vector<64x16xf32>
    %cst_203 = arith.constant 0.000000e+00 : f32
    %475 = vector.broadcast %cst_203 : f32 to vector<8x16xf32>
    %476 = vector.extract_strided_slice %465 {offsets = [0, 0], sizes = [56, 16], strides = [1, 1]} : vector<64x16xf32> to vector<56x16xf32>
    %477 = tpu.concatenate %475, %476 in 0 : vector<8x16xf32>, vector<56x16xf32> -> vector<64x16xf32>
    %cst_204 = arith.constant 0.000000e+00 : f32
    %478 = vector.broadcast %cst_204 : f32 to vector<7x16xf32>
    %479 = vector.extract_strided_slice %465 {offsets = [0, 0], sizes = [57, 16], strides = [1, 1]} : vector<64x16xf32> to vector<57x16xf32>
    %480 = tpu.concatenate %478, %479 in 0 : vector<7x16xf32>, vector<57x16xf32> -> vector<64x16xf32>
    %481 = vector.broadcast %10 : vector<64x1xf32> to vector<64x16xf32>
    %482 = arith.mulf %480, %481 : vector<64x16xf32>
    %cst_205 = arith.constant 0.000000e+00 : f32
    %483 = vector.broadcast %cst_205 : f32 to vector<1x16xf32>
    %484 = vector.extract_strided_slice %465 {offsets = [0, 0], sizes = [63, 16], strides = [1, 1]} : vector<64x16xf32> to vector<63x16xf32>
    %485 = tpu.concatenate %483, %484 in 0 : vector<1x16xf32>, vector<63x16xf32> -> vector<64x16xf32>
    %486 = vector.broadcast %6 : vector<64x1xf32> to vector<64x16xf32>
    %487 = arith.mulf %485, %486 : vector<64x16xf32>
    %488 = vector.extract_strided_slice %465 {offsets = [1, 0], sizes = [63, 16], strides = [1, 1]} : vector<64x16xf32> to vector<63x16xf32>
    %cst_206 = arith.constant 0.000000e+00 : f32
    %489 = vector.broadcast %cst_206 : f32 to vector<1x16xf32>
    %490 = tpu.concatenate %488, %489 in 0 : vector<63x16xf32>, vector<1x16xf32> -> vector<64x16xf32>
    %491 = vector.broadcast %10 : vector<64x1xf32> to vector<64x16xf32>
    %492 = arith.mulf %490, %491 : vector<64x16xf32>
    %493 = vector.extract_strided_slice %465 {offsets = [7, 0], sizes = [57, 16], strides = [1, 1]} : vector<64x16xf32> to vector<57x16xf32>
    %cst_207 = arith.constant 0.000000e+00 : f32
    %494 = vector.broadcast %cst_207 : f32 to vector<7x16xf32>
    %495 = tpu.concatenate %493, %494 in 0 : vector<57x16xf32>, vector<7x16xf32> -> vector<64x16xf32>
    %496 = vector.broadcast %6 : vector<64x1xf32> to vector<64x16xf32>
    %497 = arith.mulf %495, %496 : vector<64x16xf32>
    %498 = vector.extract_strided_slice %465 {offsets = [8, 0], sizes = [56, 16], strides = [1, 1]} : vector<64x16xf32> to vector<56x16xf32>
    %cst_208 = arith.constant 0.000000e+00 : f32
    %499 = vector.broadcast %cst_208 : f32 to vector<8x16xf32>
    %500 = tpu.concatenate %498, %499 in 0 : vector<56x16xf32>, vector<8x16xf32> -> vector<64x16xf32>
    %501 = vector.extract_strided_slice %465 {offsets = [9, 0], sizes = [55, 16], strides = [1, 1]} : vector<64x16xf32> to vector<55x16xf32>
    %cst_209 = arith.constant 0.000000e+00 : f32
    %502 = vector.broadcast %cst_209 : f32 to vector<9x16xf32>
    %503 = tpu.concatenate %501, %502 in 0 : vector<55x16xf32>, vector<9x16xf32> -> vector<64x16xf32>
    %504 = vector.broadcast %10 : vector<64x1xf32> to vector<64x16xf32>
    %505 = arith.mulf %503, %504 : vector<64x16xf32>
    %506 = tpu.concatenate %474, %477, %482, %487, %465, %492, %497, %500, %505 in 1 : vector<64x16xf32>, vector<64x16xf32>, vector<64x16xf32>, vector<64x16xf32>, vector<64x16xf32>, vector<64x16xf32>, vector<64x16xf32>, vector<64x16xf32>, vector<64x16xf32> -> vector<64x144xf32>
    %cst_210 = arith.constant dense<0.000000e+00> : vector<64x16xf32>
    %507 = tpu.matmul %506, %58, %cst_210 {dimension_numbers = #tpu.dot_dimension_numbers<[1], [0], [0], [1], [0, 0, 1, 1], [], []>} : vector<64x144xf32>, vector<144x16xf32>, vector<64x16xf32> -> vector<64x16xf32>
    %508 = vector.broadcast %59 : vector<1x16xf32> to vector<64x16xf32>
    %509 = arith.addf %507, %508 : vector<64x16xf32>
    %c0_211 = arith.constant 0 : index
    %c0_212 = arith.constant 0 : index
    %510 = vector.load %arg12[%c0_211, %c0_212] : memref<64x16xf32, #tpu.memory_space<vmem>>, vector<64x16xf32>
    %cst_213 = arith.constant 9.900000e-01 : f32
    %511 = vector.broadcast %cst_213 : f32 to vector<64x16xf32>
    %512 = arith.mulf %511, %510 : vector<64x16xf32>
    %513 = arith.addf %512, %509 : vector<64x16xf32>
    %cst_214 = arith.constant 1.000000e+00 : f32
    %514 = vector.broadcast %cst_214 : f32 to vector<64x16xf32>
    %515 = arith.cmpf oge, %513, %514 : vector<64x16xf32>
    %516 = arith.extui %515 : vector<64x16xi1> to vector<64x16xi32>
    %517 = arith.sitofp %516 : vector<64x16xi32> to vector<64x16xf32>
    %cst_215 = arith.constant 1.000000e+00 : f32
    %518 = vector.broadcast %cst_215 : f32 to vector<64x16xf32>
    %519 = arith.mulf %518, %517 : vector<64x16xf32>
    %520 = arith.subf %513, %519 : vector<64x16xf32>
    %c0_216 = arith.constant 0 : index
    %c0_217 = arith.constant 0 : index
    %521 = vector.load %arg12[%c0_216, %c0_217] : memref<64x16xf32, #tpu.memory_space<vmem>>, vector<64x16xf32>
    tpu.vector_store %arg12[%c0_216, %c0_217], %520 {strides = array<i32>} : memref<64x16xf32, #tpu.memory_space<vmem>>, vector<64x16xf32>,
    %c0_218 = arith.constant 0 : index
    %c0_219 = arith.constant 0 : index
    %522 = vector.load %arg13[%c0_218, %c0_219] : memref<64x16xf32, #tpu.memory_space<vmem>>, vector<64x16xf32>
    tpu.vector_store %arg13[%c0_218, %c0_219], %517 {strides = array<i32>} : memref<64x16xf32, #tpu.memory_space<vmem>>, vector<64x16xf32>,
    %c0_220 = arith.constant 0 : index
    %c0_221 = arith.constant 0 : index
    %523 = vector.load %arg14[%c0_220, %c0_221] : memref<64x16xf32, #tpu.memory_space<vmem>>, vector<64x16xf32>
    %524 = arith.addf %523, %517 : vector<64x16xf32>
    %c0_222 = arith.constant 0 : index
    %c0_223 = arith.constant 0 : index
    %525 = vector.load %arg14[%c0_222, %c0_223] : memref<64x16xf32, #tpu.memory_space<vmem>>, vector<64x16xf32>
    tpu.vector_store %arg14[%c0_222, %c0_223], %524 {strides = array<i32>} : memref<64x16xf32, #tpu.memory_space<vmem>>, vector<64x16xf32>,
    %c0_224 = arith.constant 0 : index
    %c0_225 = arith.constant 0 : index
    %526 = vector.load %arg14[%c0_224, %c0_225] : memref<64x16xf32, #tpu.memory_space<vmem>>, vector<64x16xf32>
    %cst_226 = arith.constant 2.500000e-01 : f32
    %527 = vector.broadcast %cst_226 : f32 to vector<64x16xf32>
    %528 = arith.mulf %526, %527 : vector<64x16xf32>
    %c0_227 = arith.constant 0 : index
    %c0_228 = arith.constant 0 : index
    %c0_229 = arith.constant 0 : index
    %529 = vector.load %arg9[%c0_227, %c0_228, %c0_229] : memref<1x64x16xf32, #tpu.memory_space<vmem>>, vector<1x64x16xf32>
    %530 = vector.shape_cast %529 : vector<1x64x16xf32> to vector<64x16xf32>
    %531 = vector.shape_cast %528 : vector<64x16xf32> to vector<1x64x16xf32>
    tpu.vector_store %arg9[%c0_227, %c0_228, %c0_229], %531 {strides = array<i32>} : memref<1x64x16xf32, #tpu.memory_space<vmem>>, vector<1x64x16xf32>,
    return
  }
  func.func @transform_0(%arg0: i32) -> (i32, i32, i32) {
    %c0_i32 = arith.constant 0 : i32
    %c0_i32_0 = arith.constant 0 : i32
    %c0_i32_1 = arith.constant 0 : i32
    return %arg0, %c0_i32, %c0_i32_0 : i32, i32, i32
  }
  func.func @transform_1(%arg0: i32) -> (i32, i32) {
    %c0_i32 = arith.constant 0 : i32
    %c0_i32_0 = arith.constant 0 : i32
    %c0_i32_1 = arith.constant 0 : i32
    return %c0_i32, %c0_i32_0 : i32, i32
  }
  func.func @transform_2(%arg0: i32) -> (i32, i32) {
    %c0_i32 = arith.constant 0 : i32
    %c0_i32_0 = arith.constant 0 : i32
    %c0_i32_1 = arith.constant 0 : i32
    return %c0_i32, %c0_i32_0 : i32, i32
  }
  func.func @transform_3(%arg0: i32) -> (i32, i32) {
    %c0_i32 = arith.constant 0 : i32
    %c0_i32_0 = arith.constant 0 : i32
    %c0_i32_1 = arith.constant 0 : i32
    return %c0_i32, %c0_i32_0 : i32, i32
  }
  func.func @transform_4(%arg0: i32) -> (i32, i32) {
    %c0_i32 = arith.constant 0 : i32
    %c0_i32_0 = arith.constant 0 : i32
    %c0_i32_1 = arith.constant 0 : i32
    return %c0_i32, %c0_i32_0 : i32, i32
  }
  func.func @transform_5(%arg0: i32) -> (i32, i32) {
    %c0_i32 = arith.constant 0 : i32
    %c0_i32_0 = arith.constant 0 : i32
    %c0_i32_1 = arith.constant 0 : i32
    return %c0_i32, %c0_i32_0 : i32, i32
  }
  func.func @transform_6(%arg0: i32) -> (i32, i32) {
    %c0_i32 = arith.constant 0 : i32
    %c0_i32_0 = arith.constant 0 : i32
    %c0_i32_1 = arith.constant 0 : i32
    return %c0_i32, %c0_i32_0 : i32, i32
  }
  func.func @transform_7(%arg0: i32) -> (i32, i32) {
    %c0_i32 = arith.constant 0 : i32
    %c0_i32_0 = arith.constant 0 : i32
    %c0_i32_1 = arith.constant 0 : i32
    return %c0_i32, %c0_i32_0 : i32, i32
  }
  func.func @transform_8(%arg0: i32) -> (i32, i32, i32) {
    %c0_i32 = arith.constant 0 : i32
    %c0_i32_0 = arith.constant 0 : i32
    %c0_i32_1 = arith.constant 0 : i32
    return %arg0, %c0_i32, %c0_i32_0 : i32, i32, i32
  }
}

module attributes {stable_mosaic.version = 11 : i64} {
  func.func @_head_kernel(%arg0: i32, %arg1: memref<1x16x64xf32, #tpu.memory_space<vmem>>, %arg2: memref<1x16x16xf32, #tpu.memory_space<vmem>>, %arg3: memref<256x16xf32, #tpu.memory_space<vmem>>, %arg4: memref<1x16xf32, #tpu.memory_space<vmem>>, %arg5: memref<16x16xf32, #tpu.memory_space<vmem>>, %arg6: memref<1x16xf32, #tpu.memory_space<vmem>>, %arg7: memref<1x16x16xf32, #tpu.memory_space<vmem>>) attributes {dimension_semantics = [#tpu.dimension_semantics<parallel>], iteration_bounds = array<i64: 2>, scalar_prefetch = 0 : i64, scratch_operands = 0 : i64, tpu.core_type = #tpu.core_type<tc>, window_params = [{transform_indices = @transform_0, window_bounds = array<i64: 1, 16, 64>}, {transform_indices = @transform_1, window_bounds = array<i64: 1, 16, 16>}, {pipeline_mode = #tpu.pipeline_mode<synchronous>, transform_indices = @transform_2, window_bounds = array<i64: 256, 16>}, {pipeline_mode = #tpu.pipeline_mode<synchronous>, transform_indices = @transform_3, window_bounds = array<i64: 1, 16>}, {pipeline_mode = #tpu.pipeline_mode<synchronous>, transform_indices = @transform_4, window_bounds = array<i64: 16, 16>}, {pipeline_mode = #tpu.pipeline_mode<synchronous>, transform_indices = @transform_5, window_bounds = array<i64: 1, 16>}, {transform_indices = @transform_6, window_bounds = array<i64: 1, 16, 16>}]} {
    %0 = tpu.iota {dimensions = array<i32: 0>} : vector<16x1xi32>
    %c3_i32 = arith.constant 3 : i32
    %1 = vector.broadcast %c3_i32 : i32 to vector<16x1xi32>
    %2 = arith.andi %0, %1 : vector<16x1xi32>
    %c1_i32 = arith.constant 1 : i32
    %3 = vector.broadcast %c1_i32 : i32 to vector<16x1xi32>
    %4 = arith.cmpi sge, %2, %3 : vector<16x1xi32>
    %5 = arith.extui %4 : vector<16x1xi1> to vector<16x1xi32>
    %6 = arith.sitofp %5 : vector<16x1xi32> to vector<16x1xf32>
    %c0 = arith.constant 0 : index
    %c0_0 = arith.constant 0 : index
    %c0_1 = arith.constant 0 : index
    %7 = vector.load %arg1[%c0, %c0_0, %c0_1] : memref<1x16x64xf32, #tpu.memory_space<vmem>>, vector<1x16x64xf32>
    %8 = vector.shape_cast %7 : vector<1x16x64xf32> to vector<16x64xf32>
    %cst = arith.constant 0.000000e+00 : f32
    %9 = vector.broadcast %cst : f32 to vector<1x64xf32>
    %10 = vector.extract_strided_slice %8 {offsets = [0, 0], sizes = [15, 64], strides = [1, 1]} : vector<16x64xf32> to vector<15x64xf32>
    %11 = tpu.concatenate %9, %10 in 0 : vector<1x64xf32>, vector<15x64xf32> -> vector<16x64xf32>
    %12 = vector.broadcast %6 : vector<16x1xf32> to vector<16x64xf32>
    %13 = arith.mulf %11, %12 : vector<16x64xf32>
    %cst_2 = arith.constant 0.000000e+00 : f32
    %14 = vector.broadcast %cst_2 : f32 to vector<4x64xf32>
    %15 = vector.extract_strided_slice %8 {offsets = [0, 0], sizes = [12, 64], strides = [1, 1]} : vector<16x64xf32> to vector<12x64xf32>
    %16 = tpu.concatenate %14, %15 in 0 : vector<4x64xf32>, vector<12x64xf32> -> vector<16x64xf32>
    %cst_3 = arith.constant 0.000000e+00 : f32
    %17 = vector.broadcast %cst_3 : f32 to vector<5x64xf32>
    %18 = vector.extract_strided_slice %8 {offsets = [0, 0], sizes = [11, 64], strides = [1, 1]} : vector<16x64xf32> to vector<11x64xf32>
    %19 = tpu.concatenate %17, %18 in 0 : vector<5x64xf32>, vector<11x64xf32> -> vector<16x64xf32>
    %20 = vector.broadcast %6 : vector<16x1xf32> to vector<16x64xf32>
    %21 = arith.mulf %19, %20 : vector<16x64xf32>
    %22 = tpu.concatenate %8, %13, %16, %21 in 1 : vector<16x64xf32>, vector<16x64xf32>, vector<16x64xf32>, vector<16x64xf32> -> vector<16x256xf32>
    %c0_4 = arith.constant 0 : index
    %c0_5 = arith.constant 0 : index
    %23 = vector.load %arg3[%c0_4, %c0_5] : memref<256x16xf32, #tpu.memory_space<vmem>>, vector<256x16xf32>
    %cst_6 = arith.constant dense<0.000000e+00> : vector<16x16xf32>
    %24 = tpu.matmul %22, %23, %cst_6 {dimension_numbers = #tpu.dot_dimension_numbers<[1], [0], [0], [1], [0, 0, 1, 1], [], []>} : vector<16x256xf32>, vector<256x16xf32>, vector<16x16xf32> -> vector<16x16xf32>
    %c0_7 = arith.constant 0 : index
    %c0_8 = arith.constant 0 : index
    %25 = vector.load %arg4[%c0_7, %c0_8] : memref<1x16xf32, #tpu.memory_space<vmem>>, vector<1x16xf32>
    %26 = vector.broadcast %25 : vector<1x16xf32> to vector<16x16xf32>
    %27 = arith.addf %24, %26 : vector<16x16xf32>
    %cst_9 = arith.constant 0.000000e+00 : f32
    %cst_10 = arith.constant 1.000000e+00 : f32
    %28 = vector.broadcast %cst_9 : f32 to vector<16x16xf32>
    %29 = arith.maximumf %28, %27 : vector<16x16xf32>
    %30 = vector.broadcast %cst_10 : f32 to vector<16x16xf32>
    %31 = arith.minimumf %30, %29 : vector<16x16xf32>
    %c0_11 = arith.constant 0 : index
    %c0_12 = arith.constant 0 : index
    %c0_13 = arith.constant 0 : index
    %32 = vector.load %arg2[%c0_11, %c0_12, %c0_13] : memref<1x16x16xf32, #tpu.memory_space<vmem>>, vector<1x16x16xf32>
    %33 = vector.shape_cast %32 : vector<1x16x16xf32> to vector<16x16xf32>
    %34 = arith.addf %31, %33 : vector<16x16xf32>
    %c0_14 = arith.constant 0 : index
    %c0_15 = arith.constant 0 : index
    %35 = vector.load %arg5[%c0_14, %c0_15] : memref<16x16xf32, #tpu.memory_space<vmem>>, vector<16x16xf32>
    %cst_16 = arith.constant dense<0.000000e+00> : vector<16x16xf32>
    %36 = tpu.matmul %34, %35, %cst_16 {dimension_numbers = #tpu.dot_dimension_numbers<[1], [0], [0], [1], [0, 0, 1, 1], [], []>} : vector<16x16xf32>, vector<16x16xf32>, vector<16x16xf32> -> vector<16x16xf32>
    %c0_17 = arith.constant 0 : index
    %c0_18 = arith.constant 0 : index
    %37 = vector.load %arg6[%c0_17, %c0_18] : memref<1x16xf32, #tpu.memory_space<vmem>>, vector<1x16xf32>
    %38 = vector.broadcast %37 : vector<1x16xf32> to vector<16x16xf32>
    %39 = arith.addf %36, %38 : vector<16x16xf32>
    %cst_19 = arith.constant 0.000000e+00 : f32
    %cst_20 = arith.constant 1.000000e+00 : f32
    %40 = vector.broadcast %cst_19 : f32 to vector<16x16xf32>
    %41 = arith.maximumf %40, %39 : vector<16x16xf32>
    %42 = vector.broadcast %cst_20 : f32 to vector<16x16xf32>
    %43 = arith.minimumf %42, %41 : vector<16x16xf32>
    %c0_21 = arith.constant 0 : index
    %c0_22 = arith.constant 0 : index
    %c0_23 = arith.constant 0 : index
    %44 = vector.load %arg7[%c0_21, %c0_22, %c0_23] : memref<1x16x16xf32, #tpu.memory_space<vmem>>, vector<1x16x16xf32>
    %45 = vector.shape_cast %44 : vector<1x16x16xf32> to vector<16x16xf32>
    %46 = vector.shape_cast %43 : vector<16x16xf32> to vector<1x16x16xf32>
    tpu.vector_store %arg7[%c0_21, %c0_22, %c0_23], %46 {strides = array<i32>} : memref<1x16x16xf32, #tpu.memory_space<vmem>>, vector<1x16x16xf32>,
    return
  }
  func.func @transform_0(%arg0: i32) -> (i32, i32, i32) {
    %c0_i32 = arith.constant 0 : i32
    %c0_i32_0 = arith.constant 0 : i32
    %c0_i32_1 = arith.constant 0 : i32
    return %arg0, %c0_i32, %c0_i32_0 : i32, i32, i32
  }
  func.func @transform_1(%arg0: i32) -> (i32, i32, i32) {
    %c0_i32 = arith.constant 0 : i32
    %c0_i32_0 = arith.constant 0 : i32
    %c0_i32_1 = arith.constant 0 : i32
    return %arg0, %c0_i32, %c0_i32_0 : i32, i32, i32
  }
  func.func @transform_2(%arg0: i32) -> (i32, i32) {
    %c0_i32 = arith.constant 0 : i32
    %c0_i32_0 = arith.constant 0 : i32
    %c0_i32_1 = arith.constant 0 : i32
    return %c0_i32, %c0_i32_0 : i32, i32
  }
  func.func @transform_3(%arg0: i32) -> (i32, i32) {
    %c0_i32 = arith.constant 0 : i32
    %c0_i32_0 = arith.constant 0 : i32
    %c0_i32_1 = arith.constant 0 : i32
    return %c0_i32, %c0_i32_0 : i32, i32
  }
  func.func @transform_4(%arg0: i32) -> (i32, i32) {
    %c0_i32 = arith.constant 0 : i32
    %c0_i32_0 = arith.constant 0 : i32
    %c0_i32_1 = arith.constant 0 : i32
    return %c0_i32, %c0_i32_0 : i32, i32
  }
  func.func @transform_5(%arg0: i32) -> (i32, i32) {
    %c0_i32 = arith.constant 0 : i32
    %c0_i32_0 = arith.constant 0 : i32
    %c0_i32_1 = arith.constant 0 : i32
    return %c0_i32, %c0_i32_0 : i32, i32
  }
  func.func @transform_6(%arg0: i32) -> (i32, i32, i32) {
    %c0_i32 = arith.constant 0 : i32
    %c0_i32_0 = arith.constant 0 : i32
    %c0_i32_1 = arith.constant 0 : i32
    return %arg0, %c0_i32, %c0_i32_0 : i32, i32, i32
  }
}

</mosaic_0001>

<llo_original>
// kernel: mpis_neuro_forward.4
$region0: #{mpis_neuro_forward.4}
  #allocation0 [shape = 'u32[]', space=smem, size = 0x4, offset = 0x4, fixed_abs, tag = 'smem constant byte address 0x4 - core index']
  #allocation1 [shape = 'u32[144,128]{1,0:T(1,128)}', space=vmem, size = 0x12000, scoped, tag = 'internal scratch']
  #allocation2 [shape = 'f32[16,32]{1,0:T(8,128)}', space=vmem, size = 0x2000, scoped, tag = 'scratch operand']
  #allocation3 [shape = 'f32[16,16]{1,0:T(8,128)}', space=vmem, size = 0x2000, scoped, tag = 'scratch operand']
  #allocation4 [shape = 'f32[16,16]{1,0:T(8,128)}', space=vmem, size = 0x2000, scoped, tag = 'scratch operand']
  #allocation5 [shape = 'f32[16,16]{1,0:T(8,128)}', space=vmem, size = 0x2000, scoped, tag = 'scratch operand']
  #allocation6 [shape = 'f32[16,16]{1,0:T(8,128)}', space=vmem, size = 0x2000, scoped, tag = 'scratch operand']
  %s0 = inlined_call_operand.vmem [shape: f32[2,16,16], index: 0, kind: input, shape index: {}]
  %s1 = inlined_call_operand.vmem [shape: f32[144,32], index: 1, kind: input, shape index: {}]
  %s2 = inlined_call_operand.vmem [shape: f32[1,32], index: 2, kind: input, shape index: {}]
  %s3 = inlined_call_operand.vmem [shape: f32[64,32], index: 3, kind: input, shape index: {}]
  %s4 = inlined_call_operand.vmem [shape: f32[128,16], index: 4, kind: input, shape index: {}]
  %s5 = inlined_call_operand.vmem [shape: f32[1,16], index: 5, kind: input, shape index: {}]
  %s6 = inlined_call_operand.vmem [shape: f32[144,16], index: 6, kind: input, shape index: {}]
  %s7 = inlined_call_operand.vmem [shape: f32[1,16], index: 7, kind: input, shape index: {}]
  %s8 = inlined_call_operand.vmem [shape: f32[2,16,16], index: 8, kind: output, shape index: {}]
  %s9 = sld [smem:[#allocation0]]
  $region65: #{mpis_neuro_forward.4} parent=0
    _
  %s11 = ssub.s32 1, %s9
  %s12 = scalar_select 0, %s11, %s9
  loop: start=0, step=1, limit=4
  $region2: #{mpis_neuro_forward.4} parent=0 // loop_pre_header
    _
  $region3: #{mpis_neuro_forward.4} parent=0 // loop_header
    %s14 = sphi 0, %s18
    %p15 = scmp.ge.s32.totalorder %s14, 4
    %s24 = sphi 0, %s26
    %s27 = sphi 0, %s24
    %s28 = sphi 0, %s27
    %s44 = sphi 0, %s28
    %s48 = sphi 0, %s48
    %s50 = sphi 0, %s48
    %s51 = sphi 0, %s50
    %s65 = sphi 0, %s51
    %s69 = sphi 0, %s69
    %s71 = sphi 0, %s69
    %s72 = sphi 0, %s71
    %s86 = sphi 0, %s72
    %s90 = sphi 0, %s90
    %s92 = sphi 0, %s90
    %s93 = sphi 0, %s92
    %s107 = sphi 0, %s93
    %s111 = sphi 0, %s111
    %s113 = sphi 0, %s111
    %s114 = sphi 0, %s113
    %s128 = sphi 0, %s114
    %s132 = sphi 0, %s132
    %s134 = sphi 0, %s132
    %s135 = sphi 0, %s134
    %s149 = sphi 0, %s135
    %s153 = sphi 0, %s153
    %s155 = sphi 0, %s153
    %s156 = sphi 0, %s155
    %s170 = sphi 0, %s156
    %s174 = sphi 0, %s174
    %s176 = sphi 0, %s174
    %s177 = sphi 0, %s176
    %s191 = sphi 0, %s177
    %s197 = sphi 0, %s199
    %s200 = sphi 0, %s197
    %s201 = sphi 0, %s200
    %s217 = sphi 0, %s201
  $region4: #{mpis_neuro_forward.4} parent=0 // loop_header_branch
    %17 = sbr.rel (%p15) target = $region8
  $region5: #{mpis_neuro_forward.4} parent=0 // loop_body
    %s19 = ssub.s32 %s14, 1
    %s20 = ssub.s32 %s14, 2
    %s21 = sadd.s32 %s14, 1
    %s22 = ssub.s32 %s14, %s21
    %p23 = scmp.eq.s32.totalorder %s22, 0
    %s25 = sadd.s32 %s24, 1
    %s26 = scalar_select %p23, %s24, %s25
    %p29 = pneg %p23
    %p30 = scmp.eq.s32.totalorder %s14, 1
    %p31 = por %p29, %p30
    %p32 = scmp.ne.s32.totalorder %s24, %s27
    %p33 = scmp.eq.s32.totalorder %s14, 0
    %p34 = por %p32, %p33
    %p35 = scmp.ne.s32.totalorder %s24, %s27
    %p36 = scmp.eq.s32.totalorder %s19, 1
    %p37 = por %p35, %p36
    %p38 = scmp.ne.s32.totalorder %s27, %s28
    %p39 = scmp.eq.s32.totalorder %s19, 0
    %p40 = por %p38, %p39
    %p41 = scmp.ne.s32.totalorder %s27, %s28
    %p42 = scmp.eq.s32.totalorder %s20, 1
    %p43 = por %p41, %p42
    %p45 = scmp.ne.s32.totalorder %s28, %s44
    %p46 = scmp.eq.s32.totalorder %s20, 0
    %p47 = por %p45, %p46
    %s49 = sadd.s32 %s48, 1
    %p52 = scmp.eq.s32.totalorder %s14, 1
    %p53 = scmp.ne.s32.totalorder %s48, %s50
    %p54 = scmp.eq.s32.totalorder %s14, 0
    %p55 = por %p53, %p54
    %p56 = scmp.ne.s32.totalorder %s48, %s50
    %p57 = scmp.eq.s32.totalorder %s19, 1
    %p58 = por %p56, %p57
    %p59 = scmp.ne.s32.totalorder %s50, %s51
    %p60 = scmp.eq.s32.totalorder %s19, 0
    %p61 = por %p59, %p60
    %p62 = scmp.ne.s32.totalorder %s50, %s51
    %p63 = scmp.eq.s32.totalorder %s20, 1
    %p64 = por %p62, %p63
    %p66 = scmp.ne.s32.totalorder %s51, %s65
    %p67 = scmp.eq.s32.totalorder %s20, 0
    %p68 = por %p66, %p67
    %s70 = sadd.s32 %s69, 1
    %p73 = scmp.eq.s32.totalorder %s14, 1
    %p74 = scmp.ne.s32.totalorder %s69, %s71
    %p75 = scmp.eq.s32.totalorder %s14, 0
    %p76 = por %p74, %p75
    %p77 = scmp.ne.s32.totalorder %s69, %s71
    %p78 = scmp.eq.s32.totalorder %s19, 1
    %p79 = por %p77, %p78
    %p80 = scmp.ne.s32.totalorder %s71, %s72
    %p81 = scmp.eq.s32.totalorder %s19, 0
    %p82 = por %p80, %p81
    %p83 = scmp.ne.s32.totalorder %s71, %s72
    %p84 = scmp.eq.s32.totalorder %s20, 1
    %p85 = por %p83, %p84
    %p87 = scmp.ne.s32.totalorder %s72, %s86
    %p88 = scmp.eq.s32.totalorder %s20, 0
    %p89 = por %p87, %p88
    %s91 = sadd.s32 %s90, 1
    %p94 = scmp.eq.s32.totalorder %s14, 1
    %p95 = scmp.ne.s32.totalorder %s90, %s92
    %p96 = scmp.eq.s32.totalorder %s14, 0
    %p97 = por %p95, %p96
    %p98 = scmp.ne.s32.totalorder %s90, %s92
    %p99 = scmp.eq.s32.totalorder %s19, 1
    %p100 = por %p98, %p99
    %p101 = scmp.ne.s32.totalorder %s92, %s93
    %p102 = scmp.eq.s32.totalorder %s19, 0
    %p103 = por %p101, %p102
    %p104 = scmp.ne.s32.totalorder %s92, %s93
    %p105 = scmp.eq.s32.totalorder %s20, 1
    %p106 = por %p104, %p105
    %p108 = scmp.ne.s32.totalorder %s93, %s107
    %p109 = scmp.eq.s32.totalorder %s20, 0
    %p110 = por %p108, %p109
    %s112 = sadd.s32 %s111, 1
    %p115 = scmp.eq.s32.totalorder %s14, 1
    %p116 = scmp.ne.s32.totalorder %s111, %s113
    %p117 = scmp.eq.s32.totalorder %s14, 0
    %p118 = por %p116, %p117
    %p119 = scmp.ne.s32.totalorder %s111, %s113
    %p120 = scmp.eq.s32.totalorder %s19, 1
    %p121 = por %p119, %p120
    %p122 = scmp.ne.s32.totalorder %s113, %s114
    %p123 = scmp.eq.s32.totalorder %s19, 0
    %p124 = por %p122, %p123
    %p125 = scmp.ne.s32.totalorder %s113, %s114
    %p126 = scmp.eq.s32.totalorder %s20, 1
    %p127 = por %p125, %p126
    %p129 = scmp.ne.s32.totalorder %s114, %s128
    %p130 = scmp.eq.s32.totalorder %s20, 0
    %p131 = por %p129, %p130
    %s133 = sadd.s32 %s132, 1
    %p136 = scmp.eq.s32.totalorder %s14, 1
    %p137 = scmp.ne.s32.totalorder %s132, %s134
    %p138 = scmp.eq.s32.totalorder %s14, 0
    %p139 = por %p137, %p138
    %p140 = scmp.ne.s32.totalorder %s132, %s134
    %p141 = scmp.eq.s32.totalorder %s19, 1
    %p142 = por %p140, %p141
    %p143 = scmp.ne.s32.totalorder %s134, %s135
    %p144 = scmp.eq.s32.totalorder %s19, 0
    %p145 = por %p143, %p144
    %p146 = scmp.ne.s32.totalorder %s134, %s135
    %p147 = scmp.eq.s32.totalorder %s20, 1
    %p148 = por %p146, %p147
    %p150 = scmp.ne.s32.totalorder %s135, %s149
    %p151 = scmp.eq.s32.totalorder %s20, 0
    %p152 = por %p150, %p151
    %s154 = sadd.s32 %s153, 1
    %p157 = scmp.eq.s32.totalorder %s14, 1
    %p158 = scmp.ne.s32.totalorder %s153, %s155
    %p159 = scmp.eq.s32.totalorder %s14, 0
    %p160 = por %p158, %p159
    %p161 = scmp.ne.s32.totalorder %s153, %s155
    %p162 = scmp.eq.s32.totalorder %s19, 1
    %p163 = por %p161, %p162
    %p164 = scmp.ne.s32.totalorder %s155, %s156
    %p165 = scmp.eq.s32.totalorder %s19, 0
    %p166 = por %p164, %p165
    %p167 = scmp.ne.s32.totalorder %s155, %s156
    %p168 = scmp.eq.s32.totalorder %s20, 1
    %p169 = por %p167, %p168
    %p171 = scmp.ne.s32.totalorder %s156, %s170
    %p172 = scmp.eq.s32.totalorder %s20, 0
    %p173 = por %p171, %p172
    %s175 = sadd.s32 %s174, 1
    %p178 = scmp.eq.s32.totalorder %s14, 1
    %p179 = scmp.ne.s32.totalorder %s174, %s176
    %p180 = scmp.eq.s32.totalorder %s14, 0
    %p181 = por %p179, %p180
    %p182 = scmp.ne.s32.totalorder %s174, %s176
    %p183 = scmp.eq.s32.totalorder %s19, 1
    %p184 = por %p182, %p183
    %p185 = scmp.ne.s32.totalorder %s176, %s177
    %p186 = scmp.eq.s32.totalorder %s19, 0
    %p187 = por %p185, %p186
    %p188 = scmp.ne.s32.totalorder %s176, %s177
    %p189 = scmp.eq.s32.totalorder %s20, 1
    %p190 = por %p188, %p189
    %p192 = scmp.ne.s32.totalorder %s177, %s191
    %p193 = scmp.eq.s32.totalorder %s20, 0
    %p194 = por %p192, %p193
    %s195 = ssub.s32 %s14, %s21
    %p196 = scmp.eq.s32.totalorder %s195, 0
    %s198 = sadd.s32 %s197, 1
    %s199 = scalar_select %p196, %s197, %s198
    %p202 = pneg %p196
    %p203 = scmp.eq.s32.totalorder %s14, 1
    %p204 = por %p202, %p203
    %p205 = scmp.ne.s32.totalorder %s197, %s200
    %p206 = scmp.eq.s32.totalorder %s14, 0
    %p207 = por %p205, %p206
    %p208 = scmp.ne.s32.totalorder %s197, %s200
    %p209 = scmp.eq.s32.totalorder %s19, 1
    %p210 = por %p208, %p209
    %p211 = scmp.ne.s32.totalorder %s200, %s201
    %p212 = scmp.eq.s32.totalorder %s19, 0
    %p213 = por %p211, %p212
    %p214 = scmp.ne.s32.totalorder %s200, %s201
    %p215 = scmp.eq.s32.totalorder %s20, 1
    %p216 = por %p214, %p215
    %p218 = scmp.ne.s32.totalorder %s201, %s217
    %p219 = scmp.eq.s32.totalorder %s20, 0
    %p220 = por %p218, %p219
    %p221 = scmp.le.s32.totalorder 1, %s14
    %p222 = scmp.lt.s32.totalorder %s14, 3
    %p223 = pnand %p221, %p222
    %p224 = pneg %p223
    // Predicated region
    $region9: #{mpis_neuro_forward.4} parent=5 // pred_check
      _
    $region10: #{mpis_neuro_forward.4} parent=5 // pred_check_branch
      %226 = sbr.rel (%p223) target = $region12
    $region11: #{mpis_neuro_forward.4} parent=5 // pred_region
      %s227 = ssub.s32 %s14, 1
      // Predicated region
      $region13: #{mpis_neuro_forward.4} parent=11 // pred_check
        %p228 = pneg %p61
      $region14: #{mpis_neuro_forward.4} parent=11 // pred_check_branch
        %230 = sbr.rel (%p228) target = $region16
      $region15: #{mpis_neuro_forward.4} parent=11 // pred_region
        _
      $region16: #{mpis_neuro_forward.4} parent=11 // pred_fallthru
        _
      // Predicated region
      $region17: #{mpis_neuro_forward.4} parent=11 // pred_check
        %p231 = pneg %p82
      $region18: #{mpis_neuro_forward.4} parent=11 // pred_check_branch
        %233 = sbr.rel (%p231) target = $region20
      $region19: #{mpis_neuro_forward.4} parent=11 // pred_region
        _
      $region20: #{mpis_neuro_forward.4} parent=11 // pred_fallthru
        _
      // Predicated region
      $region21: #{mpis_neuro_forward.4} parent=11 // pred_check
        %p234 = pneg %p103
      $region22: #{mpis_neuro_forward.4} parent=11 // pred_check_branch
        %236 = sbr.rel (%p234) target = $region24
      $region23: #{mpis_neuro_forward.4} parent=11 // pred_region
        _
      $region24: #{mpis_neuro_forward.4} parent=11 // pred_fallthru
        _
      // Predicated region
      $region25: #{mpis_neuro_forward.4} parent=11 // pred_check
        %p237 = pneg %p124
      $region26: #{mpis_neuro_forward.4} parent=11 // pred_check_branch
        %239 = sbr.rel (%p237) target = $region28
      $region27: #{mpis_neuro_forward.4} parent=11 // pred_region
        _
      $region28: #{mpis_neuro_forward.4} parent=11 // pred_fallthru
        _
      // Predicated region
      $region29: #{mpis_neuro_forward.4} parent=11 // pred_check
        %p240 = pneg %p145
      $region30: #{mpis_neuro_forward.4} parent=11 // pred_check_branch
        %242 = sbr.rel (%p240) target = $region32
      $region31: #{mpis_neuro_forward.4} parent=11 // pred_region
        _
      $region32: #{mpis_neuro_forward.4} parent=11 // pred_fallthru
        _
      // Predicated region
      $region33: #{mpis_neuro_forward.4} parent=11 // pred_check
        %p243 = pneg %p166
      $region34: #{mpis_neuro_forward.4} parent=11 // pred_check_branch
        %245 = sbr.rel (%p243) target = $region36
      $region35: #{mpis_neuro_forward.4} parent=11 // pred_region
        _
      $region36: #{mpis_neuro_forward.4} parent=11 // pred_fallthru
        _
      // Predicated region
      $region37: #{mpis_neuro_forward.4} parent=11 // pred_check
        %p246 = pneg %p187
      $region38: #{mpis_neuro_forward.4} parent=11 // pred_check_branch
        %248 = sbr.rel (%p246) target = $region40
      $region39: #{mpis_neuro_forward.4} parent=11 // pred_region
        _
      $region40: #{mpis_neuro_forward.4} parent=11 // pred_fallthru
        _
    $region12: #{mpis_neuro_forward.4} parent=5 // pred_fallthru
      _
    %p249 = scmp.lt.s32.totalorder %s14, 2
    // Predicated region
    $region41: #{mpis_neuro_forward.4} parent=5 // pred_check
      %p250 = pneg %p249
    $region42: #{mpis_neuro_forward.4} parent=5 // pred_check_branch
      %252 = sbr.rel (%p250) target = $region44
    $region43: #{mpis_neuro_forward.4} parent=5 // pred_region
      // Predicated region
      $region45: #{mpis_neuro_forward.4} parent=43 // pred_check
        %p253 = pneg %p34
      $region46: #{mpis_neuro_forward.4} parent=43 // pred_check_branch
        %255 = sbr.rel (%p253) target = $region48
      $region47: #{mpis_neuro_forward.4} parent=43 // pred_region
        %p256 = scmp.lt.s32.totalorder %s14, 1
        %s257 = scalar_select %p256, %s14, 1
        %s258 = smul.addr %s257, 2
        %s259 = smul.addr %s258, 8
        %s260 = scalar_lea.vmem %s0, %s259
      $region48: #{mpis_neuro_forward.4} parent=43 // pred_fallthru
        _
    $region44: #{mpis_neuro_forward.4} parent=5 // pred_fallthru
      _
    %p261 = scmp.le.s32.totalorder 1, %s14
    %p262 = scmp.lt.s32.totalorder %s14, 3
    %p263 = pnand %p261, %p262
    %p264 = pneg %p263
    // Predicated region
    $region49: #{mpis_neuro_forward.4} parent=5 // pred_check
      _
    $region50: #{mpis_neuro_forward.4} parent=5 // pred_check_branch
      %266 = sbr.rel (%p263) target = $region52
    $region51: #{mpis_neuro_forward.4} parent=5 // pred_region
      %s267 = ssub.s32 %s14, 1
      %p268 = scmp.lt.s32.totalorder %s19, 1
      %s269 = scalar_select %p268, %s19, 1
      %s270 = smul.addr %s269, 2
      %s271 = smul.addr %s270, 8
      %s272 = scalar_lea.vmem %s0, %s271
      %p273 = pneg %p40
      %p274 = pneg %p37
      %p275 = pneg %p61
      %p276 = pneg %p58
      %p277 = pneg %p82
      %p278 = pneg %p79
      %p279 = pneg %p103
      %p280 = pneg %p100
      %p281 = pneg %p124
      %p282 = pneg %p121
      %p283 = pneg %p145
      %p284 = pneg %p142
      %p285 = pneg %p166
      %p286 = pneg %p163
      %p287 = pneg %p187
      %p288 = pneg %p184
      %p289 = pneg %p213
      %p290 = pneg %p210
      %p291 = scmp.lt.s32.totalorder %s19, 1
      %s292 = scalar_select %p291, %s19, 1
      %s293 = smul.addr %s292, 2
      %s294 = smul.addr %s293, 8
      %s295 = scalar_lea.vmem %s8, %s294
      %p296 = scmp.lt.s32.totalorder %s19, 1
      %s297 = scalar_select %p296, %s19, 1
      %s298 = smul.addr %s297, 2
      %s299 = smul.addr %s298, 8
      %s300 = scalar_lea.vmem %s0, %s299
      %p301 = scmp.lt.s32.totalorder %s19, 1
      %s302 = scalar_select %p301, %s19, 1
      %s303 = smul.addr %s302, 2
      %s304 = smul.addr %s303, 8
      %s305 = scalar_lea.vmem %s8, %s304
      %v306 = vlaneseq
      %v307 = vshrl.u32 %v306, 7
      %v308 = vadd.s32 %v307, 8
      %v309 = vand.u32 %v307, 3
      %v310 = vand.u32 %v308, 3
      %vm311 = vcmp.ge.s32.totalorder %v309, 1
      %vm312 = vcmp.ge.s32.totalorder %v310, 1
      %v313 = vsel %vm311, 1, 0
      %v314 = vsel %vm312, 1, 0
      %v315 = vcvt.s32.f32 %v313
      %v316 = vcvt.s32.f32 %v314
      %vm317 = vcmp.le.s32.totalorder %v309, 2
      %vm318 = vcmp.le.s32.totalorder %v310, 2
      %v319 = vsel %vm317, 1, 0
      %v320 = vsel %vm318, 1, 0
      %v321 = vcvt.s32.f32 %v319
      %v322 = vcvt.s32.f32 %v320
      %v323 = vld [vmem:[%s300] sm:$0xff]
      %v324 = vld [vmem:[%s300 + $0x8] sm:$0xff]
      %vm327 = vcmask 1042432
      %v328 = vrot.slane %v323, 5
      %v329 = vrot.slane %v324, 5
      %v330 = vsel %vm327, %v328, %v329
      %v333 = vsel %vm327, %v329, 0.0
      %v334 = vmul.f32 %v330, %v321
      %v335 = vmul.f32 %v333, %v322
      %vm336 = vcmask 1043456
      %v337 = vrot.slane %v323, 4
      %v338 = vrot.slane %v324, 4
      %v339 = vsel %vm336, %v337, %v338
      %v341 = vsel %vm336, %v338, 0.0
      %vm342 = vcmask 1044480
      %v343 = vrot.slane %v323, 3
      %v344 = vrot.slane %v324, 3
      %v345 = vsel %vm342, %v343, %v344
      %v348 = vsel %vm342, %v344, 0.0
      %v349 = vmul.f32 %v345, %v315
      %v350 = vmul.f32 %v348, %v316
      %vm351 = vcmask 1046528
      %v352 = vrot.slane %v323, 1
      %v353 = vrot.slane %v324, 1
      %v354 = vsel %vm351, %v352, %v353
      %v357 = vsel %vm351, %v353, 0.0
      %v358 = vmul.f32 %v354, %v321
      %v359 = vmul.f32 %v357, %v322
      %vm360 = vcmask 1040384
      %v361 = vrot.slane %v323, 7
      %v362 = vrot.slane %v324, 7
      %v363 = vsel %vm360, %v361, %v362
      %v366 = vsel %vm360, 0.0, %v361
      %v367 = vmul.f32 %v366, %v315
      %v368 = vmul.f32 %v363, %v316
      %v370 = vsel %vm327, 0.0, %v328
      %v371 = vmul.f32 %v370, %v321
      %v372 = vmul.f32 %v330, %v322
      %v374 = vsel %vm336, 0.0, %v337
      %v376 = vsel %vm342, 0.0, %v343
      %v377 = vmul.f32 %v376, %v315
      %v378 = vmul.f32 %v345, %v316
      %380 = vrot.lane.b32.xlu0 %v339, 16
      %v381 = vpop.permute.xlu0 %380
      %382 = vrot.lane.b32.xlu0 %v341, 16
      %v383 = vpop.permute.xlu0 %382
      %388 = vrot.lane.b32.xlu0 %v349, 32
      %v389 = vpop.permute.xlu0 %388
      %390 = vrot.lane.b32.xlu0 %v350, 32
      %v391 = vpop.permute.xlu0 %390
      %396 = vrot.lane.b32.xlu0 %v358, 48
      %v397 = vpop.permute.xlu0 %396
      %398 = vrot.lane.b32.xlu0 %v359, 48
      %v399 = vpop.permute.xlu0 %398
      %402 = vrot.lane.b32.xlu0 %v323, 64
      %v403 = vpop.permute.xlu0 %402
      %404 = vrot.lane.b32.xlu0 %v324, 64
      %v405 = vpop.permute.xlu0 %404
      %410 = vrot.lane.b32.xlu0 %v367, 80
      %v411 = vpop.permute.xlu0 %410
      %412 = vrot.lane.b32.xlu0 %v368, 80
      %v413 = vpop.permute.xlu0 %412
      %418 = vrot.lane.b32.xlu0 %v371, 96
      %v419 = vpop.permute.xlu0 %418
      %420 = vrot.lane.b32.xlu0 %v372, 96
      %v421 = vpop.permute.xlu0 %420
      %425 = vrot.lane.b32.xlu0 %v374, 112
      %v426 = vpop.permute.xlu0 %425
      %427 = vrot.lane.b32.xlu0 %v339, 112
      %v428 = vpop.permute.xlu0 %427
      %vm431 = vcmask 130048
      %v432 = vsel %vm431, %v334, %v381
      %v433 = vsel %vm431, %v335, %v383
      %vm434 = vcmask 261120
      %v435 = vsel %vm434, %v432, %v389
      %v436 = vsel %vm434, %v433, %v391
      %vm437 = vcmask 392192
      %v438 = vsel %vm437, %v435, %v397
      %v439 = vsel %vm437, %v436, %v399
      %vm440 = vcmask 523264
      %v441 = vsel %vm440, %v438, %v403
      %v442 = vsel %vm440, %v439, %v405
      %vm443 = vcmask 654336
      %v444 = vsel %vm443, %v441, %v411
      %v445 = vsel %vm443, %v442, %v413
      %vm446 = vcmask 785408
      %v447 = vsel %vm446, %v444, %v419
      %v448 = vsel %vm446, %v445, %v421
      %vm449 = vcmask 916480
      %v450 = vsel %vm449, %v447, %v426
      %v451 = vsel %vm449, %v448, %v428
      %v452 = vld [vmem:[%s1] sm:$0xff]
      %v453 = vld [vmem:[%s1 + $0x8] sm:$0xff]
      %v454 = vld [vmem:[%s1 + $0x10] sm:$0xff]
      %v455 = vld [vmem:[%s1 + $0x18] sm:$0xff]
      %v456 = vld [vmem:[%s1 + $0x20] sm:$0xff]
      %v457 = vld [vmem:[%s1 + $0x28] sm:$0xff]
      %v458 = vld [vmem:[%s1 + $0x30] sm:$0xff]
      %v459 = vld [vmem:[%s1 + $0x38] sm:$0xff]
      %v460 = vld [vmem:[%s1 + $0x40] sm:$0xff]
      %v461 = vld [vmem:[%s1 + $0x48] sm:$0xff]
      %v462 = vld [vmem:[%s1 + $0x50] sm:$0xff]
      %v463 = vld [vmem:[%s1 + $0x58] sm:$0xff]
      %v464 = vld [vmem:[%s1 + $0x60] sm:$0xff]
      %v465 = vld [vmem:[%s1 + $0x68] sm:$0xff]
      %v466 = vld [vmem:[%s1 + $0x70] sm:$0xff]
      %v467 = vld [vmem:[%s1 + $0x78] sm:$0xff]
      %v468 = vld [vmem:[%s1 + $0x80] sm:$0xff]
      %v469 = vld [vmem:[%s1 + $0x88] sm:$0xff]
      %v470 = vld [vmem:[%s2] sm:$0x1]
      %v472 = vlaneseq
      %v473 = vshrl.u32 %v472, 7
      %v474 = vsub.s32 0, %v473
      %v475 = vrot.slane %v470, %v474
      %v478 = vsel %vm431, %v377, 0
      %v481 = vsel %vm431, %v378, 0
      %483 = vmatprep.subr.mxu0 0.0
      %484 = vmatpush1.msra.mxu0 %v452
      %485 = vmatprep.subr.mxu0 0.0
      %486 = vmatpush1.msra.mxu0 %v453
      %487 = vmatprep.subr.mxu0 0.0
      %488 = vmatpush1.msra.mxu0 %v454
      %489 = vmatprep.subr.mxu0 0.0
      %490 = vmatpush1.msra.mxu0 %v455
      %491 = vmatprep.subr.mxu0 0.0
      %492 = vmatpush1.msra.mxu0 %v456
      %493 = vmatprep.subr.mxu0 0.0
      %494 = vmatpush1.msra.mxu0 %v457
      %495 = vmatprep.subr.mxu0 0.0
      %496 = vmatpush1.msra.mxu0 %v458
      %497 = vmatprep.subr.mxu0 0.0
      %498 = vmatpush1.msra.mxu0 %v459
      %499 = vmatprep.subr.mxu0 0.0
      %500 = vmatpush1.msra.mxu0 %v460
      %501 = vmatprep.subr.mxu0 0.0
      %502 = vmatpush1.msra.mxu0 %v461
      %503 = vmatprep.subr.mxu0 0.0
      %504 = vmatpush1.msra.mxu0 %v462
      %505 = vmatprep.subr.mxu0 0.0
      %506 = vmatpush1.msra.mxu0 %v463
      %507 = vmatprep.subr.mxu0 0.0
      %508 = vmatpush1.msra.mxu0 %v464
      %509 = vmatprep.subr.mxu0 0.0
      %510 = vmatpush1.msra.mxu0 %v465
      %511 = vmatprep.subr.mxu0 0.0
      %512 = vmatpush1.msra.mxu0 %v466
      %513 = vmatprep.subr.mxu0 0.0
      %514 = vmatpush1.msra.mxu0 %v467
      %515 = vmatprep.subr.mxu0 0.0
      %516 = vmatpush1.msra.mxu0 %v468
      %517 = vmatprep.subr.mxu0 0.0
      %518 = vmatpush1.msra.mxu0 %v469
      %519 = vmatprep.subr.mxu0 0.0
      %520 = vmatpush1.msra.mxu0 0.0
      %521 = vmatprep.subr.mxu0 0.0
      %522 = vmatpush1.msra.mxu0 0.0
      %523 = vmatprep.subr.mxu0 0.0
      %524 = vmatpush1.msra.mxu0 0.0
      %525 = vmatprep.subr.mxu0 0.0
      %526 = vmatpush1.msra.mxu0 0.0
      %527 = vmatprep.subr.mxu0 0.0
      %528 = vmatpush1.msra.mxu0 0.0
      %529 = vmatprep.subr.mxu0 0.0
      %530 = vmatpush1.msra.mxu0 0.0
      %531 = vmatprep.subr.mxu0 0.0
      %532 = vmatpush1.msra.mxu0 0.0
      %533 = vmatprep.subr.mxu0 0.0
      %534 = vmatpush1.msra.mxu0 0.0
      %535 = vmatprep.subr.mxu0 0.0
      %536 = vmatpush1.msra.mxu0 0.0
      %537 = vmatprep.subr.mxu0 0.0
      %538 = vmatpush1.msra.mxu0 0.0
      %539 = vmatprep.subr.mxu0 0.0
      %540 = vmatpush1.msra.mxu0 0.0
      %541 = vmatprep.subr.mxu0 0.0
      %542 = vmatpush1.msra.mxu0 0.0
      %543 = vmatprep.subr.mxu0 0.0
      %544 = vmatpush1.msra.mxu0 0.0
      %545 = vmatprep.subr.mxu0 0.0
      %546 = vmatpush1.msra.mxu0 0.0
      %547 = vmatprep.mubr.f32.mxu0 %v478
      %548 = vmatmul.mubr.f32.gmra.mrb[0].mxu0 %v450
      %v549 = vpop.f32.mrb[0].mxu0
      %v550 = vadd.f32 %v475, %v549
      %v551 = vpop.f32.mrb[0].mxu0
      %552 = vmatprep.mubr.f32.mxu0 %v481
      %553 = vmatmul.mubr.f32.gmra.mrb[0].mxu0 %v451
      %v554 = vpop.f32.mrb[0].mxu0
      %v555 = vadd.f32 %v475, %v554
      %v556 = vpop.f32.mrb[0].mxu0
      %557 = vdwg.mxu0
      %v558 = vld [vmem:[%s3] sm:$0xff]
      %v559 = vld [vmem:[%s3 + $0x8] sm:$0xff]
      %v560 = vld [vmem:[%s3 + $0x10] sm:$0xff]
      %v561 = vld [vmem:[%s3 + $0x18] sm:$0xff]
      %v562 = vld [vmem:[%s3 + $0x20] sm:$0xff]
      %v563 = vld [vmem:[%s3 + $0x28] sm:$0xff]
      %v564 = vld [vmem:[%s3 + $0x30] sm:$0xff]
      %v565 = vld [vmem:[%s3 + $0x38] sm:$0xff]
      %v566 = vld [vmem:[%s4] sm:$0xff]
      %v567 = vld [vmem:[%s4 + $0x8] sm:$0xff]
      %v568 = vld [vmem:[%s4 + $0x10] sm:$0xff]
      %v569 = vld [vmem:[%s4 + $0x18] sm:$0xff]
      %v570 = vld [vmem:[%s4 + $0x20] sm:$0xff]
      %v571 = vld [vmem:[%s4 + $0x28] sm:$0xff]
      %v572 = vld [vmem:[%s4 + $0x30] sm:$0xff]
      %v573 = vld [vmem:[%s4 + $0x38] sm:$0xff]
      %v574 = vld [vmem:[%s4 + $0x40] sm:$0xff]
      %v575 = vld [vmem:[%s4 + $0x48] sm:$0xff]
      %v576 = vld [vmem:[%s4 + $0x50] sm:$0xff]
      %v577 = vld [vmem:[%s4 + $0x58] sm:$0xff]
      %v578 = vld [vmem:[%s4 + $0x60] sm:$0xff]
      %v579 = vld [vmem:[%s4 + $0x68] sm:$0xff]
      %v580 = vld [vmem:[%s4 + $0x70] sm:$0xff]
      %v581 = vld [vmem:[%s4 + $0x78] sm:$0xff]
      %v582 = vld [vmem:[%s5] sm:$0x1]
      %v583 = vld [vmem:[%s6] sm:$0xff]
      %v584 = vld [vmem:[%s6 + $0x8] sm:$0xff]
      %v585 = vld [vmem:[%s6 + $0x10] sm:$0xff]
      %v586 = vld [vmem:[%s6 + $0x18] sm:$0xff]
      %v587 = vld [vmem:[%s6 + $0x20] sm:$0xff]
      %v588 = vld [vmem:[%s6 + $0x28] sm:$0xff]
      %v589 = vld [vmem:[%s6 + $0x30] sm:$0xff]
      %v590 = vld [vmem:[%s6 + $0x38] sm:$0xff]
      %v591 = vld [vmem:[%s6 + $0x40] sm:$0xff]
      %v592 = vld [vmem:[%s6 + $0x48] sm:$0xff]
      %v593 = vld [vmem:[%s6 + $0x50] sm:$0xff]
      %v594 = vld [vmem:[%s6 + $0x58] sm:$0xff]
      %v595 = vld [vmem:[%s6 + $0x60] sm:$0xff]
      %v596 = vld [vmem:[%s6 + $0x68] sm:$0xff]
      %v597 = vld [vmem:[%s6 + $0x70] sm:$0xff]
      %v598 = vld [vmem:[%s6 + $0x78] sm:$0xff]
      %v599 = vld [vmem:[%s6 + $0x80] sm:$0xff]
      %v600 = vld [vmem:[%s6 + $0x88] sm:$0xff]
      %v601 = vld [vmem:[%s7] sm:$0x1]
      %602 = vst.msk [vmem:[#allocation2] sm:$0xff] %vm434, 0.0
      %603 = vst.msk [vmem:[#allocation2 + $0x8] sm:$0xff] %vm434, 0.0
      %604 = vst.msk [vmem:[#allocation3] sm:$0xff] %vm431, 0.0
      %605 = vst.msk [vmem:[#allocation3 + $0x8] sm:$0xff] %vm431, 0.0
      %606 = vst.msk [vmem:[#allocation4] sm:$0xff] %vm431, 0.0
      %607 = vst.msk [vmem:[#allocation4 + $0x8] sm:$0xff] %vm431, 0.0
      %608 = vst.msk [vmem:[#allocation5] sm:$0xff] %vm431, 0.0
      %609 = vst.msk [vmem:[#allocation5 + $0x8] sm:$0xff] %vm431, 0.0
      %610 = vst.msk [vmem:[#allocation6] sm:$0xff] %vm431, 0.0
      %611 = vst.msk [vmem:[#allocation6 + $0x8] sm:$0xff] %vm431, 0.0
      %v612 = vld [vmem:[#allocation5] sm:$0xff]
      %v613 = vld [vmem:[#allocation5 + $0x8] sm:$0xff]
      %v616 = vrot.slane %v612, 1
      %v617 = vrot.slane %v613, 1
      %v618 = vsel %vm351, %v616, %v617
      %v621 = vsel %vm351, %v617, 0.0
      %v622 = vmul.f32 %v618, %v321
      %v623 = vmul.f32 %v621, %v322
      %v624 = vrot.slane %v612, 4
      %v625 = vrot.slane %v613, 4
      %v626 = vsel %vm336, %v624, %v625
      %v628 = vsel %vm336, %v625, 0.0
      %v629 = vrot.slane %v612, 5
      %v630 = vrot.slane %v613, 5
      %v631 = vsel %vm327, %v629, %v630
      %v634 = vsel %vm327, %v630, 0.0
      %v635 = vmul.f32 %v631, %v321
      %v636 = vmul.f32 %v634, %v322
      %639 = vrot.lane.b32.xlu0 %v622, 16
      %v640 = vpop.permute.xlu0 %639
      %641 = vrot.lane.b32.xlu0 %v623, 16
      %v642 = vpop.permute.xlu0 %641
      %646 = vrot.lane.b32.xlu0 %v626, 32
      %v647 = vpop.permute.xlu0 %646
      %648 = vrot.lane.b32.xlu0 %v628, 32
      %v649 = vpop.permute.xlu0 %648
      %654 = vrot.lane.b32.xlu0 %v635, 48
      %v655 = vpop.permute.xlu0 %654
      %656 = vrot.lane.b32.xlu0 %v636, 48
      %v657 = vpop.permute.xlu0 %656
      %v660 = vsel %vm431, %v612, %v640
      %v661 = vsel %vm431, %v613, %v642
      %v662 = vsel %vm434, %v660, %v647
      %v663 = vsel %vm434, %v661, %v649
      %v664 = vsel %vm437, %v662, %v655
      %v665 = vsel %vm437, %v663, %v657
      %v667 = vsel %vm440, %v664, 0
      %v670 = vsel %vm440, %v665, 0
      %672 = vmatprep.subr.mxu0 0.0
      %673 = vmatpush1.msra.mxu0 %v558
      %674 = vmatprep.subr.mxu0 0.0
      %675 = vmatpush1.msra.mxu0 %v559
      %676 = vmatprep.subr.mxu0 0.0
      %677 = vmatpush1.msra.mxu0 %v560
      %678 = vmatprep.subr.mxu0 0.0
      %679 = vmatpush1.msra.mxu0 %v561
      %680 = vmatprep.subr.mxu0 0.0
      %681 = vmatpush1.msra.mxu0 %v562
      %682 = vmatprep.subr.mxu0 0.0
      %683 = vmatpush1.msra.mxu0 %v563
      %684 = vmatprep.subr.mxu0 0.0
      %685 = vmatpush1.msra.mxu0 %v564
      %686 = vmatprep.subr.mxu0 0.0
      %687 = vmatpush1.msra.mxu0 %v565
      %688 = vmatprep.subr.mxu0 0.0
      %689 = vmatpush1.msra.mxu0 0.0
      %690 = vmatprep.subr.mxu0 0.0
      %691 = vmatpush1.msra.mxu0 0.0
      %692 = vmatprep.subr.mxu0 0.0
      %693 = vmatpush1.msra.mxu0 0.0
      %694 = vmatprep.subr.mxu0 0.0
      %695 = vmatpush1.msra.mxu0 0.0
      %696 = vmatprep.subr.mxu0 0.0
      %697 = vmatpush1.msra.mxu0 0.0
      %698 = vmatprep.subr.mxu0 0.0
      %699 = vmatpush1.msra.mxu0 0.0
      %700 = vmatprep.subr.mxu0 0.0
      %701 = vmatpush1.msra.mxu0 0.0
      %702 = vmatprep.subr.mxu0 0.0
      %703 = vmatpush1.msra.mxu0 0.0
      %704 = vmatprep.subr.mxu0 0.0
      %705 = vmatpush1.msra.mxu0 0.0
      %706 = vmatprep.subr.mxu0 0.0
      %707 = vmatpush1.msra.mxu0 0.0
      %708 = vmatprep.subr.mxu0 0.0
      %709 = vmatpush1.msra.mxu0 0.0
      %710 = vmatprep.subr.mxu0 0.0
      %711 = vmatpush1.msra.mxu0 0.0
      %712 = vmatprep.subr.mxu0 0.0
      %713 = vmatpush1.msra.mxu0 0.0
      %714 = vmatprep.subr.mxu0 0.0
      %715 = vmatpush1.msra.mxu0 0.0
      %716 = vmatprep.subr.mxu0 0.0
      %717 = vmatpush1.msra.mxu0 0.0
      %718 = vmatprep.subr.mxu0 0.0
      %719 = vmatpush1.msra.mxu0 0.0
      %720 = vmatprep.subr.mxu0 0.0
      %721 = vmatpush1.msra.mxu0 0.0
      %722 = vmatprep.subr.mxu0 0.0
      %723 = vmatpush1.msra.mxu0 0.0
      %724 = vmatprep.subr.mxu0 0.0
      %725 = vmatpush1.msra.mxu0 0.0
      %726 = vmatprep.subr.mxu0 0.0
      %727 = vmatpush1.msra.mxu0 0.0
      %728 = vmatprep.subr.mxu0 0.0
      %729 = vmatpush1.msra.mxu0 0.0
      %730 = vmatprep.subr.mxu0 0.0
      %731 = vmatpush1.msra.mxu0 0.0
      %732 = vmatprep.subr.mxu0 0.0
      %733 = vmatpush1.msra.mxu0 0.0
      %734 = vmatprep.subr.mxu0 0.0
      %735 = vmatpush1.msra.mxu0 0.0
      %736 = vmatprep.mubr.f32.mxu0 0.0
      %737 = vmatmul.mubr.f32.gmra.mrb[0].mxu0 %v667
      %v738 = vpop.f32.mrb[0].mxu0
      %v739 = vadd.f32 %v550, %v738
      %v740 = vpop.f32.mrb[0].mxu0
      %741 = vmatprep.mubr.f32.mxu0 0.0
      %742 = vmatmul.mubr.f32.gmra.mrb[0].mxu0 %v670
      %v743 = vpop.f32.mrb[0].mxu0
      %v744 = vadd.f32 %v555, %v743
      %v745 = vpop.f32.mrb[0].mxu0
      %746 = vdwg.mxu0
      %v747 = vld [vmem:[#allocation2] sm:$0xff]
      %v748 = vld [vmem:[#allocation2 + $0x8] sm:$0xff]
      %v749 = vmul.f32 %v747, 0.99
      %v750 = vmul.f32 %v748, 0.99
      %v751 = vadd.f32 %v749, %v739
      %v752 = vadd.f32 %v750, %v744
      %vm753 = vcmp.ge.f32.partialorder %v751, 1.0
      %vm754 = vcmp.ge.f32.partialorder %v752, 1.0
      %v755 = vsel %vm753, 1, 0
      %v756 = vsel %vm754, 1, 0
      %v757 = vcvt.s32.f32 %v755
      %v758 = vcvt.s32.f32 %v756
      %v759 = vsub.f32 %v751, %v757
      %v760 = vsub.f32 %v752, %v758
      %761 = vst.msk [vmem:[#allocation2] sm:$0xff] %vm434, %v759
      %762 = vst.msk [vmem:[#allocation2 + $0x8] sm:$0xff] %vm434, %v760
      %v765 = vrot.slane %v757, 7
      %v766 = vrot.slane %v758, 7
      %v767 = vsel %vm360, %v765, %v766
      %v770 = vsel %vm360, 0.0, %v765
      %v771 = vmul.f32 %v770, %v315
      %v772 = vmul.f32 %v767, %v316
      %v773 = vrot.slane %v757, 4
      %v774 = vrot.slane %v758, 4
      %v775 = vsel %vm336, %v773, %v774
      %v777 = vsel %vm336, 0.0, %v773
      %v778 = vrot.slane %v757, 3
      %v779 = vrot.slane %v758, 3
      %v780 = vsel %vm342, %v778, %v779
      %v783 = vsel %vm342, 0.0, %v778
      %v784 = vmul.f32 %v783, %v315
      %v785 = vmul.f32 %v780, %v316
      %788 = vrot.lane.b32.xlu0 %v771, 32
      %v789 = vpop.permute.xlu0 %788
      %790 = vrot.lane.b32.xlu0 %v772, 32
      %v791 = vpop.permute.xlu0 %790
      %795 = vrot.lane.b32.xlu0 %v777, 64
      %v796 = vpop.permute.xlu0 %795
      %797 = vrot.lane.b32.xlu0 %v775, 64
      %v798 = vpop.permute.xlu0 %797
      %803 = vrot.lane.b32.xlu0 %v784, 96
      %v804 = vpop.permute.xlu0 %803
      %805 = vrot.lane.b32.xlu0 %v785, 96
      %v806 = vpop.permute.xlu0 %805
      %v809 = vsel %vm434, %v757, %v789
      %v810 = vsel %vm434, %v758, %v791
      %v811 = vsel %vm440, %v809, %v796
      %v812 = vsel %vm440, %v810, %v798
      %v813 = vsel %vm446, %v811, %v804
      %v814 = vsel %vm446, %v812, %v806
      %v816 = vlaneseq
      %v817 = vshrl.u32 %v816, 7
      %v818 = vsub.s32 0, %v817
      %v819 = vrot.slane %v582, %v818
      %821 = vmatprep.subr.mxu0 0.0
      %822 = vmatpush1.msra.mxu0 %v566
      %823 = vmatprep.subr.mxu0 0.0
      %824 = vmatpush1.msra.mxu0 %v567
      %825 = vmatprep.subr.mxu0 0.0
      %826 = vmatpush1.msra.mxu0 %v568
      %827 = vmatprep.subr.mxu0 0.0
      %828 = vmatpush1.msra.mxu0 %v569
      %829 = vmatprep.subr.mxu0 0.0
      %830 = vmatpush1.msra.mxu0 %v570
      %831 = vmatprep.subr.mxu0 0.0
      %832 = vmatpush1.msra.mxu0 %v571
      %833 = vmatprep.subr.mxu0 0.0
      %834 = vmatpush1.msra.mxu0 %v572
      %835 = vmatprep.subr.mxu0 0.0
      %836 = vmatpush1.msra.mxu0 %v573
      %837 = vmatprep.subr.mxu0 0.0
      %838 = vmatpush1.msra.mxu0 %v574
      %839 = vmatprep.subr.mxu0 0.0
      %840 = vmatpush1.msra.mxu0 %v575
      %841 = vmatprep.subr.mxu0 0.0
      %842 = vmatpush1.msra.mxu0 %v576
      %843 = vmatprep.subr.mxu0 0.0
      %844 = vmatpush1.msra.mxu0 %v577
      %845 = vmatprep.subr.mxu0 0.0
      %846 = vmatpush1.msra.mxu0 %v578
      %847 = vmatprep.subr.mxu0 0.0
      %848 = vmatpush1.msra.mxu0 %v579
      %849 = vmatprep.subr.mxu0 0.0
      %850 = vmatpush1.msra.mxu0 %v580
      %851 = vmatprep.subr.mxu0 0.0
      %852 = vmatpush1.msra.mxu0 %v581
      %853 = vmatprep.subr.mxu0 0.0
      %854 = vmatpush1.msra.mxu0 0.0
      %855 = vmatprep.subr.mxu0 0.0
      %856 = vmatpush1.msra.mxu0 0.0
      %857 = vmatprep.subr.mxu0 0.0
      %858 = vmatpush1.msra.mxu0 0.0
      %859 = vmatprep.subr.mxu0 0.0
      %860 = vmatpush1.msra.mxu0 0.0
      %861 = vmatprep.subr.mxu0 0.0
      %862 = vmatpush1.msra.mxu0 0.0
      %863 = vmatprep.subr.mxu0 0.0
      %864 = vmatpush1.msra.mxu0 0.0
      %865 = vmatprep.subr.mxu0 0.0
      %866 = vmatpush1.msra.mxu0 0.0
      %867 = vmatprep.subr.mxu0 0.0
      %868 = vmatpush1.msra.mxu0 0.0
      %869 = vmatprep.subr.mxu0 0.0
      %870 = vmatpush1.msra.mxu0 0.0
      %871 = vmatprep.subr.mxu0 0.0
      %872 = vmatpush1.msra.mxu0 0.0
      %873 = vmatprep.subr.mxu0 0.0
      %874 = vmatpush1.msra.mxu0 0.0
      %875 = vmatprep.subr.mxu0 0.0
      %876 = vmatpush1.msra.mxu0 0.0
      %877 = vmatprep.subr.mxu0 0.0
      %878 = vmatpush1.msra.mxu0 0.0
      %879 = vmatprep.subr.mxu0 0.0
      %880 = vmatpush1.msra.mxu0 0.0
      %881 = vmatprep.subr.mxu0 0.0
      %882 = vmatpush1.msra.mxu0 0.0
      %883 = vmatprep.subr.mxu0 0.0
      %884 = vmatpush1.msra.mxu0 0.0
      %885 = vmatprep.mubr.f32.mxu0 0.0
      %886 = vmatmul.mubr.f32.gmra.mrb[0].mxu0 %v813
      %v887 = vpop.f32.mrb[0].mxu0
      %v888 = vadd.f32 %v819, %v887
      %v889 = vpop.f32.mrb[0].mxu0
      %890 = vmatprep.mubr.f32.mxu0 0.0
      %891 = vmatmul.mubr.f32.gmra.mrb[0].mxu0 %v814
      %v892 = vpop.f32.mrb[0].mxu0
      %v893 = vadd.f32 %v819, %v892
      %v894 = vpop.f32.mrb[0].mxu0
      %895 = vdwg.mxu0
      %v896 = vld [vmem:[#allocation3] sm:$0xff]
      %v897 = vld [vmem:[#allocation3 + $0x8] sm:$0xff]
      %v898 = vmul.f32 %v896, 0.99
      %v899 = vmul.f32 %v897, 0.99
      %v900 = vadd.f32 %v898, %v888
      %v901 = vadd.f32 %v899, %v893
      %vm902 = vcmp.ge.f32.partialorder %v900, 1.0
      %vm903 = vcmp.ge.f32.partialorder %v901, 1.0
      %v904 = vsel %vm902, 1, 0
      %v905 = vsel %vm903, 1, 0
      %v906 = vcvt.s32.f32 %v904
      %v907 = vcvt.s32.f32 %v905
      %v908 = vsub.f32 %v900, %v906
      %v909 = vsub.f32 %v901, %v907
      %910 = vst.msk [vmem:[#allocation3] sm:$0xff] %vm431, %v908
      %911 = vst.msk [vmem:[#allocation3 + $0x8] sm:$0xff] %vm431, %v909
      %v914 = vrot.slane %v906, 3
      %v915 = vrot.slane %v907, 3
      %v916 = vsel %vm342, %v914, %v915
      %v919 = vsel %vm342, 0.0, %v914
      %v920 = vmul.f32 %v919, %v315
      %v921 = vmul.f32 %v916, %v316
      %v922 = vrot.slane %v906, 4
      %v923 = vrot.slane %v907, 4
      %v924 = vsel %vm336, %v922, %v923
      %v926 = vsel %vm336, 0.0, %v922
      %v927 = vrot.slane %v906, 5
      %v928 = vrot.slane %v907, 5
      %v929 = vsel %vm327, %v927, %v928
      %v932 = vsel %vm327, 0.0, %v927
      %v933 = vmul.f32 %v932, %v321
      %v934 = vmul.f32 %v929, %v322
      %v935 = vrot.slane %v906, 7
      %v936 = vrot.slane %v907, 7
      %v937 = vsel %vm360, %v935, %v936
      %v940 = vsel %vm360, 0.0, %v935
      %v941 = vmul.f32 %v940, %v315
      %v942 = vmul.f32 %v937, %v316
      %v943 = vrot.slane %v906, 1
      %v944 = vrot.slane %v907, 1
      %v945 = vsel %vm351, %v943, %v944
      %v948 = vsel %vm351, %v944, 0.0
      %v949 = vmul.f32 %v945, %v321
      %v950 = vmul.f32 %v948, %v322
      %v952 = vsel %vm342, %v915, 0.0
      %v953 = vmul.f32 %v916, %v315
      %v954 = vmul.f32 %v952, %v316
      %v956 = vsel %vm336, %v923, 0.0
      %v958 = vsel %vm327, %v928, 0.0
      %v959 = vmul.f32 %v929, %v321
      %v960 = vmul.f32 %v958, %v322
      %962 = vrot.lane.b32.xlu0 %v926, 16
      %v963 = vpop.permute.xlu0 %962
      %964 = vrot.lane.b32.xlu0 %v924, 16
      %v965 = vpop.permute.xlu0 %964
      %970 = vrot.lane.b32.xlu0 %v933, 32
      %v971 = vpop.permute.xlu0 %970
      %972 = vrot.lane.b32.xlu0 %v934, 32
      %v973 = vpop.permute.xlu0 %972
      %978 = vrot.lane.b32.xlu0 %v941, 48
      %v979 = vpop.permute.xlu0 %978
      %980 = vrot.lane.b32.xlu0 %v942, 48
      %v981 = vpop.permute.xlu0 %980
      %984 = vrot.lane.b32.xlu0 %v906, 64
      %v985 = vpop.permute.xlu0 %984
      %986 = vrot.lane.b32.xlu0 %v907, 64
      %v987 = vpop.permute.xlu0 %986
      %992 = vrot.lane.b32.xlu0 %v949, 80
      %v993 = vpop.permute.xlu0 %992
      %994 = vrot.lane.b32.xlu0 %v950, 80
      %v995 = vpop.permute.xlu0 %994
      %1000 = vrot.lane.b32.xlu0 %v953, 96
      %v1001 = vpop.permute.xlu0 %1000
      %1002 = vrot.lane.b32.xlu0 %v954, 96
      %v1003 = vpop.permute.xlu0 %1002
      %1007 = vrot.lane.b32.xlu0 %v924, 112
      %v1008 = vpop.permute.xlu0 %1007
      %1009 = vrot.lane.b32.xlu0 %v956, 112
      %v1010 = vpop.permute.xlu0 %1009
      %v1013 = vsel %vm431, %v920, %v963
      %v1014 = vsel %vm431, %v921, %v965
      %v1015 = vsel %vm434, %v1013, %v971
      %v1016 = vsel %vm434, %v1014, %v973
      %v1017 = vsel %vm437, %v1015, %v979
      %v1018 = vsel %vm437, %v1016, %v981
      %v1019 = vsel %vm440, %v1017, %v985
      %v1020 = vsel %vm440, %v1018, %v987
      %v1021 = vsel %vm443, %v1019, %v993
      %v1022 = vsel %vm443, %v1020, %v995
      %v1023 = vsel %vm446, %v1021, %v1001
      %v1024 = vsel %vm446, %v1022, %v1003
      %v1025 = vsel %vm449, %v1023, %v1008
      %v1026 = vsel %vm449, %v1024, %v1010
      %v1028 = vlaneseq
      %v1029 = vshrl.u32 %v1028, 7
      %v1030 = vsub.s32 0, %v1029
      %v1031 = vrot.slane %v601, %v1030
      %v1034 = vsel %vm431, %v959, 0
      %v1037 = vsel %vm431, %v960, 0
      %1039 = vmatprep.subr.mxu0 0.0
      %1040 = vmatpush1.msra.mxu0 %v583
      %1041 = vmatprep.subr.mxu0 0.0
      %1042 = vmatpush1.msra.mxu0 %v584
      %1043 = vmatprep.subr.mxu0 0.0
      %1044 = vmatpush1.msra.mxu0 %v585
      %1045 = vmatprep.subr.mxu0 0.0
      %1046 = vmatpush1.msra.mxu0 %v586
      %1047 = vmatprep.subr.mxu0 0.0
      %1048 = vmatpush1.msra.mxu0 %v587
      %1049 = vmatprep.subr.mxu0 0.0
      %1050 = vmatpush1.msra.mxu0 %v588
      %1051 = vmatprep.subr.mxu0 0.0
      %1052 = vmatpush1.msra.mxu0 %v589
      %1053 = vmatprep.subr.mxu0 0.0
      %1054 = vmatpush1.msra.mxu0 %v590
      %1055 = vmatprep.subr.mxu0 0.0
      %1056 = vmatpush1.msra.mxu0 %v591
      %1057 = vmatprep.subr.mxu0 0.0
      %1058 = vmatpush1.msra.mxu0 %v592
      %1059 = vmatprep.subr.mxu0 0.0
      %1060 = vmatpush1.msra.mxu0 %v593
      %1061 = vmatprep.subr.mxu0 0.0
      %1062 = vmatpush1.msra.mxu0 %v594
      %1063 = vmatprep.subr.mxu0 0.0
      %1064 = vmatpush1.msra.mxu0 %v595
      %1065 = vmatprep.subr.mxu0 0.0
      %1066 = vmatpush1.msra.mxu0 %v596
      %1067 = vmatprep.subr.mxu0 0.0
      %1068 = vmatpush1.msra.mxu0 %v597
      %1069 = vmatprep.subr.mxu0 0.0
      %1070 = vmatpush1.msra.mxu0 %v598
      %1071 = vmatprep.subr.mxu0 0.0
      %1072 = vmatpush1.msra.mxu0 %v599
      %1073 = vmatprep.subr.mxu0 0.0
      %1074 = vmatpush1.msra.mxu0 %v600
      %1075 = vmatprep.subr.mxu0 0.0
      %1076 = vmatpush1.msra.mxu0 0.0
      %1077 = vmatprep.subr.mxu0 0.0
      %1078 = vmatpush1.msra.mxu0 0.0
      %1079 = vmatprep.subr.mxu0 0.0
      %1080 = vmatpush1.msra.mxu0 0.0
      %1081 = vmatprep.subr.mxu0 0.0
      %1082 = vmatpush1.msra.mxu0 0.0
      %1083 = vmatprep.subr.mxu0 0.0
      %1084 = vmatpush1.msra.mxu0 0.0
      %1085 = vmatprep.subr.mxu0 0.0
      %1086 = vmatpush1.msra.mxu0 0.0
      %1087 = vmatprep.subr.mxu0 0.0
      %1088 = vmatpush1.msra.mxu0 0.0
      %1089 = vmatprep.subr.mxu0 0.0
      %1090 = vmatpush1.msra.mxu0 0.0
      %1091 = vmatprep.subr.mxu0 0.0
      %1092 = vmatpush1.msra.mxu0 0.0
      %1093 = vmatprep.subr.mxu0 0.0
      %1094 = vmatpush1.msra.mxu0 0.0
      %1095 = vmatprep.subr.mxu0 0.0
      %1096 = vmatpush1.msra.mxu0 0.0
      %1097 = vmatprep.subr.mxu0 0.0
      %1098 = vmatpush1.msra.mxu0 0.0
      %1099 = vmatprep.subr.mxu0 0.0
      %1100 = vmatpush1.msra.mxu0 0.0
      %1101 = vmatprep.subr.mxu0 0.0
      %1102 = vmatpush1.msra.mxu0 0.0
      %1103 = vmatprep.mubr.f32.mxu0 %v1034
      %1104 = vmatmul.mubr.f32.gmra.mrb[0].mxu0 %v1025
      %v1105 = vpop.f32.mrb[0].mxu0
      %v1106 = vadd.f32 %v1031, %v1105
      %v1107 = vpop.f32.mrb[0].mxu0
      %1108 = vmatprep.mubr.f32.mxu0 %v1037
      %1109 = vmatmul.mubr.f32.gmra.mrb[0].mxu0 %v1026
      %v1110 = vpop.f32.mrb[0].mxu0
      %v1111 = vadd.f32 %v1031, %v1110
      %v1112 = vpop.f32.mrb[0].mxu0
      %1113 = vdwg.mxu0
      %v1114 = vld [vmem:[#allocation4] sm:$0xff]
      %v1115 = vld [vmem:[#allocation4 + $0x8] sm:$0xff]
      %v1116 = vmul.f32 %v1114, 0.99
      %v1117 = vmul.f32 %v1115, 0.99
      %v1118 = vadd.f32 %v1116, %v1106
      %v1119 = vadd.f32 %v1117, %v1111
      %vm1120 = vcmp.ge.f32.partialorder %v1118, 1.0
      %vm1121 = vcmp.ge.f32.partialorder %v1119, 1.0
      %v1122 = vsel %vm1120, 1, 0
      %v1123 = vsel %vm1121, 1, 0
      %v1124 = vcvt.s32.f32 %v1122
      %v1125 = vcvt.s32.f32 %v1123
      %v1126 = vsub.f32 %v1118, %v1124
      %v1127 = vsub.f32 %v1119, %v1125
      %1128 = vst.msk [vmem:[#allocation4] sm:$0xff] %vm431, %v1126
      %1129 = vst.msk [vmem:[#allocation4 + $0x8] sm:$0xff] %vm431, %v1127
      %1130 = vst.msk [vmem:[#allocation5] sm:$0xff] %vm431, %v1124
      %1131 = vst.msk [vmem:[#allocation5 + $0x8] sm:$0xff] %vm431, %v1125
      %v1132 = vld [vmem:[#allocation6] sm:$0xff]
      %v1133 = vld [vmem:[#allocation6 + $0x8] sm:$0xff]
      %v1134 = vadd.f32 %v1132, %v1124
      %v1135 = vadd.f32 %v1133, %v1125
      %1136 = vst.msk [vmem:[#allocation6] sm:$0xff] %vm431, %v1134
      %1137 = vst.msk [vmem:[#allocation6 + $0x8] sm:$0xff] %vm431, %v1135
      %v1138 = vld [vmem:[#allocation5] sm:$0xff]
      %v1139 = vld [vmem:[#allocation5 + $0x8] sm:$0xff]
      %v1142 = vrot.slane %v1138, 1
      %v1143 = vrot.slane %v1139, 1
      %v1144 = vsel %vm351, %v1142, %v1143
      %v1147 = vsel %vm351, %v1143, 0.0
      %v1148 = vmul.f32 %v1144, %v321
      %v1149 = vmul.f32 %v1147, %v322
      %v1150 = vrot.slane %v1138, 4
      %v1151 = vrot.slane %v1139, 4
      %v1152 = vsel %vm336, %v1150, %v1151
      %v1154 = vsel %vm336, %v1151, 0.0
      %v1155 = vrot.slane %v1138, 5
      %v1156 = vrot.slane %v1139, 5
      %v1157 = vsel %vm327, %v1155, %v1156
      %v1160 = vsel %vm327, %v1156, 0.0
      %v1161 = vmul.f32 %v1157, %v321
      %v1162 = vmul.f32 %v1160, %v322
      %1165 = vrot.lane.b32.xlu0 %v1148, 16
      %v1166 = vpop.permute.xlu0 %1165
      %1167 = vrot.lane.b32.xlu0 %v1149, 16
      %v1168 = vpop.permute.xlu0 %1167
      %1172 = vrot.lane.b32.xlu0 %v1152, 32
      %v1173 = vpop.permute.xlu0 %1172
      %1174 = vrot.lane.b32.xlu0 %v1154, 32
      %v1175 = vpop.permute.xlu0 %1174
      %1180 = vrot.lane.b32.xlu0 %v1161, 48
      %v1181 = vpop.permute.xlu0 %1180
      %1182 = vrot.lane.b32.xlu0 %v1162, 48
      %v1183 = vpop.permute.xlu0 %1182
      %v1186 = vsel %vm431, %v1138, %v1166
      %v1187 = vsel %vm431, %v1139, %v1168
      %v1188 = vsel %vm434, %v1186, %v1173
      %v1189 = vsel %vm434, %v1187, %v1175
      %v1190 = vsel %vm437, %v1188, %v1181
      %v1191 = vsel %vm437, %v1189, %v1183
      %v1193 = vsel %vm440, %v1190, 0
      %v1196 = vsel %vm440, %v1191, 0
      %1198 = vmatprep.subr.mxu0 0.0
      %1199 = vmatpush1.msra.mxu0 %v558
      %1200 = vmatprep.subr.mxu0 0.0
      %1201 = vmatpush1.msra.mxu0 %v559
      %1202 = vmatprep.subr.mxu0 0.0
      %1203 = vmatpush1.msra.mxu0 %v560
      %1204 = vmatprep.subr.mxu0 0.0
      %1205 = vmatpush1.msra.mxu0 %v561
      %1206 = vmatprep.subr.mxu0 0.0
      %1207 = vmatpush1.msra.mxu0 %v562
      %1208 = vmatprep.subr.mxu0 0.0
      %1209 = vmatpush1.msra.mxu0 %v563
      %1210 = vmatprep.subr.mxu0 0.0
      %1211 = vmatpush1.msra.mxu0 %v564
      %1212 = vmatprep.subr.mxu0 0.0
      %1213 = vmatpush1.msra.mxu0 %v565
      %1214 = vmatprep.subr.mxu0 0.0
      %1215 = vmatpush1.msra.mxu0 0.0
      %1216 = vmatprep.subr.mxu0 0.0
      %1217 = vmatpush1.msra.mxu0 0.0
      %1218 = vmatprep.subr.mxu0 0.0
      %1219 = vmatpush1.msra.mxu0 0.0
      %1220 = vmatprep.subr.mxu0 0.0
      %1221 = vmatpush1.msra.mxu0 0.0
      %1222 = vmatprep.subr.mxu0 0.0
      %1223 = vmatpush1.msra.mxu0 0.0
      %1224 = vmatprep.subr.mxu0 0.0
      %1225 = vmatpush1.msra.mxu0 0.0
      %1226 = vmatprep.subr.mxu0 0.0
      %1227 = vmatpush1.msra.mxu0 0.0
      %1228 = vmatprep.subr.mxu0 0.0
      %1229 = vmatpush1.msra.mxu0 0.0
      %1230 = vmatprep.subr.mxu0 0.0
      %1231 = vmatpush1.msra.mxu0 0.0
      %1232 = vmatprep.subr.mxu0 0.0
      %1233 = vmatpush1.msra.mxu0 0.0
      %1234 = vmatprep.subr.mxu0 0.0
      %1235 = vmatpush1.msra.mxu0 0.0
      %1236 = vmatprep.subr.mxu0 0.0
      %1237 = vmatpush1.msra.mxu0 0.0
      %1238 = vmatprep.subr.mxu0 0.0
      %1239 = vmatpush1.msra.mxu0 0.0
      %1240 = vmatprep.subr.mxu0 0.0
      %1241 = vmatpush1.msra.mxu0 0.0
      %1242 = vmatprep.subr.mxu0 0.0
      %1243 = vmatpush1.msra.mxu0 0.0
      %1244 = vmatprep.subr.mxu0 0.0
      %1245 = vmatpush1.msra.mxu0 0.0
      %1246 = vmatprep.subr.mxu0 0.0
      %1247 = vmatpush1.msra.mxu0 0.0
      %1248 = vmatprep.subr.mxu0 0.0
      %1249 = vmatpush1.msra.mxu0 0.0
      %1250 = vmatprep.subr.mxu0 0.0
      %1251 = vmatpush1.msra.mxu0 0.0
      %1252 = vmatprep.subr.mxu0 0.0
      %1253 = vmatpush1.msra.mxu0 0.0
      %1254 = vmatprep.subr.mxu0 0.0
      %1255 = vmatpush1.msra.mxu0 0.0
      %1256 = vmatprep.subr.mxu0 0.0
      %1257 = vmatpush1.msra.mxu0 0.0
      %1258 = vmatprep.subr.mxu0 0.0
      %1259 = vmatpush1.msra.mxu0 0.0
      %1260 = vmatprep.subr.mxu0 0.0
      %1261 = vmatpush1.msra.mxu0 0.0
      %1262 = vmatprep.mubr.f32.mxu0 0.0
      %1263 = vmatmul.mubr.f32.gmra.mrb[0].mxu0 %v1193
      %v1264 = vpop.f32.mrb[0].mxu0
      %v1265 = vadd.f32 %v550, %v1264
      %v1266 = vpop.f32.mrb[0].mxu0
      %1267 = vmatprep.mubr.f32.mxu0 0.0
      %1268 = vmatmul.mubr.f32.gmra.mrb[0].mxu0 %v1196
      %v1269 = vpop.f32.mrb[0].mxu0
      %v1270 = vadd.f32 %v555, %v1269
      %v1271 = vpop.f32.mrb[0].mxu0
      %1272 = vdwg.mxu0
      %v1273 = vld [vmem:[#allocation2] sm:$0xff]
      %v1274 = vld [vmem:[#allocation2 + $0x8] sm:$0xff]
      %v1275 = vmul.f32 %v1273, 0.99
      %v1276 = vmul.f32 %v1274, 0.99
      %v1277 = vadd.f32 %v1275, %v1265
      %v1278 = vadd.f32 %v1276, %v1270
      %vm1279 = vcmp.ge.f32.partialorder %v1277, 1.0
      %vm1280 = vcmp.ge.f32.partialorder %v1278, 1.0
      %v1281 = vsel %vm1279, 1, 0
      %v1282 = vsel %vm1280, 1, 0
      %v1283 = vcvt.s32.f32 %v1281
      %v1284 = vcvt.s32.f32 %v1282
      %v1285 = vsub.f32 %v1277, %v1283
      %v1286 = vsub.f32 %v1278, %v1284
      %1287 = vst.msk [vmem:[#allocation2] sm:$0xff] %vm434, %v1285
      %1288 = vst.msk [vmem:[#allocation2 + $0x8] sm:$0xff] %vm434, %v1286
      %v1291 = vrot.slane %v1283, 7
      %v1292 = vrot.slane %v1284, 7
      %v1293 = vsel %vm360, %v1291, %v1292
      %v1296 = vsel %vm360, 0.0, %v1291
      %v1297 = vmul.f32 %v1296, %v315
      %v1298 = vmul.f32 %v1293, %v316
      %v1299 = vrot.slane %v1283, 4
      %v1300 = vrot.slane %v1284, 4
      %v1301 = vsel %vm336, %v1299, %v1300
      %v1303 = vsel %vm336, 0.0, %v1299
      %v1304 = vrot.slane %v1283, 3
      %v1305 = vrot.slane %v1284, 3
      %v1306 = vsel %vm342, %v1304, %v1305
      %v1309 = vsel %vm342, 0.0, %v1304
      %v1310 = vmul.f32 %v1309, %v315
      %v1311 = vmul.f32 %v1306, %v316
      %1314 = vrot.lane.b32.xlu0 %v1297, 32
      %v1315 = vpop.permute.xlu0 %1314
      %1316 = vrot.lane.b32.xlu0 %v1298, 32
      %v1317 = vpop.permute.xlu0 %1316
      %1321 = vrot.lane.b32.xlu0 %v1303, 64
      %v1322 = vpop.permute.xlu0 %1321
      %1323 = vrot.lane.b32.xlu0 %v1301, 64
      %v1324 = vpop.permute.xlu0 %1323
      %1329 = vrot.lane.b32.xlu0 %v1310, 96
      %v1330 = vpop.permute.xlu0 %1329
      %1331 = vrot.lane.b32.xlu0 %v1311, 96
      %v1332 = vpop.permute.xlu0 %1331
      %v1335 = vsel %vm434, %v1283, %v1315
      %v1336 = vsel %vm434, %v1284, %v1317
      %v1337 = vsel %vm440, %v1335, %v1322
      %v1338 = vsel %vm440, %v1336, %v1324
      %v1339 = vsel %vm446, %v1337, %v1330
      %v1340 = vsel %vm446, %v1338, %v1332
      %1341 = vmatprep.subr.mxu0 0.0
      %1342 = vmatpush1.msra.mxu0 %v566
      %1343 = vmatprep.subr.mxu0 0.0
      %1344 = vmatpush1.msra.mxu0 %v567
      %1345 = vmatprep.subr.mxu0 0.0
      %1346 = vmatpush1.msra.mxu0 %v568
      %1347 = vmatprep.subr.mxu0 0.0
      %1348 = vmatpush1.msra.mxu0 %v569
      %1349 = vmatprep.subr.mxu0 0.0
      %1350 = vmatpush1.msra.mxu0 %v570
      %1351 = vmatprep.subr.mxu0 0.0
      %1352 = vmatpush1.msra.mxu0 %v571
      %1353 = vmatprep.subr.mxu0 0.0
      %1354 = vmatpush1.msra.mxu0 %v572
      %1355 = vmatprep.subr.mxu0 0.0
      %1356 = vmatpush1.msra.mxu0 %v573
      %1357 = vmatprep.subr.mxu0 0.0
      %1358 = vmatpush1.msra.mxu0 %v574
      %1359 = vmatprep.subr.mxu0 0.0
      %1360 = vmatpush1.msra.mxu0 %v575
      %1361 = vmatprep.subr.mxu0 0.0
      %1362 = vmatpush1.msra.mxu0 %v576
      %1363 = vmatprep.subr.mxu0 0.0
      %1364 = vmatpush1.msra.mxu0 %v577
      %1365 = vmatprep.subr.mxu0 0.0
      %1366 = vmatpush1.msra.mxu0 %v578
      %1367 = vmatprep.subr.mxu0 0.0
      %1368 = vmatpush1.msra.mxu0 %v579
      %1369 = vmatprep.subr.mxu0 0.0
      %1370 = vmatpush1.msra.mxu0 %v580
      %1371 = vmatprep.subr.mxu0 0.0
      %1372 = vmatpush1.msra.mxu0 %v581
      %1373 = vmatprep.subr.mxu0 0.0
      %1374 = vmatpush1.msra.mxu0 0.0
      %1375 = vmatprep.subr.mxu0 0.0
      %1376 = vmatpush1.msra.mxu0 0.0
      %1377 = vmatprep.subr.mxu0 0.0
      %1378 = vmatpush1.msra.mxu0 0.0
      %1379 = vmatprep.subr.mxu0 0.0
      %1380 = vmatpush1.msra.mxu0 0.0
      %1381 = vmatprep.subr.mxu0 0.0
      %1382 = vmatpush1.msra.mxu0 0.0
      %1383 = vmatprep.subr.mxu0 0.0
      %1384 = vmatpush1.msra.mxu0 0.0
      %1385 = vmatprep.subr.mxu0 0.0
      %1386 = vmatpush1.msra.mxu0 0.0
      %1387 = vmatprep.subr.mxu0 0.0
      %1388 = vmatpush1.msra.mxu0 0.0
      %1389 = vmatprep.subr.mxu0 0.0
      %1390 = vmatpush1.msra.mxu0 0.0
      %1391 = vmatprep.subr.mxu0 0.0
      %1392 = vmatpush1.msra.mxu0 0.0
      %1393 = vmatprep.subr.mxu0 0.0
      %1394 = vmatpush1.msra.mxu0 0.0
      %1395 = vmatprep.subr.mxu0 0.0
      %1396 = vmatpush1.msra.mxu0 0.0
      %1397 = vmatprep.subr.mxu0 0.0
      %1398 = vmatpush1.msra.mxu0 0.0
      %1399 = vmatprep.subr.mxu0 0.0
      %1400 = vmatpush1.msra.mxu0 0.0
      %1401 = vmatprep.subr.mxu0 0.0
      %1402 = vmatpush1.msra.mxu0 0.0
      %1403 = vmatprep.subr.mxu0 0.0
      %1404 = vmatpush1.msra.mxu0 0.0
      %1405 = vmatprep.mubr.f32.mxu0 0.0
      %1406 = vmatmul.mubr.f32.gmra.mrb[0].mxu0 %v1339
      %v1407 = vpop.f32.mrb[0].mxu0
      %v1408 = vadd.f32 %v819, %v1407
      %v1409 = vpop.f32.mrb[0].mxu0
      %1410 = vmatprep.mubr.f32.mxu0 0.0
      %1411 = vmatmul.mubr.f32.gmra.mrb[0].mxu0 %v1340
      %v1412 = vpop.f32.mrb[0].mxu0
      %v1413 = vadd.f32 %v819, %v1412
      %v1414 = vpop.f32.mrb[0].mxu0
      %1415 = vdwg.mxu0
      %v1416 = vld [vmem:[#allocation3] sm:$0xff]
      %v1417 = vld [vmem:[#allocation3 + $0x8] sm:$0xff]
      %v1418 = vmul.f32 %v1416, 0.99
      %v1419 = vmul.f32 %v1417, 0.99
      %v1420 = vadd.f32 %v1418, %v1408
      %v1421 = vadd.f32 %v1419, %v1413
      %vm1422 = vcmp.ge.f32.partialorder %v1420, 1.0
      %vm1423 = vcmp.ge.f32.partialorder %v1421, 1.0
      %v1424 = vsel %vm1422, 1, 0
      %v1425 = vsel %vm1423, 1, 0
      %v1426 = vcvt.s32.f32 %v1424
      %v1427 = vcvt.s32.f32 %v1425
      %v1428 = vsub.f32 %v1420, %v1426
      %v1429 = vsub.f32 %v1421, %v1427
      %1430 = vst.msk [vmem:[#allocation3] sm:$0xff] %vm431, %v1428
      %1431 = vst.msk [vmem:[#allocation3 + $0x8] sm:$0xff] %vm431, %v1429
      %v1434 = vrot.slane %v1426, 3
      %v1435 = vrot.slane %v1427, 3
      %v1436 = vsel %vm342, %v1434, %v1435
      %v1439 = vsel %vm342, 0.0, %v1434
      %v1440 = vmul.f32 %v1439, %v315
      %v1441 = vmul.f32 %v1436, %v316
      %v1442 = vrot.slane %v1426, 4
      %v1443 = vrot.slane %v1427, 4
      %v1444 = vsel %vm336, %v1442, %v1443
      %v1446 = vsel %vm336, 0.0, %v1442
      %v1447 = vrot.slane %v1426, 5
      %v1448 = vrot.slane %v1427, 5
      %v1449 = vsel %vm327, %v1447, %v1448
      %v1452 = vsel %vm327, 0.0, %v1447
      %v1453 = vmul.f32 %v1452, %v321
      %v1454 = vmul.f32 %v1449, %v322
      %v1455 = vrot.slane %v1426, 7
      %v1456 = vrot.slane %v1427, 7
      %v1457 = vsel %vm360, %v1455, %v1456
      %v1460 = vsel %vm360, 0.0, %v1455
      %v1461 = vmul.f32 %v1460, %v315
      %v1462 = vmul.f32 %v1457, %v316
      %v1463 = vrot.slane %v1426, 1
      %v1464 = vrot.slane %v1427, 1
      %v1465 = vsel %vm351, %v1463, %v1464
      %v1468 = vsel %vm351, %v1464, 0.0
      %v1469 = vmul.f32 %v1465, %v321
      %v1470 = vmul.f32 %v1468, %v322
      %v1472 = vsel %vm342, %v1435, 0.0
      %v1473 = vmul.f32 %v1436, %v315
      %v1474 = vmul.f32 %v1472, %v316
      %v1476 = vsel %vm336, %v1443, 0.0
      %v1478 = vsel %vm327, %v1448, 0.0
      %v1479 = vmul.f32 %v1449, %v321
      %v1480 = vmul.f32 %v1478, %v322
      %1482 = vrot.lane.b32.xlu0 %v1446, 16
      %v1483 = vpop.permute.xlu0 %1482
      %1484 = vrot.lane.b32.xlu0 %v1444, 16
      %v1485 = vpop.permute.xlu0 %1484
      %1490 = vrot.lane.b32.xlu0 %v1453, 32
      %v1491 = vpop.permute.xlu0 %1490
      %1492 = vrot.lane.b32.xlu0 %v1454, 32
      %v1493 = vpop.permute.xlu0 %1492
      %1498 = vrot.lane.b32.xlu0 %v1461, 48
      %v1499 = vpop.permute.xlu0 %1498
      %1500 = vrot.lane.b32.xlu0 %v1462, 48
      %v1501 = vpop.permute.xlu0 %1500
      %1504 = vrot.lane.b32.xlu0 %v1426, 64
      %v1505 = vpop.permute.xlu0 %1504
      %1506 = vrot.lane.b32.xlu0 %v1427, 64
      %v1507 = vpop.permute.xlu0 %1506
      %1512 = vrot.lane.b32.xlu0 %v1469, 80
      %v1513 = vpop.permute.xlu0 %1512
      %1514 = vrot.lane.b32.xlu0 %v1470, 80
      %v1515 = vpop.permute.xlu0 %1514
      %1520 = vrot.lane.b32.xlu0 %v1473, 96
      %v1521 = vpop.permute.xlu0 %1520
      %1522 = vrot.lane.b32.xlu0 %v1474, 96
      %v1523 = vpop.permute.xlu0 %1522
      %1527 = vrot.lane.b32.xlu0 %v1444, 112
      %v1528 = vpop.permute.xlu0 %1527
      %1529 = vrot.lane.b32.xlu0 %v1476, 112
      %v1530 = vpop.permute.xlu0 %1529
      %v1533 = vsel %vm431, %v1440, %v1483
      %v1534 = vsel %vm431, %v1441, %v1485
      %v1535 = vsel %vm434, %v1533, %v1491
      %v1536 = vsel %vm434, %v1534, %v1493
      %v1537 = vsel %vm437, %v1535, %v1499
      %v1538 = vsel %vm437, %v1536, %v1501
      %v1539 = vsel %vm440, %v1537, %v1505
      %v1540 = vsel %vm440, %v1538, %v1507
      %v1541 = vsel %vm443, %v1539, %v1513
      %v1542 = vsel %vm443, %v1540, %v1515
      %v1543 = vsel %vm446, %v1541, %v1521
      %v1544 = vsel %vm446, %v1542, %v1523
      %v1545 = vsel %vm449, %v1543, %v1528
      %v1546 = vsel %vm449, %v1544, %v1530
      %v1548 = vsel %vm431, %v1479, 0
      %v1551 = vsel %vm431, %v1480, 0
      %1553 = vmatprep.subr.mxu0 0.0
      %1554 = vmatpush1.msra.mxu0 %v583
      %1555 = vmatprep.subr.mxu0 0.0
      %1556 = vmatpush1.msra.mxu0 %v584
      %1557 = vmatprep.subr.mxu0 0.0
      %1558 = vmatpush1.msra.mxu0 %v585
      %1559 = vmatprep.subr.mxu0 0.0
      %1560 = vmatpush1.msra.mxu0 %v586
      %1561 = vmatprep.subr.mxu0 0.0
      %1562 = vmatpush1.msra.mxu0 %v587
      %1563 = vmatprep.subr.mxu0 0.0
      %1564 = vmatpush1.msra.mxu0 %v588
      %1565 = vmatprep.subr.mxu0 0.0
      %1566 = vmatpush1.msra.mxu0 %v589
      %1567 = vmatprep.subr.mxu0 0.0
      %1568 = vmatpush1.msra.mxu0 %v590
      %1569 = vmatprep.subr.mxu0 0.0
      %1570 = vmatpush1.msra.mxu0 %v591
      %1571 = vmatprep.subr.mxu0 0.0
      %1572 = vmatpush1.msra.mxu0 %v592
      %1573 = vmatprep.subr.mxu0 0.0
      %1574 = vmatpush1.msra.mxu0 %v593
      %1575 = vmatprep.subr.mxu0 0.0
      %1576 = vmatpush1.msra.mxu0 %v594
      %1577 = vmatprep.subr.mxu0 0.0
      %1578 = vmatpush1.msra.mxu0 %v595
      %1579 = vmatprep.subr.mxu0 0.0
      %1580 = vmatpush1.msra.mxu0 %v596
      %1581 = vmatprep.subr.mxu0 0.0
      %1582 = vmatpush1.msra.mxu0 %v597
      %1583 = vmatprep.subr.mxu0 0.0
      %1584 = vmatpush1.msra.mxu0 %v598
      %1585 = vmatprep.subr.mxu0 0.0
      %1586 = vmatpush1.msra.mxu0 %v599
      %1587 = vmatprep.subr.mxu0 0.0
      %1588 = vmatpush1.msra.mxu0 %v600
      %1589 = vmatprep.subr.mxu0 0.0
      %1590 = vmatpush1.msra.mxu0 0.0
      %1591 = vmatprep.subr.mxu0 0.0
      %1592 = vmatpush1.msra.mxu0 0.0
      %1593 = vmatprep.subr.mxu0 0.0
      %1594 = vmatpush1.msra.mxu0 0.0
      %1595 = vmatprep.subr.mxu0 0.0
      %1596 = vmatpush1.msra.mxu0 0.0
      %1597 = vmatprep.subr.mxu0 0.0
      %1598 = vmatpush1.msra.mxu0 0.0
      %1599 = vmatprep.subr.mxu0 0.0
      %1600 = vmatpush1.msra.mxu0 0.0
      %1601 = vmatprep.subr.mxu0 0.0
      %1602 = vmatpush1.msra.mxu0 0.0
      %1603 = vmatprep.subr.mxu0 0.0
      %1604 = vmatpush1.msra.mxu0 0.0
      %1605 = vmatprep.subr.mxu0 0.0
      %1606 = vmatpush1.msra.mxu0 0.0
      %1607 = vmatprep.subr.mxu0 0.0
      %1608 = vmatpush1.msra.mxu0 0.0
      %1609 = vmatprep.subr.mxu0 0.0
      %1610 = vmatpush1.msra.mxu0 0.0
      %1611 = vmatprep.subr.mxu0 0.0
      %1612 = vmatpush1.msra.mxu0 0.0
      %1613 = vmatprep.subr.mxu0 0.0
      %1614 = vmatpush1.msra.mxu0 0.0
      %1615 = vmatprep.subr.mxu0 0.0
      %1616 = vmatpush1.msra.mxu0 0.0
      %1617 = vmatprep.mubr.f32.mxu0 %v1548
      %1618 = vmatmul.mubr.f32.gmra.mrb[0].mxu0 %v1545
      %v1619 = vpop.f32.mrb[0].mxu0
      %v1620 = vadd.f32 %v1031, %v1619
      %v1621 = vpop.f32.mrb[0].mxu0
      %1622 = vmatprep.mubr.f32.mxu0 %v1551
      %1623 = vmatmul.mubr.f32.gmra.mrb[0].mxu0 %v1546
      %v1624 = vpop.f32.mrb[0].mxu0
      %v1625 = vadd.f32 %v1031, %v1624
      %v1626 = vpop.f32.mrb[0].mxu0
      %1627 = vdwg.mxu0
      %v1628 = vld [vmem:[#allocation4] sm:$0xff]
      %v1629 = vld [vmem:[#allocation4 + $0x8] sm:$0xff]
      %v1630 = vmul.f32 %v1628, 0.99
      %v1631 = vmul.f32 %v1629, 0.99
      %v1632 = vadd.f32 %v1630, %v1620
      %v1633 = vadd.f32 %v1631, %v1625
      %vm1634 = vcmp.ge.f32.partialorder %v1632, 1.0
      %vm1635 = vcmp.ge.f32.partialorder %v1633, 1.0
      %v1636 = vsel %vm1634, 1, 0
      %v1637 = vsel %vm1635, 1, 0
      %v1638 = vcvt.s32.f32 %v1636
      %v1639 = vcvt.s32.f32 %v1637
      %v1640 = vsub.f32 %v1632, %v1638
      %v1641 = vsub.f32 %v1633, %v1639
      %1642 = vst.msk [vmem:[#allocation4] sm:$0xff] %vm431, %v1640
      %1643 = vst.msk [vmem:[#allocation4 + $0x8] sm:$0xff] %vm431, %v1641
      %1644 = vst.msk [vmem:[#allocation5] sm:$0xff] %vm431, %v1638
      %1645 = vst.msk [vmem:[#allocation5 + $0x8] sm:$0xff] %vm431, %v1639
      %v1646 = vld [vmem:[#allocation6] sm:$0xff]
      %v1647 = vld [vmem:[#allocation6 + $0x8] sm:$0xff]
      %v1648 = vadd.f32 %v1646, %v1638
      %v1649 = vadd.f32 %v1647, %v1639
      %1650 = vst.msk [vmem:[#allocation6] sm:$0xff] %vm431, %v1648
      %1651 = vst.msk [vmem:[#allocation6 + $0x8] sm:$0xff] %vm431, %v1649
      %v1652 = vld [vmem:[#allocation5] sm:$0xff]
      %v1653 = vld [vmem:[#allocation5 + $0x8] sm:$0xff]
      %v1656 = vrot.slane %v1652, 1
      %v1657 = vrot.slane %v1653, 1
      %v1658 = vsel %vm351, %v1656, %v1657
      %v1661 = vsel %vm351, %v1657, 0.0
      %v1662 = vmul.f32 %v1658, %v321
      %v1663 = vmul.f32 %v1661, %v322
      %v1664 = vrot.slane %v1652, 4
      %v1665 = vrot.slane %v1653, 4
      %v1666 = vsel %vm336, %v1664, %v1665
      %v1668 = vsel %vm336, %v1665, 0.0
      %v1669 = vrot.slane %v1652, 5
      %v1670 = vrot.slane %v1653, 5
      %v1671 = vsel %vm327, %v1669, %v1670
      %v1674 = vsel %vm327, %v1670, 0.0
      %v1675 = vmul.f32 %v1671, %v321
      %v1676 = vmul.f32 %v1674, %v322
      %1679 = vrot.lane.b32.xlu0 %v1662, 16
      %v1680 = vpop.permute.xlu0 %1679
      %1681 = vrot.lane.b32.xlu0 %v1663, 16
      %v1682 = vpop.permute.xlu0 %1681
      %1686 = vrot.lane.b32.xlu0 %v1666, 32
      %v1687 = vpop.permute.xlu0 %1686
      %1688 = vrot.lane.b32.xlu0 %v1668, 32
      %v1689 = vpop.permute.xlu0 %1688
      %1694 = vrot.lane.b32.xlu0 %v1675, 48
      %v1695 = vpop.permute.xlu0 %1694
      %1696 = vrot.lane.b32.xlu0 %v1676, 48
      %v1697 = vpop.permute.xlu0 %1696
      %v1700 = vsel %vm431, %v1652, %v1680
      %v1701 = vsel %vm431, %v1653, %v1682
      %v1702 = vsel %vm434, %v1700, %v1687
      %v1703 = vsel %vm434, %v1701, %v1689
      %v1704 = vsel %vm437, %v1702, %v1695
      %v1705 = vsel %vm437, %v1703, %v1697
      %v1707 = vsel %vm440, %v1704, 0
      %v1710 = vsel %vm440, %v1705, 0
      %1712 = vmatprep.subr.mxu0 0.0
      %1713 = vmatpush1.msra.mxu0 %v558
      %1714 = vmatprep.subr.mxu0 0.0
      %1715 = vmatpush1.msra.mxu0 %v559
      %1716 = vmatprep.subr.mxu0 0.0
      %1717 = vmatpush1.msra.mxu0 %v560
      %1718 = vmatprep.subr.mxu0 0.0
      %1719 = vmatpush1.msra.mxu0 %v561
      %1720 = vmatprep.subr.mxu0 0.0
      %1721 = vmatpush1.msra.mxu0 %v562
      %1722 = vmatprep.subr.mxu0 0.0
      %1723 = vmatpush1.msra.mxu0 %v563
      %1724 = vmatprep.subr.mxu0 0.0
      %1725 = vmatpush1.msra.mxu0 %v564
      %1726 = vmatprep.subr.mxu0 0.0
      %1727 = vmatpush1.msra.mxu0 %v565
      %1728 = vmatprep.subr.mxu0 0.0
      %1729 = vmatpush1.msra.mxu0 0.0
      %1730 = vmatprep.subr.mxu0 0.0
      %1731 = vmatpush1.msra.mxu0 0.0
      %1732 = vmatprep.subr.mxu0 0.0
      %1733 = vmatpush1.msra.mxu0 0.0
      %1734 = vmatprep.subr.mxu0 0.0
      %1735 = vmatpush1.msra.mxu0 0.0
      %1736 = vmatprep.subr.mxu0 0.0
      %1737 = vmatpush1.msra.mxu0 0.0
      %1738 = vmatprep.subr.mxu0 0.0
      %1739 = vmatpush1.msra.mxu0 0.0
      %1740 = vmatprep.subr.mxu0 0.0
      %1741 = vmatpush1.msra.mxu0 0.0
      %1742 = vmatprep.subr.mxu0 0.0
      %1743 = vmatpush1.msra.mxu0 0.0
      %1744 = vmatprep.subr.mxu0 0.0
      %1745 = vmatpush1.msra.mxu0 0.0
      %1746 = vmatprep.subr.mxu0 0.0
      %1747 = vmatpush1.msra.mxu0 0.0
      %1748 = vmatprep.subr.mxu0 0.0
      %1749 = vmatpush1.msra.mxu0 0.0
      %1750 = vmatprep.subr.mxu0 0.0
      %1751 = vmatpush1.msra.mxu0 0.0
      %1752 = vmatprep.subr.mxu0 0.0
      %1753 = vmatpush1.msra.mxu0 0.0
      %1754 = vmatprep.subr.mxu0 0.0
      %1755 = vmatpush1.msra.mxu0 0.0
      %1756 = vmatprep.subr.mxu0 0.0
      %1757 = vmatpush1.msra.mxu0 0.0
      %1758 = vmatprep.subr.mxu0 0.0
      %1759 = vmatpush1.msra.mxu0 0.0
      %1760 = vmatprep.subr.mxu0 0.0
      %1761 = vmatpush1.msra.mxu0 0.0
      %1762 = vmatprep.subr.mxu0 0.0
      %1763 = vmatpush1.msra.mxu0 0.0
      %1764 = vmatprep.subr.mxu0 0.0
      %1765 = vmatpush1.msra.mxu0 0.0
      %1766 = vmatprep.subr.mxu0 0.0
      %1767 = vmatpush1.msra.mxu0 0.0
      %1768 = vmatprep.subr.mxu0 0.0
      %1769 = vmatpush1.msra.mxu0 0.0
      %1770 = vmatprep.subr.mxu0 0.0
      %1771 = vmatpush1.msra.mxu0 0.0
      %1772 = vmatprep.subr.mxu0 0.0
      %1773 = vmatpush1.msra.mxu0 0.0
      %1774 = vmatprep.subr.mxu0 0.0
      %1775 = vmatpush1.msra.mxu0 0.0
      %1776 = vmatprep.mubr.f32.mxu0 0.0
      %1777 = vmatmul.mubr.f32.gmra.mrb[0].mxu0 %v1707
      %v1778 = vpop.f32.mrb[0].mxu0
      %v1779 = vadd.f32 %v550, %v1778
      %v1780 = vpop.f32.mrb[0].mxu0
      %1781 = vmatprep.mubr.f32.mxu0 0.0
      %1782 = vmatmul.mubr.f32.gmra.mrb[0].mxu0 %v1710
      %v1783 = vpop.f32.mrb[0].mxu0
      %v1784 = vadd.f32 %v555, %v1783
      %v1785 = vpop.f32.mrb[0].mxu0
      %1786 = vdwg.mxu0
      %v1787 = vld [vmem:[#allocation2] sm:$0xff]
      %v1788 = vld [vmem:[#allocation2 + $0x8] sm:$0xff]
      %v1789 = vmul.f32 %v1787, 0.99
      %v1790 = vmul.f32 %v1788, 0.99
      %v1791 = vadd.f32 %v1789, %v1779
      %v1792 = vadd.f32 %v1790, %v1784
      %vm1793 = vcmp.ge.f32.partialorder %v1791, 1.0
      %vm1794 = vcmp.ge.f32.partialorder %v1792, 1.0
      %v1795 = vsel %vm1793, 1, 0
      %v1796 = vsel %vm1794, 1, 0
      %v1797 = vcvt.s32.f32 %v1795
      %v1798 = vcvt.s32.f32 %v1796
      %v1799 = vsub.f32 %v1791, %v1797
      %v1800 = vsub.f32 %v1792, %v1798
      %1801 = vst.msk [vmem:[#allocation2] sm:$0xff] %vm434, %v1799
      %1802 = vst.msk [vmem:[#allocation2 + $0x8] sm:$0xff] %vm434, %v1800
      %v1805 = vrot.slane %v1797, 7
      %v1806 = vrot.slane %v1798, 7
      %v1807 = vsel %vm360, %v1805, %v1806
      %v1810 = vsel %vm360, 0.0, %v1805
      %v1811 = vmul.f32 %v1810, %v315
      %v1812 = vmul.f32 %v1807, %v316
      %v1813 = vrot.slane %v1797, 4
      %v1814 = vrot.slane %v1798, 4
      %v1815 = vsel %vm336, %v1813, %v1814
      %v1817 = vsel %vm336, 0.0, %v1813
      %v1818 = vrot.slane %v1797, 3
      %v1819 = vrot.slane %v1798, 3
      %v1820 = vsel %vm342, %v1818, %v1819
      %v1823 = vsel %vm342, 0.0, %v1818
      %v1824 = vmul.f32 %v1823, %v315
      %v1825 = vmul.f32 %v1820, %v316
      %1828 = vrot.lane.b32.xlu0 %v1811, 32
      %v1829 = vpop.permute.xlu0 %1828
      %1830 = vrot.lane.b32.xlu0 %v1812, 32
      %v1831 = vpop.permute.xlu0 %1830
      %1835 = vrot.lane.b32.xlu0 %v1817, 64
      %v1836 = vpop.permute.xlu0 %1835
      %1837 = vrot.lane.b32.xlu0 %v1815, 64
      %v1838 = vpop.permute.xlu0 %1837
      %1843 = vrot.lane.b32.xlu0 %v1824, 96
      %v1844 = vpop.permute.xlu0 %1843
      %1845 = vrot.lane.b32.xlu0 %v1825, 96
      %v1846 = vpop.permute.xlu0 %1845
      %v1849 = vsel %vm434, %v1797, %v1829
      %v1850 = vsel %vm434, %v1798, %v1831
      %v1851 = vsel %vm440, %v1849, %v1836
      %v1852 = vsel %vm440, %v1850, %v1838
      %v1853 = vsel %vm446, %v1851, %v1844
      %v1854 = vsel %vm446, %v1852, %v1846
      %1855 = vmatprep.subr.mxu0 0.0
      %1856 = vmatpush1.msra.mxu0 %v566
      %1857 = vmatprep.subr.mxu0 0.0
      %1858 = vmatpush1.msra.mxu0 %v567
      %1859 = vmatprep.subr.mxu0 0.0
      %1860 = vmatpush1.msra.mxu0 %v568
      %1861 = vmatprep.subr.mxu0 0.0
      %1862 = vmatpush1.msra.mxu0 %v569
      %1863 = vmatprep.subr.mxu0 0.0
      %1864 = vmatpush1.msra.mxu0 %v570
      %1865 = vmatprep.subr.mxu0 0.0
      %1866 = vmatpush1.msra.mxu0 %v571
      %1867 = vmatprep.subr.mxu0 0.0
      %1868 = vmatpush1.msra.mxu0 %v572
      %1869 = vmatprep.subr.mxu0 0.0
      %1870 = vmatpush1.msra.mxu0 %v573
      %1871 = vmatprep.subr.mxu0 0.0
      %1872 = vmatpush1.msra.mxu0 %v574
      %1873 = vmatprep.subr.mxu0 0.0
      %1874 = vmatpush1.msra.mxu0 %v575
      %1875 = vmatprep.subr.mxu0 0.0
      %1876 = vmatpush1.msra.mxu0 %v576
      %1877 = vmatprep.subr.mxu0 0.0
      %1878 = vmatpush1.msra.mxu0 %v577
      %1879 = vmatprep.subr.mxu0 0.0
      %1880 = vmatpush1.msra.mxu0 %v578
      %1881 = vmatprep.subr.mxu0 0.0
      %1882 = vmatpush1.msra.mxu0 %v579
      %1883 = vmatprep.subr.mxu0 0.0
      %1884 = vmatpush1.msra.mxu0 %v580
      %1885 = vmatprep.subr.mxu0 0.0
      %1886 = vmatpush1.msra.mxu0 %v581
      %1887 = vmatprep.subr.mxu0 0.0
      %1888 = vmatpush1.msra.mxu0 0.0
      %1889 = vmatprep.subr.mxu0 0.0
      %1890 = vmatpush1.msra.mxu0 0.0
      %1891 = vmatprep.subr.mxu0 0.0
      %1892 = vmatpush1.msra.mxu0 0.0
      %1893 = vmatprep.subr.mxu0 0.0
      %1894 = vmatpush1.msra.mxu0 0.0
      %1895 = vmatprep.subr.mxu0 0.0
      %1896 = vmatpush1.msra.mxu0 0.0
      %1897 = vmatprep.subr.mxu0 0.0
      %1898 = vmatpush1.msra.mxu0 0.0
      %1899 = vmatprep.subr.mxu0 0.0
      %1900 = vmatpush1.msra.mxu0 0.0
      %1901 = vmatprep.subr.mxu0 0.0
      %1902 = vmatpush1.msra.mxu0 0.0
      %1903 = vmatprep.subr.mxu0 0.0
      %1904 = vmatpush1.msra.mxu0 0.0
      %1905 = vmatprep.subr.mxu0 0.0
      %1906 = vmatpush1.msra.mxu0 0.0
      %1907 = vmatprep.subr.mxu0 0.0
      %1908 = vmatpush1.msra.mxu0 0.0
      %1909 = vmatprep.subr.mxu0 0.0
      %1910 = vmatpush1.msra.mxu0 0.0
      %1911 = vmatprep.subr.mxu0 0.0
      %1912 = vmatpush1.msra.mxu0 0.0
      %1913 = vmatprep.subr.mxu0 0.0
      %1914 = vmatpush1.msra.mxu0 0.0
      %1915 = vmatprep.subr.mxu0 0.0
      %1916 = vmatpush1.msra.mxu0 0.0
      %1917 = vmatprep.subr.mxu0 0.0
      %1918 = vmatpush1.msra.mxu0 0.0
      %1919 = vmatprep.mubr.f32.mxu0 0.0
      %1920 = vmatmul.mubr.f32.gmra.mrb[0].mxu0 %v1853
      %v1921 = vpop.f32.mrb[0].mxu0
      %v1922 = vadd.f32 %v819, %v1921
      %v1923 = vpop.f32.mrb[0].mxu0
      %1924 = vmatprep.mubr.f32.mxu0 0.0
      %1925 = vmatmul.mubr.f32.gmra.mrb[0].mxu0 %v1854
      %v1926 = vpop.f32.mrb[0].mxu0
      %v1927 = vadd.f32 %v819, %v1926
      %v1928 = vpop.f32.mrb[0].mxu0
      %1929 = vdwg.mxu0
      %v1930 = vld [vmem:[#allocation3] sm:$0xff]
      %v1931 = vld [vmem:[#allocation3 + $0x8] sm:$0xff]
      %v1932 = vmul.f32 %v1930, 0.99
      %v1933 = vmul.f32 %v1931, 0.99
      %v1934 = vadd.f32 %v1932, %v1922
      %v1935 = vadd.f32 %v1933, %v1927
      %vm1936 = vcmp.ge.f32.partialorder %v1934, 1.0
      %vm1937 = vcmp.ge.f32.partialorder %v1935, 1.0
      %v1938 = vsel %vm1936, 1, 0
      %v1939 = vsel %vm1937, 1, 0
      %v1940 = vcvt.s32.f32 %v1938
      %v1941 = vcvt.s32.f32 %v1939
      %v1942 = vsub.f32 %v1934, %v1940
      %v1943 = vsub.f32 %v1935, %v1941
      %1944 = vst.msk [vmem:[#allocation3] sm:$0xff] %vm431, %v1942
      %1945 = vst.msk [vmem:[#allocation3 + $0x8] sm:$0xff] %vm431, %v1943
      %v1948 = vrot.slane %v1940, 3
      %v1949 = vrot.slane %v1941, 3
      %v1950 = vsel %vm342, %v1948, %v1949
      %v1953 = vsel %vm342, 0.0, %v1948
      %v1954 = vmul.f32 %v1953, %v315
      %v1955 = vmul.f32 %v1950, %v316
      %v1956 = vrot.slane %v1940, 4
      %v1957 = vrot.slane %v1941, 4
      %v1958 = vsel %vm336, %v1956, %v1957
      %v1960 = vsel %vm336, 0.0, %v1956
      %v1961 = vrot.slane %v1940, 5
      %v1962 = vrot.slane %v1941, 5
      %v1963 = vsel %vm327, %v1961, %v1962
      %v1966 = vsel %vm327, 0.0, %v1961
      %v1967 = vmul.f32 %v1966, %v321
      %v1968 = vmul.f32 %v1963, %v322
      %v1969 = vrot.slane %v1940, 7
      %v1970 = vrot.slane %v1941, 7
      %v1971 = vsel %vm360, %v1969, %v1970
      %v1974 = vsel %vm360, 0.0, %v1969
      %v1975 = vmul.f32 %v1974, %v315
      %v1976 = vmul.f32 %v1971, %v316
      %v1977 = vrot.slane %v1940, 1
      %v1978 = vrot.slane %v1941, 1
      %v1979 = vsel %vm351, %v1977, %v1978
      %v1982 = vsel %vm351, %v1978, 0.0
      %v1983 = vmul.f32 %v1979, %v321
      %v1984 = vmul.f32 %v1982, %v322
      %v1986 = vsel %vm342, %v1949, 0.0
      %v1987 = vmul.f32 %v1950, %v315
      %v1988 = vmul.f32 %v1986, %v316
      %v1990 = vsel %vm336, %v1957, 0.0
      %v1992 = vsel %vm327, %v1962, 0.0
      %v1993 = vmul.f32 %v1963, %v321
      %v1994 = vmul.f32 %v1992, %v322
      %1996 = vrot.lane.b32.xlu0 %v1960, 16
      %v1997 = vpop.permute.xlu0 %1996
      %1998 = vrot.lane.b32.xlu0 %v1958, 16
      %v1999 = vpop.permute.xlu0 %1998
      %2004 = vrot.lane.b32.xlu0 %v1967, 32
      %v2005 = vpop.permute.xlu0 %2004
      %2006 = vrot.lane.b32.xlu0 %v1968, 32
      %v2007 = vpop.permute.xlu0 %2006
      %2012 = vrot.lane.b32.xlu0 %v1975, 48
      %v2013 = vpop.permute.xlu0 %2012
      %2014 = vrot.lane.b32.xlu0 %v1976, 48
      %v2015 = vpop.permute.xlu0 %2014
      %2018 = vrot.lane.b32.xlu0 %v1940, 64
      %v2019 = vpop.permute.xlu0 %2018
      %2020 = vrot.lane.b32.xlu0 %v1941, 64
      %v2021 = vpop.permute.xlu0 %2020
      %2026 = vrot.lane.b32.xlu0 %v1983, 80
      %v2027 = vpop.permute.xlu0 %2026
      %2028 = vrot.lane.b32.xlu0 %v1984, 80
      %v2029 = vpop.permute.xlu0 %2028
      %2034 = vrot.lane.b32.xlu0 %v1987, 96
      %v2035 = vpop.permute.xlu0 %2034
      %2036 = vrot.lane.b32.xlu0 %v1988, 96
      %v2037 = vpop.permute.xlu0 %2036
      %2041 = vrot.lane.b32.xlu0 %v1958, 112
      %v2042 = vpop.permute.xlu0 %2041
      %2043 = vrot.lane.b32.xlu0 %v1990, 112
      %v2044 = vpop.permute.xlu0 %2043
      %v2047 = vsel %vm431, %v1954, %v1997
      %v2048 = vsel %vm431, %v1955, %v1999
      %v2049 = vsel %vm434, %v2047, %v2005
      %v2050 = vsel %vm434, %v2048, %v2007
      %v2051 = vsel %vm437, %v2049, %v2013
      %v2052 = vsel %vm437, %v2050, %v2015
      %v2053 = vsel %vm440, %v2051, %v2019
      %v2054 = vsel %vm440, %v2052, %v2021
      %v2055 = vsel %vm443, %v2053, %v2027
      %v2056 = vsel %vm443, %v2054, %v2029
      %v2057 = vsel %vm446, %v2055, %v2035
      %v2058 = vsel %vm446, %v2056, %v2037
      %v2059 = vsel %vm449, %v2057, %v2042
      %v2060 = vsel %vm449, %v2058, %v2044
      %v2062 = vsel %vm431, %v1993, 0
      %v2065 = vsel %vm431, %v1994, 0
      %2067 = vmatprep.subr.mxu0 0.0
      %2068 = vmatpush1.msra.mxu0 %v583
      %2069 = vmatprep.subr.mxu0 0.0
      %2070 = vmatpush1.msra.mxu0 %v584
      %2071 = vmatprep.subr.mxu0 0.0
      %2072 = vmatpush1.msra.mxu0 %v585
      %2073 = vmatprep.subr.mxu0 0.0
      %2074 = vmatpush1.msra.mxu0 %v586
      %2075 = vmatprep.subr.mxu0 0.0
      %2076 = vmatpush1.msra.mxu0 %v587
      %2077 = vmatprep.subr.mxu0 0.0
      %2078 = vmatpush1.msra.mxu0 %v588
      %2079 = vmatprep.subr.mxu0 0.0
      %2080 = vmatpush1.msra.mxu0 %v589
      %2081 = vmatprep.subr.mxu0 0.0
      %2082 = vmatpush1.msra.mxu0 %v590
      %2083 = vmatprep.subr.mxu0 0.0
      %2084 = vmatpush1.msra.mxu0 %v591
      %2085 = vmatprep.subr.mxu0 0.0
      %2086 = vmatpush1.msra.mxu0 %v592
      %2087 = vmatprep.subr.mxu0 0.0
      %2088 = vmatpush1.msra.mxu0 %v593
      %2089 = vmatprep.subr.mxu0 0.0
      %2090 = vmatpush1.msra.mxu0 %v594
      %2091 = vmatprep.subr.mxu0 0.0
      %2092 = vmatpush1.msra.mxu0 %v595
      %2093 = vmatprep.subr.mxu0 0.0
      %2094 = vmatpush1.msra.mxu0 %v596
      %2095 = vmatprep.subr.mxu0 0.0
      %2096 = vmatpush1.msra.mxu0 %v597
      %2097 = vmatprep.subr.mxu0 0.0
      %2098 = vmatpush1.msra.mxu0 %v598
      %2099 = vmatprep.subr.mxu0 0.0
      %2100 = vmatpush1.msra.mxu0 %v599
      %2101 = vmatprep.subr.mxu0 0.0
      %2102 = vmatpush1.msra.mxu0 %v600
      %2103 = vmatprep.subr.mxu0 0.0
      %2104 = vmatpush1.msra.mxu0 0.0
      %2105 = vmatprep.subr.mxu0 0.0
      %2106 = vmatpush1.msra.mxu0 0.0
      %2107 = vmatprep.subr.mxu0 0.0
      %2108 = vmatpush1.msra.mxu0 0.0
      %2109 = vmatprep.subr.mxu0 0.0
      %2110 = vmatpush1.msra.mxu0 0.0
      %2111 = vmatprep.subr.mxu0 0.0
      %2112 = vmatpush1.msra.mxu0 0.0
      %2113 = vmatprep.subr.mxu0 0.0
      %2114 = vmatpush1.msra.mxu0 0.0
      %2115 = vmatprep.subr.mxu0 0.0
      %2116 = vmatpush1.msra.mxu0 0.0
      %2117 = vmatprep.subr.mxu0 0.0
      %2118 = vmatpush1.msra.mxu0 0.0
      %2119 = vmatprep.subr.mxu0 0.0
      %2120 = vmatpush1.msra.mxu0 0.0
      %2121 = vmatprep.subr.mxu0 0.0
      %2122 = vmatpush1.msra.mxu0 0.0
      %2123 = vmatprep.subr.mxu0 0.0
      %2124 = vmatpush1.msra.mxu0 0.0
      %2125 = vmatprep.subr.mxu0 0.0
      %2126 = vmatpush1.msra.mxu0 0.0
      %2127 = vmatprep.subr.mxu0 0.0
      %2128 = vmatpush1.msra.mxu0 0.0
      %2129 = vmatprep.subr.mxu0 0.0
      %2130 = vmatpush1.msra.mxu0 0.0
      %2131 = vmatprep.mubr.f32.mxu0 %v2062
      %2132 = vmatmul.mubr.f32.gmra.mrb[0].mxu0 %v2059
      %v2133 = vpop.f32.mrb[0].mxu0
      %v2134 = vadd.f32 %v1031, %v2133
      %v2135 = vpop.f32.mrb[0].mxu0
      %2136 = vmatprep.mubr.f32.mxu0 %v2065
      %2137 = vmatmul.mubr.f32.gmra.mrb[0].mxu0 %v2060
      %v2138 = vpop.f32.mrb[0].mxu0
      %v2139 = vadd.f32 %v1031, %v2138
      %v2140 = vpop.f32.mrb[0].mxu0
      %2141 = vdwg.mxu0
      %v2142 = vld [vmem:[#allocation4] sm:$0xff]
      %v2143 = vld [vmem:[#allocation4 + $0x8] sm:$0xff]
      %v2144 = vmul.f32 %v2142, 0.99
      %v2145 = vmul.f32 %v2143, 0.99
      %v2146 = vadd.f32 %v2144, %v2134
      %v2147 = vadd.f32 %v2145, %v2139
      %vm2148 = vcmp.ge.f32.partialorder %v2146, 1.0
      %vm2149 = vcmp.ge.f32.partialorder %v2147, 1.0
      %v2150 = vsel %vm2148, 1, 0
      %v2151 = vsel %vm2149, 1, 0
      %v2152 = vcvt.s32.f32 %v2150
      %v2153 = vcvt.s32.f32 %v2151
      %v2154 = vsub.f32 %v2146, %v2152
      %v2155 = vsub.f32 %v2147, %v2153
      %2156 = vst.msk [vmem:[#allocation4] sm:$0xff] %vm431, %v2154
      %2157 = vst.msk [vmem:[#allocation4 + $0x8] sm:$0xff] %vm431, %v2155
      %2158 = vst.msk [vmem:[#allocation5] sm:$0xff] %vm431, %v2152
      %2159 = vst.msk [vmem:[#allocation5 + $0x8] sm:$0xff] %vm431, %v2153
      %v2160 = vld [vmem:[#allocation6] sm:$0xff]
      %v2161 = vld [vmem:[#allocation6 + $0x8] sm:$0xff]
      %v2162 = vadd.f32 %v2160, %v2152
      %v2163 = vadd.f32 %v2161, %v2153
      %2164 = vst.msk [vmem:[#allocation6] sm:$0xff] %vm431, %v2162
      %2165 = vst.msk [vmem:[#allocation6 + $0x8] sm:$0xff] %vm431, %v2163
      %v2166 = vld [vmem:[#allocation5] sm:$0xff]
      %v2167 = vld [vmem:[#allocation5 + $0x8] sm:$0xff]
      %v2170 = vrot.slane %v2166, 1
      %v2171 = vrot.slane %v2167, 1
      %v2172 = vsel %vm351, %v2170, %v2171
      %v2175 = vsel %vm351, %v2171, 0.0
      %v2176 = vmul.f32 %v2172, %v321
      %v2177 = vmul.f32 %v2175, %v322
      %v2178 = vrot.slane %v2166, 4
      %v2179 = vrot.slane %v2167, 4
      %v2180 = vsel %vm336, %v2178, %v2179
      %v2182 = vsel %vm336, %v2179, 0.0
      %v2183 = vrot.slane %v2166, 5
      %v2184 = vrot.slane %v2167, 5
      %v2185 = vsel %vm327, %v2183, %v2184
      %v2188 = vsel %vm327, %v2184, 0.0
      %v2189 = vmul.f32 %v2185, %v321
      %v2190 = vmul.f32 %v2188, %v322
      %2193 = vrot.lane.b32.xlu0 %v2176, 16
      %v2194 = vpop.permute.xlu0 %2193
      %2195 = vrot.lane.b32.xlu0 %v2177, 16
      %v2196 = vpop.permute.xlu0 %2195
      %2200 = vrot.lane.b32.xlu0 %v2180, 32
      %v2201 = vpop.permute.xlu0 %2200
      %2202 = vrot.lane.b32.xlu0 %v2182, 32
      %v2203 = vpop.permute.xlu0 %2202
      %2208 = vrot.lane.b32.xlu0 %v2189, 48
      %v2209 = vpop.permute.xlu0 %2208
      %2210 = vrot.lane.b32.xlu0 %v2190, 48
      %v2211 = vpop.permute.xlu0 %2210
      %v2214 = vsel %vm431, %v2166, %v2194
      %v2215 = vsel %vm431, %v2167, %v2196
      %v2216 = vsel %vm434, %v2214, %v2201
      %v2217 = vsel %vm434, %v2215, %v2203
      %v2218 = vsel %vm437, %v2216, %v2209
      %v2219 = vsel %vm437, %v2217, %v2211
      %v2221 = vsel %vm440, %v2218, 0
      %v2224 = vsel %vm440, %v2219, 0
      %2226 = vmatprep.subr.mxu0 0.0
      %2227 = vmatpush1.msra.mxu0 %v558
      %2228 = vmatprep.subr.mxu0 0.0
      %2229 = vmatpush1.msra.mxu0 %v559
      %2230 = vmatprep.subr.mxu0 0.0
      %2231 = vmatpush1.msra.mxu0 %v560
      %2232 = vmatprep.subr.mxu0 0.0
      %2233 = vmatpush1.msra.mxu0 %v561
      %2234 = vmatprep.subr.mxu0 0.0
      %2235 = vmatpush1.msra.mxu0 %v562
      %2236 = vmatprep.subr.mxu0 0.0
      %2237 = vmatpush1.msra.mxu0 %v563
      %2238 = vmatprep.subr.mxu0 0.0
      %2239 = vmatpush1.msra.mxu0 %v564
      %2240 = vmatprep.subr.mxu0 0.0
      %2241 = vmatpush1.msra.mxu0 %v565
      %2242 = vmatprep.subr.mxu0 0.0
      %2243 = vmatpush1.msra.mxu0 0.0
      %2244 = vmatprep.subr.mxu0 0.0
      %2245 = vmatpush1.msra.mxu0 0.0
      %2246 = vmatprep.subr.mxu0 0.0
      %2247 = vmatpush1.msra.mxu0 0.0
      %2248 = vmatprep.subr.mxu0 0.0
      %2249 = vmatpush1.msra.mxu0 0.0
      %2250 = vmatprep.subr.mxu0 0.0
      %2251 = vmatpush1.msra.mxu0 0.0
      %2252 = vmatprep.subr.mxu0 0.0
      %2253 = vmatpush1.msra.mxu0 0.0
      %2254 = vmatprep.subr.mxu0 0.0
      %2255 = vmatpush1.msra.mxu0 0.0
      %2256 = vmatprep.subr.mxu0 0.0
      %2257 = vmatpush1.msra.mxu0 0.0
      %2258 = vmatprep.subr.mxu0 0.0
      %2259 = vmatpush1.msra.mxu0 0.0
      %2260 = vmatprep.subr.mxu0 0.0
      %2261 = vmatpush1.msra.mxu0 0.0
      %2262 = vmatprep.subr.mxu0 0.0
      %2263 = vmatpush1.msra.mxu0 0.0
      %2264 = vmatprep.subr.mxu0 0.0
      %2265 = vmatpush1.msra.mxu0 0.0
      %2266 = vmatprep.subr.mxu0 0.0
      %2267 = vmatpush1.msra.mxu0 0.0
      %2268 = vmatprep.subr.mxu0 0.0
      %2269 = vmatpush1.msra.mxu0 0.0
      %2270 = vmatprep.subr.mxu0 0.0
      %2271 = vmatpush1.msra.mxu0 0.0
      %2272 = vmatprep.subr.mxu0 0.0
      %2273 = vmatpush1.msra.mxu0 0.0
      %2274 = vmatprep.subr.mxu0 0.0
      %2275 = vmatpush1.msra.mxu0 0.0
      %2276 = vmatprep.subr.mxu0 0.0
      %2277 = vmatpush1.msra.mxu0 0.0
      %2278 = vmatprep.subr.mxu0 0.0
      %2279 = vmatpush1.msra.mxu0 0.0
      %2280 = vmatprep.subr.mxu0 0.0
      %2281 = vmatpush1.msra.mxu0 0.0
      %2282 = vmatprep.subr.mxu0 0.0
      %2283 = vmatpush1.msra.mxu0 0.0
      %2284 = vmatprep.subr.mxu0 0.0
      %2285 = vmatpush1.msra.mxu0 0.0
      %2286 = vmatprep.subr.mxu0 0.0
      %2287 = vmatpush1.msra.mxu0 0.0
      %2288 = vmatprep.subr.mxu0 0.0
      %2289 = vmatpush1.msra.mxu0 0.0
      %2290 = vmatprep.mubr.f32.mxu0 0.0
      %2291 = vmatmul.mubr.f32.gmra.mrb[0].mxu0 %v2221
      %v2292 = vpop.f32.mrb[0].mxu0
      %v2293 = vadd.f32 %v550, %v2292
      %v2294 = vpop.f32.mrb[0].mxu0
      %2295 = vmatprep.mubr.f32.mxu0 0.0
      %2296 = vmatmul.mubr.f32.gmra.mrb[0].mxu0 %v2224
      %v2297 = vpop.f32.mrb[0].mxu0
      %v2298 = vadd.f32 %v555, %v2297
      %v2299 = vpop.f32.mrb[0].mxu0
      %2300 = vdwg.mxu0
      %v2301 = vld [vmem:[#allocation2] sm:$0xff]
      %v2302 = vld [vmem:[#allocation2 + $0x8] sm:$0xff]
      %v2303 = vmul.f32 %v2301, 0.99
      %v2304 = vmul.f32 %v2302, 0.99
      %v2305 = vadd.f32 %v2303, %v2293
      %v2306 = vadd.f32 %v2304, %v2298
      %vm2307 = vcmp.ge.f32.partialorder %v2305, 1.0
      %vm2308 = vcmp.ge.f32.partialorder %v2306, 1.0
      %v2309 = vsel %vm2307, 1, 0
      %v2310 = vsel %vm2308, 1, 0
      %v2311 = vcvt.s32.f32 %v2309
      %v2312 = vcvt.s32.f32 %v2310
      %v2313 = vsub.f32 %v2305, %v2311
      %v2314 = vsub.f32 %v2306, %v2312
      %2315 = vst.msk [vmem:[#allocation2] sm:$0xff] %vm434, %v2313
      %2316 = vst.msk [vmem:[#allocation2 + $0x8] sm:$0xff] %vm434, %v2314
      %v2319 = vrot.slane %v2311, 7
      %v2320 = vrot.slane %v2312, 7
      %v2321 = vsel %vm360, %v2319, %v2320
      %v2324 = vsel %vm360, 0.0, %v2319
      %v2325 = vmul.f32 %v2324, %v315
      %v2326 = vmul.f32 %v2321, %v316
      %v2327 = vrot.slane %v2311, 4
      %v2328 = vrot.slane %v2312, 4
      %v2329 = vsel %vm336, %v2327, %v2328
      %v2331 = vsel %vm336, 0.0, %v2327
      %v2332 = vrot.slane %v2311, 3
      %v2333 = vrot.slane %v2312, 3
      %v2334 = vsel %vm342, %v2332, %v2333
      %v2337 = vsel %vm342, 0.0, %v2332
      %v2338 = vmul.f32 %v2337, %v315
      %v2339 = vmul.f32 %v2334, %v316
      %2342 = vrot.lane.b32.xlu0 %v2325, 32
      %v2343 = vpop.permute.xlu0 %2342
      %2344 = vrot.lane.b32.xlu0 %v2326, 32
      %v2345 = vpop.permute.xlu0 %2344
      %2349 = vrot.lane.b32.xlu0 %v2331, 64
      %v2350 = vpop.permute.xlu0 %2349
      %2351 = vrot.lane.b32.xlu0 %v2329, 64
      %v2352 = vpop.permute.xlu0 %2351
      %2357 = vrot.lane.b32.xlu0 %v2338, 96
      %v2358 = vpop.permute.xlu0 %2357
      %2359 = vrot.lane.b32.xlu0 %v2339, 96
      %v2360 = vpop.permute.xlu0 %2359
      %v2363 = vsel %vm434, %v2311, %v2343
      %v2364 = vsel %vm434, %v2312, %v2345
      %v2365 = vsel %vm440, %v2363, %v2350
      %v2366 = vsel %vm440, %v2364, %v2352
      %v2367 = vsel %vm446, %v2365, %v2358
      %v2368 = vsel %vm446, %v2366, %v2360
      %2369 = vmatprep.subr.mxu0 0.0
      %2370 = vmatpush1.msra.mxu0 %v566
      %2371 = vmatprep.subr.mxu0 0.0
      %2372 = vmatpush1.msra.mxu0 %v567
      %2373 = vmatprep.subr.mxu0 0.0
      %2374 = vmatpush1.msra.mxu0 %v568
      %2375 = vmatprep.subr.mxu0 0.0
      %2376 = vmatpush1.msra.mxu0 %v569
      %2377 = vmatprep.subr.mxu0 0.0
      %2378 = vmatpush1.msra.mxu0 %v570
      %2379 = vmatprep.subr.mxu0 0.0
      %2380 = vmatpush1.msra.mxu0 %v571
      %2381 = vmatprep.subr.mxu0 0.0
      %2382 = vmatpush1.msra.mxu0 %v572
      %2383 = vmatprep.subr.mxu0 0.0
      %2384 = vmatpush1.msra.mxu0 %v573
      %2385 = vmatprep.subr.mxu0 0.0
      %2386 = vmatpush1.msra.mxu0 %v574
      %2387 = vmatprep.subr.mxu0 0.0
      %2388 = vmatpush1.msra.mxu0 %v575
      %2389 = vmatprep.subr.mxu0 0.0
      %2390 = vmatpush1.msra.mxu0 %v576
      %2391 = vmatprep.subr.mxu0 0.0
      %2392 = vmatpush1.msra.mxu0 %v577
      %2393 = vmatprep.subr.mxu0 0.0
      %2394 = vmatpush1.msra.mxu0 %v578
      %2395 = vmatprep.subr.mxu0 0.0
      %2396 = vmatpush1.msra.mxu0 %v579
      %2397 = vmatprep.subr.mxu0 0.0
      %2398 = vmatpush1.msra.mxu0 %v580
      %2399 = vmatprep.subr.mxu0 0.0
      %2400 = vmatpush1.msra.mxu0 %v581
      %2401 = vmatprep.subr.mxu0 0.0
      %2402 = vmatpush1.msra.mxu0 0.0
      %2403 = vmatprep.subr.mxu0 0.0
      %2404 = vmatpush1.msra.mxu0 0.0
      %2405 = vmatprep.subr.mxu0 0.0
      %2406 = vmatpush1.msra.mxu0 0.0
      %2407 = vmatprep.subr.mxu0 0.0
      %2408 = vmatpush1.msra.mxu0 0.0
      %2409 = vmatprep.subr.mxu0 0.0
      %2410 = vmatpush1.msra.mxu0 0.0
      %2411 = vmatprep.subr.mxu0 0.0
      %2412 = vmatpush1.msra.mxu0 0.0
      %2413 = vmatprep.subr.mxu0 0.0
      %2414 = vmatpush1.msra.mxu0 0.0
      %2415 = vmatprep.subr.mxu0 0.0
      %2416 = vmatpush1.msra.mxu0 0.0
      %2417 = vmatprep.subr.mxu0 0.0
      %2418 = vmatpush1.msra.mxu0 0.0
      %2419 = vmatprep.subr.mxu0 0.0
      %2420 = vmatpush1.msra.mxu0 0.0
      %2421 = vmatprep.subr.mxu0 0.0
      %2422 = vmatpush1.msra.mxu0 0.0
      %2423 = vmatprep.subr.mxu0 0.0
      %2424 = vmatpush1.msra.mxu0 0.0
      %2425 = vmatprep.subr.mxu0 0.0
      %2426 = vmatpush1.msra.mxu0 0.0
      %2427 = vmatprep.subr.mxu0 0.0
      %2428 = vmatpush1.msra.mxu0 0.0
      %2429 = vmatprep.subr.mxu0 0.0
      %2430 = vmatpush1.msra.mxu0 0.0
      %2431 = vmatprep.subr.mxu0 0.0
      %2432 = vmatpush1.msra.mxu0 0.0
      %2433 = vmatprep.mubr.f32.mxu0 0.0
      %2434 = vmatmul.mubr.f32.gmra.mrb[0].mxu0 %v2367
      %v2435 = vpop.f32.mrb[0].mxu0
      %v2436 = vadd.f32 %v819, %v2435
      %v2437 = vpop.f32.mrb[0].mxu0
      %2438 = vmatprep.mubr.f32.mxu0 0.0
      %2439 = vmatmul.mubr.f32.gmra.mrb[0].mxu0 %v2368
      %v2440 = vpop.f32.mrb[0].mxu0
      %v2441 = vadd.f32 %v819, %v2440
      %v2442 = vpop.f32.mrb[0].mxu0
      %2443 = vdwg.mxu0
      %v2444 = vld [vmem:[#allocation3] sm:$0xff]
      %v2445 = vld [vmem:[#allocation3 + $0x8] sm:$0xff]
      %v2446 = vmul.f32 %v2444, 0.99
      %v2447 = vmul.f32 %v2445, 0.99
      %v2448 = vadd.f32 %v2446, %v2436
      %v2449 = vadd.f32 %v2447, %v2441
      %vm2450 = vcmp.ge.f32.partialorder %v2448, 1.0
      %vm2451 = vcmp.ge.f32.partialorder %v2449, 1.0
      %v2452 = vsel %vm2450, 1, 0
      %v2453 = vsel %vm2451, 1, 0
      %v2454 = vcvt.s32.f32 %v2452
      %v2455 = vcvt.s32.f32 %v2453
      %v2456 = vsub.f32 %v2448, %v2454
      %v2457 = vsub.f32 %v2449, %v2455
      %2458 = vst.msk [vmem:[#allocation3] sm:$0xff] %vm431, %v2456
      %2459 = vst.msk [vmem:[#allocation3 + $0x8] sm:$0xff] %vm431, %v2457
      %v2462 = vrot.slane %v2454, 3
      %v2463 = vrot.slane %v2455, 3
      %v2464 = vsel %vm342, %v2462, %v2463
      %v2467 = vsel %vm342, 0.0, %v2462
      %v2468 = vmul.f32 %v2467, %v315
      %v2469 = vmul.f32 %v2464, %v316
      %v2470 = vrot.slane %v2454, 4
      %v2471 = vrot.slane %v2455, 4
      %v2472 = vsel %vm336, %v2470, %v2471
      %v2474 = vsel %vm336, 0.0, %v2470
      %v2475 = vrot.slane %v2454, 5
      %v2476 = vrot.slane %v2455, 5
      %v2477 = vsel %vm327, %v2475, %v2476
      %v2480 = vsel %vm327, 0.0, %v2475
      %v2481 = vmul.f32 %v2480, %v321
      %v2482 = vmul.f32 %v2477, %v322
      %v2483 = vrot.slane %v2454, 7
      %v2484 = vrot.slane %v2455, 7
      %v2485 = vsel %vm360, %v2483, %v2484
      %v2488 = vsel %vm360, 0.0, %v2483
      %v2489 = vmul.f32 %v2488, %v315
      %v2490 = vmul.f32 %v2485, %v316
      %v2491 = vrot.slane %v2454, 1
      %v2492 = vrot.slane %v2455, 1
      %v2493 = vsel %vm351, %v2491, %v2492
      %v2496 = vsel %vm351, %v2492, 0.0
      %v2497 = vmul.f32 %v2493, %v321
      %v2498 = vmul.f32 %v2496, %v322
      %v2500 = vsel %vm342, %v2463, 0.0
      %v2501 = vmul.f32 %v2464, %v315
      %v2502 = vmul.f32 %v2500, %v316
      %v2504 = vsel %vm336, %v2471, 0.0
      %v2506 = vsel %vm327, %v2476, 0.0
      %v2507 = vmul.f32 %v2477, %v321
      %v2508 = vmul.f32 %v2506, %v322
      %2510 = vrot.lane.b32.xlu0 %v2474, 16
      %v2511 = vpop.permute.xlu0 %2510
      %2512 = vrot.lane.b32.xlu0 %v2472, 16
      %v2513 = vpop.permute.xlu0 %2512
      %2518 = vrot.lane.b32.xlu0 %v2481, 32
      %v2519 = vpop.permute.xlu0 %2518
      %2520 = vrot.lane.b32.xlu0 %v2482, 32
      %v2521 = vpop.permute.xlu0 %2520
      %2526 = vrot.lane.b32.xlu0 %v2489, 48
      %v2527 = vpop.permute.xlu0 %2526
      %2528 = vrot.lane.b32.xlu0 %v2490, 48
      %v2529 = vpop.permute.xlu0 %2528
      %2532 = vrot.lane.b32.xlu0 %v2454, 64
      %v2533 = vpop.permute.xlu0 %2532
      %2534 = vrot.lane.b32.xlu0 %v2455, 64
      %v2535 = vpop.permute.xlu0 %2534
      %2540 = vrot.lane.b32.xlu0 %v2497, 80
      %v2541 = vpop.permute.xlu0 %2540
      %2542 = vrot.lane.b32.xlu0 %v2498, 80
      %v2543 = vpop.permute.xlu0 %2542
      %2548 = vrot.lane.b32.xlu0 %v2501, 96
      %v2549 = vpop.permute.xlu0 %2548
      %2550 = vrot.lane.b32.xlu0 %v2502, 96
      %v2551 = vpop.permute.xlu0 %2550
      %2555 = vrot.lane.b32.xlu0 %v2472, 112
      %v2556 = vpop.permute.xlu0 %2555
      %2557 = vrot.lane.b32.xlu0 %v2504, 112
      %v2558 = vpop.permute.xlu0 %2557
      %v2561 = vsel %vm431, %v2468, %v2511
      %v2562 = vsel %vm431, %v2469, %v2513
      %v2563 = vsel %vm434, %v2561, %v2519
      %v2564 = vsel %vm434, %v2562, %v2521
      %v2565 = vsel %vm437, %v2563, %v2527
      %v2566 = vsel %vm437, %v2564, %v2529
      %v2567 = vsel %vm440, %v2565, %v2533
      %v2568 = vsel %vm440, %v2566, %v2535
      %v2569 = vsel %vm443, %v2567, %v2541
      %v2570 = vsel %vm443, %v2568, %v2543
      %v2571 = vsel %vm446, %v2569, %v2549
      %v2572 = vsel %vm446, %v2570, %v2551
      %v2573 = vsel %vm449, %v2571, %v2556
      %v2574 = vsel %vm449, %v2572, %v2558
      %v2576 = vsel %vm431, %v2507, 0
      %v2579 = vsel %vm431, %v2508, 0
      %2581 = vmatprep.subr.mxu0 0.0
      %2582 = vmatpush1.msra.mxu0 %v583
      %2583 = vmatprep.subr.mxu0 0.0
      %2584 = vmatpush1.msra.mxu0 %v584
      %2585 = vmatprep.subr.mxu0 0.0
      %2586 = vmatpush1.msra.mxu0 %v585
      %2587 = vmatprep.subr.mxu0 0.0
      %2588 = vmatpush1.msra.mxu0 %v586
      %2589 = vmatprep.subr.mxu0 0.0
      %2590 = vmatpush1.msra.mxu0 %v587
      %2591 = vmatprep.subr.mxu0 0.0
      %2592 = vmatpush1.msra.mxu0 %v588
      %2593 = vmatprep.subr.mxu0 0.0
      %2594 = vmatpush1.msra.mxu0 %v589
      %2595 = vmatprep.subr.mxu0 0.0
      %2596 = vmatpush1.msra.mxu0 %v590
      %2597 = vmatprep.subr.mxu0 0.0
      %2598 = vmatpush1.msra.mxu0 %v591
      %2599 = vmatprep.subr.mxu0 0.0
      %2600 = vmatpush1.msra.mxu0 %v592
      %2601 = vmatprep.subr.mxu0 0.0
      %2602 = vmatpush1.msra.mxu0 %v593
      %2603 = vmatprep.subr.mxu0 0.0
      %2604 = vmatpush1.msra.mxu0 %v594
      %2605 = vmatprep.subr.mxu0 0.0
      %2606 = vmatpush1.msra.mxu0 %v595
      %2607 = vmatprep.subr.mxu0 0.0
      %2608 = vmatpush1.msra.mxu0 %v596
      %2609 = vmatprep.subr.mxu0 0.0
      %2610 = vmatpush1.msra.mxu0 %v597
      %2611 = vmatprep.subr.mxu0 0.0
      %2612 = vmatpush1.msra.mxu0 %v598
      %2613 = vmatprep.subr.mxu0 0.0
      %2614 = vmatpush1.msra.mxu0 %v599
      %2615 = vmatprep.subr.mxu0 0.0
      %2616 = vmatpush1.msra.mxu0 %v600
      %2617 = vmatprep.subr.mxu0 0.0
      %2618 = vmatpush1.msra.mxu0 0.0
      %2619 = vmatprep.subr.mxu0 0.0
      %2620 = vmatpush1.msra.mxu0 0.0
      %2621 = vmatprep.subr.mxu0 0.0
      %2622 = vmatpush1.msra.mxu0 0.0
      %2623 = vmatprep.subr.mxu0 0.0
      %2624 = vmatpush1.msra.mxu0 0.0
      %2625 = vmatprep.subr.mxu0 0.0
      %2626 = vmatpush1.msra.mxu0 0.0
      %2627 = vmatprep.subr.mxu0 0.0
      %2628 = vmatpush1.msra.mxu0 0.0
      %2629 = vmatprep.subr.mxu0 0.0
      %2630 = vmatpush1.msra.mxu0 0.0
      %2631 = vmatprep.subr.mxu0 0.0
      %2632 = vmatpush1.msra.mxu0 0.0
      %2633 = vmatprep.subr.mxu0 0.0
      %2634 = vmatpush1.msra.mxu0 0.0
      %2635 = vmatprep.subr.mxu0 0.0
      %2636 = vmatpush1.msra.mxu0 0.0
      %2637 = vmatprep.subr.mxu0 0.0
      %2638 = vmatpush1.msra.mxu0 0.0
      %2639 = vmatprep.subr.mxu0 0.0
      %2640 = vmatpush1.msra.mxu0 0.0
      %2641 = vmatprep.subr.mxu0 0.0
      %2642 = vmatpush1.msra.mxu0 0.0
      %2643 = vmatprep.subr.mxu0 0.0
      %2644 = vmatpush1.msra.mxu0 0.0
      %2645 = vmatprep.mubr.f32.mxu0 %v2576
      %2646 = vmatmul.mubr.f32.gmra.mrb[0].mxu0 %v2573
      %v2647 = vpop.f32.mrb[0].mxu0
      %v2648 = vadd.f32 %v1031, %v2647
      %v2649 = vpop.f32.mrb[0].mxu0
      %2650 = vmatprep.mubr.f32.mxu0 %v2579
      %2651 = vmatmul.mubr.f32.gmra.mrb[0].mxu0 %v2574
      %v2652 = vpop.f32.mrb[0].mxu0
      %v2653 = vadd.f32 %v1031, %v2652
      %v2654 = vpop.f32.mrb[0].mxu0
      %2655 = vdwg.mxu0
      %v2656 = vld [vmem:[#allocation4] sm:$0xff]
      %v2657 = vld [vmem:[#allocation4 + $0x8] sm:$0xff]
      %v2658 = vmul.f32 %v2656, 0.99
      %v2659 = vmul.f32 %v2657, 0.99
      %v2660 = vadd.f32 %v2658, %v2648
      %v2661 = vadd.f32 %v2659, %v2653
      %vm2662 = vcmp.ge.f32.partialorder %v2660, 1.0
      %vm2663 = vcmp.ge.f32.partialorder %v2661, 1.0
      %v2664 = vsel %vm2662, 1, 0
      %v2665 = vsel %vm2663, 1, 0
      %v2666 = vcvt.s32.f32 %v2664
      %v2667 = vcvt.s32.f32 %v2665
      %v2668 = vsub.f32 %v2660, %v2666
      %v2669 = vsub.f32 %v2661, %v2667
      %2670 = vst.msk [vmem:[#allocation4] sm:$0xff] %vm431, %v2668
      %2671 = vst.msk [vmem:[#allocation4 + $0x8] sm:$0xff] %vm431, %v2669
      %2672 = vst.msk [vmem:[#allocation5] sm:$0xff] %vm431, %v2666
      %2673 = vst.msk [vmem:[#allocation5 + $0x8] sm:$0xff] %vm431, %v2667
      %v2674 = vld [vmem:[#allocation6] sm:$0xff]
      %v2675 = vld [vmem:[#allocation6 + $0x8] sm:$0xff]
      %v2676 = vadd.f32 %v2674, %v2666
      %v2677 = vadd.f32 %v2675, %v2667
      %2678 = vst.msk [vmem:[#allocation6] sm:$0xff] %vm431, %v2676
      %2679 = vst.msk [vmem:[#allocation6 + $0x8] sm:$0xff] %vm431, %v2677
      %v2680 = vld [vmem:[#allocation6] sm:$0xff]
      %v2681 = vld [vmem:[#allocation6 + $0x8] sm:$0xff]
      %v2682 = vmul.f32 %v2680, 0.25
      %v2683 = vmul.f32 %v2681, 0.25
      %2684 = vst.msk [vmem:[%s305] sm:$0xff] %vm431, %v2682
      %2685 = vst.msk [vmem:[%s305 + $0x8] sm:$0xff] %vm431, %v2683
      %p2686 = scmp.lt.s32.totalorder %s19, 1
      %s2687 = scalar_select %p2686, %s19, 1
      %s2688 = smul.addr %s2687, 2
      %s2689 = smul.addr %s2688, 8
      %s2690 = scalar_lea.vmem %s8, %s2689
      // Predicated region
      $region53: #{mpis_neuro_forward.4} parent=51 // pred_check
        %p2691 = pneg %p210
      $region54: #{mpis_neuro_forward.4} parent=51 // pred_check_branch
        %2693 = sbr.rel (%p2691) target = $region56
      $region55: #{mpis_neuro_forward.4} parent=51 // pred_region
        _
      $region56: #{mpis_neuro_forward.4} parent=51 // pred_fallthru
        _
    $region52: #{mpis_neuro_forward.4} parent=5 // pred_fallthru
      _
    %p2694 = scmp.le.s32.totalorder 2, %s14
    // Predicated region
    $region57: #{mpis_neuro_forward.4} parent=5 // pred_check
      %p2695 = pneg %p2694
    $region58: #{mpis_neuro_forward.4} parent=5 // pred_check_branch
      %2697 = sbr.rel (%p2695) target = $region60
    $region59: #{mpis_neuro_forward.4} parent=5 // pred_region
      %s2698 = ssub.s32 %s14, 2
      // Predicated region
      $region61: #{mpis_neuro_forward.4} parent=59 // pred_check
        %p2699 = pneg %p216
      $region62: #{mpis_neuro_forward.4} parent=59 // pred_check_branch
        %2701 = sbr.rel (%p2699) target = $region64
      $region63: #{mpis_neuro_forward.4} parent=59 // pred_region
        %p2702 = scmp.lt.s32.totalorder %s20, 1
        %s2703 = scalar_select %p2702, %s20, 1
        %s2704 = smul.addr %s2703, 2
        %s2705 = smul.addr %s2704, 8
        %s2706 = scalar_lea.vmem %s8, %s2705
      $region64: #{mpis_neuro_forward.4} parent=59 // pred_fallthru
        _
    $region60: #{mpis_neuro_forward.4} parent=5 // pred_fallthru
      _
  $region6: #{mpis_neuro_forward.4} parent=0 // loop_footer
    %s18 = sadd.s32 1, %s14
  $region7: #{mpis_neuro_forward.4} parent=0 // loop_footer_branch
    %13 = sbr.rel target = $region3
  $region8: #{mpis_neuro_forward.4} parent=0 // loop_exit
    _

// kernel: mpis_neuro_forward.5
$region0: #{mpis_neuro_forward.5}
  #allocation0 [shape = 'u32[]', space=smem, size = 0x4, offset = 0x4, fixed_abs, tag = 'smem constant byte address 0x4 - core index']
  #allocation1 [shape = 'u32[144,128]{1,0:T(1,128)}', space=vmem, size = 0x12000, scoped, tag = 'internal scratch']
  %s0 = inlined_call_operand.vmem [shape: f32[2,16,64], index: 0, kind: input, shape index: {}]
  %s1 = inlined_call_operand.vmem [shape: f32[2,16,16], index: 1, kind: input, shape index: {}]
  %s2 = inlined_call_operand.vmem [shape: f32[256,16], index: 2, kind: input, shape index: {}]
  %s3 = inlined_call_operand.vmem [shape: f32[1,16], index: 3, kind: input, shape index: {}]
  %s4 = inlined_call_operand.vmem [shape: f32[16,16], index: 4, kind: input, shape index: {}]
  %s5 = inlined_call_operand.vmem [shape: f32[1,16], index: 5, kind: input, shape index: {}]
  %s6 = inlined_call_operand.vmem [shape: f32[2,16,16], index: 6, kind: output, shape index: {}]
  %s7 = sld [smem:[#allocation0]]
  $region57: #{mpis_neuro_forward.5} parent=0
    _
  %s9 = ssub.s32 1, %s7
  %s10 = scalar_select 0, %s9, %s7
  loop: start=0, step=1, limit=4
  $region2: #{mpis_neuro_forward.5} parent=0 // loop_pre_header
    _
  $region3: #{mpis_neuro_forward.5} parent=0 // loop_header
    %s12 = sphi 0, %s16
    %p13 = scmp.ge.s32.totalorder %s12, 4
    %s22 = sphi 0, %s24
    %s25 = sphi 0, %s22
    %s26 = sphi 0, %s25
    %s42 = sphi 0, %s26
    %s48 = sphi 0, %s50
    %s51 = sphi 0, %s48
    %s52 = sphi 0, %s51
    %s68 = sphi 0, %s52
    %s72 = sphi 0, %s72
    %s74 = sphi 0, %s72
    %s75 = sphi 0, %s74
    %s89 = sphi 0, %s75
    %s93 = sphi 0, %s93
    %s95 = sphi 0, %s93
    %s96 = sphi 0, %s95
    %s110 = sphi 0, %s96
    %s114 = sphi 0, %s114
    %s116 = sphi 0, %s114
    %s117 = sphi 0, %s116
    %s131 = sphi 0, %s117
    %s135 = sphi 0, %s135
    %s137 = sphi 0, %s135
    %s138 = sphi 0, %s137
    %s152 = sphi 0, %s138
    %s158 = sphi 0, %s160
    %s161 = sphi 0, %s158
    %s162 = sphi 0, %s161
    %s178 = sphi 0, %s162
  $region4: #{mpis_neuro_forward.5} parent=0 // loop_header_branch
    %15 = sbr.rel (%p13) target = $region8
  $region5: #{mpis_neuro_forward.5} parent=0 // loop_body
    %s17 = ssub.s32 %s12, 1
    %s18 = ssub.s32 %s12, 2
    %s19 = sadd.s32 %s12, 1
    %s20 = ssub.s32 %s12, %s19
    %p21 = scmp.eq.s32.totalorder %s20, 0
    %s23 = sadd.s32 %s22, 1
    %s24 = scalar_select %p21, %s22, %s23
    %p27 = pneg %p21
    %p28 = scmp.eq.s32.totalorder %s12, 1
    %p29 = por %p27, %p28
    %p30 = scmp.ne.s32.totalorder %s22, %s25
    %p31 = scmp.eq.s32.totalorder %s12, 0
    %p32 = por %p30, %p31
    %p33 = scmp.ne.s32.totalorder %s22, %s25
    %p34 = scmp.eq.s32.totalorder %s17, 1
    %p35 = por %p33, %p34
    %p36 = scmp.ne.s32.totalorder %s25, %s26
    %p37 = scmp.eq.s32.totalorder %s17, 0
    %p38 = por %p36, %p37
    %p39 = scmp.ne.s32.totalorder %s25, %s26
    %p40 = scmp.eq.s32.totalorder %s18, 1
    %p41 = por %p39, %p40
    %p43 = scmp.ne.s32.totalorder %s26, %s42
    %p44 = scmp.eq.s32.totalorder %s18, 0
    %p45 = por %p43, %p44
    %s46 = ssub.s32 %s12, %s19
    %p47 = scmp.eq.s32.totalorder %s46, 0
    %s49 = sadd.s32 %s48, 1
    %s50 = scalar_select %p47, %s48, %s49
    %p53 = pneg %p47
    %p54 = scmp.eq.s32.totalorder %s12, 1
    %p55 = por %p53, %p54
    %p56 = scmp.ne.s32.totalorder %s48, %s51
    %p57 = scmp.eq.s32.totalorder %s12, 0
    %p58 = por %p56, %p57
    %p59 = scmp.ne.s32.totalorder %s48, %s51
    %p60 = scmp.eq.s32.totalorder %s17, 1
    %p61 = por %p59, %p60
    %p62 = scmp.ne.s32.totalorder %s51, %s52
    %p63 = scmp.eq.s32.totalorder %s17, 0
    %p64 = por %p62, %p63
    %p65 = scmp.ne.s32.totalorder %s51, %s52
    %p66 = scmp.eq.s32.totalorder %s18, 1
    %p67 = por %p65, %p66
    %p69 = scmp.ne.s32.totalorder %s52, %s68
    %p70 = scmp.eq.s32.totalorder %s18, 0
    %p71 = por %p69, %p70
    %s73 = sadd.s32 %s72, 1
    %p76 = scmp.eq.s32.totalorder %s12, 1
    %p77 = scmp.ne.s32.totalorder %s72, %s74
    %p78 = scmp.eq.s32.totalorder %s12, 0
    %p79 = por %p77, %p78
    %p80 = scmp.ne.s32.totalorder %s72, %s74
    %p81 = scmp.eq.s32.totalorder %s17, 1
    %p82 = por %p80, %p81
    %p83 = scmp.ne.s32.totalorder %s74, %s75
    %p84 = scmp.eq.s32.totalorder %s17, 0
    %p85 = por %p83, %p84
    %p86 = scmp.ne.s32.totalorder %s74, %s75
    %p87 = scmp.eq.s32.totalorder %s18, 1
    %p88 = por %p86, %p87
    %p90 = scmp.ne.s32.totalorder %s75, %s89
    %p91 = scmp.eq.s32.totalorder %s18, 0
    %p92 = por %p90, %p91
    %s94 = sadd.s32 %s93, 1
    %p97 = scmp.eq.s32.totalorder %s12, 1
    %p98 = scmp.ne.s32.totalorder %s93, %s95
    %p99 = scmp.eq.s32.totalorder %s12, 0
    %p100 = por %p98, %p99
    %p101 = scmp.ne.s32.totalorder %s93, %s95
    %p102 = scmp.eq.s32.totalorder %s17, 1
    %p103 = por %p101, %p102
    %p104 = scmp.ne.s32.totalorder %s95, %s96
    %p105 = scmp.eq.s32.totalorder %s17, 0
    %p106 = por %p104, %p105
    %p107 = scmp.ne.s32.totalorder %s95, %s96
    %p108 = scmp.eq.s32.totalorder %s18, 1
    %p109 = por %p107, %p108
    %p111 = scmp.ne.s32.totalorder %s96, %s110
    %p112 = scmp.eq.s32.totalorder %s18, 0
    %p113 = por %p111, %p112
    %s115 = sadd.s32 %s114, 1
    %p118 = scmp.eq.s32.totalorder %s12, 1
    %p119 = scmp.ne.s32.totalorder %s114, %s116
    %p120 = scmp.eq.s32.totalorder %s12, 0
    %p121 = por %p119, %p120
    %p122 = scmp.ne.s32.totalorder %s114, %s116
    %p123 = scmp.eq.s32.totalorder %s17, 1
    %p124 = por %p122, %p123
    %p125 = scmp.ne.s32.totalorder %s116, %s117
    %p126 = scmp.eq.s32.totalorder %s17, 0
    %p127 = por %p125, %p126
    %p128 = scmp.ne.s32.totalorder %s116, %s117
    %p129 = scmp.eq.s32.totalorder %s18, 1
    %p130 = por %p128, %p129
    %p132 = scmp.ne.s32.totalorder %s117, %s131
    %p133 = scmp.eq.s32.totalorder %s18, 0
    %p134 = por %p132, %p133
    %s136 = sadd.s32 %s135, 1
    %p139 = scmp.eq.s32.totalorder %s12, 1
    %p140 = scmp.ne.s32.totalorder %s135, %s137
    %p141 = scmp.eq.s32.totalorder %s12, 0
    %p142 = por %p140, %p141
    %p143 = scmp.ne.s32.totalorder %s135, %s137
    %p144 = scmp.eq.s32.totalorder %s17, 1
    %p145 = por %p143, %p144
    %p146 = scmp.ne.s32.totalorder %s137, %s138
    %p147 = scmp.eq.s32.totalorder %s17, 0
    %p148 = por %p146, %p147
    %p149 = scmp.ne.s32.totalorder %s137, %s138
    %p150 = scmp.eq.s32.totalorder %s18, 1
    %p151 = por %p149, %p150
    %p153 = scmp.ne.s32.totalorder %s138, %s152
    %p154 = scmp.eq.s32.totalorder %s18, 0
    %p155 = por %p153, %p154
    %s156 = ssub.s32 %s12, %s19
    %p157 = scmp.eq.s32.totalorder %s156, 0
    %s159 = sadd.s32 %s158, 1
    %s160 = scalar_select %p157, %s158, %s159
    %p163 = pneg %p157
    %p164 = scmp.eq.s32.totalorder %s12, 1
    %p165 = por %p163, %p164
    %p166 = scmp.ne.s32.totalorder %s158, %s161
    %p167 = scmp.eq.s32.totalorder %s12, 0
    %p168 = por %p166, %p167
    %p169 = scmp.ne.s32.totalorder %s158, %s161
    %p170 = scmp.eq.s32.totalorder %s17, 1
    %p171 = por %p169, %p170
    %p172 = scmp.ne.s32.totalorder %s161, %s162
    %p173 = scmp.eq.s32.totalorder %s17, 0
    %p174 = por %p172, %p173
    %p175 = scmp.ne.s32.totalorder %s161, %s162
    %p176 = scmp.eq.s32.totalorder %s18, 1
    %p177 = por %p175, %p176
    %p179 = scmp.ne.s32.totalorder %s162, %s178
    %p180 = scmp.eq.s32.totalorder %s18, 0
    %p181 = por %p179, %p180
    %p182 = scmp.le.s32.totalorder 1, %s12
    %p183 = scmp.lt.s32.totalorder %s12, 3
    %p184 = pnand %p182, %p183
    %p185 = pneg %p184
    // Predicated region
    $region9: #{mpis_neuro_forward.5} parent=5 // pred_check
      _
    $region10: #{mpis_neuro_forward.5} parent=5 // pred_check_branch
      %187 = sbr.rel (%p184) target = $region12
    $region11: #{mpis_neuro_forward.5} parent=5 // pred_region
      %s188 = ssub.s32 %s12, 1
      // Predicated region
      $region13: #{mpis_neuro_forward.5} parent=11 // pred_check
        %p189 = pneg %p85
      $region14: #{mpis_neuro_forward.5} parent=11 // pred_check_branch
        %191 = sbr.rel (%p189) target = $region16
      $region15: #{mpis_neuro_forward.5} parent=11 // pred_region
        _
      $region16: #{mpis_neuro_forward.5} parent=11 // pred_fallthru
        _
      // Predicated region
      $region17: #{mpis_neuro_forward.5} parent=11 // pred_check
        %p192 = pneg %p106
      $region18: #{mpis_neuro_forward.5} parent=11 // pred_check_branch
        %194 = sbr.rel (%p192) target = $region20
      $region19: #{mpis_neuro_forward.5} parent=11 // pred_region
        _
      $region20: #{mpis_neuro_forward.5} parent=11 // pred_fallthru
        _
      // Predicated region
      $region21: #{mpis_neuro_forward.5} parent=11 // pred_check
        %p195 = pneg %p127
      $region22: #{mpis_neuro_forward.5} parent=11 // pred_check_branch
        %197 = sbr.rel (%p195) target = $region24
      $region23: #{mpis_neuro_forward.5} parent=11 // pred_region
        _
      $region24: #{mpis_neuro_forward.5} parent=11 // pred_fallthru
        _
      // Predicated region
      $region25: #{mpis_neuro_forward.5} parent=11 // pred_check
        %p198 = pneg %p148
      $region26: #{mpis_neuro_forward.5} parent=11 // pred_check_branch
        %200 = sbr.rel (%p198) target = $region28
      $region27: #{mpis_neuro_forward.5} parent=11 // pred_region
        _
      $region28: #{mpis_neuro_forward.5} parent=11 // pred_fallthru
        _
    $region12: #{mpis_neuro_forward.5} parent=5 // pred_fallthru
      _
    %p201 = scmp.lt.s32.totalorder %s12, 2
    // Predicated region
    $region29: #{mpis_neuro_forward.5} parent=5 // pred_check
      %p202 = pneg %p201
    $region30: #{mpis_neuro_forward.5} parent=5 // pred_check_branch
      %204 = sbr.rel (%p202) target = $region32
    $region31: #{mpis_neuro_forward.5} parent=5 // pred_region
      // Predicated region
      $region33: #{mpis_neuro_forward.5} parent=31 // pred_check
        %p205 = pneg %p32
      $region34: #{mpis_neuro_forward.5} parent=31 // pred_check_branch
        %207 = sbr.rel (%p205) target = $region36
      $region35: #{mpis_neuro_forward.5} parent=31 // pred_region
        %p208 = scmp.lt.s32.totalorder %s12, 1
        %s209 = scalar_select %p208, %s12, 1
        %s210 = smul.addr %s209, 2
        %s211 = smul.addr %s210, 8
        %s212 = scalar_lea.vmem %s0, %s211
      $region36: #{mpis_neuro_forward.5} parent=31 // pred_fallthru
        _
      // Predicated region
      $region37: #{mpis_neuro_forward.5} parent=31 // pred_check
        %p213 = pneg %p58
      $region38: #{mpis_neuro_forward.5} parent=31 // pred_check_branch
        %215 = sbr.rel (%p213) target = $region40
      $region39: #{mpis_neuro_forward.5} parent=31 // pred_region
        %p216 = scmp.lt.s32.totalorder %s12, 1
        %s217 = scalar_select %p216, %s12, 1
        %s218 = smul.addr %s217, 2
        %s219 = smul.addr %s218, 8
        %s220 = scalar_lea.vmem %s1, %s219
      $region40: #{mpis_neuro_forward.5} parent=31 // pred_fallthru
        _
    $region32: #{mpis_neuro_forward.5} parent=5 // pred_fallthru
      _
    %p221 = scmp.le.s32.totalorder 1, %s12
    %p222 = scmp.lt.s32.totalorder %s12, 3
    %p223 = pnand %p221, %p222
    %p224 = pneg %p223
    // Predicated region
    $region41: #{mpis_neuro_forward.5} parent=5 // pred_check
      _
    $region42: #{mpis_neuro_forward.5} parent=5 // pred_check_branch
      %226 = sbr.rel (%p223) target = $region44
    $region43: #{mpis_neuro_forward.5} parent=5 // pred_region
      %s227 = ssub.s32 %s12, 1
      %p228 = scmp.lt.s32.totalorder %s17, 1
      %s229 = scalar_select %p228, %s17, 1
      %s230 = smul.addr %s229, 2
      %s231 = smul.addr %s230, 8
      %s232 = scalar_lea.vmem %s0, %s231
      %p233 = pneg %p38
      %p234 = pneg %p35
      %p235 = scmp.lt.s32.totalorder %s17, 1
      %s236 = scalar_select %p235, %s17, 1
      %s237 = smul.addr %s236, 2
      %s238 = smul.addr %s237, 8
      %s239 = scalar_lea.vmem %s1, %s238
      %p240 = pneg %p64
      %p241 = pneg %p61
      %p242 = pneg %p85
      %p243 = pneg %p82
      %p244 = pneg %p106
      %p245 = pneg %p103
      %p246 = pneg %p127
      %p247 = pneg %p124
      %p248 = pneg %p148
      %p249 = pneg %p145
      %p250 = pneg %p174
      %p251 = pneg %p171
      %p252 = scmp.lt.s32.totalorder %s17, 1
      %s253 = scalar_select %p252, %s17, 1
      %s254 = smul.addr %s253, 2
      %s255 = smul.addr %s254, 8
      %s256 = scalar_lea.vmem %s6, %s255
      %p257 = scmp.lt.s32.totalorder %s17, 1
      %s258 = scalar_select %p257, %s17, 1
      %s259 = smul.addr %s258, 2
      %s260 = smul.addr %s259, 8
      %s261 = scalar_lea.vmem %s0, %s260
      %p262 = scmp.lt.s32.totalorder %s17, 1
      %s263 = scalar_select %p262, %s17, 1
      %s264 = smul.addr %s263, 2
      %s265 = smul.addr %s264, 8
      %s266 = scalar_lea.vmem %s1, %s265
      %p267 = scmp.lt.s32.totalorder %s17, 1
      %s268 = scalar_select %p267, %s17, 1
      %s269 = smul.addr %s268, 2
      %s270 = smul.addr %s269, 8
      %s271 = scalar_lea.vmem %s6, %s270
      %v272 = vlaneseq
      %v273 = vshrl.u32 %v272, 7
      %v274 = vadd.s32 %v273, 8
      %v275 = vand.u32 %v273, 3
      %v276 = vand.u32 %v274, 3
      %vm277 = vcmp.ge.s32.totalorder %v275, 1
      %vm278 = vcmp.ge.s32.totalorder %v276, 1
      %v279 = vsel %vm277, 1, 0
      %v280 = vsel %vm278, 1, 0
      %v281 = vcvt.s32.f32 %v279
      %v282 = vcvt.s32.f32 %v280
      %v283 = vld [vmem:[%s261] sm:$0xff]
      %v284 = vld [vmem:[%s261 + $0x8] sm:$0xff]
      %vm287 = vcmask 1040384
      %v288 = vrot.slane %v283, 7
      %v289 = vrot.slane %v284, 7
      %v290 = vsel %vm287, %v288, %v289
      %v293 = vsel %vm287, 0.0, %v288
      %v294 = vmul.f32 %v293, %v281
      %v295 = vmul.f32 %v290, %v282
      %vm296 = vcmask 1043456
      %v297 = vrot.slane %v283, 4
      %v298 = vrot.slane %v284, 4
      %v299 = vsel %vm296, %v297, %v298
      %v302 = vsel %vm296, 0.0, %v297
      %vm303 = vcmask 1044480
      %v304 = vrot.slane %v283, 3
      %v305 = vrot.slane %v284, 3
      %v306 = vsel %vm303, %v304, %v305
      %v309 = vsel %vm303, 0.0, %v304
      %v310 = vmul.f32 %v309, %v281
      %v311 = vmul.f32 %v306, %v282
      %314 = vrot.lane.b32.xlu0 %v294, 64
      %v315 = vpop.permute.xlu0 %314
      %316 = vrot.lane.b32.xlu0 %v295, 64
      %v317 = vpop.permute.xlu0 %316
      %322 = vrot.lane.b32.xlu0 %v310, 64
      %v323 = vpop.permute.xlu0 %322
      %324 = vrot.lane.b32.xlu0 %v311, 64
      %v325 = vpop.permute.xlu0 %324
      %vm328 = vcmask 523264
      %v329 = vsel %vm328, %v283, %v315
      %v330 = vsel %vm328, %v284, %v317
      %v331 = vsel %vm328, %v302, %v323
      %v332 = vsel %vm328, %v299, %v325
      %v333 = vld [vmem:[%s2] sm:$0xff]
      %v334 = vld [vmem:[%s2 + $0x8] sm:$0xff]
      %v335 = vld [vmem:[%s2 + $0x10] sm:$0xff]
      %v336 = vld [vmem:[%s2 + $0x18] sm:$0xff]
      %v337 = vld [vmem:[%s2 + $0x20] sm:$0xff]
      %v338 = vld [vmem:[%s2 + $0x28] sm:$0xff]
      %v339 = vld [vmem:[%s2 + $0x30] sm:$0xff]
      %v340 = vld [vmem:[%s2 + $0x38] sm:$0xff]
      %v341 = vld [vmem:[%s2 + $0x40] sm:$0xff]
      %v342 = vld [vmem:[%s2 + $0x48] sm:$0xff]
      %v343 = vld [vmem:[%s2 + $0x50] sm:$0xff]
      %v344 = vld [vmem:[%s2 + $0x58] sm:$0xff]
      %v345 = vld [vmem:[%s2 + $0x60] sm:$0xff]
      %v346 = vld [vmem:[%s2 + $0x68] sm:$0xff]
      %v347 = vld [vmem:[%s2 + $0x70] sm:$0xff]
      %v348 = vld [vmem:[%s2 + $0x78] sm:$0xff]
      %v349 = vld [vmem:[%s2 + $0x80] sm:$0xff]
      %v350 = vld [vmem:[%s2 + $0x88] sm:$0xff]
      %v351 = vld [vmem:[%s2 + $0x90] sm:$0xff]
      %v352 = vld [vmem:[%s2 + $0x98] sm:$0xff]
      %v353 = vld [vmem:[%s2 + $0xa0] sm:$0xff]
      %v354 = vld [vmem:[%s2 + $0xa8] sm:$0xff]
      %v355 = vld [vmem:[%s2 + $0xb0] sm:$0xff]
      %v356 = vld [vmem:[%s2 + $0xb8] sm:$0xff]
      %v357 = vld [vmem:[%s2 + $0xc0] sm:$0xff]
      %v358 = vld [vmem:[%s2 + $0xc8] sm:$0xff]
      %v359 = vld [vmem:[%s2 + $0xd0] sm:$0xff]
      %v360 = vld [vmem:[%s2 + $0xd8] sm:$0xff]
      %v361 = vld [vmem:[%s2 + $0xe0] sm:$0xff]
      %v362 = vld [vmem:[%s2 + $0xe8] sm:$0xff]
      %v363 = vld [vmem:[%s2 + $0xf0] sm:$0xff]
      %v364 = vld [vmem:[%s2 + $0xf8] sm:$0xff]
      %v365 = vld [vmem:[%s3] sm:$0x1]
      %v367 = vlaneseq
      %v368 = vshrl.u32 %v367, 7
      %v369 = vsub.s32 0, %v368
      %v370 = vrot.slane %v365, %v369
      %372 = vmatprep.subr.mxu0 0.0
      %373 = vmatpush1.msra.mxu0 %v333
      %374 = vmatprep.subr.mxu0 0.0
      %375 = vmatpush1.msra.mxu0 %v334
      %376 = vmatprep.subr.mxu0 0.0
      %377 = vmatpush1.msra.mxu0 %v335
      %378 = vmatprep.subr.mxu0 0.0
      %379 = vmatpush1.msra.mxu0 %v336
      %380 = vmatprep.subr.mxu0 0.0
      %381 = vmatpush1.msra.mxu0 %v337
      %382 = vmatprep.subr.mxu0 0.0
      %383 = vmatpush1.msra.mxu0 %v338
      %384 = vmatprep.subr.mxu0 0.0
      %385 = vmatpush1.msra.mxu0 %v339
      %386 = vmatprep.subr.mxu0 0.0
      %387 = vmatpush1.msra.mxu0 %v340
      %388 = vmatprep.subr.mxu0 0.0
      %389 = vmatpush1.msra.mxu0 %v341
      %390 = vmatprep.subr.mxu0 0.0
      %391 = vmatpush1.msra.mxu0 %v342
      %392 = vmatprep.subr.mxu0 0.0
      %393 = vmatpush1.msra.mxu0 %v343
      %394 = vmatprep.subr.mxu0 0.0
      %395 = vmatpush1.msra.mxu0 %v344
      %396 = vmatprep.subr.mxu0 0.0
      %397 = vmatpush1.msra.mxu0 %v345
      %398 = vmatprep.subr.mxu0 0.0
      %399 = vmatpush1.msra.mxu0 %v346
      %400 = vmatprep.subr.mxu0 0.0
      %401 = vmatpush1.msra.mxu0 %v347
      %402 = vmatprep.subr.mxu0 0.0
      %403 = vmatpush1.msra.mxu0 %v348
      %404 = vmatprep.subr.mxu0 0.0
      %405 = vmatpush1.msra.mxu0 %v349
      %406 = vmatprep.subr.mxu0 0.0
      %407 = vmatpush1.msra.mxu0 %v350
      %408 = vmatprep.subr.mxu0 0.0
      %409 = vmatpush1.msra.mxu0 %v351
      %410 = vmatprep.subr.mxu0 0.0
      %411 = vmatpush1.msra.mxu0 %v352
      %412 = vmatprep.subr.mxu0 0.0
      %413 = vmatpush1.msra.mxu0 %v353
      %414 = vmatprep.subr.mxu0 0.0
      %415 = vmatpush1.msra.mxu0 %v354
      %416 = vmatprep.subr.mxu0 0.0
      %417 = vmatpush1.msra.mxu0 %v355
      %418 = vmatprep.subr.mxu0 0.0
      %419 = vmatpush1.msra.mxu0 %v356
      %420 = vmatprep.subr.mxu0 0.0
      %421 = vmatpush1.msra.mxu0 %v357
      %422 = vmatprep.subr.mxu0 0.0
      %423 = vmatpush1.msra.mxu0 %v358
      %424 = vmatprep.subr.mxu0 0.0
      %425 = vmatpush1.msra.mxu0 %v359
      %426 = vmatprep.subr.mxu0 0.0
      %427 = vmatpush1.msra.mxu0 %v360
      %428 = vmatprep.subr.mxu0 0.0
      %429 = vmatpush1.msra.mxu0 %v361
      %430 = vmatprep.subr.mxu0 0.0
      %431 = vmatpush1.msra.mxu0 %v362
      %432 = vmatprep.subr.mxu0 0.0
      %433 = vmatpush1.msra.mxu0 %v363
      %434 = vmatprep.subr.mxu0 0.0
      %435 = vmatpush1.msra.mxu0 %v364
      %436 = vmatprep.mubr.f32.mxu0 %v331
      %437 = vmatmul.mubr.f32.gmra.mrb[0].mxu0 %v329
      %v438 = vpop.f32.mrb[0].mxu0
      %v439 = vadd.f32 %v370, %v438
      %v440 = vpop.f32.mrb[0].mxu0
      %441 = vmatprep.mubr.f32.mxu0 %v332
      %442 = vmatmul.mubr.f32.gmra.mrb[0].mxu0 %v330
      %v443 = vpop.f32.mrb[0].mxu0
      %v444 = vadd.f32 %v370, %v443
      %v445 = vpop.f32.mrb[0].mxu0
      %446 = vdwg.mxu0
      %v447 = vmax.f32 %v439, 0.0
      %v448 = vmax.f32 %v444, 0.0
      %v449 = vmin.f32 %v447, 1.0
      %v450 = vmin.f32 %v448, 1.0
      %v451 = vld [vmem:[%s266] sm:$0xff]
      %v452 = vld [vmem:[%s266 + $0x8] sm:$0xff]
      %v453 = vadd.f32 %v449, %v451
      %v454 = vadd.f32 %v450, %v452
      %v455 = vld [vmem:[%s4] sm:$0xff]
      %v456 = vld [vmem:[%s4 + $0x8] sm:$0xff]
      %v457 = vld [vmem:[%s5] sm:$0x1]
      %v459 = vlaneseq
      %v460 = vshrl.u32 %v459, 7
      %v461 = vsub.s32 0, %v460
      %v462 = vrot.slane %v457, %v461
      %vm464 = vcmask 130048
      %v466 = vsel %vm464, %v453, 0
      %v469 = vsel %vm464, %v454, 0
      %471 = vmatprep.subr.mxu0 0.0
      %472 = vmatpush1.msra.mxu0 %v455
      %473 = vmatprep.subr.mxu0 0.0
      %474 = vmatpush1.msra.mxu0 %v456
      %475 = vmatprep.subr.mxu0 0.0
      %476 = vmatpush1.msra.mxu0 0.0
      %477 = vmatprep.subr.mxu0 0.0
      %478 = vmatpush1.msra.mxu0 0.0
      %479 = vmatprep.subr.mxu0 0.0
      %480 = vmatpush1.msra.mxu0 0.0
      %481 = vmatprep.subr.mxu0 0.0
      %482 = vmatpush1.msra.mxu0 0.0
      %483 = vmatprep.subr.mxu0 0.0
      %484 = vmatpush1.msra.mxu0 0.0
      %485 = vmatprep.subr.mxu0 0.0
      %486 = vmatpush1.msra.mxu0 0.0
      %487 = vmatprep.subr.mxu0 0.0
      %488 = vmatpush1.msra.mxu0 0.0
      %489 = vmatprep.subr.mxu0 0.0
      %490 = vmatpush1.msra.mxu0 0.0
      %491 = vmatprep.subr.mxu0 0.0
      %492 = vmatpush1.msra.mxu0 0.0
      %493 = vmatprep.subr.mxu0 0.0
      %494 = vmatpush1.msra.mxu0 0.0
      %495 = vmatprep.subr.mxu0 0.0
      %496 = vmatpush1.msra.mxu0 0.0
      %497 = vmatprep.subr.mxu0 0.0
      %498 = vmatpush1.msra.mxu0 0.0
      %499 = vmatprep.subr.mxu0 0.0
      %500 = vmatpush1.msra.mxu0 0.0
      %501 = vmatprep.subr.mxu0 0.0
      %502 = vmatpush1.msra.mxu0 0.0
      %503 = vmatprep.subr.mxu0 0.0
      %504 = vmatpush1.msra.mxu0 0.0
      %505 = vmatprep.subr.mxu0 0.0
      %506 = vmatpush1.msra.mxu0 0.0
      %507 = vmatprep.subr.mxu0 0.0
      %508 = vmatpush1.msra.mxu0 0.0
      %509 = vmatprep.subr.mxu0 0.0
      %510 = vmatpush1.msra.mxu0 0.0
      %511 = vmatprep.subr.mxu0 0.0
      %512 = vmatpush1.msra.mxu0 0.0
      %513 = vmatprep.subr.mxu0 0.0
      %514 = vmatpush1.msra.mxu0 0.0
      %515 = vmatprep.subr.mxu0 0.0
      %516 = vmatpush1.msra.mxu0 0.0
      %517 = vmatprep.subr.mxu0 0.0
      %518 = vmatpush1.msra.mxu0 0.0
      %519 = vmatprep.subr.mxu0 0.0
      %520 = vmatpush1.msra.mxu0 0.0
      %521 = vmatprep.subr.mxu0 0.0
      %522 = vmatpush1.msra.mxu0 0.0
      %523 = vmatprep.subr.mxu0 0.0
      %524 = vmatpush1.msra.mxu0 0.0
      %525 = vmatprep.subr.mxu0 0.0
      %526 = vmatpush1.msra.mxu0 0.0
      %527 = vmatprep.subr.mxu0 0.0
      %528 = vmatpush1.msra.mxu0 0.0
      %529 = vmatprep.subr.mxu0 0.0
      %530 = vmatpush1.msra.mxu0 0.0
      %531 = vmatprep.subr.mxu0 0.0
      %532 = vmatpush1.msra.mxu0 0.0
      %533 = vmatprep.subr.mxu0 0.0
      %534 = vmatpush1.msra.mxu0 0.0
      %535 = vmatprep.mubr.f32.mxu0 0.0
      %536 = vmatmul.mubr.f32.gmra.mrb[0].mxu0 %v466
      %v537 = vpop.f32.mrb[0].mxu0
      %v538 = vadd.f32 %v462, %v537
      %v539 = vpop.f32.mrb[0].mxu0
      %540 = vmatprep.mubr.f32.mxu0 0.0
      %541 = vmatmul.mubr.f32.gmra.mrb[0].mxu0 %v469
      %v542 = vpop.f32.mrb[0].mxu0
      %v543 = vadd.f32 %v462, %v542
      %v544 = vpop.f32.mrb[0].mxu0
      %545 = vdwg.mxu0
      %v546 = vmax.f32 %v538, 0.0
      %v547 = vmax.f32 %v543, 0.0
      %v548 = vmin.f32 %v546, 1.0
      %v549 = vmin.f32 %v547, 1.0
      %550 = vst.msk [vmem:[%s271] sm:$0xff] %vm464, %v548
      %551 = vst.msk [vmem:[%s271 + $0x8] sm:$0xff] %vm464, %v549
      %p552 = scmp.lt.s32.totalorder %s17, 1
      %s553 = scalar_select %p552, %s17, 1
      %s554 = smul.addr %s553, 2
      %s555 = smul.addr %s554, 8
      %s556 = scalar_lea.vmem %s6, %s555
      // Predicated region
      $region45: #{mpis_neuro_forward.5} parent=43 // pred_check
        %p557 = pneg %p171
      $region46: #{mpis_neuro_forward.5} parent=43 // pred_check_branch
        %559 = sbr.rel (%p557) target = $region48
      $region47: #{mpis_neuro_forward.5} parent=43 // pred_region
        _
      $region48: #{mpis_neuro_forward.5} parent=43 // pred_fallthru
        _
    $region44: #{mpis_neuro_forward.5} parent=5 // pred_fallthru
      _
    %p560 = scmp.le.s32.totalorder 2, %s12
    // Predicated region
    $region49: #{mpis_neuro_forward.5} parent=5 // pred_check
      %p561 = pneg %p560
    $region50: #{mpis_neuro_forward.5} parent=5 // pred_check_branch
      %563 = sbr.rel (%p561) target = $region52
    $region51: #{mpis_neuro_forward.5} parent=5 // pred_region
      %s564 = ssub.s32 %s12, 2
      // Predicated region
      $region53: #{mpis_neuro_forward.5} parent=51 // pred_check
        %p565 = pneg %p177
      $region54: #{mpis_neuro_forward.5} parent=51 // pred_check_branch
        %567 = sbr.rel (%p565) target = $region56
      $region55: #{mpis_neuro_forward.5} parent=51 // pred_region
        %p568 = scmp.lt.s32.totalorder %s18, 1
        %s569 = scalar_select %p568, %s18, 1
        %s570 = smul.addr %s569, 2
        %s571 = smul.addr %s570, 8
        %s572 = scalar_lea.vmem %s6, %s571
      $region56: #{mpis_neuro_forward.5} parent=51 // pred_fallthru
        _
    $region52: #{mpis_neuro_forward.5} parent=5 // pred_fallthru
      _
  $region6: #{mpis_neuro_forward.5} parent=0 // loop_footer
    %s16 = sadd.s32 1, %s12
  $region7: #{mpis_neuro_forward.5} parent=0 // loop_footer_branch
    %11 = sbr.rel target = $region3
  $region8: #{mpis_neuro_forward.5} parent=0 // loop_exit
    _

// kernel: mpis_neuro_forward.3
$region0: #{mpis_neuro_forward.3}
  #allocation0 [shape = 'u32[]', space=smem, size = 0x4, offset = 0x4, fixed_abs, tag = 'smem constant byte address 0x4 - core index']
  #allocation1 [shape = 'u32[144,128]{1,0:T(1,128)}', space=vmem, size = 0x12000, scoped, tag = 'internal scratch']
  #allocation2 [shape = 'f32[64,32]{1,0:T(8,128)}', space=vmem, size = 0x8000, scoped, tag = 'scratch operand']
  #allocation3 [shape = 'f32[64,16]{1,0:T(8,128)}', space=vmem, size = 0x8000, scoped, tag = 'scratch operand']
  #allocation4 [shape = 'f32[64,16]{1,0:T(8,128)}', space=vmem, size = 0x8000, scoped, tag = 'scratch operand']
  #allocation5 [shape = 'f32[64,16]{1,0:T(8,128)}', space=vmem, size = 0x8000, scoped, tag = 'scratch operand']
  #allocation6 [shape = 'f32[64,16]{1,0:T(8,128)}', space=vmem, size = 0x8000, scoped, tag = 'scratch operand']
  %s0 = inlined_call_operand.vmem [shape: f32[2,64,16], index: 0, kind: input, shape index: {}]
  %s1 = inlined_call_operand.vmem [shape: f32[144,32], index: 1, kind: input, shape index: {}]
  %s2 = inlined_call_operand.vmem [shape: f32[1,32], index: 2, kind: input, shape index: {}]
  %s3 = inlined_call_operand.vmem [shape: f32[64,32], index: 3, kind: input, shape index: {}]
  %s4 = inlined_call_operand.vmem [shape: f32[128,16], index: 4, kind: input, shape index: {}]
  %s5 = inlined_call_operand.vmem [shape: f32[1,16], index: 5, kind: input, shape index: {}]
  %s6 = inlined_call_operand.vmem [shape: f32[144,16], index: 6, kind: input, shape index: {}]
  %s7 = inlined_call_operand.vmem [shape: f32[1,16], index: 7, kind: input, shape index: {}]
  %s8 = inlined_call_operand.vmem [shape: f32[2,64,16], index: 8, kind: output, shape index: {}]
  %s9 = sld [smem:[#allocation0]]
  $region65: #{mpis_neuro_forward.3} parent=0
    _
  %s11 = ssub.s32 1, %s9
  %s12 = scalar_select 0, %s11, %s9
  loop: start=0, step=1, limit=4
  $region2: #{mpis_neuro_forward.3} parent=0 // loop_pre_header
    _
  $region3: #{mpis_neuro_forward.3} parent=0 // loop_header
    %s14 = sphi 0, %s18
    %p15 = scmp.ge.s32.totalorder %s14, 4
    %s24 = sphi 0, %s26
    %s27 = sphi 0, %s24
    %s28 = sphi 0, %s27
    %s44 = sphi 0, %s28
    %s48 = sphi 0, %s48
    %s50 = sphi 0, %s48
    %s51 = sphi 0, %s50
    %s65 = sphi 0, %s51
    %s69 = sphi 0, %s69
    %s71 = sphi 0, %s69
    %s72 = sphi 0, %s71
    %s86 = sphi 0, %s72
    %s90 = sphi 0, %s90
    %s92 = sphi 0, %s90
    %s93 = sphi 0, %s92
    %s107 = sphi 0, %s93
    %s111 = sphi 0, %s111
    %s113 = sphi 0, %s111
    %s114 = sphi 0, %s113
    %s128 = sphi 0, %s114
    %s132 = sphi 0, %s132
    %s134 = sphi 0, %s132
    %s135 = sphi 0, %s134
    %s149 = sphi 0, %s135
    %s153 = sphi 0, %s153
    %s155 = sphi 0, %s153
    %s156 = sphi 0, %s155
    %s170 = sphi 0, %s156
    %s174 = sphi 0, %s174
    %s176 = sphi 0, %s174
    %s177 = sphi 0, %s176
    %s191 = sphi 0, %s177
    %s197 = sphi 0, %s199
    %s200 = sphi 0, %s197
    %s201 = sphi 0, %s200
    %s217 = sphi 0, %s201
  $region4: #{mpis_neuro_forward.3} parent=0 // loop_header_branch
    %17 = sbr.rel (%p15) target = $region8
  $region5: #{mpis_neuro_forward.3} parent=0 // loop_body
    %s19 = ssub.s32 %s14, 1
    %s20 = ssub.s32 %s14, 2
    %s21 = sadd.s32 %s14, 1
    %s22 = ssub.s32 %s14, %s21
    %p23 = scmp.eq.s32.totalorder %s22, 0
    %s25 = sadd.s32 %s24, 1
    %s26 = scalar_select %p23, %s24, %s25
    %p29 = pneg %p23
    %p30 = scmp.eq.s32.totalorder %s14, 1
    %p31 = por %p29, %p30
    %p32 = scmp.ne.s32.totalorder %s24, %s27
    %p33 = scmp.eq.s32.totalorder %s14, 0
    %p34 = por %p32, %p33
    %p35 = scmp.ne.s32.totalorder %s24, %s27
    %p36 = scmp.eq.s32.totalorder %s19, 1
    %p37 = por %p35, %p36
    %p38 = scmp.ne.s32.totalorder %s27, %s28
    %p39 = scmp.eq.s32.totalorder %s19, 0
    %p40 = por %p38, %p39
    %p41 = scmp.ne.s32.totalorder %s27, %s28
    %p42 = scmp.eq.s32.totalorder %s20, 1
    %p43 = por %p41, %p42
    %p45 = scmp.ne.s32.totalorder %s28, %s44
    %p46 = scmp.eq.s32.totalorder %s20, 0
    %p47 = por %p45, %p46
    %s49 = sadd.s32 %s48, 1
    %p52 = scmp.eq.s32.totalorder %s14, 1
    %p53 = scmp.ne.s32.totalorder %s48, %s50
    %p54 = scmp.eq.s32.totalorder %s14, 0
    %p55 = por %p53, %p54
    %p56 = scmp.ne.s32.totalorder %s48, %s50
    %p57 = scmp.eq.s32.totalorder %s19, 1
    %p58 = por %p56, %p57
    %p59 = scmp.ne.s32.totalorder %s50, %s51
    %p60 = scmp.eq.s32.totalorder %s19, 0
    %p61 = por %p59, %p60
    %p62 = scmp.ne.s32.totalorder %s50, %s51
    %p63 = scmp.eq.s32.totalorder %s20, 1
    %p64 = por %p62, %p63
    %p66 = scmp.ne.s32.totalorder %s51, %s65
    %p67 = scmp.eq.s32.totalorder %s20, 0
    %p68 = por %p66, %p67
    %s70 = sadd.s32 %s69, 1
    %p73 = scmp.eq.s32.totalorder %s14, 1
    %p74 = scmp.ne.s32.totalorder %s69, %s71
    %p75 = scmp.eq.s32.totalorder %s14, 0
    %p76 = por %p74, %p75
    %p77 = scmp.ne.s32.totalorder %s69, %s71
    %p78 = scmp.eq.s32.totalorder %s19, 1
    %p79 = por %p77, %p78
    %p80 = scmp.ne.s32.totalorder %s71, %s72
    %p81 = scmp.eq.s32.totalorder %s19, 0
    %p82 = por %p80, %p81
    %p83 = scmp.ne.s32.totalorder %s71, %s72
    %p84 = scmp.eq.s32.totalorder %s20, 1
    %p85 = por %p83, %p84
    %p87 = scmp.ne.s32.totalorder %s72, %s86
    %p88 = scmp.eq.s32.totalorder %s20, 0
    %p89 = por %p87, %p88
    %s91 = sadd.s32 %s90, 1
    %p94 = scmp.eq.s32.totalorder %s14, 1
    %p95 = scmp.ne.s32.totalorder %s90, %s92
    %p96 = scmp.eq.s32.totalorder %s14, 0
    %p97 = por %p95, %p96
    %p98 = scmp.ne.s32.totalorder %s90, %s92
    %p99 = scmp.eq.s32.totalorder %s19, 1
    %p100 = por %p98, %p99
    %p101 = scmp.ne.s32.totalorder %s92, %s93
    %p102 = scmp.eq.s32.totalorder %s19, 0
    %p103 = por %p101, %p102
    %p104 = scmp.ne.s32.totalorder %s92, %s93
    %p105 = scmp.eq.s32.totalorder %s20, 1
    %p106 = por %p104, %p105
    %p108 = scmp.ne.s32.totalorder %s93, %s107
    %p109 = scmp.eq.s32.totalorder %s20, 0
    %p110 = por %p108, %p109
    %s112 = sadd.s32 %s111, 1
    %p115 = scmp.eq.s32.totalorder %s14, 1
    %p116 = scmp.ne.s32.totalorder %s111, %s113
    %p117 = scmp.eq.s32.totalorder %s14, 0
    %p118 = por %p116, %p117
    %p119 = scmp.ne.s32.totalorder %s111, %s113
    %p120 = scmp.eq.s32.totalorder %s19, 1
    %p121 = por %p119, %p120
    %p122 = scmp.ne.s32.totalorder %s113, %s114
    %p123 = scmp.eq.s32.totalorder %s19, 0
    %p124 = por %p122, %p123
    %p125 = scmp.ne.s32.totalorder %s113, %s114
    %p126 = scmp.eq.s32.totalorder %s20, 1
    %p127 = por %p125, %p126
    %p129 = scmp.ne.s32.totalorder %s114, %s128
    %p130 = scmp.eq.s32.totalorder %s20, 0
    %p131 = por %p129, %p130
    %s133 = sadd.s32 %s132, 1
    %p136 = scmp.eq.s32.totalorder %s14, 1
    %p137 = scmp.ne.s32.totalorder %s132, %s134
    %p138 = scmp.eq.s32.totalorder %s14, 0
    %p139 = por %p137, %p138
    %p140 = scmp.ne.s32.totalorder %s132, %s134
    %p141 = scmp.eq.s32.totalorder %s19, 1
    %p142 = por %p140, %p141
    %p143 = scmp.ne.s32.totalorder %s134, %s135
    %p144 = scmp.eq.s32.totalorder %s19, 0
    %p145 = por %p143, %p144
    %p146 = scmp.ne.s32.totalorder %s134, %s135
    %p147 = scmp.eq.s32.totalorder %s20, 1
    %p148 = por %p146, %p147
    %p150 = scmp.ne.s32.totalorder %s135, %s149
    %p151 = scmp.eq.s32.totalorder %s20, 0
    %p152 = por %p150, %p151
    %s154 = sadd.s32 %s153, 1
    %p157 = scmp.eq.s32.totalorder %s14, 1
    %p158 = scmp.ne.s32.totalorder %s153, %s155
    %p159 = scmp.eq.s32.totalorder %s14, 0
    %p160 = por %p158, %p159
    %p161 = scmp.ne.s32.totalorder %s153, %s155
    %p162 = scmp.eq.s32.totalorder %s19, 1
    %p163 = por %p161, %p162
    %p164 = scmp.ne.s32.totalorder %s155, %s156
    %p165 = scmp.eq.s32.totalorder %s19, 0
    %p166 = por %p164, %p165
    %p167 = scmp.ne.s32.totalorder %s155, %s156
    %p168 = scmp.eq.s32.totalorder %s20, 1
    %p169 = por %p167, %p168
    %p171 = scmp.ne.s32.totalorder %s156, %s170
    %p172 = scmp.eq.s32.totalorder %s20, 0
    %p173 = por %p171, %p172
    %s175 = sadd.s32 %s174, 1
    %p178 = scmp.eq.s32.totalorder %s14, 1
    %p179 = scmp.ne.s32.totalorder %s174, %s176
    %p180 = scmp.eq.s32.totalorder %s14, 0
    %p181 = por %p179, %p180
    %p182 = scmp.ne.s32.totalorder %s174, %s176
    %p183 = scmp.eq.s32.totalorder %s19, 1
    %p184 = por %p182, %p183
    %p185 = scmp.ne.s32.totalorder %s176, %s177
    %p186 = scmp.eq.s32.totalorder %s19, 0
    %p187 = por %p185, %p186
    %p188 = scmp.ne.s32.totalorder %s176, %s177
    %p189 = scmp.eq.s32.totalorder %s20, 1
    %p190 = por %p188, %p189
    %p192 = scmp.ne.s32.totalorder %s177, %s191
    %p193 = scmp.eq.s32.totalorder %s20, 0
    %p194 = por %p192, %p193
    %s195 = ssub.s32 %s14, %s21
    %p196 = scmp.eq.s32.totalorder %s195, 0
    %s198 = sadd.s32 %s197, 1
    %s199 = scalar_select %p196, %s197, %s198
    %p202 = pneg %p196
    %p203 = scmp.eq.s32.totalorder %s14, 1
    %p204 = por %p202, %p203
    %p205 = scmp.ne.s32.totalorder %s197, %s200
    %p206 = scmp.eq.s32.totalorder %s14, 0
    %p207 = por %p205, %p206
    %p208 = scmp.ne.s32.totalorder %s197, %s200
    %p209 = scmp.eq.s32.totalorder %s19, 1
    %p210 = por %p208, %p209
    %p211 = scmp.ne.s32.totalorder %s200, %s201
    %p212 = scmp.eq.s32.totalorder %s19, 0
    %p213 = por %p211, %p212
    %p214 = scmp.ne.s32.totalorder %s200, %s201
    %p215 = scmp.eq.s32.totalorder %s20, 1
    %p216 = por %p214, %p215
    %p218 = scmp.ne.s32.totalorder %s201, %s217
    %p219 = scmp.eq.s32.totalorder %s20, 0
    %p220 = por %p218, %p219
    %p221 = scmp.le.s32.totalorder 1, %s14
    %p222 = scmp.lt.s32.totalorder %s14, 3
    %p223 = pnand %p221, %p222
    %p224 = pneg %p223
    // Predicated region
    $region9: #{mpis_neuro_forward.3} parent=5 // pred_check
      _
    $region10: #{mpis_neuro_forward.3} parent=5 // pred_check_branch
      %226 = sbr.rel (%p223) target = $region12
    $region11: #{mpis_neuro_forward.3} parent=5 // pred_region
      %s227 = ssub.s32 %s14, 1
      // Predicated region
      $region13: #{mpis_neuro_forward.3} parent=11 // pred_check
        %p228 = pneg %p61
      $region14: #{mpis_neuro_forward.3} parent=11 // pred_check_branch
        %230 = sbr.rel (%p228) target = $region16
      $region15: #{mpis_neuro_forward.3} parent=11 // pred_region
        _
      $region16: #{mpis_neuro_forward.3} parent=11 // pred_fallthru
        _
      // Predicated region
      $region17: #{mpis_neuro_forward.3} parent=11 // pred_check
        %p231 = pneg %p82
      $region18: #{mpis_neuro_forward.3} parent=11 // pred_check_branch
        %233 = sbr.rel (%p231) target = $region20
      $region19: #{mpis_neuro_forward.3} parent=11 // pred_region
        _
      $region20: #{mpis_neuro_forward.3} parent=11 // pred_fallthru
        _
      // Predicated region
      $region21: #{mpis_neuro_forward.3} parent=11 // pred_check
        %p234 = pneg %p103
      $region22: #{mpis_neuro_forward.3} parent=11 // pred_check_branch
        %236 = sbr.rel (%p234) target = $region24
      $region23: #{mpis_neuro_forward.3} parent=11 // pred_region
        _
      $region24: #{mpis_neuro_forward.3} parent=11 // pred_fallthru
        _
      // Predicated region
      $region25: #{mpis_neuro_forward.3} parent=11 // pred_check
        %p237 = pneg %p124
      $region26: #{mpis_neuro_forward.3} parent=11 // pred_check_branch
        %239 = sbr.rel (%p237) target = $region28
      $region27: #{mpis_neuro_forward.3} parent=11 // pred_region
        _
      $region28: #{mpis_neuro_forward.3} parent=11 // pred_fallthru
        _
      // Predicated region
      $region29: #{mpis_neuro_forward.3} parent=11 // pred_check
        %p240 = pneg %p145
      $region30: #{mpis_neuro_forward.3} parent=11 // pred_check_branch
        %242 = sbr.rel (%p240) target = $region32
      $region31: #{mpis_neuro_forward.3} parent=11 // pred_region
        _
      $region32: #{mpis_neuro_forward.3} parent=11 // pred_fallthru
        _
      // Predicated region
      $region33: #{mpis_neuro_forward.3} parent=11 // pred_check
        %p243 = pneg %p166
      $region34: #{mpis_neuro_forward.3} parent=11 // pred_check_branch
        %245 = sbr.rel (%p243) target = $region36
      $region35: #{mpis_neuro_forward.3} parent=11 // pred_region
        _
      $region36: #{mpis_neuro_forward.3} parent=11 // pred_fallthru
        _
      // Predicated region
      $region37: #{mpis_neuro_forward.3} parent=11 // pred_check
        %p246 = pneg %p187
      $region38: #{mpis_neuro_forward.3} parent=11 // pred_check_branch
        %248 = sbr.rel (%p246) target = $region40
      $region39: #{mpis_neuro_forward.3} parent=11 // pred_region
        _
      $region40: #{mpis_neuro_forward.3} parent=11 // pred_fallthru
        _
    $region12: #{mpis_neuro_forward.3} parent=5 // pred_fallthru
      _
    %p249 = scmp.lt.s32.totalorder %s14, 2
    // Predicated region
    $region41: #{mpis_neuro_forward.3} parent=5 // pred_check
      %p250 = pneg %p249
    $region42: #{mpis_neuro_forward.3} parent=5 // pred_check_branch
      %252 = sbr.rel (%p250) target = $region44
    $region43: #{mpis_neuro_forward.3} parent=5 // pred_region
      // Predicated region
      $region45: #{mpis_neuro_forward.3} parent=43 // pred_check
        %p253 = pneg %p34
      $region46: #{mpis_neuro_forward.3} parent=43 // pred_check_branch
        %255 = sbr.rel (%p253) target = $region48
      $region47: #{mpis_neuro_forward.3} parent=43 // pred_region
        %p256 = scmp.lt.s32.totalorder %s14, 1
        %s257 = scalar_select %p256, %s14, 1
        %s258 = smul.addr %s257, 8
        %s259 = smul.addr %s258, 8
        %s260 = scalar_lea.vmem %s0, %s259
      $region48: #{mpis_neuro_forward.3} parent=43 // pred_fallthru
        _
    $region44: #{mpis_neuro_forward.3} parent=5 // pred_fallthru
      _
    %p261 = scmp.le.s32.totalorder 1, %s14
    %p262 = scmp.lt.s32.totalorder %s14, 3
    %p263 = pnand %p261, %p262
    %p264 = pneg %p263
    // Predicated region
    $region49: #{mpis_neuro_forward.3} parent=5 // pred_check
      _
    $region50: #{mpis_neuro_forward.3} parent=5 // pred_check_branch
      %266 = sbr.rel (%p263) target = $region52
    $region51: #{mpis_neuro_forward.3} parent=5 // pred_region
      %s267 = ssub.s32 %s14, 1
      %p268 = scmp.lt.s32.totalorder %s19, 1
      %s269 = scalar_select %p268, %s19, 1
      %s270 = smul.addr %s269, 8
      %s271 = smul.addr %s270, 8
      %s272 = scalar_lea.vmem %s0, %s271
      %p273 = pneg %p40
      %p274 = pneg %p37
      %p275 = pneg %p61
      %p276 = pneg %p58
      %p277 = pneg %p82
      %p278 = pneg %p79
      %p279 = pneg %p103
      %p280 = pneg %p100
      %p281 = pneg %p124
      %p282 = pneg %p121
      %p283 = pneg %p145
      %p284 = pneg %p142
      %p285 = pneg %p166
      %p286 = pneg %p163
      %p287 = pneg %p187
      %p288 = pneg %p184
      %p289 = pneg %p213
      %p290 = pneg %p210
      %p291 = scmp.lt.s32.totalorder %s19, 1
      %s292 = scalar_select %p291, %s19, 1
      %s293 = smul.addr %s292, 8
      %s294 = smul.addr %s293, 8
      %s295 = scalar_lea.vmem %s8, %s294
      %p296 = scmp.lt.s32.totalorder %s19, 1
      %s297 = scalar_select %p296, %s19, 1
      %s298 = smul.addr %s297, 8
      %s299 = smul.addr %s298, 8
      %s300 = scalar_lea.vmem %s0, %s299
      %p301 = scmp.lt.s32.totalorder %s19, 1
      %s302 = scalar_select %p301, %s19, 1
      %s303 = smul.addr %s302, 8
      %s304 = smul.addr %s303, 8
      %s305 = scalar_lea.vmem %s8, %s304
      %v306 = vlaneseq
      %v307 = vshrl.u32 %v306, 7
      %v308 = vadd.s32 %v307, 8
      %v309 = vadd.s32 %v307, 16
      %v310 = vadd.s32 %v307, 24
      %v311 = vadd.s32 %v307, 32
      %v312 = vadd.s32 %v307, 40
      %v313 = vadd.s32 %v307, 48
      %v314 = vadd.s32 %v307, 56
      %v315 = vand.u32 %v307, 7
      %v316 = vand.u32 %v308, 7
      %v317 = vand.u32 %v309, 7
      %v318 = vand.u32 %v310, 7
      %v319 = vand.u32 %v311, 7
      %v320 = vand.u32 %v312, 7
      %v321 = vand.u32 %v313, 7
      %v322 = vand.u32 %v314, 7
      %vm323 = vcmp.ge.s32.totalorder %v315, 1
      %vm324 = vcmp.ge.s32.totalorder %v316, 1
      %vm325 = vcmp.ge.s32.totalorder %v317, 1
      %vm326 = vcmp.ge.s32.totalorder %v318, 1
      %vm327 = vcmp.ge.s32.totalorder %v319, 1
      %vm328 = vcmp.ge.s32.totalorder %v320, 1
      %vm329 = vcmp.ge.s32.totalorder %v321, 1
      %vm330 = vcmp.ge.s32.totalorder %v322, 1
      %v331 = vsel %vm323, 1, 0
      %v332 = vsel %vm324, 1, 0
      %v333 = vsel %vm325, 1, 0
      %v334 = vsel %vm326, 1, 0
      %v335 = vsel %vm327, 1, 0
      %v336 = vsel %vm328, 1, 0
      %v337 = vsel %vm329, 1, 0
      %v338 = vsel %vm330, 1, 0
      %v339 = vcvt.s32.f32 %v331
      %v340 = vcvt.s32.f32 %v332
      %v341 = vcvt.s32.f32 %v333
      %v342 = vcvt.s32.f32 %v334
      %v343 = vcvt.s32.f32 %v335
      %v344 = vcvt.s32.f32 %v336
      %v345 = vcvt.s32.f32 %v337
      %v346 = vcvt.s32.f32 %v338
      %vm347 = vcmp.le.s32.totalorder %v315, 6
      %vm348 = vcmp.le.s32.totalorder %v316, 6
      %vm349 = vcmp.le.s32.totalorder %v317, 6
      %vm350 = vcmp.le.s32.totalorder %v318, 6
      %vm351 = vcmp.le.s32.totalorder %v319, 6
      %vm352 = vcmp.le.s32.totalorder %v320, 6
      %vm353 = vcmp.le.s32.totalorder %v321, 6
      %vm354 = vcmp.le.s32.totalorder %v322, 6
      %v355 = vsel %vm347, 1, 0
      %v356 = vsel %vm348, 1, 0
      %v357 = vsel %vm349, 1, 0
      %v358 = vsel %vm350, 1, 0
      %v359 = vsel %vm351, 1, 0
      %v360 = vsel %vm352, 1, 0
      %v361 = vsel %vm353, 1, 0
      %v362 = vsel %vm354, 1, 0
      %v363 = vcvt.s32.f32 %v355
      %v364 = vcvt.s32.f32 %v356
      %v365 = vcvt.s32.f32 %v357
      %v366 = vcvt.s32.f32 %v358
      %v367 = vcvt.s32.f32 %v359
      %v368 = vcvt.s32.f32 %v360
      %v369 = vcvt.s32.f32 %v361
      %v370 = vcvt.s32.f32 %v362
      %v371 = vld [vmem:[%s300] sm:$0xff]
      %v372 = vld [vmem:[%s300 + $0x8] sm:$0xff]
      %v373 = vld [vmem:[%s300 + $0x10] sm:$0xff]
      %v374 = vld [vmem:[%s300 + $0x18] sm:$0xff]
      %v375 = vld [vmem:[%s300 + $0x20] sm:$0xff]
      %v376 = vld [vmem:[%s300 + $0x28] sm:$0xff]
      %v377 = vld [vmem:[%s300 + $0x30] sm:$0xff]
      %v378 = vld [vmem:[%s300 + $0x38] sm:$0xff]
      %vm386 = vcmask 1046528
      %v387 = vrot.slane %v372, 1
      %v388 = vrot.slane %v373, 1
      %v389 = vsel %vm386, %v387, %v388
      %v390 = vrot.slane %v374, 1
      %v391 = vsel %vm386, %v388, %v390
      %v392 = vrot.slane %v375, 1
      %v393 = vsel %vm386, %v390, %v392
      %v394 = vrot.slane %v376, 1
      %v395 = vsel %vm386, %v392, %v394
      %v396 = vrot.slane %v377, 1
      %v397 = vsel %vm386, %v394, %v396
      %v398 = vrot.slane %v378, 1
      %v399 = vsel %vm386, %v396, %v398
      %v407 = vsel %vm386, %v398, 0.0
      %v408 = vmul.f32 %v389, %v363
      %v409 = vmul.f32 %v391, %v364
      %v410 = vmul.f32 %v393, %v365
      %v411 = vmul.f32 %v395, %v366
      %v412 = vmul.f32 %v397, %v367
      %v413 = vmul.f32 %v399, %v368
      %v414 = vmul.f32 %v407, %v369
      %v415 = vmul.f32 %v370, 0.0
      %vm417 = vcmask 1040384
      %v418 = vrot.slane %v371, 7
      %v419 = vrot.slane %v372, 7
      %v420 = vsel %vm417, %v418, %v419
      %v421 = vrot.slane %v373, 7
      %v422 = vsel %vm417, %v419, %v421
      %v423 = vrot.slane %v374, 7
      %v424 = vsel %vm417, %v421, %v423
      %v425 = vrot.slane %v375, 7
      %v426 = vsel %vm417, %v423, %v425
      %v427 = vrot.slane %v376, 7
      %v428 = vsel %vm417, %v425, %v427
      %v429 = vrot.slane %v377, 7
      %v430 = vsel %vm417, %v427, %v429
      %v431 = vrot.slane %v378, 7
      %v432 = vsel %vm417, %v429, %v431
      %v441 = vsel %vm417, %v431, 0.0
      %v442 = vmul.f32 %v420, %v339
      %v443 = vmul.f32 %v422, %v340
      %v444 = vmul.f32 %v424, %v341
      %v445 = vmul.f32 %v426, %v342
      %v446 = vmul.f32 %v428, %v343
      %v447 = vmul.f32 %v430, %v344
      %v448 = vmul.f32 %v432, %v345
      %v449 = vmul.f32 %v441, %v346
      %v450 = vrot.slane %v371, 1
      %v451 = vsel %vm386, %v450, %v387
      %v453 = vmul.f32 %v451, %v363
      %v454 = vmul.f32 %v389, %v364
      %v455 = vmul.f32 %v391, %v365
      %v456 = vmul.f32 %v393, %v366
      %v457 = vmul.f32 %v395, %v367
      %v458 = vmul.f32 %v397, %v368
      %v459 = vmul.f32 %v399, %v369
      %v460 = vmul.f32 %v407, %v370
      %v462 = vsel %vm417, 0.0, %v418
      %v463 = vmul.f32 %v462, %v339
      %v464 = vmul.f32 %v420, %v340
      %v465 = vmul.f32 %v422, %v341
      %v466 = vmul.f32 %v424, %v342
      %v467 = vmul.f32 %v426, %v343
      %v468 = vmul.f32 %v428, %v344
      %v469 = vmul.f32 %v430, %v345
      %v470 = vmul.f32 %v432, %v346
      %v472 = vsel %vm386, 0.0, %v450
      %v473 = vmul.f32 %v472, %v363
      %v474 = vmul.f32 %v451, %v364
      %v475 = vmul.f32 %v389, %v365
      %v476 = vmul.f32 %v391, %v366
      %v477 = vmul.f32 %v393, %v367
      %v478 = vmul.f32 %v395, %v368
      %v479 = vmul.f32 %v397, %v369
      %v480 = vmul.f32 %v399, %v370
      %v481 = vmul.f32 %v339, 0.0
      %v482 = vmul.f32 %v462, %v340
      %v483 = vmul.f32 %v420, %v341
      %v484 = vmul.f32 %v422, %v342
      %v485 = vmul.f32 %v424, %v343
      %v486 = vmul.f32 %v426, %v344
      %v487 = vmul.f32 %v428, %v345
      %v488 = vmul.f32 %v430, %v346
      %490 = vrot.lane.b32.xlu0 %v372, 16
      %v491 = vpop.permute.xlu0 %490
      %492 = vrot.lane.b32.xlu0 %v373, 16
      %v493 = vpop.permute.xlu0 %492
      %494 = vrot.lane.b32.xlu0 %v374, 16
      %v495 = vpop.permute.xlu0 %494
      %496 = vrot.lane.b32.xlu0 %v375, 16
      %v497 = vpop.permute.xlu0 %496
      %498 = vrot.lane.b32.xlu0 %v376, 16
      %v499 = vpop.permute.xlu0 %498
      %500 = vrot.lane.b32.xlu0 %v377, 16
      %v501 = vpop.permute.xlu0 %500
      %502 = vrot.lane.b32.xlu0 %v378, 16
      %v503 = vpop.permute.xlu0 %502
      %504 = vrot.lane.b32.xlu0 0.0, 16
      %v505 = vpop.permute.xlu0 %504
      %522 = vrot.lane.b32.xlu0 %v442, 32
      %v523 = vpop.permute.xlu0 %522
      %524 = vrot.lane.b32.xlu0 %v443, 32
      %v525 = vpop.permute.xlu0 %524
      %526 = vrot.lane.b32.xlu0 %v444, 32
      %v527 = vpop.permute.xlu0 %526
      %528 = vrot.lane.b32.xlu0 %v445, 32
      %v529 = vpop.permute.xlu0 %528
      %530 = vrot.lane.b32.xlu0 %v446, 32
      %v531 = vpop.permute.xlu0 %530
      %532 = vrot.lane.b32.xlu0 %v447, 32
      %v533 = vpop.permute.xlu0 %532
      %534 = vrot.lane.b32.xlu0 %v448, 32
      %v535 = vpop.permute.xlu0 %534
      %536 = vrot.lane.b32.xlu0 %v449, 32
      %v537 = vpop.permute.xlu0 %536
      %554 = vrot.lane.b32.xlu0 %v453, 48
      %v555 = vpop.permute.xlu0 %554
      %556 = vrot.lane.b32.xlu0 %v454, 48
      %v557 = vpop.permute.xlu0 %556
      %558 = vrot.lane.b32.xlu0 %v455, 48
      %v559 = vpop.permute.xlu0 %558
      %560 = vrot.lane.b32.xlu0 %v456, 48
      %v561 = vpop.permute.xlu0 %560
      %562 = vrot.lane.b32.xlu0 %v457, 48
      %v563 = vpop.permute.xlu0 %562
      %564 = vrot.lane.b32.xlu0 %v458, 48
      %v565 = vpop.permute.xlu0 %564
      %566 = vrot.lane.b32.xlu0 %v459, 48
      %v567 = vpop.permute.xlu0 %566
      %568 = vrot.lane.b32.xlu0 %v460, 48
      %v569 = vpop.permute.xlu0 %568
      %578 = vrot.lane.b32.xlu0 %v371, 64
      %v579 = vpop.permute.xlu0 %578
      %580 = vrot.lane.b32.xlu0 %v372, 64
      %v581 = vpop.permute.xlu0 %580
      %582 = vrot.lane.b32.xlu0 %v373, 64
      %v583 = vpop.permute.xlu0 %582
      %584 = vrot.lane.b32.xlu0 %v374, 64
      %v585 = vpop.permute.xlu0 %584
      %586 = vrot.lane.b32.xlu0 %v375, 64
      %v587 = vpop.permute.xlu0 %586
      %588 = vrot.lane.b32.xlu0 %v376, 64
      %v589 = vpop.permute.xlu0 %588
      %590 = vrot.lane.b32.xlu0 %v377, 64
      %v591 = vpop.permute.xlu0 %590
      %592 = vrot.lane.b32.xlu0 %v378, 64
      %v593 = vpop.permute.xlu0 %592
      %610 = vrot.lane.b32.xlu0 %v463, 80
      %v611 = vpop.permute.xlu0 %610
      %612 = vrot.lane.b32.xlu0 %v464, 80
      %v613 = vpop.permute.xlu0 %612
      %614 = vrot.lane.b32.xlu0 %v465, 80
      %v615 = vpop.permute.xlu0 %614
      %616 = vrot.lane.b32.xlu0 %v466, 80
      %v617 = vpop.permute.xlu0 %616
      %618 = vrot.lane.b32.xlu0 %v467, 80
      %v619 = vpop.permute.xlu0 %618
      %620 = vrot.lane.b32.xlu0 %v468, 80
      %v621 = vpop.permute.xlu0 %620
      %622 = vrot.lane.b32.xlu0 %v469, 80
      %v623 = vpop.permute.xlu0 %622
      %624 = vrot.lane.b32.xlu0 %v470, 80
      %v625 = vpop.permute.xlu0 %624
      %642 = vrot.lane.b32.xlu0 %v473, 96
      %v643 = vpop.permute.xlu0 %642
      %644 = vrot.lane.b32.xlu0 %v474, 96
      %v645 = vpop.permute.xlu0 %644
      %646 = vrot.lane.b32.xlu0 %v475, 96
      %v647 = vpop.permute.xlu0 %646
      %648 = vrot.lane.b32.xlu0 %v476, 96
      %v649 = vpop.permute.xlu0 %648
      %650 = vrot.lane.b32.xlu0 %v477, 96
      %v651 = vpop.permute.xlu0 %650
      %652 = vrot.lane.b32.xlu0 %v478, 96
      %v653 = vpop.permute.xlu0 %652
      %654 = vrot.lane.b32.xlu0 %v479, 96
      %v655 = vpop.permute.xlu0 %654
      %656 = vrot.lane.b32.xlu0 %v480, 96
      %v657 = vpop.permute.xlu0 %656
      %666 = vrot.lane.b32.xlu0 0.0, 112
      %v667 = vpop.permute.xlu0 %666
      %668 = vrot.lane.b32.xlu0 %v371, 112
      %v669 = vpop.permute.xlu0 %668
      %670 = vrot.lane.b32.xlu0 %v372, 112
      %v671 = vpop.permute.xlu0 %670
      %672 = vrot.lane.b32.xlu0 %v373, 112
      %v673 = vpop.permute.xlu0 %672
      %674 = vrot.lane.b32.xlu0 %v374, 112
      %v675 = vpop.permute.xlu0 %674
      %676 = vrot.lane.b32.xlu0 %v375, 112
      %v677 = vpop.permute.xlu0 %676
      %678 = vrot.lane.b32.xlu0 %v376, 112
      %v679 = vpop.permute.xlu0 %678
      %680 = vrot.lane.b32.xlu0 %v377, 112
      %v681 = vpop.permute.xlu0 %680
      %vm690 = vcmask 130048
      %v691 = vsel %vm690, %v408, %v491
      %v692 = vsel %vm690, %v409, %v493
      %v693 = vsel %vm690, %v410, %v495
      %v694 = vsel %vm690, %v411, %v497
      %v695 = vsel %vm690, %v412, %v499
      %v696 = vsel %vm690, %v413, %v501
      %v697 = vsel %vm690, %v414, %v503
      %v698 = vsel %vm690, %v415, %v505
      %vm699 = vcmask 261120
      %v700 = vsel %vm699, %v691, %v523
      %v701 = vsel %vm699, %v692, %v525
      %v702 = vsel %vm699, %v693, %v527
      %v703 = vsel %vm699, %v694, %v529
      %v704 = vsel %vm699, %v695, %v531
      %v705 = vsel %vm699, %v696, %v533
      %v706 = vsel %vm699, %v697, %v535
      %v707 = vsel %vm699, %v698, %v537
      %vm708 = vcmask 392192
      %v709 = vsel %vm708, %v700, %v555
      %v710 = vsel %vm708, %v701, %v557
      %v711 = vsel %vm708, %v702, %v559
      %v712 = vsel %vm708, %v703, %v561
      %v713 = vsel %vm708, %v704, %v563
      %v714 = vsel %vm708, %v705, %v565
      %v715 = vsel %vm708, %v706, %v567
      %v716 = vsel %vm708, %v707, %v569
      %vm717 = vcmask 523264
      %v718 = vsel %vm717, %v709, %v579
      %v719 = vsel %vm717, %v710, %v581
      %v720 = vsel %vm717, %v711, %v583
      %v721 = vsel %vm717, %v712, %v585
      %v722 = vsel %vm717, %v713, %v587
      %v723 = vsel %vm717, %v714, %v589
      %v724 = vsel %vm717, %v715, %v591
      %v725 = vsel %vm717, %v716, %v593
      %vm726 = vcmask 654336
      %v727 = vsel %vm726, %v718, %v611
      %v728 = vsel %vm726, %v719, %v613
      %v729 = vsel %vm726, %v720, %v615
      %v730 = vsel %vm726, %v721, %v617
      %v731 = vsel %vm726, %v722, %v619
      %v732 = vsel %vm726, %v723, %v621
      %v733 = vsel %vm726, %v724, %v623
      %v734 = vsel %vm726, %v725, %v625
      %vm735 = vcmask 785408
      %v736 = vsel %vm735, %v727, %v643
      %v737 = vsel %vm735, %v728, %v645
      %v738 = vsel %vm735, %v729, %v647
      %v739 = vsel %vm735, %v730, %v649
      %v740 = vsel %vm735, %v731, %v651
      %v741 = vsel %vm735, %v732, %v653
      %v742 = vsel %vm735, %v733, %v655
      %v743 = vsel %vm735, %v734, %v657
      %vm744 = vcmask 916480
      %v745 = vsel %vm744, %v736, %v667
      %v746 = vsel %vm744, %v737, %v669
      %v747 = vsel %vm744, %v738, %v671
      %v748 = vsel %vm744, %v739, %v673
      %v749 = vsel %vm744, %v740, %v675
      %v750 = vsel %vm744, %v741, %v677
      %v751 = vsel %vm744, %v742, %v679
      %v752 = vsel %vm744, %v743, %v681
      %v753 = vld [vmem:[%s1] sm:$0xff]
      %v754 = vld [vmem:[%s1 + $0x8] sm:$0xff]
      %v755 = vld [vmem:[%s1 + $0x10] sm:$0xff]
      %v756 = vld [vmem:[%s1 + $0x18] sm:$0xff]
      %v757 = vld [vmem:[%s1 + $0x20] sm:$0xff]
      %v758 = vld [vmem:[%s1 + $0x28] sm:$0xff]
      %v759 = vld [vmem:[%s1 + $0x30] sm:$0xff]
      %v760 = vld [vmem:[%s1 + $0x38] sm:$0xff]
      %v761 = vld [vmem:[%s1 + $0x40] sm:$0xff]
      %v762 = vld [vmem:[%s1 + $0x48] sm:$0xff]
      %v763 = vld [vmem:[%s1 + $0x50] sm:$0xff]
      %v764 = vld [vmem:[%s1 + $0x58] sm:$0xff]
      %v765 = vld [vmem:[%s1 + $0x60] sm:$0xff]
      %v766 = vld [vmem:[%s1 + $0x68] sm:$0xff]
      %v767 = vld [vmem:[%s1 + $0x70] sm:$0xff]
      %v768 = vld [vmem:[%s1 + $0x78] sm:$0xff]
      %v769 = vld [vmem:[%s1 + $0x80] sm:$0xff]
      %v770 = vld [vmem:[%s1 + $0x88] sm:$0xff]
      %v771 = vld [vmem:[%s2] sm:$0x1]
      %v773 = vlaneseq
      %v774 = vshrl.u32 %v773, 7
      %v775 = vsub.s32 0, %v774
      %v776 = vrot.slane %v771, %v775
      %v779 = vsel %vm690, %v481, 0
      %v782 = vsel %vm690, %v482, 0
      %v785 = vsel %vm690, %v483, 0
      %v788 = vsel %vm690, %v484, 0
      %v791 = vsel %vm690, %v485, 0
      %v794 = vsel %vm690, %v486, 0
      %v797 = vsel %vm690, %v487, 0
      %v800 = vsel %vm690, %v488, 0
      %802 = vmatprep.subr.mxu0 0.0
      %803 = vmatpush1.msra.mxu0 %v753
      %804 = vmatprep.subr.mxu0 0.0
      %805 = vmatpush1.msra.mxu0 %v754
      %806 = vmatprep.subr.mxu0 0.0
      %807 = vmatpush1.msra.mxu0 %v755
      %808 = vmatprep.subr.mxu0 0.0
      %809 = vmatpush1.msra.mxu0 %v756
      %810 = vmatprep.subr.mxu0 0.0
      %811 = vmatpush1.msra.mxu0 %v757
      %812 = vmatprep.subr.mxu0 0.0
      %813 = vmatpush1.msra.mxu0 %v758
      %814 = vmatprep.subr.mxu0 0.0
      %815 = vmatpush1.msra.mxu0 %v759
      %816 = vmatprep.subr.mxu0 0.0
      %817 = vmatpush1.msra.mxu0 %v760
      %818 = vmatprep.subr.mxu0 0.0
      %819 = vmatpush1.msra.mxu0 %v761
      %820 = vmatprep.subr.mxu0 0.0
      %821 = vmatpush1.msra.mxu0 %v762
      %822 = vmatprep.subr.mxu0 0.0
      %823 = vmatpush1.msra.mxu0 %v763
      %824 = vmatprep.subr.mxu0 0.0
      %825 = vmatpush1.msra.mxu0 %v764
      %826 = vmatprep.subr.mxu0 0.0
      %827 = vmatpush1.msra.mxu0 %v765
      %828 = vmatprep.subr.mxu0 0.0
      %829 = vmatpush1.msra.mxu0 %v766
      %830 = vmatprep.subr.mxu0 0.0
      %831 = vmatpush1.msra.mxu0 %v767
      %832 = vmatprep.subr.mxu0 0.0
      %833 = vmatpush1.msra.mxu0 %v768
      %834 = vmatprep.subr.mxu0 0.0
      %835 = vmatpush1.msra.mxu0 %v769
      %836 = vmatprep.subr.mxu0 0.0
      %837 = vmatpush1.msra.mxu0 %v770
      %838 = vmatprep.subr.mxu0 0.0
      %839 = vmatpush1.msra.mxu0 0.0
      %840 = vmatprep.subr.mxu0 0.0
      %841 = vmatpush1.msra.mxu0 0.0
      %842 = vmatprep.subr.mxu0 0.0
      %843 = vmatpush1.msra.mxu0 0.0
      %844 = vmatprep.subr.mxu0 0.0
      %845 = vmatpush1.msra.mxu0 0.0
      %846 = vmatprep.subr.mxu0 0.0
      %847 = vmatpush1.msra.mxu0 0.0
      %848 = vmatprep.subr.mxu0 0.0
      %849 = vmatpush1.msra.mxu0 0.0
      %850 = vmatprep.subr.mxu0 0.0
      %851 = vmatpush1.msra.mxu0 0.0
      %852 = vmatprep.subr.mxu0 0.0
      %853 = vmatpush1.msra.mxu0 0.0
      %854 = vmatprep.subr.mxu0 0.0
      %855 = vmatpush1.msra.mxu0 0.0
      %856 = vmatprep.subr.mxu0 0.0
      %857 = vmatpush1.msra.mxu0 0.0
      %858 = vmatprep.subr.mxu0 0.0
      %859 = vmatpush1.msra.mxu0 0.0
      %860 = vmatprep.subr.mxu0 0.0
      %861 = vmatpush1.msra.mxu0 0.0
      %862 = vmatprep.subr.mxu0 0.0
      %863 = vmatpush1.msra.mxu0 0.0
      %864 = vmatprep.subr.mxu0 0.0
      %865 = vmatpush1.msra.mxu0 0.0
      %866 = vmatprep.mubr.f32.mxu0 %v779
      %867 = vmatmul.mubr.f32.gmra.mrb[0].mxu0 %v745
      %v868 = vpop.f32.mrb[0].mxu0
      %v869 = vadd.f32 %v776, %v868
      %v870 = vpop.f32.mrb[0].mxu0
      %871 = vmatprep.mubr.f32.mxu0 %v782
      %872 = vmatmul.mubr.f32.gmra.mrb[0].mxu0 %v746
      %v873 = vpop.f32.mrb[0].mxu0
      %v874 = vadd.f32 %v776, %v873
      %v875 = vpop.f32.mrb[0].mxu0
      %876 = vmatprep.mubr.f32.mxu0 %v785
      %877 = vmatmul.mubr.f32.gmra.mrb[0].mxu0 %v747
      %v878 = vpop.f32.mrb[0].mxu0
      %v879 = vadd.f32 %v776, %v878
      %v880 = vpop.f32.mrb[0].mxu0
      %881 = vmatprep.mubr.f32.mxu0 %v788
      %882 = vmatmul.mubr.f32.gmra.mrb[0].mxu0 %v748
      %v883 = vpop.f32.mrb[0].mxu0
      %v884 = vadd.f32 %v776, %v883
      %v885 = vpop.f32.mrb[0].mxu0
      %886 = vmatprep.mubr.f32.mxu0 %v791
      %887 = vmatmul.mubr.f32.gmra.mrb[0].mxu0 %v749
      %v888 = vpop.f32.mrb[0].mxu0
      %v889 = vadd.f32 %v776, %v888
      %v890 = vpop.f32.mrb[0].mxu0
      %891 = vmatprep.mubr.f32.mxu0 %v794
      %892 = vmatmul.mubr.f32.gmra.mrb[0].mxu0 %v750
      %v893 = vpop.f32.mrb[0].mxu0
      %v894 = vadd.f32 %v776, %v893
      %v895 = vpop.f32.mrb[0].mxu0
      %896 = vmatprep.mubr.f32.mxu0 %v797
      %897 = vmatmul.mubr.f32.gmra.mrb[0].mxu0 %v751
      %v898 = vpop.f32.mrb[0].mxu0
      %v899 = vadd.f32 %v776, %v898
      %v900 = vpop.f32.mrb[0].mxu0
      %901 = vmatprep.mubr.f32.mxu0 %v800
      %902 = vmatmul.mubr.f32.gmra.mrb[0].mxu0 %v752
      %v903 = vpop.f32.mrb[0].mxu0
      %v904 = vadd.f32 %v776, %v903
      %v905 = vpop.f32.mrb[0].mxu0
      %906 = vdwg.mxu0
      %v907 = vld [vmem:[%s3] sm:$0xff]
      %v908 = vld [vmem:[%s3 + $0x8] sm:$0xff]
      %v909 = vld [vmem:[%s3 + $0x10] sm:$0xff]
      %v910 = vld [vmem:[%s3 + $0x18] sm:$0xff]
      %v911 = vld [vmem:[%s3 + $0x20] sm:$0xff]
      %v912 = vld [vmem:[%s3 + $0x28] sm:$0xff]
      %v913 = vld [vmem:[%s3 + $0x30] sm:$0xff]
      %v914 = vld [vmem:[%s3 + $0x38] sm:$0xff]
      %v915 = vld [vmem:[%s4] sm:$0xff]
      %v916 = vld [vmem:[%s4 + $0x8] sm:$0xff]
      %v917 = vld [vmem:[%s4 + $0x10] sm:$0xff]
      %v918 = vld [vmem:[%s4 + $0x18] sm:$0xff]
      %v919 = vld [vmem:[%s4 + $0x20] sm:$0xff]
      %v920 = vld [vmem:[%s4 + $0x28] sm:$0xff]
      %v921 = vld [vmem:[%s4 + $0x30] sm:$0xff]
      %v922 = vld [vmem:[%s4 + $0x38] sm:$0xff]
      %v923 = vld [vmem:[%s4 + $0x40] sm:$0xff]
      %v924 = vld [vmem:[%s4 + $0x48] sm:$0xff]
      %v925 = vld [vmem:[%s4 + $0x50] sm:$0xff]
      %v926 = vld [vmem:[%s4 + $0x58] sm:$0xff]
      %v927 = vld [vmem:[%s4 + $0x60] sm:$0xff]
      %v928 = vld [vmem:[%s4 + $0x68] sm:$0xff]
      %v929 = vld [vmem:[%s4 + $0x70] sm:$0xff]
      %v930 = vld [vmem:[%s4 + $0x78] sm:$0xff]
      %v931 = vld [vmem:[%s5] sm:$0x1]
      %v932 = vld [vmem:[%s6] sm:$0xff]
      %v933 = vld [vmem:[%s6 + $0x8] sm:$0xff]
      %v934 = vld [vmem:[%s6 + $0x10] sm:$0xff]
      %v935 = vld [vmem:[%s6 + $0x18] sm:$0xff]
      %v936 = vld [vmem:[%s6 + $0x20] sm:$0xff]
      %v937 = vld [vmem:[%s6 + $0x28] sm:$0xff]
      %v938 = vld [vmem:[%s6 + $0x30] sm:$0xff]
      %v939 = vld [vmem:[%s6 + $0x38] sm:$0xff]
      %v940 = vld [vmem:[%s6 + $0x40] sm:$0xff]
      %v941 = vld [vmem:[%s6 + $0x48] sm:$0xff]
      %v942 = vld [vmem:[%s6 + $0x50] sm:$0xff]
      %v943 = vld [vmem:[%s6 + $0x58] sm:$0xff]
      %v944 = vld [vmem:[%s6 + $0x60] sm:$0xff]
      %v945 = vld [vmem:[%s6 + $0x68] sm:$0xff]
      %v946 = vld [vmem:[%s6 + $0x70] sm:$0xff]
      %v947 = vld [vmem:[%s6 + $0x78] sm:$0xff]
      %v948 = vld [vmem:[%s6 + $0x80] sm:$0xff]
      %v949 = vld [vmem:[%s6 + $0x88] sm:$0xff]
      %v950 = vld [vmem:[%s7] sm:$0x1]
      %951 = vst.msk [vmem:[#allocation2] sm:$0xff] %vm699, 0.0
      %952 = vst.msk [vmem:[#allocation2 + $0x8] sm:$0xff] %vm699, 0.0
      %953 = vst.msk [vmem:[#allocation2 + $0x10] sm:$0xff] %vm699, 0.0
      %954 = vst.msk [vmem:[#allocation2 + $0x18] sm:$0xff] %vm699, 0.0
      %955 = vst.msk [vmem:[#allocation2 + $0x20] sm:$0xff] %vm699, 0.0
      %956 = vst.msk [vmem:[#allocation2 + $0x28] sm:$0xff] %vm699, 0.0
      %957 = vst.msk [vmem:[#allocation2 + $0x30] sm:$0xff] %vm699, 0.0
      %958 = vst.msk [vmem:[#allocation2 + $0x38] sm:$0xff] %vm699, 0.0
      %959 = vst.msk [vmem:[#allocation3] sm:$0xff] %vm690, 0.0
      %960 = vst.msk [vmem:[#allocation3 + $0x8] sm:$0xff] %vm690, 0.0
      %961 = vst.msk [vmem:[#allocation3 + $0x10] sm:$0xff] %vm690, 0.0
      %962 = vst.msk [vmem:[#allocation3 + $0x18] sm:$0xff] %vm690, 0.0
      %963 = vst.msk [vmem:[#allocation3 + $0x20] sm:$0xff] %vm690, 0.0
      %964 = vst.msk [vmem:[#allocation3 + $0x28] sm:$0xff] %vm690, 0.0
      %965 = vst.msk [vmem:[#allocation3 + $0x30] sm:$0xff] %vm690, 0.0
      %966 = vst.msk [vmem:[#allocation3 + $0x38] sm:$0xff] %vm690, 0.0
      %967 = vst.msk [vmem:[#allocation4] sm:$0xff] %vm690, 0.0
      %968 = vst.msk [vmem:[#allocation4 + $0x8] sm:$0xff] %vm690, 0.0
      %969 = vst.msk [vmem:[#allocation4 + $0x10] sm:$0xff] %vm690, 0.0
      %970 = vst.msk [vmem:[#allocation4 + $0x18] sm:$0xff] %vm690, 0.0
      %971 = vst.msk [vmem:[#allocation4 + $0x20] sm:$0xff] %vm690, 0.0
      %972 = vst.msk [vmem:[#allocation4 + $0x28] sm:$0xff] %vm690, 0.0
      %973 = vst.msk [vmem:[#allocation4 + $0x30] sm:$0xff] %vm690, 0.0
      %974 = vst.msk [vmem:[#allocation4 + $0x38] sm:$0xff] %vm690, 0.0
      %975 = vst.msk [vmem:[#allocation5] sm:$0xff] %vm690, 0.0
      %976 = vst.msk [vmem:[#allocation5 + $0x8] sm:$0xff] %vm690, 0.0
      %977 = vst.msk [vmem:[#allocation5 + $0x10] sm:$0xff] %vm690, 0.0
      %978 = vst.msk [vmem:[#allocation5 + $0x18] sm:$0xff] %vm690, 0.0
      %979 = vst.msk [vmem:[#allocation5 + $0x20] sm:$0xff] %vm690, 0.0
      %980 = vst.msk [vmem:[#allocation5 + $0x28] sm:$0xff] %vm690, 0.0
      %981 = vst.msk [vmem:[#allocation5 + $0x30] sm:$0xff] %vm690, 0.0
      %982 = vst.msk [vmem:[#allocation5 + $0x38] sm:$0xff] %vm690, 0.0
      %983 = vst.msk [vmem:[#allocation6] sm:$0xff] %vm690, 0.0
      %984 = vst.msk [vmem:[#allocation6 + $0x8] sm:$0xff] %vm690, 0.0
      %985 = vst.msk [vmem:[#allocation6 + $0x10] sm:$0xff] %vm690, 0.0
      %986 = vst.msk [vmem:[#allocation6 + $0x18] sm:$0xff] %vm690, 0.0
      %987 = vst.msk [vmem:[#allocation6 + $0x20] sm:$0xff] %vm690, 0.0
      %988 = vst.msk [vmem:[#allocation6 + $0x28] sm:$0xff] %vm690, 0.0
      %989 = vst.msk [vmem:[#allocation6 + $0x30] sm:$0xff] %vm690, 0.0
      %990 = vst.msk [vmem:[#allocation6 + $0x38] sm:$0xff] %vm690, 0.0
      %v991 = vld [vmem:[#allocation5] sm:$0xff]
      %v992 = vld [vmem:[#allocation5 + $0x8] sm:$0xff]
      %v993 = vld [vmem:[#allocation5 + $0x10] sm:$0xff]
      %v994 = vld [vmem:[#allocation5 + $0x18] sm:$0xff]
      %v995 = vld [vmem:[#allocation5 + $0x20] sm:$0xff]
      %v996 = vld [vmem:[#allocation5 + $0x28] sm:$0xff]
      %v997 = vld [vmem:[#allocation5 + $0x30] sm:$0xff]
      %v998 = vld [vmem:[#allocation5 + $0x38] sm:$0xff]
      %v1007 = vrot.slane %v991, 1
      %v1008 = vrot.slane %v992, 1
      %v1009 = vsel %vm386, %v1007, %v1008
      %v1010 = vrot.slane %v993, 1
      %v1011 = vsel %vm386, %v1008, %v1010
      %v1012 = vrot.slane %v994, 1
      %v1013 = vsel %vm386, %v1010, %v1012
      %v1014 = vrot.slane %v995, 1
      %v1015 = vsel %vm386, %v1012, %v1014
      %v1016 = vrot.slane %v996, 1
      %v1017 = vsel %vm386, %v1014, %v1016
      %v1018 = vrot.slane %v997, 1
      %v1019 = vsel %vm386, %v1016, %v1018
      %v1020 = vrot.slane %v998, 1
      %v1021 = vsel %vm386, %v1018, %v1020
      %v1030 = vsel %vm386, %v1020, 0.0
      %v1031 = vmul.f32 %v1009, %v363
      %v1032 = vmul.f32 %v1011, %v364
      %v1033 = vmul.f32 %v1013, %v365
      %v1034 = vmul.f32 %v1015, %v366
      %v1035 = vmul.f32 %v1017, %v367
      %v1036 = vmul.f32 %v1019, %v368
      %v1037 = vmul.f32 %v1021, %v369
      %v1038 = vmul.f32 %v1030, %v370
      %v1039 = vmul.f32 %v1011, %v363
      %v1040 = vmul.f32 %v1013, %v364
      %v1041 = vmul.f32 %v1015, %v365
      %v1042 = vmul.f32 %v1017, %v366
      %v1043 = vmul.f32 %v1019, %v367
      %v1044 = vmul.f32 %v1021, %v368
      %v1045 = vmul.f32 %v1030, %v369
      %1054 = vrot.lane.b32.xlu0 %v1031, 16
      %v1055 = vpop.permute.xlu0 %1054
      %1056 = vrot.lane.b32.xlu0 %v1032, 16
      %v1057 = vpop.permute.xlu0 %1056
      %1058 = vrot.lane.b32.xlu0 %v1033, 16
      %v1059 = vpop.permute.xlu0 %1058
      %1060 = vrot.lane.b32.xlu0 %v1034, 16
      %v1061 = vpop.permute.xlu0 %1060
      %1062 = vrot.lane.b32.xlu0 %v1035, 16
      %v1063 = vpop.permute.xlu0 %1062
      %1064 = vrot.lane.b32.xlu0 %v1036, 16
      %v1065 = vpop.permute.xlu0 %1064
      %1066 = vrot.lane.b32.xlu0 %v1037, 16
      %v1067 = vpop.permute.xlu0 %1066
      %1068 = vrot.lane.b32.xlu0 %v1038, 16
      %v1069 = vpop.permute.xlu0 %1068
      %1078 = vrot.lane.b32.xlu0 %v992, 32
      %v1079 = vpop.permute.xlu0 %1078
      %1080 = vrot.lane.b32.xlu0 %v993, 32
      %v1081 = vpop.permute.xlu0 %1080
      %1082 = vrot.lane.b32.xlu0 %v994, 32
      %v1083 = vpop.permute.xlu0 %1082
      %1084 = vrot.lane.b32.xlu0 %v995, 32
      %v1085 = vpop.permute.xlu0 %1084
      %1086 = vrot.lane.b32.xlu0 %v996, 32
      %v1087 = vpop.permute.xlu0 %1086
      %1088 = vrot.lane.b32.xlu0 %v997, 32
      %v1089 = vpop.permute.xlu0 %1088
      %1090 = vrot.lane.b32.xlu0 %v998, 32
      %v1091 = vpop.permute.xlu0 %1090
      %1092 = vrot.lane.b32.xlu0 0.0, 32
      %v1093 = vpop.permute.xlu0 %1092
      %1110 = vrot.lane.b32.xlu0 %v1039, 48
      %v1111 = vpop.permute.xlu0 %1110
      %1112 = vrot.lane.b32.xlu0 %v1040, 48
      %v1113 = vpop.permute.xlu0 %1112
      %1114 = vrot.lane.b32.xlu0 %v1041, 48
      %v1115 = vpop.permute.xlu0 %1114
      %1116 = vrot.lane.b32.xlu0 %v1042, 48
      %v1117 = vpop.permute.xlu0 %1116
      %1118 = vrot.lane.b32.xlu0 %v1043, 48
      %v1119 = vpop.permute.xlu0 %1118
      %1120 = vrot.lane.b32.xlu0 %v1044, 48
      %v1121 = vpop.permute.xlu0 %1120
      %1122 = vrot.lane.b32.xlu0 %v1045, 48
      %v1123 = vpop.permute.xlu0 %1122
      %1124 = vrot.lane.b32.xlu0 %v415, 48
      %v1125 = vpop.permute.xlu0 %1124
      %v1134 = vsel %vm690, %v991, %v1055
      %v1135 = vsel %vm690, %v992, %v1057
      %v1136 = vsel %vm690, %v993, %v1059
      %v1137 = vsel %vm690, %v994, %v1061
      %v1138 = vsel %vm690, %v995, %v1063
      %v1139 = vsel %vm690, %v996, %v1065
      %v1140 = vsel %vm690, %v997, %v1067
      %v1141 = vsel %vm690, %v998, %v1069
      %v1142 = vsel %vm699, %v1134, %v1079
      %v1143 = vsel %vm699, %v1135, %v1081
      %v1144 = vsel %vm699, %v1136, %v1083
      %v1145 = vsel %vm699, %v1137, %v1085
      %v1146 = vsel %vm699, %v1138, %v1087
      %v1147 = vsel %vm699, %v1139, %v1089
      %v1148 = vsel %vm699, %v1140, %v1091
      %v1149 = vsel %vm699, %v1141, %v1093
      %v1150 = vsel %vm708, %v1142, %v1111
      %v1151 = vsel %vm708, %v1143, %v1113
      %v1152 = vsel %vm708, %v1144, %v1115
      %v1153 = vsel %vm708, %v1145, %v1117
      %v1154 = vsel %vm708, %v1146, %v1119
      %v1155 = vsel %vm708, %v1147, %v1121
      %v1156 = vsel %vm708, %v1148, %v1123
      %v1157 = vsel %vm708, %v1149, %v1125
      %v1159 = vsel %vm717, %v1150, 0
      %v1162 = vsel %vm717, %v1151, 0
      %v1165 = vsel %vm717, %v1152, 0
      %v1168 = vsel %vm717, %v1153, 0
      %v1171 = vsel %vm717, %v1154, 0
      %v1174 = vsel %vm717, %v1155, 0
      %v1177 = vsel %vm717, %v1156, 0
      %v1180 = vsel %vm717, %v1157, 0
      %1182 = vmatprep.subr.mxu0 0.0
      %1183 = vmatpush1.msra.mxu0 %v907
      %1184 = vmatprep.subr.mxu0 0.0
      %1185 = vmatpush1.msra.mxu0 %v908
      %1186 = vmatprep.subr.mxu0 0.0
      %1187 = vmatpush1.msra.mxu0 %v909
      %1188 = vmatprep.subr.mxu0 0.0
      %1189 = vmatpush1.msra.mxu0 %v910
      %1190 = vmatprep.subr.mxu0 0.0
      %1191 = vmatpush1.msra.mxu0 %v911
      %1192 = vmatprep.subr.mxu0 0.0
      %1193 = vmatpush1.msra.mxu0 %v912
      %1194 = vmatprep.subr.mxu0 0.0
      %1195 = vmatpush1.msra.mxu0 %v913
      %1196 = vmatprep.subr.mxu0 0.0
      %1197 = vmatpush1.msra.mxu0 %v914
      %1198 = vmatprep.subr.mxu0 0.0
      %1199 = vmatpush1.msra.mxu0 0.0
      %1200 = vmatprep.subr.mxu0 0.0
      %1201 = vmatpush1.msra.mxu0 0.0
      %1202 = vmatprep.subr.mxu0 0.0
      %1203 = vmatpush1.msra.mxu0 0.0
      %1204 = vmatprep.subr.mxu0 0.0
      %1205 = vmatpush1.msra.mxu0 0.0
      %1206 = vmatprep.subr.mxu0 0.0
      %1207 = vmatpush1.msra.mxu0 0.0
      %1208 = vmatprep.subr.mxu0 0.0
      %1209 = vmatpush1.msra.mxu0 0.0
      %1210 = vmatprep.subr.mxu0 0.0
      %1211 = vmatpush1.msra.mxu0 0.0
      %1212 = vmatprep.subr.mxu0 0.0
      %1213 = vmatpush1.msra.mxu0 0.0
      %1214 = vmatprep.subr.mxu0 0.0
      %1215 = vmatpush1.msra.mxu0 0.0
      %1216 = vmatprep.subr.mxu0 0.0
      %1217 = vmatpush1.msra.mxu0 0.0
      %1218 = vmatprep.subr.mxu0 0.0
      %1219 = vmatpush1.msra.mxu0 0.0
      %1220 = vmatprep.subr.mxu0 0.0
      %1221 = vmatpush1.msra.mxu0 0.0
      %1222 = vmatprep.subr.mxu0 0.0
      %1223 = vmatpush1.msra.mxu0 0.0
      %1224 = vmatprep.subr.mxu0 0.0
      %1225 = vmatpush1.msra.mxu0 0.0
      %1226 = vmatprep.subr.mxu0 0.0
      %1227 = vmatpush1.msra.mxu0 0.0
      %1228 = vmatprep.subr.mxu0 0.0
      %1229 = vmatpush1.msra.mxu0 0.0
      %1230 = vmatprep.subr.mxu0 0.0
      %1231 = vmatpush1.msra.mxu0 0.0
      %1232 = vmatprep.subr.mxu0 0.0
      %1233 = vmatpush1.msra.mxu0 0.0
      %1234 = vmatprep.subr.mxu0 0.0
      %1235 = vmatpush1.msra.mxu0 0.0
      %1236 = vmatprep.subr.mxu0 0.0
      %1237 = vmatpush1.msra.mxu0 0.0
      %1238 = vmatprep.subr.mxu0 0.0
      %1239 = vmatpush1.msra.mxu0 0.0
      %1240 = vmatprep.subr.mxu0 0.0
      %1241 = vmatpush1.msra.mxu0 0.0
      %1242 = vmatprep.subr.mxu0 0.0
      %1243 = vmatpush1.msra.mxu0 0.0
      %1244 = vmatprep.subr.mxu0 0.0
      %1245 = vmatpush1.msra.mxu0 0.0
      %1246 = vmatprep.mubr.f32.mxu0 0.0
      %1247 = vmatmul.mubr.f32.gmra.mrb[0].mxu0 %v1159
      %v1248 = vpop.f32.mrb[0].mxu0
      %v1249 = vadd.f32 %v869, %v1248
      %v1250 = vpop.f32.mrb[0].mxu0
      %1251 = vmatprep.mubr.f32.mxu0 0.0
      %1252 = vmatmul.mubr.f32.gmra.mrb[0].mxu0 %v1162
      %v1253 = vpop.f32.mrb[0].mxu0
      %v1254 = vadd.f32 %v874, %v1253
      %v1255 = vpop.f32.mrb[0].mxu0
      %1256 = vmatprep.mubr.f32.mxu0 0.0
      %1257 = vmatmul.mubr.f32.gmra.mrb[0].mxu0 %v1165
      %v1258 = vpop.f32.mrb[0].mxu0
      %v1259 = vadd.f32 %v879, %v1258
      %v1260 = vpop.f32.mrb[0].mxu0
      %1261 = vmatprep.mubr.f32.mxu0 0.0
      %1262 = vmatmul.mubr.f32.gmra.mrb[0].mxu0 %v1168
      %v1263 = vpop.f32.mrb[0].mxu0
      %v1264 = vadd.f32 %v884, %v1263
      %v1265 = vpop.f32.mrb[0].mxu0
      %1266 = vmatprep.mubr.f32.mxu0 0.0
      %1267 = vmatmul.mubr.f32.gmra.mrb[0].mxu0 %v1171
      %v1268 = vpop.f32.mrb[0].mxu0
      %v1269 = vadd.f32 %v889, %v1268
      %v1270 = vpop.f32.mrb[0].mxu0
      %1271 = vmatprep.mubr.f32.mxu0 0.0
      %1272 = vmatmul.mubr.f32.gmra.mrb[0].mxu0 %v1174
      %v1273 = vpop.f32.mrb[0].mxu0
      %v1274 = vadd.f32 %v894, %v1273
      %v1275 = vpop.f32.mrb[0].mxu0
      %1276 = vmatprep.mubr.f32.mxu0 0.0
      %1277 = vmatmul.mubr.f32.gmra.mrb[0].mxu0 %v1177
      %v1278 = vpop.f32.mrb[0].mxu0
      %v1279 = vadd.f32 %v899, %v1278
      %v1280 = vpop.f32.mrb[0].mxu0
      %1281 = vmatprep.mubr.f32.mxu0 0.0
      %1282 = vmatmul.mubr.f32.gmra.mrb[0].mxu0 %v1180
      %v1283 = vpop.f32.mrb[0].mxu0
      %v1284 = vadd.f32 %v904, %v1283
      %v1285 = vpop.f32.mrb[0].mxu0
      %1286 = vdwg.mxu0
      %v1287 = vld [vmem:[#allocation2] sm:$0xff]
      %v1288 = vld [vmem:[#allocation2 + $0x8] sm:$0xff]
      %v1289 = vld [vmem:[#allocation2 + $0x10] sm:$0xff]
      %v1290 = vld [vmem:[#allocation2 + $0x18] sm:$0xff]
      %v1291 = vld [vmem:[#allocation2 + $0x20] sm:$0xff]
      %v1292 = vld [vmem:[#allocation2 + $0x28] sm:$0xff]
      %v1293 = vld [vmem:[#allocation2 + $0x30] sm:$0xff]
      %v1294 = vld [vmem:[#allocation2 + $0x38] sm:$0xff]
      %v1295 = vmul.f32 %v1287, 0.99
      %v1296 = vmul.f32 %v1288, 0.99
      %v1297 = vmul.f32 %v1289, 0.99
      %v1298 = vmul.f32 %v1290, 0.99
      %v1299 = vmul.f32 %v1291, 0.99
      %v1300 = vmul.f32 %v1292, 0.99
      %v1301 = vmul.f32 %v1293, 0.99
      %v1302 = vmul.f32 %v1294, 0.99
      %v1303 = vadd.f32 %v1295, %v1249
      %v1304 = vadd.f32 %v1296, %v1254
      %v1305 = vadd.f32 %v1297, %v1259
      %v1306 = vadd.f32 %v1298, %v1264
      %v1307 = vadd.f32 %v1299, %v1269
      %v1308 = vadd.f32 %v1300, %v1274
      %v1309 = vadd.f32 %v1301, %v1279
      %v1310 = vadd.f32 %v1302, %v1284
      %vm1311 = vcmp.ge.f32.partialorder %v1303, 1.0
      %vm1312 = vcmp.ge.f32.partialorder %v1304, 1.0
      %vm1313 = vcmp.ge.f32.partialorder %v1305, 1.0
      %vm1314 = vcmp.ge.f32.partialorder %v1306, 1.0
      %vm1315 = vcmp.ge.f32.partialorder %v1307, 1.0
      %vm1316 = vcmp.ge.f32.partialorder %v1308, 1.0
      %vm1317 = vcmp.ge.f32.partialorder %v1309, 1.0
      %vm1318 = vcmp.ge.f32.partialorder %v1310, 1.0
      %v1319 = vsel %vm1311, 1, 0
      %v1320 = vsel %vm1312, 1, 0
      %v1321 = vsel %vm1313, 1, 0
      %v1322 = vsel %vm1314, 1, 0
      %v1323 = vsel %vm1315, 1, 0
      %v1324 = vsel %vm1316, 1, 0
      %v1325 = vsel %vm1317, 1, 0
      %v1326 = vsel %vm1318, 1, 0
      %v1327 = vcvt.s32.f32 %v1319
      %v1328 = vcvt.s32.f32 %v1320
      %v1329 = vcvt.s32.f32 %v1321
      %v1330 = vcvt.s32.f32 %v1322
      %v1331 = vcvt.s32.f32 %v1323
      %v1332 = vcvt.s32.f32 %v1324
      %v1333 = vcvt.s32.f32 %v1325
      %v1334 = vcvt.s32.f32 %v1326
      %v1335 = vsub.f32 %v1303, %v1327
      %v1336 = vsub.f32 %v1304, %v1328
      %v1337 = vsub.f32 %v1305, %v1329
      %v1338 = vsub.f32 %v1306, %v1330
      %v1339 = vsub.f32 %v1307, %v1331
      %v1340 = vsub.f32 %v1308, %v1332
      %v1341 = vsub.f32 %v1309, %v1333
      %v1342 = vsub.f32 %v1310, %v1334
      %1343 = vst.msk [vmem:[#allocation2] sm:$0xff] %vm699, %v1335
      %1344 = vst.msk [vmem:[#allocation2 + $0x8] sm:$0xff] %vm699, %v1336
      %1345 = vst.msk [vmem:[#allocation2 + $0x10] sm:$0xff] %vm699, %v1337
      %1346 = vst.msk [vmem:[#allocation2 + $0x18] sm:$0xff] %vm699, %v1338
      %1347 = vst.msk [vmem:[#allocation2 + $0x20] sm:$0xff] %vm699, %v1339
      %1348 = vst.msk [vmem:[#allocation2 + $0x28] sm:$0xff] %vm699, %v1340
      %1349 = vst.msk [vmem:[#allocation2 + $0x30] sm:$0xff] %vm699, %v1341
      %1350 = vst.msk [vmem:[#allocation2 + $0x38] sm:$0xff] %vm699, %v1342
      %v1359 = vrot.slane %v1327, 7
      %v1360 = vrot.slane %v1328, 7
      %v1361 = vsel %vm417, %v1359, %v1360
      %v1362 = vrot.slane %v1329, 7
      %v1363 = vsel %vm417, %v1360, %v1362
      %v1364 = vrot.slane %v1330, 7
      %v1365 = vsel %vm417, %v1362, %v1364
      %v1366 = vrot.slane %v1331, 7
      %v1367 = vsel %vm417, %v1364, %v1366
      %v1368 = vrot.slane %v1332, 7
      %v1369 = vsel %vm417, %v1366, %v1368
      %v1370 = vrot.slane %v1333, 7
      %v1371 = vsel %vm417, %v1368, %v1370
      %v1372 = vrot.slane %v1334, 7
      %v1373 = vsel %vm417, %v1370, %v1372
      %v1382 = vsel %vm417, 0.0, %v1359
      %v1383 = vmul.f32 %v1382, %v339
      %v1384 = vmul.f32 %v1361, %v340
      %v1385 = vmul.f32 %v1363, %v341
      %v1386 = vmul.f32 %v1365, %v342
      %v1387 = vmul.f32 %v1367, %v343
      %v1388 = vmul.f32 %v1369, %v344
      %v1389 = vmul.f32 %v1371, %v345
      %v1390 = vmul.f32 %v1373, %v346
      %v1391 = vmul.f32 %v1382, %v340
      %v1392 = vmul.f32 %v1361, %v341
      %v1393 = vmul.f32 %v1363, %v342
      %v1394 = vmul.f32 %v1365, %v343
      %v1395 = vmul.f32 %v1367, %v344
      %v1396 = vmul.f32 %v1369, %v345
      %v1397 = vmul.f32 %v1371, %v346
      %1406 = vrot.lane.b32.xlu0 %v1383, 32
      %v1407 = vpop.permute.xlu0 %1406
      %1408 = vrot.lane.b32.xlu0 %v1384, 32
      %v1409 = vpop.permute.xlu0 %1408
      %1410 = vrot.lane.b32.xlu0 %v1385, 32
      %v1411 = vpop.permute.xlu0 %1410
      %1412 = vrot.lane.b32.xlu0 %v1386, 32
      %v1413 = vpop.permute.xlu0 %1412
      %1414 = vrot.lane.b32.xlu0 %v1387, 32
      %v1415 = vpop.permute.xlu0 %1414
      %1416 = vrot.lane.b32.xlu0 %v1388, 32
      %v1417 = vpop.permute.xlu0 %1416
      %1418 = vrot.lane.b32.xlu0 %v1389, 32
      %v1419 = vpop.permute.xlu0 %1418
      %1420 = vrot.lane.b32.xlu0 %v1390, 32
      %v1421 = vpop.permute.xlu0 %1420
      %1430 = vrot.lane.b32.xlu0 0.0, 64
      %v1431 = vpop.permute.xlu0 %1430
      %1432 = vrot.lane.b32.xlu0 %v1327, 64
      %v1433 = vpop.permute.xlu0 %1432
      %1434 = vrot.lane.b32.xlu0 %v1328, 64
      %v1435 = vpop.permute.xlu0 %1434
      %1436 = vrot.lane.b32.xlu0 %v1329, 64
      %v1437 = vpop.permute.xlu0 %1436
      %1438 = vrot.lane.b32.xlu0 %v1330, 64
      %v1439 = vpop.permute.xlu0 %1438
      %1440 = vrot.lane.b32.xlu0 %v1331, 64
      %v1441 = vpop.permute.xlu0 %1440
      %1442 = vrot.lane.b32.xlu0 %v1332, 64
      %v1443 = vpop.permute.xlu0 %1442
      %1444 = vrot.lane.b32.xlu0 %v1333, 64
      %v1445 = vpop.permute.xlu0 %1444
      %1461 = vrot.lane.b32.xlu0 %v481, 96
      %v1462 = vpop.permute.xlu0 %1461
      %1463 = vrot.lane.b32.xlu0 %v1391, 96
      %v1464 = vpop.permute.xlu0 %1463
      %1465 = vrot.lane.b32.xlu0 %v1392, 96
      %v1466 = vpop.permute.xlu0 %1465
      %1467 = vrot.lane.b32.xlu0 %v1393, 96
      %v1468 = vpop.permute.xlu0 %1467
      %1469 = vrot.lane.b32.xlu0 %v1394, 96
      %v1470 = vpop.permute.xlu0 %1469
      %1471 = vrot.lane.b32.xlu0 %v1395, 96
      %v1472 = vpop.permute.xlu0 %1471
      %1473 = vrot.lane.b32.xlu0 %v1396, 96
      %v1474 = vpop.permute.xlu0 %1473
      %1475 = vrot.lane.b32.xlu0 %v1397, 96
      %v1476 = vpop.permute.xlu0 %1475
      %v1485 = vsel %vm699, %v1327, %v1407
      %v1486 = vsel %vm699, %v1328, %v1409
      %v1487 = vsel %vm699, %v1329, %v1411
      %v1488 = vsel %vm699, %v1330, %v1413
      %v1489 = vsel %vm699, %v1331, %v1415
      %v1490 = vsel %vm699, %v1332, %v1417
      %v1491 = vsel %vm699, %v1333, %v1419
      %v1492 = vsel %vm699, %v1334, %v1421
      %v1493 = vsel %vm717, %v1485, %v1431
      %v1494 = vsel %vm717, %v1486, %v1433
      %v1495 = vsel %vm717, %v1487, %v1435
      %v1496 = vsel %vm717, %v1488, %v1437
      %v1497 = vsel %vm717, %v1489, %v1439
      %v1498 = vsel %vm717, %v1490, %v1441
      %v1499 = vsel %vm717, %v1491, %v1443
      %v1500 = vsel %vm717, %v1492, %v1445
      %v1501 = vsel %vm735, %v1493, %v1462
      %v1502 = vsel %vm735, %v1494, %v1464
      %v1503 = vsel %vm735, %v1495, %v1466
      %v1504 = vsel %vm735, %v1496, %v1468
      %v1505 = vsel %vm735, %v1497, %v1470
      %v1506 = vsel %vm735, %v1498, %v1472
      %v1507 = vsel %vm735, %v1499, %v1474
      %v1508 = vsel %vm735, %v1500, %v1476
      %v1510 = vlaneseq
      %v1511 = vshrl.u32 %v1510, 7
      %v1512 = vsub.s32 0, %v1511
      %v1513 = vrot.slane %v931, %v1512
      %1515 = vmatprep.subr.mxu0 0.0
      %1516 = vmatpush1.msra.mxu0 %v915
      %1517 = vmatprep.subr.mxu0 0.0
      %1518 = vmatpush1.msra.mxu0 %v916
      %1519 = vmatprep.subr.mxu0 0.0
      %1520 = vmatpush1.msra.mxu0 %v917
      %1521 = vmatprep.subr.mxu0 0.0
      %1522 = vmatpush1.msra.mxu0 %v918
      %1523 = vmatprep.subr.mxu0 0.0
      %1524 = vmatpush1.msra.mxu0 %v919
      %1525 = vmatprep.subr.mxu0 0.0
      %1526 = vmatpush1.msra.mxu0 %v920
      %1527 = vmatprep.subr.mxu0 0.0
      %1528 = vmatpush1.msra.mxu0 %v921
      %1529 = vmatprep.subr.mxu0 0.0
      %1530 = vmatpush1.msra.mxu0 %v922
      %1531 = vmatprep.subr.mxu0 0.0
      %1532 = vmatpush1.msra.mxu0 %v923
      %1533 = vmatprep.subr.mxu0 0.0
      %1534 = vmatpush1.msra.mxu0 %v924
      %1535 = vmatprep.subr.mxu0 0.0
      %1536 = vmatpush1.msra.mxu0 %v925
      %1537 = vmatprep.subr.mxu0 0.0
      %1538 = vmatpush1.msra.mxu0 %v926
      %1539 = vmatprep.subr.mxu0 0.0
      %1540 = vmatpush1.msra.mxu0 %v927
      %1541 = vmatprep.subr.mxu0 0.0
      %1542 = vmatpush1.msra.mxu0 %v928
      %1543 = vmatprep.subr.mxu0 0.0
      %1544 = vmatpush1.msra.mxu0 %v929
      %1545 = vmatprep.subr.mxu0 0.0
      %1546 = vmatpush1.msra.mxu0 %v930
      %1547 = vmatprep.subr.mxu0 0.0
      %1548 = vmatpush1.msra.mxu0 0.0
      %1549 = vmatprep.subr.mxu0 0.0
      %1550 = vmatpush1.msra.mxu0 0.0
      %1551 = vmatprep.subr.mxu0 0.0
      %1552 = vmatpush1.msra.mxu0 0.0
      %1553 = vmatprep.subr.mxu0 0.0
      %1554 = vmatpush1.msra.mxu0 0.0
      %1555 = vmatprep.subr.mxu0 0.0
      %1556 = vmatpush1.msra.mxu0 0.0
      %1557 = vmatprep.subr.mxu0 0.0
      %1558 = vmatpush1.msra.mxu0 0.0
      %1559 = vmatprep.subr.mxu0 0.0
      %1560 = vmatpush1.msra.mxu0 0.0
      %1561 = vmatprep.subr.mxu0 0.0
      %1562 = vmatpush1.msra.mxu0 0.0
      %1563 = vmatprep.subr.mxu0 0.0
      %1564 = vmatpush1.msra.mxu0 0.0
      %1565 = vmatprep.subr.mxu0 0.0
      %1566 = vmatpush1.msra.mxu0 0.0
      %1567 = vmatprep.subr.mxu0 0.0
      %1568 = vmatpush1.msra.mxu0 0.0
      %1569 = vmatprep.subr.mxu0 0.0
      %1570 = vmatpush1.msra.mxu0 0.0
      %1571 = vmatprep.subr.mxu0 0.0
      %1572 = vmatpush1.msra.mxu0 0.0
      %1573 = vmatprep.subr.mxu0 0.0
      %1574 = vmatpush1.msra.mxu0 0.0
      %1575 = vmatprep.subr.mxu0 0.0
      %1576 = vmatpush1.msra.mxu0 0.0
      %1577 = vmatprep.subr.mxu0 0.0
      %1578 = vmatpush1.msra.mxu0 0.0
      %1579 = vmatprep.mubr.f32.mxu0 0.0
      %1580 = vmatmul.mubr.f32.gmra.mrb[0].mxu0 %v1501
      %v1581 = vpop.f32.mrb[0].mxu0
      %v1582 = vadd.f32 %v1513, %v1581
      %v1583 = vpop.f32.mrb[0].mxu0
      %1584 = vmatprep.mubr.f32.mxu0 0.0
      %1585 = vmatmul.mubr.f32.gmra.mrb[0].mxu0 %v1502
      %v1586 = vpop.f32.mrb[0].mxu0
      %v1587 = vadd.f32 %v1513, %v1586
      %v1588 = vpop.f32.mrb[0].mxu0
      %1589 = vmatprep.mubr.f32.mxu0 0.0
      %1590 = vmatmul.mubr.f32.gmra.mrb[0].mxu0 %v1503
      %v1591 = vpop.f32.mrb[0].mxu0
      %v1592 = vadd.f32 %v1513, %v1591
      %v1593 = vpop.f32.mrb[0].mxu0
      %1594 = vmatprep.mubr.f32.mxu0 0.0
      %1595 = vmatmul.mubr.f32.gmra.mrb[0].mxu0 %v1504
      %v1596 = vpop.f32.mrb[0].mxu0
      %v1597 = vadd.f32 %v1513, %v1596
      %v1598 = vpop.f32.mrb[0].mxu0
      %1599 = vmatprep.mubr.f32.mxu0 0.0
      %1600 = vmatmul.mubr.f32.gmra.mrb[0].mxu0 %v1505
      %v1601 = vpop.f32.mrb[0].mxu0
      %v1602 = vadd.f32 %v1513, %v1601
      %v1603 = vpop.f32.mrb[0].mxu0
      %1604 = vmatprep.mubr.f32.mxu0 0.0
      %1605 = vmatmul.mubr.f32.gmra.mrb[0].mxu0 %v1506
      %v1606 = vpop.f32.mrb[0].mxu0
      %v1607 = vadd.f32 %v1513, %v1606
      %v1608 = vpop.f32.mrb[0].mxu0
      %1609 = vmatprep.mubr.f32.mxu0 0.0
      %1610 = vmatmul.mubr.f32.gmra.mrb[0].mxu0 %v1507
      %v1611 = vpop.f32.mrb[0].mxu0
      %v1612 = vadd.f32 %v1513, %v1611
      %v1613 = vpop.f32.mrb[0].mxu0
      %1614 = vmatprep.mubr.f32.mxu0 0.0
      %1615 = vmatmul.mubr.f32.gmra.mrb[0].mxu0 %v1508
      %v1616 = vpop.f32.mrb[0].mxu0
      %v1617 = vadd.f32 %v1513, %v1616
      %v1618 = vpop.f32.mrb[0].mxu0
      %1619 = vdwg.mxu0
      %v1620 = vld [vmem:[#allocation3] sm:$0xff]
      %v1621 = vld [vmem:[#allocation3 + $0x8] sm:$0xff]
      %v1622 = vld [vmem:[#allocation3 + $0x10] sm:$0xff]
      %v1623 = vld [vmem:[#allocation3 + $0x18] sm:$0xff]
      %v1624 = vld [vmem:[#allocation3 + $0x20] sm:$0xff]
      %v1625 = vld [vmem:[#allocation3 + $0x28] sm:$0xff]
      %v1626 = vld [vmem:[#allocation3 + $0x30] sm:$0xff]
      %v1627 = vld [vmem:[#allocation3 + $0x38] sm:$0xff]
      %v1628 = vmul.f32 %v1620, 0.99
      %v1629 = vmul.f32 %v1621, 0.99
      %v1630 = vmul.f32 %v1622, 0.99
      %v1631 = vmul.f32 %v1623, 0.99
      %v1632 = vmul.f32 %v1624, 0.99
      %v1633 = vmul.f32 %v1625, 0.99
      %v1634 = vmul.f32 %v1626, 0.99
      %v1635 = vmul.f32 %v1627, 0.99
      %v1636 = vadd.f32 %v1628, %v1582
      %v1637 = vadd.f32 %v1629, %v1587
      %v1638 = vadd.f32 %v1630, %v1592
      %v1639 = vadd.f32 %v1631, %v1597
      %v1640 = vadd.f32 %v1632, %v1602
      %v1641 = vadd.f32 %v1633, %v1607
      %v1642 = vadd.f32 %v1634, %v1612
      %v1643 = vadd.f32 %v1635, %v1617
      %vm1644 = vcmp.ge.f32.partialorder %v1636, 1.0
      %vm1645 = vcmp.ge.f32.partialorder %v1637, 1.0
      %vm1646 = vcmp.ge.f32.partialorder %v1638, 1.0
      %vm1647 = vcmp.ge.f32.partialorder %v1639, 1.0
      %vm1648 = vcmp.ge.f32.partialorder %v1640, 1.0
      %vm1649 = vcmp.ge.f32.partialorder %v1641, 1.0
      %vm1650 = vcmp.ge.f32.partialorder %v1642, 1.0
      %vm1651 = vcmp.ge.f32.partialorder %v1643, 1.0
      %v1652 = vsel %vm1644, 1, 0
      %v1653 = vsel %vm1645, 1, 0
      %v1654 = vsel %vm1646, 1, 0
      %v1655 = vsel %vm1647, 1, 0
      %v1656 = vsel %vm1648, 1, 0
      %v1657 = vsel %vm1649, 1, 0
      %v1658 = vsel %vm1650, 1, 0
      %v1659 = vsel %vm1651, 1, 0
      %v1660 = vcvt.s32.f32 %v1652
      %v1661 = vcvt.s32.f32 %v1653
      %v1662 = vcvt.s32.f32 %v1654
      %v1663 = vcvt.s32.f32 %v1655
      %v1664 = vcvt.s32.f32 %v1656
      %v1665 = vcvt.s32.f32 %v1657
      %v1666 = vcvt.s32.f32 %v1658
      %v1667 = vcvt.s32.f32 %v1659
      %v1668 = vsub.f32 %v1636, %v1660
      %v1669 = vsub.f32 %v1637, %v1661
      %v1670 = vsub.f32 %v1638, %v1662
      %v1671 = vsub.f32 %v1639, %v1663
      %v1672 = vsub.f32 %v1640, %v1664
      %v1673 = vsub.f32 %v1641, %v1665
      %v1674 = vsub.f32 %v1642, %v1666
      %v1675 = vsub.f32 %v1643, %v1667
      %1676 = vst.msk [vmem:[#allocation3] sm:$0xff] %vm690, %v1668
      %1677 = vst.msk [vmem:[#allocation3 + $0x8] sm:$0xff] %vm690, %v1669
      %1678 = vst.msk [vmem:[#allocation3 + $0x10] sm:$0xff] %vm690, %v1670
      %1679 = vst.msk [vmem:[#allocation3 + $0x18] sm:$0xff] %vm690, %v1671
      %1680 = vst.msk [vmem:[#allocation3 + $0x20] sm:$0xff] %vm690, %v1672
      %1681 = vst.msk [vmem:[#allocation3 + $0x28] sm:$0xff] %vm690, %v1673
      %1682 = vst.msk [vmem:[#allocation3 + $0x30] sm:$0xff] %vm690, %v1674
      %1683 = vst.msk [vmem:[#allocation3 + $0x38] sm:$0xff] %vm690, %v1675
      %v1691 = vrot.slane %v1660, 7
      %v1692 = vrot.slane %v1661, 7
      %v1693 = vsel %vm417, %v1691, %v1692
      %v1694 = vrot.slane %v1662, 7
      %v1695 = vsel %vm417, %v1692, %v1694
      %v1696 = vrot.slane %v1663, 7
      %v1697 = vsel %vm417, %v1694, %v1696
      %v1698 = vrot.slane %v1664, 7
      %v1699 = vsel %vm417, %v1696, %v1698
      %v1700 = vrot.slane %v1665, 7
      %v1701 = vsel %vm417, %v1698, %v1700
      %v1702 = vrot.slane %v1666, 7
      %v1703 = vsel %vm417, %v1700, %v1702
      %v1711 = vsel %vm417, 0.0, %v1691
      %v1712 = vmul.f32 %v1711, %v340
      %v1713 = vmul.f32 %v1693, %v341
      %v1714 = vmul.f32 %v1695, %v342
      %v1715 = vmul.f32 %v1697, %v343
      %v1716 = vmul.f32 %v1699, %v344
      %v1717 = vmul.f32 %v1701, %v345
      %v1718 = vmul.f32 %v1703, %v346
      %v1720 = vrot.slane %v1660, 1
      %v1721 = vrot.slane %v1661, 1
      %v1722 = vsel %vm386, %v1720, %v1721
      %v1723 = vrot.slane %v1662, 1
      %v1724 = vsel %vm386, %v1721, %v1723
      %v1725 = vrot.slane %v1663, 1
      %v1726 = vsel %vm386, %v1723, %v1725
      %v1727 = vrot.slane %v1664, 1
      %v1728 = vsel %vm386, %v1725, %v1727
      %v1729 = vrot.slane %v1665, 1
      %v1730 = vsel %vm386, %v1727, %v1729
      %v1731 = vrot.slane %v1666, 1
      %v1732 = vsel %vm386, %v1729, %v1731
      %v1733 = vrot.slane %v1667, 1
      %v1734 = vsel %vm386, %v1731, %v1733
      %v1743 = vsel %vm386, 0.0, %v1720
      %v1744 = vmul.f32 %v1743, %v363
      %v1745 = vmul.f32 %v1722, %v364
      %v1746 = vmul.f32 %v1724, %v365
      %v1747 = vmul.f32 %v1726, %v366
      %v1748 = vmul.f32 %v1728, %v367
      %v1749 = vmul.f32 %v1730, %v368
      %v1750 = vmul.f32 %v1732, %v369
      %v1751 = vmul.f32 %v1734, %v370
      %v1752 = vrot.slane %v1667, 7
      %v1753 = vsel %vm417, %v1702, %v1752
      %v1755 = vmul.f32 %v1711, %v339
      %v1756 = vmul.f32 %v1693, %v340
      %v1757 = vmul.f32 %v1695, %v341
      %v1758 = vmul.f32 %v1697, %v342
      %v1759 = vmul.f32 %v1699, %v343
      %v1760 = vmul.f32 %v1701, %v344
      %v1761 = vmul.f32 %v1703, %v345
      %v1762 = vmul.f32 %v1753, %v346
      %v1764 = vsel %vm386, %v1733, 0.0
      %v1765 = vmul.f32 %v1722, %v363
      %v1766 = vmul.f32 %v1724, %v364
      %v1767 = vmul.f32 %v1726, %v365
      %v1768 = vmul.f32 %v1728, %v366
      %v1769 = vmul.f32 %v1730, %v367
      %v1770 = vmul.f32 %v1732, %v368
      %v1771 = vmul.f32 %v1734, %v369
      %v1772 = vmul.f32 %v1764, %v370
      %v1774 = vsel %vm417, %v1752, 0.0
      %v1775 = vmul.f32 %v1693, %v339
      %v1776 = vmul.f32 %v1695, %v340
      %v1777 = vmul.f32 %v1697, %v341
      %v1778 = vmul.f32 %v1699, %v342
      %v1779 = vmul.f32 %v1701, %v343
      %v1780 = vmul.f32 %v1703, %v344
      %v1781 = vmul.f32 %v1753, %v345
      %v1782 = vmul.f32 %v1774, %v346
      %v1783 = vmul.f32 %v1724, %v363
      %v1784 = vmul.f32 %v1726, %v364
      %v1785 = vmul.f32 %v1728, %v365
      %v1786 = vmul.f32 %v1730, %v366
      %v1787 = vmul.f32 %v1732, %v367
      %v1788 = vmul.f32 %v1734, %v368
      %v1789 = vmul.f32 %v1764, %v369
      %1790 = vrot.lane.b32.xlu0 %v1660, 16
      %v1791 = vpop.permute.xlu0 %1790
      %1792 = vrot.lane.b32.xlu0 %v1661, 16
      %v1793 = vpop.permute.xlu0 %1792
      %1794 = vrot.lane.b32.xlu0 %v1662, 16
      %v1795 = vpop.permute.xlu0 %1794
      %1796 = vrot.lane.b32.xlu0 %v1663, 16
      %v1797 = vpop.permute.xlu0 %1796
      %1798 = vrot.lane.b32.xlu0 %v1664, 16
      %v1799 = vpop.permute.xlu0 %1798
      %1800 = vrot.lane.b32.xlu0 %v1665, 16
      %v1801 = vpop.permute.xlu0 %1800
      %1802 = vrot.lane.b32.xlu0 %v1666, 16
      %v1803 = vpop.permute.xlu0 %1802
      %1819 = vrot.lane.b32.xlu0 %v1744, 32
      %v1820 = vpop.permute.xlu0 %1819
      %1821 = vrot.lane.b32.xlu0 %v1745, 32
      %v1822 = vpop.permute.xlu0 %1821
      %1823 = vrot.lane.b32.xlu0 %v1746, 32
      %v1824 = vpop.permute.xlu0 %1823
      %1825 = vrot.lane.b32.xlu0 %v1747, 32
      %v1826 = vpop.permute.xlu0 %1825
      %1827 = vrot.lane.b32.xlu0 %v1748, 32
      %v1828 = vpop.permute.xlu0 %1827
      %1829 = vrot.lane.b32.xlu0 %v1749, 32
      %v1830 = vpop.permute.xlu0 %1829
      %1831 = vrot.lane.b32.xlu0 %v1750, 32
      %v1832 = vpop.permute.xlu0 %1831
      %1833 = vrot.lane.b32.xlu0 %v1751, 32
      %v1834 = vpop.permute.xlu0 %1833
      %1851 = vrot.lane.b32.xlu0 %v1755, 48
      %v1852 = vpop.permute.xlu0 %1851
      %1853 = vrot.lane.b32.xlu0 %v1756, 48
      %v1854 = vpop.permute.xlu0 %1853
      %1855 = vrot.lane.b32.xlu0 %v1757, 48
      %v1856 = vpop.permute.xlu0 %1855
      %1857 = vrot.lane.b32.xlu0 %v1758, 48
      %v1858 = vpop.permute.xlu0 %1857
      %1859 = vrot.lane.b32.xlu0 %v1759, 48
      %v1860 = vpop.permute.xlu0 %1859
      %1861 = vrot.lane.b32.xlu0 %v1760, 48
      %v1862 = vpop.permute.xlu0 %1861
      %1863 = vrot.lane.b32.xlu0 %v1761, 48
      %v1864 = vpop.permute.xlu0 %1863
      %1865 = vrot.lane.b32.xlu0 %v1762, 48
      %v1866 = vpop.permute.xlu0 %1865
      %1875 = vrot.lane.b32.xlu0 %v1660, 64
      %v1876 = vpop.permute.xlu0 %1875
      %1877 = vrot.lane.b32.xlu0 %v1661, 64
      %v1878 = vpop.permute.xlu0 %1877
      %1879 = vrot.lane.b32.xlu0 %v1662, 64
      %v1880 = vpop.permute.xlu0 %1879
      %1881 = vrot.lane.b32.xlu0 %v1663, 64
      %v1882 = vpop.permute.xlu0 %1881
      %1883 = vrot.lane.b32.xlu0 %v1664, 64
      %v1884 = vpop.permute.xlu0 %1883
      %1885 = vrot.lane.b32.xlu0 %v1665, 64
      %v1886 = vpop.permute.xlu0 %1885
      %1887 = vrot.lane.b32.xlu0 %v1666, 64
      %v1888 = vpop.permute.xlu0 %1887
      %1889 = vrot.lane.b32.xlu0 %v1667, 64
      %v1890 = vpop.permute.xlu0 %1889
      %1907 = vrot.lane.b32.xlu0 %v1765, 80
      %v1908 = vpop.permute.xlu0 %1907
      %1909 = vrot.lane.b32.xlu0 %v1766, 80
      %v1910 = vpop.permute.xlu0 %1909
      %1911 = vrot.lane.b32.xlu0 %v1767, 80
      %v1912 = vpop.permute.xlu0 %1911
      %1913 = vrot.lane.b32.xlu0 %v1768, 80
      %v1914 = vpop.permute.xlu0 %1913
      %1915 = vrot.lane.b32.xlu0 %v1769, 80
      %v1916 = vpop.permute.xlu0 %1915
      %1917 = vrot.lane.b32.xlu0 %v1770, 80
      %v1918 = vpop.permute.xlu0 %1917
      %1919 = vrot.lane.b32.xlu0 %v1771, 80
      %v1920 = vpop.permute.xlu0 %1919
      %1921 = vrot.lane.b32.xlu0 %v1772, 80
      %v1922 = vpop.permute.xlu0 %1921
      %1939 = vrot.lane.b32.xlu0 %v1775, 96
      %v1940 = vpop.permute.xlu0 %1939
      %1941 = vrot.lane.b32.xlu0 %v1776, 96
      %v1942 = vpop.permute.xlu0 %1941
      %1943 = vrot.lane.b32.xlu0 %v1777, 96
      %v1944 = vpop.permute.xlu0 %1943
      %1945 = vrot.lane.b32.xlu0 %v1778, 96
      %v1946 = vpop.permute.xlu0 %1945
      %1947 = vrot.lane.b32.xlu0 %v1779, 96
      %v1948 = vpop.permute.xlu0 %1947
      %1949 = vrot.lane.b32.xlu0 %v1780, 96
      %v1950 = vpop.permute.xlu0 %1949
      %1951 = vrot.lane.b32.xlu0 %v1781, 96
      %v1952 = vpop.permute.xlu0 %1951
      %1953 = vrot.lane.b32.xlu0 %v1782, 96
      %v1954 = vpop.permute.xlu0 %1953
      %1963 = vrot.lane.b32.xlu0 %v1661, 112
      %v1964 = vpop.permute.xlu0 %1963
      %1965 = vrot.lane.b32.xlu0 %v1662, 112
      %v1966 = vpop.permute.xlu0 %1965
      %1967 = vrot.lane.b32.xlu0 %v1663, 112
      %v1968 = vpop.permute.xlu0 %1967
      %1969 = vrot.lane.b32.xlu0 %v1664, 112
      %v1970 = vpop.permute.xlu0 %1969
      %1971 = vrot.lane.b32.xlu0 %v1665, 112
      %v1972 = vpop.permute.xlu0 %1971
      %1973 = vrot.lane.b32.xlu0 %v1666, 112
      %v1974 = vpop.permute.xlu0 %1973
      %1975 = vrot.lane.b32.xlu0 %v1667, 112
      %v1976 = vpop.permute.xlu0 %1975
      %v1984 = vsel %vm690, %v481, %v505
      %v1985 = vsel %vm690, %v1712, %v1791
      %v1986 = vsel %vm690, %v1713, %v1793
      %v1987 = vsel %vm690, %v1714, %v1795
      %v1988 = vsel %vm690, %v1715, %v1797
      %v1989 = vsel %vm690, %v1716, %v1799
      %v1990 = vsel %vm690, %v1717, %v1801
      %v1991 = vsel %vm690, %v1718, %v1803
      %v1992 = vsel %vm699, %v1984, %v1820
      %v1993 = vsel %vm699, %v1985, %v1822
      %v1994 = vsel %vm699, %v1986, %v1824
      %v1995 = vsel %vm699, %v1987, %v1826
      %v1996 = vsel %vm699, %v1988, %v1828
      %v1997 = vsel %vm699, %v1989, %v1830
      %v1998 = vsel %vm699, %v1990, %v1832
      %v1999 = vsel %vm699, %v1991, %v1834
      %v2000 = vsel %vm708, %v1992, %v1852
      %v2001 = vsel %vm708, %v1993, %v1854
      %v2002 = vsel %vm708, %v1994, %v1856
      %v2003 = vsel %vm708, %v1995, %v1858
      %v2004 = vsel %vm708, %v1996, %v1860
      %v2005 = vsel %vm708, %v1997, %v1862
      %v2006 = vsel %vm708, %v1998, %v1864
      %v2007 = vsel %vm708, %v1999, %v1866
      %v2008 = vsel %vm717, %v2000, %v1876
      %v2009 = vsel %vm717, %v2001, %v1878
      %v2010 = vsel %vm717, %v2002, %v1880
      %v2011 = vsel %vm717, %v2003, %v1882
      %v2012 = vsel %vm717, %v2004, %v1884
      %v2013 = vsel %vm717, %v2005, %v1886
      %v2014 = vsel %vm717, %v2006, %v1888
      %v2015 = vsel %vm717, %v2007, %v1890
      %v2016 = vsel %vm726, %v2008, %v1908
      %v2017 = vsel %vm726, %v2009, %v1910
      %v2018 = vsel %vm726, %v2010, %v1912
      %v2019 = vsel %vm726, %v2011, %v1914
      %v2020 = vsel %vm726, %v2012, %v1916
      %v2021 = vsel %vm726, %v2013, %v1918
      %v2022 = vsel %vm726, %v2014, %v1920
      %v2023 = vsel %vm726, %v2015, %v1922
      %v2024 = vsel %vm735, %v2016, %v1940
      %v2025 = vsel %vm735, %v2017, %v1942
      %v2026 = vsel %vm735, %v2018, %v1944
      %v2027 = vsel %vm735, %v2019, %v1946
      %v2028 = vsel %vm735, %v2020, %v1948
      %v2029 = vsel %vm735, %v2021, %v1950
      %v2030 = vsel %vm735, %v2022, %v1952
      %v2031 = vsel %vm735, %v2023, %v1954
      %v2032 = vsel %vm744, %v2024, %v1964
      %v2033 = vsel %vm744, %v2025, %v1966
      %v2034 = vsel %vm744, %v2026, %v1968
      %v2035 = vsel %vm744, %v2027, %v1970
      %v2036 = vsel %vm744, %v2028, %v1972
      %v2037 = vsel %vm744, %v2029, %v1974
      %v2038 = vsel %vm744, %v2030, %v1976
      %v2039 = vsel %vm744, %v2031, %v667
      %v2041 = vlaneseq
      %v2042 = vshrl.u32 %v2041, 7
      %v2043 = vsub.s32 0, %v2042
      %v2044 = vrot.slane %v950, %v2043
      %v2047 = vsel %vm690, %v1783, 0
      %v2050 = vsel %vm690, %v1784, 0
      %v2053 = vsel %vm690, %v1785, 0
      %v2056 = vsel %vm690, %v1786, 0
      %v2059 = vsel %vm690, %v1787, 0
      %v2062 = vsel %vm690, %v1788, 0
      %v2065 = vsel %vm690, %v1789, 0
      %v2067 = vsel %vm690, %v415, 0
      %2069 = vmatprep.subr.mxu0 0.0
      %2070 = vmatpush1.msra.mxu0 %v932
      %2071 = vmatprep.subr.mxu0 0.0
      %2072 = vmatpush1.msra.mxu0 %v933
      %2073 = vmatprep.subr.mxu0 0.0
      %2074 = vmatpush1.msra.mxu0 %v934
      %2075 = vmatprep.subr.mxu0 0.0
      %2076 = vmatpush1.msra.mxu0 %v935
      %2077 = vmatprep.subr.mxu0 0.0
      %2078 = vmatpush1.msra.mxu0 %v936
      %2079 = vmatprep.subr.mxu0 0.0
      %2080 = vmatpush1.msra.mxu0 %v937
      %2081 = vmatprep.subr.mxu0 0.0
      %2082 = vmatpush1.msra.mxu0 %v938
      %2083 = vmatprep.subr.mxu0 0.0
      %2084 = vmatpush1.msra.mxu0 %v939
      %2085 = vmatprep.subr.mxu0 0.0
      %2086 = vmatpush1.msra.mxu0 %v940
      %2087 = vmatprep.subr.mxu0 0.0
      %2088 = vmatpush1.msra.mxu0 %v941
      %2089 = vmatprep.subr.mxu0 0.0
      %2090 = vmatpush1.msra.mxu0 %v942
      %2091 = vmatprep.subr.mxu0 0.0
      %2092 = vmatpush1.msra.mxu0 %v943
      %2093 = vmatprep.subr.mxu0 0.0
      %2094 = vmatpush1.msra.mxu0 %v944
      %2095 = vmatprep.subr.mxu0 0.0
      %2096 = vmatpush1.msra.mxu0 %v945
      %2097 = vmatprep.subr.mxu0 0.0
      %2098 = vmatpush1.msra.mxu0 %v946
      %2099 = vmatprep.subr.mxu0 0.0
      %2100 = vmatpush1.msra.mxu0 %v947
      %2101 = vmatprep.subr.mxu0 0.0
      %2102 = vmatpush1.msra.mxu0 %v948
      %2103 = vmatprep.subr.mxu0 0.0
      %2104 = vmatpush1.msra.mxu0 %v949
      %2105 = vmatprep.subr.mxu0 0.0
      %2106 = vmatpush1.msra.mxu0 0.0
      %2107 = vmatprep.subr.mxu0 0.0
      %2108 = vmatpush1.msra.mxu0 0.0
      %2109 = vmatprep.subr.mxu0 0.0
      %2110 = vmatpush1.msra.mxu0 0.0
      %2111 = vmatprep.subr.mxu0 0.0
      %2112 = vmatpush1.msra.mxu0 0.0
      %2113 = vmatprep.subr.mxu0 0.0
      %2114 = vmatpush1.msra.mxu0 0.0
      %2115 = vmatprep.subr.mxu0 0.0
      %2116 = vmatpush1.msra.mxu0 0.0
      %2117 = vmatprep.subr.mxu0 0.0
      %2118 = vmatpush1.msra.mxu0 0.0
      %2119 = vmatprep.subr.mxu0 0.0
      %2120 = vmatpush1.msra.mxu0 0.0
      %2121 = vmatprep.subr.mxu0 0.0
      %2122 = vmatpush1.msra.mxu0 0.0
      %2123 = vmatprep.subr.mxu0 0.0
      %2124 = vmatpush1.msra.mxu0 0.0
      %2125 = vmatprep.subr.mxu0 0.0
      %2126 = vmatpush1.msra.mxu0 0.0
      %2127 = vmatprep.subr.mxu0 0.0
      %2128 = vmatpush1.msra.mxu0 0.0
      %2129 = vmatprep.subr.mxu0 0.0
      %2130 = vmatpush1.msra.mxu0 0.0
      %2131 = vmatprep.subr.mxu0 0.0
      %2132 = vmatpush1.msra.mxu0 0.0
      %2133 = vmatprep.mubr.f32.mxu0 %v2047
      %2134 = vmatmul.mubr.f32.gmra.mrb[0].mxu0 %v2032
      %v2135 = vpop.f32.mrb[0].mxu0
      %v2136 = vadd.f32 %v2044, %v2135
      %v2137 = vpop.f32.mrb[0].mxu0
      %2138 = vmatprep.mubr.f32.mxu0 %v2050
      %2139 = vmatmul.mubr.f32.gmra.mrb[0].mxu0 %v2033
      %v2140 = vpop.f32.mrb[0].mxu0
      %v2141 = vadd.f32 %v2044, %v2140
      %v2142 = vpop.f32.mrb[0].mxu0
      %2143 = vmatprep.mubr.f32.mxu0 %v2053
      %2144 = vmatmul.mubr.f32.gmra.mrb[0].mxu0 %v2034
      %v2145 = vpop.f32.mrb[0].mxu0
      %v2146 = vadd.f32 %v2044, %v2145
      %v2147 = vpop.f32.mrb[0].mxu0
      %2148 = vmatprep.mubr.f32.mxu0 %v2056
      %2149 = vmatmul.mubr.f32.gmra.mrb[0].mxu0 %v2035
      %v2150 = vpop.f32.mrb[0].mxu0
      %v2151 = vadd.f32 %v2044, %v2150
      %v2152 = vpop.f32.mrb[0].mxu0
      %2153 = vmatprep.mubr.f32.mxu0 %v2059
      %2154 = vmatmul.mubr.f32.gmra.mrb[0].mxu0 %v2036
      %v2155 = vpop.f32.mrb[0].mxu0
      %v2156 = vadd.f32 %v2044, %v2155
      %v2157 = vpop.f32.mrb[0].mxu0
      %2158 = vmatprep.mubr.f32.mxu0 %v2062
      %2159 = vmatmul.mubr.f32.gmra.mrb[0].mxu0 %v2037
      %v2160 = vpop.f32.mrb[0].mxu0
      %v2161 = vadd.f32 %v2044, %v2160
      %v2162 = vpop.f32.mrb[0].mxu0
      %2163 = vmatprep.mubr.f32.mxu0 %v2065
      %2164 = vmatmul.mubr.f32.gmra.mrb[0].mxu0 %v2038
      %v2165 = vpop.f32.mrb[0].mxu0
      %v2166 = vadd.f32 %v2044, %v2165
      %v2167 = vpop.f32.mrb[0].mxu0
      %2168 = vmatprep.mubr.f32.mxu0 %v2067
      %2169 = vmatmul.mubr.f32.gmra.mrb[0].mxu0 %v2039
      %v2170 = vpop.f32.mrb[0].mxu0
      %v2171 = vadd.f32 %v2044, %v2170
      %v2172 = vpop.f32.mrb[0].mxu0
      %2173 = vdwg.mxu0
      %v2174 = vld [vmem:[#allocation4] sm:$0xff]
      %v2175 = vld [vmem:[#allocation4 + $0x8] sm:$0xff]
      %v2176 = vld [vmem:[#allocation4 + $0x10] sm:$0xff]
      %v2177 = vld [vmem:[#allocation4 + $0x18] sm:$0xff]
      %v2178 = vld [vmem:[#allocation4 + $0x20] sm:$0xff]
      %v2179 = vld [vmem:[#allocation4 + $0x28] sm:$0xff]
      %v2180 = vld [vmem:[#allocation4 + $0x30] sm:$0xff]
      %v2181 = vld [vmem:[#allocation4 + $0x38] sm:$0xff]
      %v2182 = vmul.f32 %v2174, 0.99
      %v2183 = vmul.f32 %v2175, 0.99
      %v2184 = vmul.f32 %v2176, 0.99
      %v2185 = vmul.f32 %v2177, 0.99
      %v2186 = vmul.f32 %v2178, 0.99
      %v2187 = vmul.f32 %v2179, 0.99
      %v2188 = vmul.f32 %v2180, 0.99
      %v2189 = vmul.f32 %v2181, 0.99
      %v2190 = vadd.f32 %v2182, %v2136
      %v2191 = vadd.f32 %v2183, %v2141
      %v2192 = vadd.f32 %v2184, %v2146
      %v2193 = vadd.f32 %v2185, %v2151
      %v2194 = vadd.f32 %v2186, %v2156
      %v2195 = vadd.f32 %v2187, %v2161
      %v2196 = vadd.f32 %v2188, %v2166
      %v2197 = vadd.f32 %v2189, %v2171
      %vm2198 = vcmp.ge.f32.partialorder %v2190, 1.0
      %vm2199 = vcmp.ge.f32.partialorder %v2191, 1.0
      %vm2200 = vcmp.ge.f32.partialorder %v2192, 1.0
      %vm2201 = vcmp.ge.f32.partialorder %v2193, 1.0
      %vm2202 = vcmp.ge.f32.partialorder %v2194, 1.0
      %vm2203 = vcmp.ge.f32.partialorder %v2195, 1.0
      %vm2204 = vcmp.ge.f32.partialorder %v2196, 1.0
      %vm2205 = vcmp.ge.f32.partialorder %v2197, 1.0
      %v2206 = vsel %vm2198, 1, 0
      %v2207 = vsel %vm2199, 1, 0
      %v2208 = vsel %vm2200, 1, 0
      %v2209 = vsel %vm2201, 1, 0
      %v2210 = vsel %vm2202, 1, 0
      %v2211 = vsel %vm2203, 1, 0
      %v2212 = vsel %vm2204, 1, 0
      %v2213 = vsel %vm2205, 1, 0
      %v2214 = vcvt.s32.f32 %v2206
      %v2215 = vcvt.s32.f32 %v2207
      %v2216 = vcvt.s32.f32 %v2208
      %v2217 = vcvt.s32.f32 %v2209
      %v2218 = vcvt.s32.f32 %v2210
      %v2219 = vcvt.s32.f32 %v2211
      %v2220 = vcvt.s32.f32 %v2212
      %v2221 = vcvt.s32.f32 %v2213
      %v2222 = vsub.f32 %v2190, %v2214
      %v2223 = vsub.f32 %v2191, %v2215
      %v2224 = vsub.f32 %v2192, %v2216
      %v2225 = vsub.f32 %v2193, %v2217
      %v2226 = vsub.f32 %v2194, %v2218
      %v2227 = vsub.f32 %v2195, %v2219
      %v2228 = vsub.f32 %v2196, %v2220
      %v2229 = vsub.f32 %v2197, %v2221
      %2230 = vst.msk [vmem:[#allocation4] sm:$0xff] %vm690, %v2222
      %2231 = vst.msk [vmem:[#allocation4 + $0x8] sm:$0xff] %vm690, %v2223
      %2232 = vst.msk [vmem:[#allocation4 + $0x10] sm:$0xff] %vm690, %v2224
      %2233 = vst.msk [vmem:[#allocation4 + $0x18] sm:$0xff] %vm690, %v2225
      %2234 = vst.msk [vmem:[#allocation4 + $0x20] sm:$0xff] %vm690, %v2226
      %2235 = vst.msk [vmem:[#allocation4 + $0x28] sm:$0xff] %vm690, %v2227
      %2236 = vst.msk [vmem:[#allocation4 + $0x30] sm:$0xff] %vm690, %v2228
      %2237 = vst.msk [vmem:[#allocation4 + $0x38] sm:$0xff] %vm690, %v2229
      %2238 = vst.msk [vmem:[#allocation5] sm:$0xff] %vm690, %v2214
      %2239 = vst.msk [vmem:[#allocation5 + $0x8] sm:$0xff] %vm690, %v2215
      %2240 = vst.msk [vmem:[#allocation5 + $0x10] sm:$0xff] %vm690, %v2216
      %2241 = vst.msk [vmem:[#allocation5 + $0x18] sm:$0xff] %vm690, %v2217
      %2242 = vst.msk [vmem:[#allocation5 + $0x20] sm:$0xff] %vm690, %v2218
      %2243 = vst.msk [vmem:[#allocation5 + $0x28] sm:$0xff] %vm690, %v2219
      %2244 = vst.msk [vmem:[#allocation5 + $0x30] sm:$0xff] %vm690, %v2220
      %2245 = vst.msk [vmem:[#allocation5 + $0x38] sm:$0xff] %vm690, %v2221
      %v2246 = vld [vmem:[#allocation6] sm:$0xff]
      %v2247 = vld [vmem:[#allocation6 + $0x8] sm:$0xff]
      %v2248 = vld [vmem:[#allocation6 + $0x10] sm:$0xff]
      %v2249 = vld [vmem:[#allocation6 + $0x18] sm:$0xff]
      %v2250 = vld [vmem:[#allocation6 + $0x20] sm:$0xff]
      %v2251 = vld [vmem:[#allocation6 + $0x28] sm:$0xff]
      %v2252 = vld [vmem:[#allocation6 + $0x30] sm:$0xff]
      %v2253 = vld [vmem:[#allocation6 + $0x38] sm:$0xff]
      %v2254 = vadd.f32 %v2246, %v2214
      %v2255 = vadd.f32 %v2247, %v2215
      %v2256 = vadd.f32 %v2248, %v2216
      %v2257 = vadd.f32 %v2249, %v2217
      %v2258 = vadd.f32 %v2250, %v2218
      %v2259 = vadd.f32 %v2251, %v2219
      %v2260 = vadd.f32 %v2252, %v2220
      %v2261 = vadd.f32 %v2253, %v2221
      %2262 = vst.msk [vmem:[#allocation6] sm:$0xff] %vm690, %v2254
      %2263 = vst.msk [vmem:[#allocation6 + $0x8] sm:$0xff] %vm690, %v2255
      %2264 = vst.msk [vmem:[#allocation6 + $0x10] sm:$0xff] %vm690, %v2256
      %2265 = vst.msk [vmem:[#allocation6 + $0x18] sm:$0xff] %vm690, %v2257
      %2266 = vst.msk [vmem:[#allocation6 + $0x20] sm:$0xff] %vm690, %v2258
      %2267 = vst.msk [vmem:[#allocation6 + $0x28] sm:$0xff] %vm690, %v2259
      %2268 = vst.msk [vmem:[#allocation6 + $0x30] sm:$0xff] %vm690, %v2260
      %2269 = vst.msk [vmem:[#allocation6 + $0x38] sm:$0xff] %vm690, %v2261
      %v2270 = vld [vmem:[#allocation5] sm:$0xff]
      %v2271 = vld [vmem:[#allocation5 + $0x8] sm:$0xff]
      %v2272 = vld [vmem:[#allocation5 + $0x10] sm:$0xff]
      %v2273 = vld [vmem:[#allocation5 + $0x18] sm:$0xff]
      %v2274 = vld [vmem:[#allocation5 + $0x20] sm:$0xff]
      %v2275 = vld [vmem:[#allocation5 + $0x28] sm:$0xff]
      %v2276 = vld [vmem:[#allocation5 + $0x30] sm:$0xff]
      %v2277 = vld [vmem:[#allocation5 + $0x38] sm:$0xff]
      %v2286 = vrot.slane %v2270, 1
      %v2287 = vrot.slane %v2271, 1
      %v2288 = vsel %vm386, %v2286, %v2287
      %v2289 = vrot.slane %v2272, 1
      %v2290 = vsel %vm386, %v2287, %v2289
      %v2291 = vrot.slane %v2273, 1
      %v2292 = vsel %vm386, %v2289, %v2291
      %v2293 = vrot.slane %v2274, 1
      %v2294 = vsel %vm386, %v2291, %v2293
      %v2295 = vrot.slane %v2275, 1
      %v2296 = vsel %vm386, %v2293, %v2295
      %v2297 = vrot.slane %v2276, 1
      %v2298 = vsel %vm386, %v2295, %v2297
      %v2299 = vrot.slane %v2277, 1
      %v2300 = vsel %vm386, %v2297, %v2299
      %v2309 = vsel %vm386, %v2299, 0.0
      %v2310 = vmul.f32 %v2288, %v363
      %v2311 = vmul.f32 %v2290, %v364
      %v2312 = vmul.f32 %v2292, %v365
      %v2313 = vmul.f32 %v2294, %v366
      %v2314 = vmul.f32 %v2296, %v367
      %v2315 = vmul.f32 %v2298, %v368
      %v2316 = vmul.f32 %v2300, %v369
      %v2317 = vmul.f32 %v2309, %v370
      %v2318 = vmul.f32 %v2290, %v363
      %v2319 = vmul.f32 %v2292, %v364
      %v2320 = vmul.f32 %v2294, %v365
      %v2321 = vmul.f32 %v2296, %v366
      %v2322 = vmul.f32 %v2298, %v367
      %v2323 = vmul.f32 %v2300, %v368
      %v2324 = vmul.f32 %v2309, %v369
      %2333 = vrot.lane.b32.xlu0 %v2310, 16
      %v2334 = vpop.permute.xlu0 %2333
      %2335 = vrot.lane.b32.xlu0 %v2311, 16
      %v2336 = vpop.permute.xlu0 %2335
      %2337 = vrot.lane.b32.xlu0 %v2312, 16
      %v2338 = vpop.permute.xlu0 %2337
      %2339 = vrot.lane.b32.xlu0 %v2313, 16
      %v2340 = vpop.permute.xlu0 %2339
      %2341 = vrot.lane.b32.xlu0 %v2314, 16
      %v2342 = vpop.permute.xlu0 %2341
      %2343 = vrot.lane.b32.xlu0 %v2315, 16
      %v2344 = vpop.permute.xlu0 %2343
      %2345 = vrot.lane.b32.xlu0 %v2316, 16
      %v2346 = vpop.permute.xlu0 %2345
      %2347 = vrot.lane.b32.xlu0 %v2317, 16
      %v2348 = vpop.permute.xlu0 %2347
      %2357 = vrot.lane.b32.xlu0 %v2271, 32
      %v2358 = vpop.permute.xlu0 %2357
      %2359 = vrot.lane.b32.xlu0 %v2272, 32
      %v2360 = vpop.permute.xlu0 %2359
      %2361 = vrot.lane.b32.xlu0 %v2273, 32
      %v2362 = vpop.permute.xlu0 %2361
      %2363 = vrot.lane.b32.xlu0 %v2274, 32
      %v2364 = vpop.permute.xlu0 %2363
      %2365 = vrot.lane.b32.xlu0 %v2275, 32
      %v2366 = vpop.permute.xlu0 %2365
      %2367 = vrot.lane.b32.xlu0 %v2276, 32
      %v2368 = vpop.permute.xlu0 %2367
      %2369 = vrot.lane.b32.xlu0 %v2277, 32
      %v2370 = vpop.permute.xlu0 %2369
      %2385 = vrot.lane.b32.xlu0 %v2318, 48
      %v2386 = vpop.permute.xlu0 %2385
      %2387 = vrot.lane.b32.xlu0 %v2319, 48
      %v2388 = vpop.permute.xlu0 %2387
      %2389 = vrot.lane.b32.xlu0 %v2320, 48
      %v2390 = vpop.permute.xlu0 %2389
      %2391 = vrot.lane.b32.xlu0 %v2321, 48
      %v2392 = vpop.permute.xlu0 %2391
      %2393 = vrot.lane.b32.xlu0 %v2322, 48
      %v2394 = vpop.permute.xlu0 %2393
      %2395 = vrot.lane.b32.xlu0 %v2323, 48
      %v2396 = vpop.permute.xlu0 %2395
      %2397 = vrot.lane.b32.xlu0 %v2324, 48
      %v2398 = vpop.permute.xlu0 %2397
      %v2406 = vsel %vm690, %v2270, %v2334
      %v2407 = vsel %vm690, %v2271, %v2336
      %v2408 = vsel %vm690, %v2272, %v2338
      %v2409 = vsel %vm690, %v2273, %v2340
      %v2410 = vsel %vm690, %v2274, %v2342
      %v2411 = vsel %vm690, %v2275, %v2344
      %v2412 = vsel %vm690, %v2276, %v2346
      %v2413 = vsel %vm690, %v2277, %v2348
      %v2414 = vsel %vm699, %v2406, %v2358
      %v2415 = vsel %vm699, %v2407, %v2360
      %v2416 = vsel %vm699, %v2408, %v2362
      %v2417 = vsel %vm699, %v2409, %v2364
      %v2418 = vsel %vm699, %v2410, %v2366
      %v2419 = vsel %vm699, %v2411, %v2368
      %v2420 = vsel %vm699, %v2412, %v2370
      %v2421 = vsel %vm699, %v2413, %v1093
      %v2422 = vsel %vm708, %v2414, %v2386
      %v2423 = vsel %vm708, %v2415, %v2388
      %v2424 = vsel %vm708, %v2416, %v2390
      %v2425 = vsel %vm708, %v2417, %v2392
      %v2426 = vsel %vm708, %v2418, %v2394
      %v2427 = vsel %vm708, %v2419, %v2396
      %v2428 = vsel %vm708, %v2420, %v2398
      %v2429 = vsel %vm708, %v2421, %v1125
      %v2431 = vsel %vm717, %v2422, 0
      %v2434 = vsel %vm717, %v2423, 0
      %v2437 = vsel %vm717, %v2424, 0
      %v2440 = vsel %vm717, %v2425, 0
      %v2443 = vsel %vm717, %v2426, 0
      %v2446 = vsel %vm717, %v2427, 0
      %v2449 = vsel %vm717, %v2428, 0
      %v2452 = vsel %vm717, %v2429, 0
      %2454 = vmatprep.subr.mxu0 0.0
      %2455 = vmatpush1.msra.mxu0 %v907
      %2456 = vmatprep.subr.mxu0 0.0
      %2457 = vmatpush1.msra.mxu0 %v908
      %2458 = vmatprep.subr.mxu0 0.0
      %2459 = vmatpush1.msra.mxu0 %v909
      %2460 = vmatprep.subr.mxu0 0.0
      %2461 = vmatpush1.msra.mxu0 %v910
      %2462 = vmatprep.subr.mxu0 0.0
      %2463 = vmatpush1.msra.mxu0 %v911
      %2464 = vmatprep.subr.mxu0 0.0
      %2465 = vmatpush1.msra.mxu0 %v912
      %2466 = vmatprep.subr.mxu0 0.0
      %2467 = vmatpush1.msra.mxu0 %v913
      %2468 = vmatprep.subr.mxu0 0.0
      %2469 = vmatpush1.msra.mxu0 %v914
      %2470 = vmatprep.subr.mxu0 0.0
      %2471 = vmatpush1.msra.mxu0 0.0
      %2472 = vmatprep.subr.mxu0 0.0
      %2473 = vmatpush1.msra.mxu0 0.0
      %2474 = vmatprep.subr.mxu0 0.0
      %2475 = vmatpush1.msra.mxu0 0.0
      %2476 = vmatprep.subr.mxu0 0.0
      %2477 = vmatpush1.msra.mxu0 0.0
      %2478 = vmatprep.subr.mxu0 0.0
      %2479 = vmatpush1.msra.mxu0 0.0
      %2480 = vmatprep.subr.mxu0 0.0
      %2481 = vmatpush1.msra.mxu0 0.0
      %2482 = vmatprep.subr.mxu0 0.0
      %2483 = vmatpush1.msra.mxu0 0.0
      %2484 = vmatprep.subr.mxu0 0.0
      %2485 = vmatpush1.msra.mxu0 0.0
      %2486 = vmatprep.subr.mxu0 0.0
      %2487 = vmatpush1.msra.mxu0 0.0
      %2488 = vmatprep.subr.mxu0 0.0
      %2489 = vmatpush1.msra.mxu0 0.0
      %2490 = vmatprep.subr.mxu0 0.0
      %2491 = vmatpush1.msra.mxu0 0.0
      %2492 = vmatprep.subr.mxu0 0.0
      %2493 = vmatpush1.msra.mxu0 0.0
      %2494 = vmatprep.subr.mxu0 0.0
      %2495 = vmatpush1.msra.mxu0 0.0
      %2496 = vmatprep.subr.mxu0 0.0
      %2497 = vmatpush1.msra.mxu0 0.0
      %2498 = vmatprep.subr.mxu0 0.0
      %2499 = vmatpush1.msra.mxu0 0.0
      %2500 = vmatprep.subr.mxu0 0.0
      %2501 = vmatpush1.msra.mxu0 0.0
      %2502 = vmatprep.subr.mxu0 0.0
      %2503 = vmatpush1.msra.mxu0 0.0
      %2504 = vmatprep.subr.mxu0 0.0
      %2505 = vmatpush1.msra.mxu0 0.0
      %2506 = vmatprep.subr.mxu0 0.0
      %2507 = vmatpush1.msra.mxu0 0.0
      %2508 = vmatprep.subr.mxu0 0.0
      %2509 = vmatpush1.msra.mxu0 0.0
      %2510 = vmatprep.subr.mxu0 0.0
      %2511 = vmatpush1.msra.mxu0 0.0
      %2512 = vmatprep.subr.mxu0 0.0
      %2513 = vmatpush1.msra.mxu0 0.0
      %2514 = vmatprep.subr.mxu0 0.0
      %2515 = vmatpush1.msra.mxu0 0.0
      %2516 = vmatprep.subr.mxu0 0.0
      %2517 = vmatpush1.msra.mxu0 0.0
      %2518 = vmatprep.mubr.f32.mxu0 0.0
      %2519 = vmatmul.mubr.f32.gmra.mrb[0].mxu0 %v2431
      %v2520 = vpop.f32.mrb[0].mxu0
      %v2521 = vadd.f32 %v869, %v2520
      %v2522 = vpop.f32.mrb[0].mxu0
      %2523 = vmatprep.mubr.f32.mxu0 0.0
      %2524 = vmatmul.mubr.f32.gmra.mrb[0].mxu0 %v2434
      %v2525 = vpop.f32.mrb[0].mxu0
      %v2526 = vadd.f32 %v874, %v2525
      %v2527 = vpop.f32.mrb[0].mxu0
      %2528 = vmatprep.mubr.f32.mxu0 0.0
      %2529 = vmatmul.mubr.f32.gmra.mrb[0].mxu0 %v2437
      %v2530 = vpop.f32.mrb[0].mxu0
      %v2531 = vadd.f32 %v879, %v2530
      %v2532 = vpop.f32.mrb[0].mxu0
      %2533 = vmatprep.mubr.f32.mxu0 0.0
      %2534 = vmatmul.mubr.f32.gmra.mrb[0].mxu0 %v2440
      %v2535 = vpop.f32.mrb[0].mxu0
      %v2536 = vadd.f32 %v884, %v2535
      %v2537 = vpop.f32.mrb[0].mxu0
      %2538 = vmatprep.mubr.f32.mxu0 0.0
      %2539 = vmatmul.mubr.f32.gmra.mrb[0].mxu0 %v2443
      %v2540 = vpop.f32.mrb[0].mxu0
      %v2541 = vadd.f32 %v889, %v2540
      %v2542 = vpop.f32.mrb[0].mxu0
      %2543 = vmatprep.mubr.f32.mxu0 0.0
      %2544 = vmatmul.mubr.f32.gmra.mrb[0].mxu0 %v2446
      %v2545 = vpop.f32.mrb[0].mxu0
      %v2546 = vadd.f32 %v894, %v2545
      %v2547 = vpop.f32.mrb[0].mxu0
      %2548 = vmatprep.mubr.f32.mxu0 0.0
      %2549 = vmatmul.mubr.f32.gmra.mrb[0].mxu0 %v2449
      %v2550 = vpop.f32.mrb[0].mxu0
      %v2551 = vadd.f32 %v899, %v2550
      %v2552 = vpop.f32.mrb[0].mxu0
      %2553 = vmatprep.mubr.f32.mxu0 0.0
      %2554 = vmatmul.mubr.f32.gmra.mrb[0].mxu0 %v2452
      %v2555 = vpop.f32.mrb[0].mxu0
      %v2556 = vadd.f32 %v904, %v2555
      %v2557 = vpop.f32.mrb[0].mxu0
      %2558 = vdwg.mxu0
      %v2559 = vld [vmem:[#allocation2] sm:$0xff]
      %v2560 = vld [vmem:[#allocation2 + $0x8] sm:$0xff]
      %v2561 = vld [vmem:[#allocation2 + $0x10] sm:$0xff]
      %v2562 = vld [vmem:[#allocation2 + $0x18] sm:$0xff]
      %v2563 = vld [vmem:[#allocation2 + $0x20] sm:$0xff]
      %v2564 = vld [vmem:[#allocation2 + $0x28] sm:$0xff]
      %v2565 = vld [vmem:[#allocation2 + $0x30] sm:$0xff]
      %v2566 = vld [vmem:[#allocation2 + $0x38] sm:$0xff]
      %v2567 = vmul.f32 %v2559, 0.99
      %v2568 = vmul.f32 %v2560, 0.99
      %v2569 = vmul.f32 %v2561, 0.99
      %v2570 = vmul.f32 %v2562, 0.99
      %v2571 = vmul.f32 %v2563, 0.99
      %v2572 = vmul.f32 %v2564, 0.99
      %v2573 = vmul.f32 %v2565, 0.99
      %v2574 = vmul.f32 %v2566, 0.99
      %v2575 = vadd.f32 %v2567, %v2521
      %v2576 = vadd.f32 %v2568, %v2526
      %v2577 = vadd.f32 %v2569, %v2531
      %v2578 = vadd.f32 %v2570, %v2536
      %v2579 = vadd.f32 %v2571, %v2541
      %v2580 = vadd.f32 %v2572, %v2546
      %v2581 = vadd.f32 %v2573, %v2551
      %v2582 = vadd.f32 %v2574, %v2556
      %vm2583 = vcmp.ge.f32.partialorder %v2575, 1.0
      %vm2584 = vcmp.ge.f32.partialorder %v2576, 1.0
      %vm2585 = vcmp.ge.f32.partialorder %v2577, 1.0
      %vm2586 = vcmp.ge.f32.partialorder %v2578, 1.0
      %vm2587 = vcmp.ge.f32.partialorder %v2579, 1.0
      %vm2588 = vcmp.ge.f32.partialorder %v2580, 1.0
      %vm2589 = vcmp.ge.f32.partialorder %v2581, 1.0
      %vm2590 = vcmp.ge.f32.partialorder %v2582, 1.0
      %v2591 = vsel %vm2583, 1, 0
      %v2592 = vsel %vm2584, 1, 0
      %v2593 = vsel %vm2585, 1, 0
      %v2594 = vsel %vm2586, 1, 0
      %v2595 = vsel %vm2587, 1, 0
      %v2596 = vsel %vm2588, 1, 0
      %v2597 = vsel %vm2589, 1, 0
      %v2598 = vsel %vm2590, 1, 0
      %v2599 = vcvt.s32.f32 %v2591
      %v2600 = vcvt.s32.f32 %v2592
      %v2601 = vcvt.s32.f32 %v2593
      %v2602 = vcvt.s32.f32 %v2594
      %v2603 = vcvt.s32.f32 %v2595
      %v2604 = vcvt.s32.f32 %v2596
      %v2605 = vcvt.s32.f32 %v2597
      %v2606 = vcvt.s32.f32 %v2598
      %v2607 = vsub.f32 %v2575, %v2599
      %v2608 = vsub.f32 %v2576, %v2600
      %v2609 = vsub.f32 %v2577, %v2601
      %v2610 = vsub.f32 %v2578, %v2602
      %v2611 = vsub.f32 %v2579, %v2603
      %v2612 = vsub.f32 %v2580, %v2604
      %v2613 = vsub.f32 %v2581, %v2605
      %v2614 = vsub.f32 %v2582, %v2606
      %2615 = vst.msk [vmem:[#allocation2] sm:$0xff] %vm699, %v2607
      %2616 = vst.msk [vmem:[#allocation2 + $0x8] sm:$0xff] %vm699, %v2608
      %2617 = vst.msk [vmem:[#allocation2 + $0x10] sm:$0xff] %vm699, %v2609
      %2618 = vst.msk [vmem:[#allocation2 + $0x18] sm:$0xff] %vm699, %v2610
      %2619 = vst.msk [vmem:[#allocation2 + $0x20] sm:$0xff] %vm699, %v2611
      %2620 = vst.msk [vmem:[#allocation2 + $0x28] sm:$0xff] %vm699, %v2612
      %2621 = vst.msk [vmem:[#allocation2 + $0x30] sm:$0xff] %vm699, %v2613
      %2622 = vst.msk [vmem:[#allocation2 + $0x38] sm:$0xff] %vm699, %v2614
      %v2631 = vrot.slane %v2599, 7
      %v2632 = vrot.slane %v2600, 7
      %v2633 = vsel %vm417, %v2631, %v2632
      %v2634 = vrot.slane %v2601, 7
      %v2635 = vsel %vm417, %v2632, %v2634
      %v2636 = vrot.slane %v2602, 7
      %v2637 = vsel %vm417, %v2634, %v2636
      %v2638 = vrot.slane %v2603, 7
      %v2639 = vsel %vm417, %v2636, %v2638
      %v2640 = vrot.slane %v2604, 7
      %v2641 = vsel %vm417, %v2638, %v2640
      %v2642 = vrot.slane %v2605, 7
      %v2643 = vsel %vm417, %v2640, %v2642
      %v2644 = vrot.slane %v2606, 7
      %v2645 = vsel %vm417, %v2642, %v2644
      %v2654 = vsel %vm417, 0.0, %v2631
      %v2655 = vmul.f32 %v2654, %v339
      %v2656 = vmul.f32 %v2633, %v340
      %v2657 = vmul.f32 %v2635, %v341
      %v2658 = vmul.f32 %v2637, %v342
      %v2659 = vmul.f32 %v2639, %v343
      %v2660 = vmul.f32 %v2641, %v344
      %v2661 = vmul.f32 %v2643, %v345
      %v2662 = vmul.f32 %v2645, %v346
      %v2663 = vmul.f32 %v2654, %v340
      %v2664 = vmul.f32 %v2633, %v341
      %v2665 = vmul.f32 %v2635, %v342
      %v2666 = vmul.f32 %v2637, %v343
      %v2667 = vmul.f32 %v2639, %v344
      %v2668 = vmul.f32 %v2641, %v345
      %v2669 = vmul.f32 %v2643, %v346
      %2678 = vrot.lane.b32.xlu0 %v2655, 32
      %v2679 = vpop.permute.xlu0 %2678
      %2680 = vrot.lane.b32.xlu0 %v2656, 32
      %v2681 = vpop.permute.xlu0 %2680
      %2682 = vrot.lane.b32.xlu0 %v2657, 32
      %v2683 = vpop.permute.xlu0 %2682
      %2684 = vrot.lane.b32.xlu0 %v2658, 32
      %v2685 = vpop.permute.xlu0 %2684
      %2686 = vrot.lane.b32.xlu0 %v2659, 32
      %v2687 = vpop.permute.xlu0 %2686
      %2688 = vrot.lane.b32.xlu0 %v2660, 32
      %v2689 = vpop.permute.xlu0 %2688
      %2690 = vrot.lane.b32.xlu0 %v2661, 32
      %v2691 = vpop.permute.xlu0 %2690
      %2692 = vrot.lane.b32.xlu0 %v2662, 32
      %v2693 = vpop.permute.xlu0 %2692
      %2702 = vrot.lane.b32.xlu0 %v2599, 64
      %v2703 = vpop.permute.xlu0 %2702
      %2704 = vrot.lane.b32.xlu0 %v2600, 64
      %v2705 = vpop.permute.xlu0 %2704
      %2706 = vrot.lane.b32.xlu0 %v2601, 64
      %v2707 = vpop.permute.xlu0 %2706
      %2708 = vrot.lane.b32.xlu0 %v2602, 64
      %v2709 = vpop.permute.xlu0 %2708
      %2710 = vrot.lane.b32.xlu0 %v2603, 64
      %v2711 = vpop.permute.xlu0 %2710
      %2712 = vrot.lane.b32.xlu0 %v2604, 64
      %v2713 = vpop.permute.xlu0 %2712
      %2714 = vrot.lane.b32.xlu0 %v2605, 64
      %v2715 = vpop.permute.xlu0 %2714
      %2730 = vrot.lane.b32.xlu0 %v2663, 96
      %v2731 = vpop.permute.xlu0 %2730
      %2732 = vrot.lane.b32.xlu0 %v2664, 96
      %v2733 = vpop.permute.xlu0 %2732
      %2734 = vrot.lane.b32.xlu0 %v2665, 96
      %v2735 = vpop.permute.xlu0 %2734
      %2736 = vrot.lane.b32.xlu0 %v2666, 96
      %v2737 = vpop.permute.xlu0 %2736
      %2738 = vrot.lane.b32.xlu0 %v2667, 96
      %v2739 = vpop.permute.xlu0 %2738
      %2740 = vrot.lane.b32.xlu0 %v2668, 96
      %v2741 = vpop.permute.xlu0 %2740
      %2742 = vrot.lane.b32.xlu0 %v2669, 96
      %v2743 = vpop.permute.xlu0 %2742
      %v2751 = vsel %vm699, %v2599, %v2679
      %v2752 = vsel %vm699, %v2600, %v2681
      %v2753 = vsel %vm699, %v2601, %v2683
      %v2754 = vsel %vm699, %v2602, %v2685
      %v2755 = vsel %vm699, %v2603, %v2687
      %v2756 = vsel %vm699, %v2604, %v2689
      %v2757 = vsel %vm699, %v2605, %v2691
      %v2758 = vsel %vm699, %v2606, %v2693
      %v2759 = vsel %vm717, %v2751, %v1431
      %v2760 = vsel %vm717, %v2752, %v2703
      %v2761 = vsel %vm717, %v2753, %v2705
      %v2762 = vsel %vm717, %v2754, %v2707
      %v2763 = vsel %vm717, %v2755, %v2709
      %v2764 = vsel %vm717, %v2756, %v2711
      %v2765 = vsel %vm717, %v2757, %v2713
      %v2766 = vsel %vm717, %v2758, %v2715
      %v2767 = vsel %vm735, %v2759, %v1462
      %v2768 = vsel %vm735, %v2760, %v2731
      %v2769 = vsel %vm735, %v2761, %v2733
      %v2770 = vsel %vm735, %v2762, %v2735
      %v2771 = vsel %vm735, %v2763, %v2737
      %v2772 = vsel %vm735, %v2764, %v2739
      %v2773 = vsel %vm735, %v2765, %v2741
      %v2774 = vsel %vm735, %v2766, %v2743
      %2775 = vmatprep.subr.mxu0 0.0
      %2776 = vmatpush1.msra.mxu0 %v915
      %2777 = vmatprep.subr.mxu0 0.0
      %2778 = vmatpush1.msra.mxu0 %v916
      %2779 = vmatprep.subr.mxu0 0.0
      %2780 = vmatpush1.msra.mxu0 %v917
      %2781 = vmatprep.subr.mxu0 0.0
      %2782 = vmatpush1.msra.mxu0 %v918
      %2783 = vmatprep.subr.mxu0 0.0
      %2784 = vmatpush1.msra.mxu0 %v919
      %2785 = vmatprep.subr.mxu0 0.0
      %2786 = vmatpush1.msra.mxu0 %v920
      %2787 = vmatprep.subr.mxu0 0.0
      %2788 = vmatpush1.msra.mxu0 %v921
      %2789 = vmatprep.subr.mxu0 0.0
      %2790 = vmatpush1.msra.mxu0 %v922
      %2791 = vmatprep.subr.mxu0 0.0
      %2792 = vmatpush1.msra.mxu0 %v923
      %2793 = vmatprep.subr.mxu0 0.0
      %2794 = vmatpush1.msra.mxu0 %v924
      %2795 = vmatprep.subr.mxu0 0.0
      %2796 = vmatpush1.msra.mxu0 %v925
      %2797 = vmatprep.subr.mxu0 0.0
      %2798 = vmatpush1.msra.mxu0 %v926
      %2799 = vmatprep.subr.mxu0 0.0
      %2800 = vmatpush1.msra.mxu0 %v927
      %2801 = vmatprep.subr.mxu0 0.0
      %2802 = vmatpush1.msra.mxu0 %v928
      %2803 = vmatprep.subr.mxu0 0.0
      %2804 = vmatpush1.msra.mxu0 %v929
      %2805 = vmatprep.subr.mxu0 0.0
      %2806 = vmatpush1.msra.mxu0 %v930
      %2807 = vmatprep.subr.mxu0 0.0
      %2808 = vmatpush1.msra.mxu0 0.0
      %2809 = vmatprep.subr.mxu0 0.0
      %2810 = vmatpush1.msra.mxu0 0.0
      %2811 = vmatprep.subr.mxu0 0.0
      %2812 = vmatpush1.msra.mxu0 0.0
      %2813 = vmatprep.subr.mxu0 0.0
      %2814 = vmatpush1.msra.mxu0 0.0
      %2815 = vmatprep.subr.mxu0 0.0
      %2816 = vmatpush1.msra.mxu0 0.0
      %2817 = vmatprep.subr.mxu0 0.0
      %2818 = vmatpush1.msra.mxu0 0.0
      %2819 = vmatprep.subr.mxu0 0.0
      %2820 = vmatpush1.msra.mxu0 0.0
      %2821 = vmatprep.subr.mxu0 0.0
      %2822 = vmatpush1.msra.mxu0 0.0
      %2823 = vmatprep.subr.mxu0 0.0
      %2824 = vmatpush1.msra.mxu0 0.0
      %2825 = vmatprep.subr.mxu0 0.0
      %2826 = vmatpush1.msra.mxu0 0.0
      %2827 = vmatprep.subr.mxu0 0.0
      %2828 = vmatpush1.msra.mxu0 0.0
      %2829 = vmatprep.subr.mxu0 0.0
      %2830 = vmatpush1.msra.mxu0 0.0
      %2831 = vmatprep.subr.mxu0 0.0
      %2832 = vmatpush1.msra.mxu0 0.0
      %2833 = vmatprep.subr.mxu0 0.0
      %2834 = vmatpush1.msra.mxu0 0.0
      %2835 = vmatprep.subr.mxu0 0.0
      %2836 = vmatpush1.msra.mxu0 0.0
      %2837 = vmatprep.subr.mxu0 0.0
      %2838 = vmatpush1.msra.mxu0 0.0
      %2839 = vmatprep.mubr.f32.mxu0 0.0
      %2840 = vmatmul.mubr.f32.gmra.mrb[0].mxu0 %v2767
      %v2841 = vpop.f32.mrb[0].mxu0
      %v2842 = vadd.f32 %v1513, %v2841
      %v2843 = vpop.f32.mrb[0].mxu0
      %2844 = vmatprep.mubr.f32.mxu0 0.0
      %2845 = vmatmul.mubr.f32.gmra.mrb[0].mxu0 %v2768
      %v2846 = vpop.f32.mrb[0].mxu0
      %v2847 = vadd.f32 %v1513, %v2846
      %v2848 = vpop.f32.mrb[0].mxu0
      %2849 = vmatprep.mubr.f32.mxu0 0.0
      %2850 = vmatmul.mubr.f32.gmra.mrb[0].mxu0 %v2769
      %v2851 = vpop.f32.mrb[0].mxu0
      %v2852 = vadd.f32 %v1513, %v2851
      %v2853 = vpop.f32.mrb[0].mxu0
      %2854 = vmatprep.mubr.f32.mxu0 0.0
      %2855 = vmatmul.mubr.f32.gmra.mrb[0].mxu0 %v2770
      %v2856 = vpop.f32.mrb[0].mxu0
      %v2857 = vadd.f32 %v1513, %v2856
      %v2858 = vpop.f32.mrb[0].mxu0
      %2859 = vmatprep.mubr.f32.mxu0 0.0
      %2860 = vmatmul.mubr.f32.gmra.mrb[0].mxu0 %v2771
      %v2861 = vpop.f32.mrb[0].mxu0
      %v2862 = vadd.f32 %v1513, %v2861
      %v2863 = vpop.f32.mrb[0].mxu0
      %2864 = vmatprep.mubr.f32.mxu0 0.0
      %2865 = vmatmul.mubr.f32.gmra.mrb[0].mxu0 %v2772
      %v2866 = vpop.f32.mrb[0].mxu0
      %v2867 = vadd.f32 %v1513, %v2866
      %v2868 = vpop.f32.mrb[0].mxu0
      %2869 = vmatprep.mubr.f32.mxu0 0.0
      %2870 = vmatmul.mubr.f32.gmra.mrb[0].mxu0 %v2773
      %v2871 = vpop.f32.mrb[0].mxu0
      %v2872 = vadd.f32 %v1513, %v2871
      %v2873 = vpop.f32.mrb[0].mxu0
      %2874 = vmatprep.mubr.f32.mxu0 0.0
      %2875 = vmatmul.mubr.f32.gmra.mrb[0].mxu0 %v2774
      %v2876 = vpop.f32.mrb[0].mxu0
      %v2877 = vadd.f32 %v1513, %v2876
      %v2878 = vpop.f32.mrb[0].mxu0
      %2879 = vdwg.mxu0
      %v2880 = vld [vmem:[#allocation3] sm:$0xff]
      %v2881 = vld [vmem:[#allocation3 + $0x8] sm:$0xff]
      %v2882 = vld [vmem:[#allocation3 + $0x10] sm:$0xff]
      %v2883 = vld [vmem:[#allocation3 + $0x18] sm:$0xff]
      %v2884 = vld [vmem:[#allocation3 + $0x20] sm:$0xff]
      %v2885 = vld [vmem:[#allocation3 + $0x28] sm:$0xff]
      %v2886 = vld [vmem:[#allocation3 + $0x30] sm:$0xff]
      %v2887 = vld [vmem:[#allocation3 + $0x38] sm:$0xff]
      %v2888 = vmul.f32 %v2880, 0.99
      %v2889 = vmul.f32 %v2881, 0.99
      %v2890 = vmul.f32 %v2882, 0.99
      %v2891 = vmul.f32 %v2883, 0.99
      %v2892 = vmul.f32 %v2884, 0.99
      %v2893 = vmul.f32 %v2885, 0.99
      %v2894 = vmul.f32 %v2886, 0.99
      %v2895 = vmul.f32 %v2887, 0.99
      %v2896 = vadd.f32 %v2888, %v2842
      %v2897 = vadd.f32 %v2889, %v2847
      %v2898 = vadd.f32 %v2890, %v2852
      %v2899 = vadd.f32 %v2891, %v2857
      %v2900 = vadd.f32 %v2892, %v2862
      %v2901 = vadd.f32 %v2893, %v2867
      %v2902 = vadd.f32 %v2894, %v2872
      %v2903 = vadd.f32 %v2895, %v2877
      %vm2904 = vcmp.ge.f32.partialorder %v2896, 1.0
      %vm2905 = vcmp.ge.f32.partialorder %v2897, 1.0
      %vm2906 = vcmp.ge.f32.partialorder %v2898, 1.0
      %vm2907 = vcmp.ge.f32.partialorder %v2899, 1.0
      %vm2908 = vcmp.ge.f32.partialorder %v2900, 1.0
      %vm2909 = vcmp.ge.f32.partialorder %v2901, 1.0
      %vm2910 = vcmp.ge.f32.partialorder %v2902, 1.0
      %vm2911 = vcmp.ge.f32.partialorder %v2903, 1.0
      %v2912 = vsel %vm2904, 1, 0
      %v2913 = vsel %vm2905, 1, 0
      %v2914 = vsel %vm2906, 1, 0
      %v2915 = vsel %vm2907, 1, 0
      %v2916 = vsel %vm2908, 1, 0
      %v2917 = vsel %vm2909, 1, 0
      %v2918 = vsel %vm2910, 1, 0
      %v2919 = vsel %vm2911, 1, 0
      %v2920 = vcvt.s32.f32 %v2912
      %v2921 = vcvt.s32.f32 %v2913
      %v2922 = vcvt.s32.f32 %v2914
      %v2923 = vcvt.s32.f32 %v2915
      %v2924 = vcvt.s32.f32 %v2916
      %v2925 = vcvt.s32.f32 %v2917
      %v2926 = vcvt.s32.f32 %v2918
      %v2927 = vcvt.s32.f32 %v2919
      %v2928 = vsub.f32 %v2896, %v2920
      %v2929 = vsub.f32 %v2897, %v2921
      %v2930 = vsub.f32 %v2898, %v2922
      %v2931 = vsub.f32 %v2899, %v2923
      %v2932 = vsub.f32 %v2900, %v2924
      %v2933 = vsub.f32 %v2901, %v2925
      %v2934 = vsub.f32 %v2902, %v2926
      %v2935 = vsub.f32 %v2903, %v2927
      %2936 = vst.msk [vmem:[#allocation3] sm:$0xff] %vm690, %v2928
      %2937 = vst.msk [vmem:[#allocation3 + $0x8] sm:$0xff] %vm690, %v2929
      %2938 = vst.msk [vmem:[#allocation3 + $0x10] sm:$0xff] %vm690, %v2930
      %2939 = vst.msk [vmem:[#allocation3 + $0x18] sm:$0xff] %vm690, %v2931
      %2940 = vst.msk [vmem:[#allocation3 + $0x20] sm:$0xff] %vm690, %v2932
      %2941 = vst.msk [vmem:[#allocation3 + $0x28] sm:$0xff] %vm690, %v2933
      %2942 = vst.msk [vmem:[#allocation3 + $0x30] sm:$0xff] %vm690, %v2934
      %2943 = vst.msk [vmem:[#allocation3 + $0x38] sm:$0xff] %vm690, %v2935
      %v2951 = vrot.slane %v2920, 7
      %v2952 = vrot.slane %v2921, 7
      %v2953 = vsel %vm417, %v2951, %v2952
      %v2954 = vrot.slane %v2922, 7
      %v2955 = vsel %vm417, %v2952, %v2954
      %v2956 = vrot.slane %v2923, 7
      %v2957 = vsel %vm417, %v2954, %v2956
      %v2958 = vrot.slane %v2924, 7
      %v2959 = vsel %vm417, %v2956, %v2958
      %v2960 = vrot.slane %v2925, 7
      %v2961 = vsel %vm417, %v2958, %v2960
      %v2962 = vrot.slane %v2926, 7
      %v2963 = vsel %vm417, %v2960, %v2962
      %v2971 = vsel %vm417, 0.0, %v2951
      %v2972 = vmul.f32 %v2971, %v340
      %v2973 = vmul.f32 %v2953, %v341
      %v2974 = vmul.f32 %v2955, %v342
      %v2975 = vmul.f32 %v2957, %v343
      %v2976 = vmul.f32 %v2959, %v344
      %v2977 = vmul.f32 %v2961, %v345
      %v2978 = vmul.f32 %v2963, %v346
      %v2980 = vrot.slane %v2920, 1
      %v2981 = vrot.slane %v2921, 1
      %v2982 = vsel %vm386, %v2980, %v2981
      %v2983 = vrot.slane %v2922, 1
      %v2984 = vsel %vm386, %v2981, %v2983
      %v2985 = vrot.slane %v2923, 1
      %v2986 = vsel %vm386, %v2983, %v2985
      %v2987 = vrot.slane %v2924, 1
      %v2988 = vsel %vm386, %v2985, %v2987
      %v2989 = vrot.slane %v2925, 1
      %v2990 = vsel %vm386, %v2987, %v2989
      %v2991 = vrot.slane %v2926, 1
      %v2992 = vsel %vm386, %v2989, %v2991
      %v2993 = vrot.slane %v2927, 1
      %v2994 = vsel %vm386, %v2991, %v2993
      %v3003 = vsel %vm386, 0.0, %v2980
      %v3004 = vmul.f32 %v3003, %v363
      %v3005 = vmul.f32 %v2982, %v364
      %v3006 = vmul.f32 %v2984, %v365
      %v3007 = vmul.f32 %v2986, %v366
      %v3008 = vmul.f32 %v2988, %v367
      %v3009 = vmul.f32 %v2990, %v368
      %v3010 = vmul.f32 %v2992, %v369
      %v3011 = vmul.f32 %v2994, %v370
      %v3012 = vrot.slane %v2927, 7
      %v3013 = vsel %vm417, %v2962, %v3012
      %v3015 = vmul.f32 %v2971, %v339
      %v3016 = vmul.f32 %v2953, %v340
      %v3017 = vmul.f32 %v2955, %v341
      %v3018 = vmul.f32 %v2957, %v342
      %v3019 = vmul.f32 %v2959, %v343
      %v3020 = vmul.f32 %v2961, %v344
      %v3021 = vmul.f32 %v2963, %v345
      %v3022 = vmul.f32 %v3013, %v346
      %v3024 = vsel %vm386, %v2993, 0.0
      %v3025 = vmul.f32 %v2982, %v363
      %v3026 = vmul.f32 %v2984, %v364
      %v3027 = vmul.f32 %v2986, %v365
      %v3028 = vmul.f32 %v2988, %v366
      %v3029 = vmul.f32 %v2990, %v367
      %v3030 = vmul.f32 %v2992, %v368
      %v3031 = vmul.f32 %v2994, %v369
      %v3032 = vmul.f32 %v3024, %v370
      %v3034 = vsel %vm417, %v3012, 0.0
      %v3035 = vmul.f32 %v2953, %v339
      %v3036 = vmul.f32 %v2955, %v340
      %v3037 = vmul.f32 %v2957, %v341
      %v3038 = vmul.f32 %v2959, %v342
      %v3039 = vmul.f32 %v2961, %v343
      %v3040 = vmul.f32 %v2963, %v344
      %v3041 = vmul.f32 %v3013, %v345
      %v3042 = vmul.f32 %v3034, %v346
      %v3043 = vmul.f32 %v2984, %v363
      %v3044 = vmul.f32 %v2986, %v364
      %v3045 = vmul.f32 %v2988, %v365
      %v3046 = vmul.f32 %v2990, %v366
      %v3047 = vmul.f32 %v2992, %v367
      %v3048 = vmul.f32 %v2994, %v368
      %v3049 = vmul.f32 %v3024, %v369
      %3050 = vrot.lane.b32.xlu0 %v2920, 16
      %v3051 = vpop.permute.xlu0 %3050
      %3052 = vrot.lane.b32.xlu0 %v2921, 16
      %v3053 = vpop.permute.xlu0 %3052
      %3054 = vrot.lane.b32.xlu0 %v2922, 16
      %v3055 = vpop.permute.xlu0 %3054
      %3056 = vrot.lane.b32.xlu0 %v2923, 16
      %v3057 = vpop.permute.xlu0 %3056
      %3058 = vrot.lane.b32.xlu0 %v2924, 16
      %v3059 = vpop.permute.xlu0 %3058
      %3060 = vrot.lane.b32.xlu0 %v2925, 16
      %v3061 = vpop.permute.xlu0 %3060
      %3062 = vrot.lane.b32.xlu0 %v2926, 16
      %v3063 = vpop.permute.xlu0 %3062
      %3079 = vrot.lane.b32.xlu0 %v3004, 32
      %v3080 = vpop.permute.xlu0 %3079
      %3081 = vrot.lane.b32.xlu0 %v3005, 32
      %v3082 = vpop.permute.xlu0 %3081
      %3083 = vrot.lane.b32.xlu0 %v3006, 32
      %v3084 = vpop.permute.xlu0 %3083
      %3085 = vrot.lane.b32.xlu0 %v3007, 32
      %v3086 = vpop.permute.xlu0 %3085
      %3087 = vrot.lane.b32.xlu0 %v3008, 32
      %v3088 = vpop.permute.xlu0 %3087
      %3089 = vrot.lane.b32.xlu0 %v3009, 32
      %v3090 = vpop.permute.xlu0 %3089
      %3091 = vrot.lane.b32.xlu0 %v3010, 32
      %v3092 = vpop.permute.xlu0 %3091
      %3093 = vrot.lane.b32.xlu0 %v3011, 32
      %v3094 = vpop.permute.xlu0 %3093
      %3111 = vrot.lane.b32.xlu0 %v3015, 48
      %v3112 = vpop.permute.xlu0 %3111
      %3113 = vrot.lane.b32.xlu0 %v3016, 48
      %v3114 = vpop.permute.xlu0 %3113
      %3115 = vrot.lane.b32.xlu0 %v3017, 48
      %v3116 = vpop.permute.xlu0 %3115
      %3117 = vrot.lane.b32.xlu0 %v3018, 48
      %v3118 = vpop.permute.xlu0 %3117
      %3119 = vrot.lane.b32.xlu0 %v3019, 48
      %v3120 = vpop.permute.xlu0 %3119
      %3121 = vrot.lane.b32.xlu0 %v3020, 48
      %v3122 = vpop.permute.xlu0 %3121
      %3123 = vrot.lane.b32.xlu0 %v3021, 48
      %v3124 = vpop.permute.xlu0 %3123
      %3125 = vrot.lane.b32.xlu0 %v3022, 48
      %v3126 = vpop.permute.xlu0 %3125
      %3135 = vrot.lane.b32.xlu0 %v2920, 64
      %v3136 = vpop.permute.xlu0 %3135
      %3137 = vrot.lane.b32.xlu0 %v2921, 64
      %v3138 = vpop.permute.xlu0 %3137
      %3139 = vrot.lane.b32.xlu0 %v2922, 64
      %v3140 = vpop.permute.xlu0 %3139
      %3141 = vrot.lane.b32.xlu0 %v2923, 64
      %v3142 = vpop.permute.xlu0 %3141
      %3143 = vrot.lane.b32.xlu0 %v2924, 64
      %v3144 = vpop.permute.xlu0 %3143
      %3145 = vrot.lane.b32.xlu0 %v2925, 64
      %v3146 = vpop.permute.xlu0 %3145
      %3147 = vrot.lane.b32.xlu0 %v2926, 64
      %v3148 = vpop.permute.xlu0 %3147
      %3149 = vrot.lane.b32.xlu0 %v2927, 64
      %v3150 = vpop.permute.xlu0 %3149
      %3167 = vrot.lane.b32.xlu0 %v3025, 80
      %v3168 = vpop.permute.xlu0 %3167
      %3169 = vrot.lane.b32.xlu0 %v3026, 80
      %v3170 = vpop.permute.xlu0 %3169
      %3171 = vrot.lane.b32.xlu0 %v3027, 80
      %v3172 = vpop.permute.xlu0 %3171
      %3173 = vrot.lane.b32.xlu0 %v3028, 80
      %v3174 = vpop.permute.xlu0 %3173
      %3175 = vrot.lane.b32.xlu0 %v3029, 80
      %v3176 = vpop.permute.xlu0 %3175
      %3177 = vrot.lane.b32.xlu0 %v3030, 80
      %v3178 = vpop.permute.xlu0 %3177
      %3179 = vrot.lane.b32.xlu0 %v3031, 80
      %v3180 = vpop.permute.xlu0 %3179
      %3181 = vrot.lane.b32.xlu0 %v3032, 80
      %v3182 = vpop.permute.xlu0 %3181
      %3199 = vrot.lane.b32.xlu0 %v3035, 96
      %v3200 = vpop.permute.xlu0 %3199
      %3201 = vrot.lane.b32.xlu0 %v3036, 96
      %v3202 = vpop.permute.xlu0 %3201
      %3203 = vrot.lane.b32.xlu0 %v3037, 96
      %v3204 = vpop.permute.xlu0 %3203
      %3205 = vrot.lane.b32.xlu0 %v3038, 96
      %v3206 = vpop.permute.xlu0 %3205
      %3207 = vrot.lane.b32.xlu0 %v3039, 96
      %v3208 = vpop.permute.xlu0 %3207
      %3209 = vrot.lane.b32.xlu0 %v3040, 96
      %v3210 = vpop.permute.xlu0 %3209
      %3211 = vrot.lane.b32.xlu0 %v3041, 96
      %v3212 = vpop.permute.xlu0 %3211
      %3213 = vrot.lane.b32.xlu0 %v3042, 96
      %v3214 = vpop.permute.xlu0 %3213
      %3223 = vrot.lane.b32.xlu0 %v2921, 112
      %v3224 = vpop.permute.xlu0 %3223
      %3225 = vrot.lane.b32.xlu0 %v2922, 112
      %v3226 = vpop.permute.xlu0 %3225
      %3227 = vrot.lane.b32.xlu0 %v2923, 112
      %v3228 = vpop.permute.xlu0 %3227
      %3229 = vrot.lane.b32.xlu0 %v2924, 112
      %v3230 = vpop.permute.xlu0 %3229
      %3231 = vrot.lane.b32.xlu0 %v2925, 112
      %v3232 = vpop.permute.xlu0 %3231
      %3233 = vrot.lane.b32.xlu0 %v2926, 112
      %v3234 = vpop.permute.xlu0 %3233
      %3235 = vrot.lane.b32.xlu0 %v2927, 112
      %v3236 = vpop.permute.xlu0 %3235
      %v3244 = vsel %vm690, %v2972, %v3051
      %v3245 = vsel %vm690, %v2973, %v3053
      %v3246 = vsel %vm690, %v2974, %v3055
      %v3247 = vsel %vm690, %v2975, %v3057
      %v3248 = vsel %vm690, %v2976, %v3059
      %v3249 = vsel %vm690, %v2977, %v3061
      %v3250 = vsel %vm690, %v2978, %v3063
      %v3251 = vsel %vm699, %v1984, %v3080
      %v3252 = vsel %vm699, %v3244, %v3082
      %v3253 = vsel %vm699, %v3245, %v3084
      %v3254 = vsel %vm699, %v3246, %v3086
      %v3255 = vsel %vm699, %v3247, %v3088
      %v3256 = vsel %vm699, %v3248, %v3090
      %v3257 = vsel %vm699, %v3249, %v3092
      %v3258 = vsel %vm699, %v3250, %v3094
      %v3259 = vsel %vm708, %v3251, %v3112
      %v3260 = vsel %vm708, %v3252, %v3114
      %v3261 = vsel %vm708, %v3253, %v3116
      %v3262 = vsel %vm708, %v3254, %v3118
      %v3263 = vsel %vm708, %v3255, %v3120
      %v3264 = vsel %vm708, %v3256, %v3122
      %v3265 = vsel %vm708, %v3257, %v3124
      %v3266 = vsel %vm708, %v3258, %v3126
      %v3267 = vsel %vm717, %v3259, %v3136
      %v3268 = vsel %vm717, %v3260, %v3138
      %v3269 = vsel %vm717, %v3261, %v3140
      %v3270 = vsel %vm717, %v3262, %v3142
      %v3271 = vsel %vm717, %v3263, %v3144
      %v3272 = vsel %vm717, %v3264, %v3146
      %v3273 = vsel %vm717, %v3265, %v3148
      %v3274 = vsel %vm717, %v3266, %v3150
      %v3275 = vsel %vm726, %v3267, %v3168
      %v3276 = vsel %vm726, %v3268, %v3170
      %v3277 = vsel %vm726, %v3269, %v3172
      %v3278 = vsel %vm726, %v3270, %v3174
      %v3279 = vsel %vm726, %v3271, %v3176
      %v3280 = vsel %vm726, %v3272, %v3178
      %v3281 = vsel %vm726, %v3273, %v3180
      %v3282 = vsel %vm726, %v3274, %v3182
      %v3283 = vsel %vm735, %v3275, %v3200
      %v3284 = vsel %vm735, %v3276, %v3202
      %v3285 = vsel %vm735, %v3277, %v3204
      %v3286 = vsel %vm735, %v3278, %v3206
      %v3287 = vsel %vm735, %v3279, %v3208
      %v3288 = vsel %vm735, %v3280, %v3210
      %v3289 = vsel %vm735, %v3281, %v3212
      %v3290 = vsel %vm735, %v3282, %v3214
      %v3291 = vsel %vm744, %v3283, %v3224
      %v3292 = vsel %vm744, %v3284, %v3226
      %v3293 = vsel %vm744, %v3285, %v3228
      %v3294 = vsel %vm744, %v3286, %v3230
      %v3295 = vsel %vm744, %v3287, %v3232
      %v3296 = vsel %vm744, %v3288, %v3234
      %v3297 = vsel %vm744, %v3289, %v3236
      %v3298 = vsel %vm744, %v3290, %v667
      %v3300 = vsel %vm690, %v3043, 0
      %v3303 = vsel %vm690, %v3044, 0
      %v3306 = vsel %vm690, %v3045, 0
      %v3309 = vsel %vm690, %v3046, 0
      %v3312 = vsel %vm690, %v3047, 0
      %v3315 = vsel %vm690, %v3048, 0
      %v3318 = vsel %vm690, %v3049, 0
      %3320 = vmatprep.subr.mxu0 0.0
      %3321 = vmatpush1.msra.mxu0 %v932
      %3322 = vmatprep.subr.mxu0 0.0
      %3323 = vmatpush1.msra.mxu0 %v933
      %3324 = vmatprep.subr.mxu0 0.0
      %3325 = vmatpush1.msra.mxu0 %v934
      %3326 = vmatprep.subr.mxu0 0.0
      %3327 = vmatpush1.msra.mxu0 %v935
      %3328 = vmatprep.subr.mxu0 0.0
      %3329 = vmatpush1.msra.mxu0 %v936
      %3330 = vmatprep.subr.mxu0 0.0
      %3331 = vmatpush1.msra.mxu0 %v937
      %3332 = vmatprep.subr.mxu0 0.0
      %3333 = vmatpush1.msra.mxu0 %v938
      %3334 = vmatprep.subr.mxu0 0.0
      %3335 = vmatpush1.msra.mxu0 %v939
      %3336 = vmatprep.subr.mxu0 0.0
      %3337 = vmatpush1.msra.mxu0 %v940
      %3338 = vmatprep.subr.mxu0 0.0
      %3339 = vmatpush1.msra.mxu0 %v941
      %3340 = vmatprep.subr.mxu0 0.0
      %3341 = vmatpush1.msra.mxu0 %v942
      %3342 = vmatprep.subr.mxu0 0.0
      %3343 = vmatpush1.msra.mxu0 %v943
      %3344 = vmatprep.subr.mxu0 0.0
      %3345 = vmatpush1.msra.mxu0 %v944
      %3346 = vmatprep.subr.mxu0 0.0
      %3347 = vmatpush1.msra.mxu0 %v945
      %3348 = vmatprep.subr.mxu0 0.0
      %3349 = vmatpush1.msra.mxu0 %v946
      %3350 = vmatprep.subr.mxu0 0.0
      %3351 = vmatpush1.msra.mxu0 %v947
      %3352 = vmatprep.subr.mxu0 0.0
      %3353 = vmatpush1.msra.mxu0 %v948
      %3354 = vmatprep.subr.mxu0 0.0
      %3355 = vmatpush1.msra.mxu0 %v949
      %3356 = vmatprep.subr.mxu0 0.0
      %3357 = vmatpush1.msra.mxu0 0.0
      %3358 = vmatprep.subr.mxu0 0.0
      %3359 = vmatpush1.msra.mxu0 0.0
      %3360 = vmatprep.subr.mxu0 0.0
      %3361 = vmatpush1.msra.mxu0 0.0
      %3362 = vmatprep.subr.mxu0 0.0
      %3363 = vmatpush1.msra.mxu0 0.0
      %3364 = vmatprep.subr.mxu0 0.0
      %3365 = vmatpush1.msra.mxu0 0.0
      %3366 = vmatprep.subr.mxu0 0.0
      %3367 = vmatpush1.msra.mxu0 0.0
      %3368 = vmatprep.subr.mxu0 0.0
      %3369 = vmatpush1.msra.mxu0 0.0
      %3370 = vmatprep.subr.mxu0 0.0
      %3371 = vmatpush1.msra.mxu0 0.0
      %3372 = vmatprep.subr.mxu0 0.0
      %3373 = vmatpush1.msra.mxu0 0.0
      %3374 = vmatprep.subr.mxu0 0.0
      %3375 = vmatpush1.msra.mxu0 0.0
      %3376 = vmatprep.subr.mxu0 0.0
      %3377 = vmatpush1.msra.mxu0 0.0
      %3378 = vmatprep.subr.mxu0 0.0
      %3379 = vmatpush1.msra.mxu0 0.0
      %3380 = vmatprep.subr.mxu0 0.0
      %3381 = vmatpush1.msra.mxu0 0.0
      %3382 = vmatprep.subr.mxu0 0.0
      %3383 = vmatpush1.msra.mxu0 0.0
      %3384 = vmatprep.mubr.f32.mxu0 %v3300
      %3385 = vmatmul.mubr.f32.gmra.mrb[0].mxu0 %v3291
      %v3386 = vpop.f32.mrb[0].mxu0
      %v3387 = vadd.f32 %v2044, %v3386
      %v3388 = vpop.f32.mrb[0].mxu0
      %3389 = vmatprep.mubr.f32.mxu0 %v3303
      %3390 = vmatmul.mubr.f32.gmra.mrb[0].mxu0 %v3292
      %v3391 = vpop.f32.mrb[0].mxu0
      %v3392 = vadd.f32 %v2044, %v3391
      %v3393 = vpop.f32.mrb[0].mxu0
      %3394 = vmatprep.mubr.f32.mxu0 %v3306
      %3395 = vmatmul.mubr.f32.gmra.mrb[0].mxu0 %v3293
      %v3396 = vpop.f32.mrb[0].mxu0
      %v3397 = vadd.f32 %v2044, %v3396
      %v3398 = vpop.f32.mrb[0].mxu0
      %3399 = vmatprep.mubr.f32.mxu0 %v3309
      %3400 = vmatmul.mubr.f32.gmra.mrb[0].mxu0 %v3294
      %v3401 = vpop.f32.mrb[0].mxu0
      %v3402 = vadd.f32 %v2044, %v3401
      %v3403 = vpop.f32.mrb[0].mxu0
      %3404 = vmatprep.mubr.f32.mxu0 %v3312
      %3405 = vmatmul.mubr.f32.gmra.mrb[0].mxu0 %v3295
      %v3406 = vpop.f32.mrb[0].mxu0
      %v3407 = vadd.f32 %v2044, %v3406
      %v3408 = vpop.f32.mrb[0].mxu0
      %3409 = vmatprep.mubr.f32.mxu0 %v3315
      %3410 = vmatmul.mubr.f32.gmra.mrb[0].mxu0 %v3296
      %v3411 = vpop.f32.mrb[0].mxu0
      %v3412 = vadd.f32 %v2044, %v3411
      %v3413 = vpop.f32.mrb[0].mxu0
      %3414 = vmatprep.mubr.f32.mxu0 %v3318
      %3415 = vmatmul.mubr.f32.gmra.mrb[0].mxu0 %v3297
      %v3416 = vpop.f32.mrb[0].mxu0
      %v3417 = vadd.f32 %v2044, %v3416
      %v3418 = vpop.f32.mrb[0].mxu0
      %3419 = vmatprep.mubr.f32.mxu0 %v2067
      %3420 = vmatmul.mubr.f32.gmra.mrb[0].mxu0 %v3298
      %v3421 = vpop.f32.mrb[0].mxu0
      %v3422 = vadd.f32 %v2044, %v3421
      %v3423 = vpop.f32.mrb[0].mxu0
      %3424 = vdwg.mxu0
      %v3425 = vld [vmem:[#allocation4] sm:$0xff]
      %v3426 = vld [vmem:[#allocation4 + $0x8] sm:$0xff]
      %v3427 = vld [vmem:[#allocation4 + $0x10] sm:$0xff]
      %v3428 = vld [vmem:[#allocation4 + $0x18] sm:$0xff]
      %v3429 = vld [vmem:[#allocation4 + $0x20] sm:$0xff]
      %v3430 = vld [vmem:[#allocation4 + $0x28] sm:$0xff]
      %v3431 = vld [vmem:[#allocation4 + $0x30] sm:$0xff]
      %v3432 = vld [vmem:[#allocation4 + $0x38] sm:$0xff]
      %v3433 = vmul.f32 %v3425, 0.99
      %v3434 = vmul.f32 %v3426, 0.99
      %v3435 = vmul.f32 %v3427, 0.99
      %v3436 = vmul.f32 %v3428, 0.99
      %v3437 = vmul.f32 %v3429, 0.99
      %v3438 = vmul.f32 %v3430, 0.99
      %v3439 = vmul.f32 %v3431, 0.99
      %v3440 = vmul.f32 %v3432, 0.99
      %v3441 = vadd.f32 %v3433, %v3387
      %v3442 = vadd.f32 %v3434, %v3392
      %v3443 = vadd.f32 %v3435, %v3397
      %v3444 = vadd.f32 %v3436, %v3402
      %v3445 = vadd.f32 %v3437, %v3407
      %v3446 = vadd.f32 %v3438, %v3412
      %v3447 = vadd.f32 %v3439, %v3417
      %v3448 = vadd.f32 %v3440, %v3422
      %vm3449 = vcmp.ge.f32.partialorder %v3441, 1.0
      %vm3450 = vcmp.ge.f32.partialorder %v3442, 1.0
      %vm3451 = vcmp.ge.f32.partialorder %v3443, 1.0
      %vm3452 = vcmp.ge.f32.partialorder %v3444, 1.0
      %vm3453 = vcmp.ge.f32.partialorder %v3445, 1.0
      %vm3454 = vcmp.ge.f32.partialorder %v3446, 1.0
      %vm3455 = vcmp.ge.f32.partialorder %v3447, 1.0
      %vm3456 = vcmp.ge.f32.partialorder %v3448, 1.0
      %v3457 = vsel %vm3449, 1, 0
      %v3458 = vsel %vm3450, 1, 0
      %v3459 = vsel %vm3451, 1, 0
      %v3460 = vsel %vm3452, 1, 0
      %v3461 = vsel %vm3453, 1, 0
      %v3462 = vsel %vm3454, 1, 0
      %v3463 = vsel %vm3455, 1, 0
      %v3464 = vsel %vm3456, 1, 0
      %v3465 = vcvt.s32.f32 %v3457
      %v3466 = vcvt.s32.f32 %v3458
      %v3467 = vcvt.s32.f32 %v3459
      %v3468 = vcvt.s32.f32 %v3460
      %v3469 = vcvt.s32.f32 %v3461
      %v3470 = vcvt.s32.f32 %v3462
      %v3471 = vcvt.s32.f32 %v3463
      %v3472 = vcvt.s32.f32 %v3464
      %v3473 = vsub.f32 %v3441, %v3465
      %v3474 = vsub.f32 %v3442, %v3466
      %v3475 = vsub.f32 %v3443, %v3467
      %v3476 = vsub.f32 %v3444, %v3468
      %v3477 = vsub.f32 %v3445, %v3469
      %v3478 = vsub.f32 %v3446, %v3470
      %v3479 = vsub.f32 %v3447, %v3471
      %v3480 = vsub.f32 %v3448, %v3472
      %3481 = vst.msk [vmem:[#allocation4] sm:$0xff] %vm690, %v3473
      %3482 = vst.msk [vmem:[#allocation4 + $0x8] sm:$0xff] %vm690, %v3474
      %3483 = vst.msk [vmem:[#allocation4 + $0x10] sm:$0xff] %vm690, %v3475
      %3484 = vst.msk [vmem:[#allocation4 + $0x18] sm:$0xff] %vm690, %v3476
      %3485 = vst.msk [vmem:[#allocation4 + $0x20] sm:$0xff] %vm690, %v3477
      %3486 = vst.msk [vmem:[#allocation4 + $0x28] sm:$0xff] %vm690, %v3478
      %3487 = vst.msk [vmem:[#allocation4 + $0x30] sm:$0xff] %vm690, %v3479
      %3488 = vst.msk [vmem:[#allocation4 + $0x38] sm:$0xff] %vm690, %v3480
      %3489 = vst.msk [vmem:[#allocation5] sm:$0xff] %vm690, %v3465
      %3490 = vst.msk [vmem:[#allocation5 + $0x8] sm:$0xff] %vm690, %v3466
      %3491 = vst.msk [vmem:[#allocation5 + $0x10] sm:$0xff] %vm690, %v3467
      %3492 = vst.msk [vmem:[#allocation5 + $0x18] sm:$0xff] %vm690, %v3468
      %3493 = vst.msk [vmem:[#allocation5 + $0x20] sm:$0xff] %vm690, %v3469
      %3494 = vst.msk [vmem:[#allocation5 + $0x28] sm:$0xff] %vm690, %v3470
      %3495 = vst.msk [vmem:[#allocation5 + $0x30] sm:$0xff] %vm690, %v3471
      %3496 = vst.msk [vmem:[#allocation5 + $0x38] sm:$0xff] %vm690, %v3472
      %v3497 = vld [vmem:[#allocation6] sm:$0xff]
      %v3498 = vld [vmem:[#allocation6 + $0x8] sm:$0xff]
      %v3499 = vld [vmem:[#allocation6 + $0x10] sm:$0xff]
      %v3500 = vld [vmem:[#allocation6 + $0x18] sm:$0xff]
      %v3501 = vld [vmem:[#allocation6 + $0x20] sm:$0xff]
      %v3502 = vld [vmem:[#allocation6 + $0x28] sm:$0xff]
      %v3503 = vld [vmem:[#allocation6 + $0x30] sm:$0xff]
      %v3504 = vld [vmem:[#allocation6 + $0x38] sm:$0xff]
      %v3505 = vadd.f32 %v3497, %v3465
      %v3506 = vadd.f32 %v3498, %v3466
      %v3507 = vadd.f32 %v3499, %v3467
      %v3508 = vadd.f32 %v3500, %v3468
      %v3509 = vadd.f32 %v3501, %v3469
      %v3510 = vadd.f32 %v3502, %v3470
      %v3511 = vadd.f32 %v3503, %v3471
      %v3512 = vadd.f32 %v3504, %v3472
      %3513 = vst.msk [vmem:[#allocation6] sm:$0xff] %vm690, %v3505
      %3514 = vst.msk [vmem:[#allocation6 + $0x8] sm:$0xff] %vm690, %v3506
      %3515 = vst.msk [vmem:[#allocation6 + $0x10] sm:$0xff] %vm690, %v3507
      %3516 = vst.msk [vmem:[#allocation6 + $0x18] sm:$0xff] %vm690, %v3508
      %3517 = vst.msk [vmem:[#allocation6 + $0x20] sm:$0xff] %vm690, %v3509
      %3518 = vst.msk [vmem:[#allocation6 + $0x28] sm:$0xff] %vm690, %v3510
      %3519 = vst.msk [vmem:[#allocation6 + $0x30] sm:$0xff] %vm690, %v3511
      %3520 = vst.msk [vmem:[#allocation6 + $0x38] sm:$0xff] %vm690, %v3512
      %v3521 = vld [vmem:[#allocation5] sm:$0xff]
      %v3522 = vld [vmem:[#allocation5 + $0x8] sm:$0xff]
      %v3523 = vld [vmem:[#allocation5 + $0x10] sm:$0xff]
      %v3524 = vld [vmem:[#allocation5 + $0x18] sm:$0xff]
      %v3525 = vld [vmem:[#allocation5 + $0x20] sm:$0xff]
      %v3526 = vld [vmem:[#allocation5 + $0x28] sm:$0xff]
      %v3527 = vld [vmem:[#allocation5 + $0x30] sm:$0xff]
      %v3528 = vld [vmem:[#allocation5 + $0x38] sm:$0xff]
      %v3537 = vrot.slane %v3521, 1
      %v3538 = vrot.slane %v3522, 1
      %v3539 = vsel %vm386, %v3537, %v3538
      %v3540 = vrot.slane %v3523, 1
      %v3541 = vsel %vm386, %v3538, %v3540
      %v3542 = vrot.slane %v3524, 1
      %v3543 = vsel %vm386, %v3540, %v3542
      %v3544 = vrot.slane %v3525, 1
      %v3545 = vsel %vm386, %v3542, %v3544
      %v3546 = vrot.slane %v3526, 1
      %v3547 = vsel %vm386, %v3544, %v3546
      %v3548 = vrot.slane %v3527, 1
      %v3549 = vsel %vm386, %v3546, %v3548
      %v3550 = vrot.slane %v3528, 1
      %v3551 = vsel %vm386, %v3548, %v3550
      %v3560 = vsel %vm386, %v3550, 0.0
      %v3561 = vmul.f32 %v3539, %v363
      %v3562 = vmul.f32 %v3541, %v364
      %v3563 = vmul.f32 %v3543, %v365
      %v3564 = vmul.f32 %v3545, %v366
      %v3565 = vmul.f32 %v3547, %v367
      %v3566 = vmul.f32 %v3549, %v368
      %v3567 = vmul.f32 %v3551, %v369
      %v3568 = vmul.f32 %v3560, %v370
      %v3569 = vmul.f32 %v3541, %v363
      %v3570 = vmul.f32 %v3543, %v364
      %v3571 = vmul.f32 %v3545, %v365
      %v3572 = vmul.f32 %v3547, %v366
      %v3573 = vmul.f32 %v3549, %v367
      %v3574 = vmul.f32 %v3551, %v368
      %v3575 = vmul.f32 %v3560, %v369
      %3584 = vrot.lane.b32.xlu0 %v3561, 16
      %v3585 = vpop.permute.xlu0 %3584
      %3586 = vrot.lane.b32.xlu0 %v3562, 16
      %v3587 = vpop.permute.xlu0 %3586
      %3588 = vrot.lane.b32.xlu0 %v3563, 16
      %v3589 = vpop.permute.xlu0 %3588
      %3590 = vrot.lane.b32.xlu0 %v3564, 16
      %v3591 = vpop.permute.xlu0 %3590
      %3592 = vrot.lane.b32.xlu0 %v3565, 16
      %v3593 = vpop.permute.xlu0 %3592
      %3594 = vrot.lane.b32.xlu0 %v3566, 16
      %v3595 = vpop.permute.xlu0 %3594
      %3596 = vrot.lane.b32.xlu0 %v3567, 16
      %v3597 = vpop.permute.xlu0 %3596
      %3598 = vrot.lane.b32.xlu0 %v3568, 16
      %v3599 = vpop.permute.xlu0 %3598
      %3608 = vrot.lane.b32.xlu0 %v3522, 32
      %v3609 = vpop.permute.xlu0 %3608
      %3610 = vrot.lane.b32.xlu0 %v3523, 32
      %v3611 = vpop.permute.xlu0 %3610
      %3612 = vrot.lane.b32.xlu0 %v3524, 32
      %v3613 = vpop.permute.xlu0 %3612
      %3614 = vrot.lane.b32.xlu0 %v3525, 32
      %v3615 = vpop.permute.xlu0 %3614
      %3616 = vrot.lane.b32.xlu0 %v3526, 32
      %v3617 = vpop.permute.xlu0 %3616
      %3618 = vrot.lane.b32.xlu0 %v3527, 32
      %v3619 = vpop.permute.xlu0 %3618
      %3620 = vrot.lane.b32.xlu0 %v3528, 32
      %v3621 = vpop.permute.xlu0 %3620
      %3636 = vrot.lane.b32.xlu0 %v3569, 48
      %v3637 = vpop.permute.xlu0 %3636
      %3638 = vrot.lane.b32.xlu0 %v3570, 48
      %v3639 = vpop.permute.xlu0 %3638
      %3640 = vrot.lane.b32.xlu0 %v3571, 48
      %v3641 = vpop.permute.xlu0 %3640
      %3642 = vrot.lane.b32.xlu0 %v3572, 48
      %v3643 = vpop.permute.xlu0 %3642
      %3644 = vrot.lane.b32.xlu0 %v3573, 48
      %v3645 = vpop.permute.xlu0 %3644
      %3646 = vrot.lane.b32.xlu0 %v3574, 48
      %v3647 = vpop.permute.xlu0 %3646
      %3648 = vrot.lane.b32.xlu0 %v3575, 48
      %v3649 = vpop.permute.xlu0 %3648
      %v3657 = vsel %vm690, %v3521, %v3585
      %v3658 = vsel %vm690, %v3522, %v3587
      %v3659 = vsel %vm690, %v3523, %v3589
      %v3660 = vsel %vm690, %v3524, %v3591
      %v3661 = vsel %vm690, %v3525, %v3593
      %v3662 = vsel %vm690, %v3526, %v3595
      %v3663 = vsel %vm690, %v3527, %v3597
      %v3664 = vsel %vm690, %v3528, %v3599
      %v3665 = vsel %vm699, %v3657, %v3609
      %v3666 = vsel %vm699, %v3658, %v3611
      %v3667 = vsel %vm699, %v3659, %v3613
      %v3668 = vsel %vm699, %v3660, %v3615
      %v3669 = vsel %vm699, %v3661, %v3617
      %v3670 = vsel %vm699, %v3662, %v3619
      %v3671 = vsel %vm699, %v3663, %v3621
      %v3672 = vsel %vm699, %v3664, %v1093
      %v3673 = vsel %vm708, %v3665, %v3637
      %v3674 = vsel %vm708, %v3666, %v3639
      %v3675 = vsel %vm708, %v3667, %v3641
      %v3676 = vsel %vm708, %v3668, %v3643
      %v3677 = vsel %vm708, %v3669, %v3645
      %v3678 = vsel %vm708, %v3670, %v3647
      %v3679 = vsel %vm708, %v3671, %v3649
      %v3680 = vsel %vm708, %v3672, %v1125
      %v3682 = vsel %vm717, %v3673, 0
      %v3685 = vsel %vm717, %v3674, 0
      %v3688 = vsel %vm717, %v3675, 0
      %v3691 = vsel %vm717, %v3676, 0
      %v3694 = vsel %vm717, %v3677, 0
      %v3697 = vsel %vm717, %v3678, 0
      %v3700 = vsel %vm717, %v3679, 0
      %v3703 = vsel %vm717, %v3680, 0
      %3705 = vmatprep.subr.mxu0 0.0
      %3706 = vmatpush1.msra.mxu0 %v907
      %3707 = vmatprep.subr.mxu0 0.0
      %3708 = vmatpush1.msra.mxu0 %v908
      %3709 = vmatprep.subr.mxu0 0.0
      %3710 = vmatpush1.msra.mxu0 %v909
      %3711 = vmatprep.subr.mxu0 0.0
      %3712 = vmatpush1.msra.mxu0 %v910
      %3713 = vmatprep.subr.mxu0 0.0
      %3714 = vmatpush1.msra.mxu0 %v911
      %3715 = vmatprep.subr.mxu0 0.0
      %3716 = vmatpush1.msra.mxu0 %v912
      %3717 = vmatprep.subr.mxu0 0.0
      %3718 = vmatpush1.msra.mxu0 %v913
      %3719 = vmatprep.subr.mxu0 0.0
      %3720 = vmatpush1.msra.mxu0 %v914
      %3721 = vmatprep.subr.mxu0 0.0
      %3722 = vmatpush1.msra.mxu0 0.0
      %3723 = vmatprep.subr.mxu0 0.0
      %3724 = vmatpush1.msra.mxu0 0.0
      %3725 = vmatprep.subr.mxu0 0.0
      %3726 = vmatpush1.msra.mxu0 0.0
      %3727 = vmatprep.subr.mxu0 0.0
      %3728 = vmatpush1.msra.mxu0 0.0
      %3729 = vmatprep.subr.mxu0 0.0
      %3730 = vmatpush1.msra.mxu0 0.0
      %3731 = vmatprep.subr.mxu0 0.0
      %3732 = vmatpush1.msra.mxu0 0.0
      %3733 = vmatprep.subr.mxu0 0.0
      %3734 = vmatpush1.msra.mxu0 0.0
      %3735 = vmatprep.subr.mxu0 0.0
      %3736 = vmatpush1.msra.mxu0 0.0
      %3737 = vmatprep.subr.mxu0 0.0
      %3738 = vmatpush1.msra.mxu0 0.0
      %3739 = vmatprep.subr.mxu0 0.0
      %3740 = vmatpush1.msra.mxu0 0.0
      %3741 = vmatprep.subr.mxu0 0.0
      %3742 = vmatpush1.msra.mxu0 0.0
      %3743 = vmatprep.subr.mxu0 0.0
      %3744 = vmatpush1.msra.mxu0 0.0
      %3745 = vmatprep.subr.mxu0 0.0
      %3746 = vmatpush1.msra.mxu0 0.0
      %3747 = vmatprep.subr.mxu0 0.0
      %3748 = vmatpush1.msra.mxu0 0.0
      %3749 = vmatprep.subr.mxu0 0.0
      %3750 = vmatpush1.msra.mxu0 0.0
      %3751 = vmatprep.subr.mxu0 0.0
      %3752 = vmatpush1.msra.mxu0 0.0
      %3753 = vmatprep.subr.mxu0 0.0
      %3754 = vmatpush1.msra.mxu0 0.0
      %3755 = vmatprep.subr.mxu0 0.0
      %3756 = vmatpush1.msra.mxu0 0.0
      %3757 = vmatprep.subr.mxu0 0.0
      %3758 = vmatpush1.msra.mxu0 0.0
      %3759 = vmatprep.subr.mxu0 0.0
      %3760 = vmatpush1.msra.mxu0 0.0
      %3761 = vmatprep.subr.mxu0 0.0
      %3762 = vmatpush1.msra.mxu0 0.0
      %3763 = vmatprep.subr.mxu0 0.0
      %3764 = vmatpush1.msra.mxu0 0.0
      %3765 = vmatprep.subr.mxu0 0.0
      %3766 = vmatpush1.msra.mxu0 0.0
      %3767 = vmatprep.subr.mxu0 0.0
      %3768 = vmatpush1.msra.mxu0 0.0
      %3769 = vmatprep.mubr.f32.mxu0 0.0
      %3770 = vmatmul.mubr.f32.gmra.mrb[0].mxu0 %v3682
      %v3771 = vpop.f32.mrb[0].mxu0
      %v3772 = vadd.f32 %v869, %v3771
      %v3773 = vpop.f32.mrb[0].mxu0
      %3774 = vmatprep.mubr.f32.mxu0 0.0
      %3775 = vmatmul.mubr.f32.gmra.mrb[0].mxu0 %v3685
      %v3776 = vpop.f32.mrb[0].mxu0
      %v3777 = vadd.f32 %v874, %v3776
      %v3778 = vpop.f32.mrb[0].mxu0
      %3779 = vmatprep.mubr.f32.mxu0 0.0
      %3780 = vmatmul.mubr.f32.gmra.mrb[0].mxu0 %v3688
      %v3781 = vpop.f32.mrb[0].mxu0
      %v3782 = vadd.f32 %v879, %v3781
      %v3783 = vpop.f32.mrb[0].mxu0
      %3784 = vmatprep.mubr.f32.mxu0 0.0
      %3785 = vmatmul.mubr.f32.gmra.mrb[0].mxu0 %v3691
      %v3786 = vpop.f32.mrb[0].mxu0
      %v3787 = vadd.f32 %v884, %v3786
      %v3788 = vpop.f32.mrb[0].mxu0
      %3789 = vmatprep.mubr.f32.mxu0 0.0
      %3790 = vmatmul.mubr.f32.gmra.mrb[0].mxu0 %v3694
      %v3791 = vpop.f32.mrb[0].mxu0
      %v3792 = vadd.f32 %v889, %v3791
      %v3793 = vpop.f32.mrb[0].mxu0
      %3794 = vmatprep.mubr.f32.mxu0 0.0
      %3795 = vmatmul.mubr.f32.gmra.mrb[0].mxu0 %v3697
      %v3796 = vpop.f32.mrb[0].mxu0
      %v3797 = vadd.f32 %v894, %v3796
      %v3798 = vpop.f32.mrb[0].mxu0
      %3799 = vmatprep.mubr.f32.mxu0 0.0
      %3800 = vmatmul.mubr.f32.gmra.mrb[0].mxu0 %v3700
      %v3801 = vpop.f32.mrb[0].mxu0
      %v3802 = vadd.f32 %v899, %v3801
      %v3803 = vpop.f32.mrb[0].mxu0
      %3804 = vmatprep.mubr.f32.mxu0 0.0
      %3805 = vmatmul.mubr.f32.gmra.mrb[0].mxu0 %v3703
      %v3806 = vpop.f32.mrb[0].mxu0
      %v3807 = vadd.f32 %v904, %v3806
      %v3808 = vpop.f32.mrb[0].mxu0
      %3809 = vdwg.mxu0
      %v3810 = vld [vmem:[#allocation2] sm:$0xff]
      %v3811 = vld [vmem:[#allocation2 + $0x8] sm:$0xff]
      %v3812 = vld [vmem:[#allocation2 + $0x10] sm:$0xff]
      %v3813 = vld [vmem:[#allocation2 + $0x18] sm:$0xff]
      %v3814 = vld [vmem:[#allocation2 + $0x20] sm:$0xff]
      %v3815 = vld [vmem:[#allocation2 + $0x28] sm:$0xff]
      %v3816 = vld [vmem:[#allocation2 + $0x30] sm:$0xff]
      %v3817 = vld [vmem:[#allocation2 + $0x38] sm:$0xff]
      %v3818 = vmul.f32 %v3810, 0.99
      %v3819 = vmul.f32 %v3811, 0.99
      %v3820 = vmul.f32 %v3812, 0.99
      %v3821 = vmul.f32 %v3813, 0.99
      %v3822 = vmul.f32 %v3814, 0.99
      %v3823 = vmul.f32 %v3815, 0.99
      %v3824 = vmul.f32 %v3816, 0.99
      %v3825 = vmul.f32 %v3817, 0.99
      %v3826 = vadd.f32 %v3818, %v3772
      %v3827 = vadd.f32 %v3819, %v3777
      %v3828 = vadd.f32 %v3820, %v3782
      %v3829 = vadd.f32 %v3821, %v3787
      %v3830 = vadd.f32 %v3822, %v3792
      %v3831 = vadd.f32 %v3823, %v3797
      %v3832 = vadd.f32 %v3824, %v3802
      %v3833 = vadd.f32 %v3825, %v3807
      %vm3834 = vcmp.ge.f32.partialorder %v3826, 1.0
      %vm3835 = vcmp.ge.f32.partialorder %v3827, 1.0
      %vm3836 = vcmp.ge.f32.partialorder %v3828, 1.0
      %vm3837 = vcmp.ge.f32.partialorder %v3829, 1.0
      %vm3838 = vcmp.ge.f32.partialorder %v3830, 1.0
      %vm3839 = vcmp.ge.f32.partialorder %v3831, 1.0
      %vm3840 = vcmp.ge.f32.partialorder %v3832, 1.0
      %vm3841 = vcmp.ge.f32.partialorder %v3833, 1.0
      %v3842 = vsel %vm3834, 1, 0
      %v3843 = vsel %vm3835, 1, 0
      %v3844 = vsel %vm3836, 1, 0
      %v3845 = vsel %vm3837, 1, 0
      %v3846 = vsel %vm3838, 1, 0
      %v3847 = vsel %vm3839, 1, 0
      %v3848 = vsel %vm3840, 1, 0
      %v3849 = vsel %vm3841, 1, 0
      %v3850 = vcvt.s32.f32 %v3842
      %v3851 = vcvt.s32.f32 %v3843
      %v3852 = vcvt.s32.f32 %v3844
      %v3853 = vcvt.s32.f32 %v3845
      %v3854 = vcvt.s32.f32 %v3846
      %v3855 = vcvt.s32.f32 %v3847
      %v3856 = vcvt.s32.f32 %v3848
      %v3857 = vcvt.s32.f32 %v3849
      %v3858 = vsub.f32 %v3826, %v3850
      %v3859 = vsub.f32 %v3827, %v3851
      %v3860 = vsub.f32 %v3828, %v3852
      %v3861 = vsub.f32 %v3829, %v3853
      %v3862 = vsub.f32 %v3830, %v3854
      %v3863 = vsub.f32 %v3831, %v3855
      %v3864 = vsub.f32 %v3832, %v3856
      %v3865 = vsub.f32 %v3833, %v3857
      %3866 = vst.msk [vmem:[#allocation2] sm:$0xff] %vm699, %v3858
      %3867 = vst.msk [vmem:[#allocation2 + $0x8] sm:$0xff] %vm699, %v3859
      %3868 = vst.msk [vmem:[#allocation2 + $0x10] sm:$0xff] %vm699, %v3860
      %3869 = vst.msk [vmem:[#allocation2 + $0x18] sm:$0xff] %vm699, %v3861
      %3870 = vst.msk [vmem:[#allocation2 + $0x20] sm:$0xff] %vm699, %v3862
      %3871 = vst.msk [vmem:[#allocation2 + $0x28] sm:$0xff] %vm699, %v3863
      %3872 = vst.msk [vmem:[#allocation2 + $0x30] sm:$0xff] %vm699, %v3864
      %3873 = vst.msk [vmem:[#allocation2 + $0x38] sm:$0xff] %vm699, %v3865
      %v3882 = vrot.slane %v3850, 7
      %v3883 = vrot.slane %v3851, 7
      %v3884 = vsel %vm417, %v3882, %v3883
      %v3885 = vrot.slane %v3852, 7
      %v3886 = vsel %vm417, %v3883, %v3885
      %v3887 = vrot.slane %v3853, 7
      %v3888 = vsel %vm417, %v3885, %v3887
      %v3889 = vrot.slane %v3854, 7
      %v3890 = vsel %vm417, %v3887, %v3889
      %v3891 = vrot.slane %v3855, 7
      %v3892 = vsel %vm417, %v3889, %v3891
      %v3893 = vrot.slane %v3856, 7
      %v3894 = vsel %vm417, %v3891, %v3893
      %v3895 = vrot.slane %v3857, 7
      %v3896 = vsel %vm417, %v3893, %v3895
      %v3905 = vsel %vm417, 0.0, %v3882
      %v3906 = vmul.f32 %v3905, %v339
      %v3907 = vmul.f32 %v3884, %v340
      %v3908 = vmul.f32 %v3886, %v341
      %v3909 = vmul.f32 %v3888, %v342
      %v3910 = vmul.f32 %v3890, %v343
      %v3911 = vmul.f32 %v3892, %v344
      %v3912 = vmul.f32 %v3894, %v345
      %v3913 = vmul.f32 %v3896, %v346
      %v3914 = vmul.f32 %v3905, %v340
      %v3915 = vmul.f32 %v3884, %v341
      %v3916 = vmul.f32 %v3886, %v342
      %v3917 = vmul.f32 %v3888, %v343
      %v3918 = vmul.f32 %v3890, %v344
      %v3919 = vmul.f32 %v3892, %v345
      %v3920 = vmul.f32 %v3894, %v346
      %3929 = vrot.lane.b32.xlu0 %v3906, 32
      %v3930 = vpop.permute.xlu0 %3929
      %3931 = vrot.lane.b32.xlu0 %v3907, 32
      %v3932 = vpop.permute.xlu0 %3931
      %3933 = vrot.lane.b32.xlu0 %v3908, 32
      %v3934 = vpop.permute.xlu0 %3933
      %3935 = vrot.lane.b32.xlu0 %v3909, 32
      %v3936 = vpop.permute.xlu0 %3935
      %3937 = vrot.lane.b32.xlu0 %v3910, 32
      %v3938 = vpop.permute.xlu0 %3937
      %3939 = vrot.lane.b32.xlu0 %v3911, 32
      %v3940 = vpop.permute.xlu0 %3939
      %3941 = vrot.lane.b32.xlu0 %v3912, 32
      %v3942 = vpop.permute.xlu0 %3941
      %3943 = vrot.lane.b32.xlu0 %v3913, 32
      %v3944 = vpop.permute.xlu0 %3943
      %3953 = vrot.lane.b32.xlu0 %v3850, 64
      %v3954 = vpop.permute.xlu0 %3953
      %3955 = vrot.lane.b32.xlu0 %v3851, 64
      %v3956 = vpop.permute.xlu0 %3955
      %3957 = vrot.lane.b32.xlu0 %v3852, 64
      %v3958 = vpop.permute.xlu0 %3957
      %3959 = vrot.lane.b32.xlu0 %v3853, 64
      %v3960 = vpop.permute.xlu0 %3959
      %3961 = vrot.lane.b32.xlu0 %v3854, 64
      %v3962 = vpop.permute.xlu0 %3961
      %3963 = vrot.lane.b32.xlu0 %v3855, 64
      %v3964 = vpop.permute.xlu0 %3963
      %3965 = vrot.lane.b32.xlu0 %v3856, 64
      %v3966 = vpop.permute.xlu0 %3965
      %3981 = vrot.lane.b32.xlu0 %v3914, 96
      %v3982 = vpop.permute.xlu0 %3981
      %3983 = vrot.lane.b32.xlu0 %v3915, 96
      %v3984 = vpop.permute.xlu0 %3983
      %3985 = vrot.lane.b32.xlu0 %v3916, 96
      %v3986 = vpop.permute.xlu0 %3985
      %3987 = vrot.lane.b32.xlu0 %v3917, 96
      %v3988 = vpop.permute.xlu0 %3987
      %3989 = vrot.lane.b32.xlu0 %v3918, 96
      %v3990 = vpop.permute.xlu0 %3989
      %3991 = vrot.lane.b32.xlu0 %v3919, 96
      %v3992 = vpop.permute.xlu0 %3991
      %3993 = vrot.lane.b32.xlu0 %v3920, 96
      %v3994 = vpop.permute.xlu0 %3993
      %v4002 = vsel %vm699, %v3850, %v3930
      %v4003 = vsel %vm699, %v3851, %v3932
      %v4004 = vsel %vm699, %v3852, %v3934
      %v4005 = vsel %vm699, %v3853, %v3936
      %v4006 = vsel %vm699, %v3854, %v3938
      %v4007 = vsel %vm699, %v3855, %v3940
      %v4008 = vsel %vm699, %v3856, %v3942
      %v4009 = vsel %vm699, %v3857, %v3944
      %v4010 = vsel %vm717, %v4002, %v1431
      %v4011 = vsel %vm717, %v4003, %v3954
      %v4012 = vsel %vm717, %v4004, %v3956
      %v4013 = vsel %vm717, %v4005, %v3958
      %v4014 = vsel %vm717, %v4006, %v3960
      %v4015 = vsel %vm717, %v4007, %v3962
      %v4016 = vsel %vm717, %v4008, %v3964
      %v4017 = vsel %vm717, %v4009, %v3966
      %v4018 = vsel %vm735, %v4010, %v1462
      %v4019 = vsel %vm735, %v4011, %v3982
      %v4020 = vsel %vm735, %v4012, %v3984
      %v4021 = vsel %vm735, %v4013, %v3986
      %v4022 = vsel %vm735, %v4014, %v3988
      %v4023 = vsel %vm735, %v4015, %v3990
      %v4024 = vsel %vm735, %v4016, %v3992
      %v4025 = vsel %vm735, %v4017, %v3994
      %4026 = vmatprep.subr.mxu0 0.0
      %4027 = vmatpush1.msra.mxu0 %v915
      %4028 = vmatprep.subr.mxu0 0.0
      %4029 = vmatpush1.msra.mxu0 %v916
      %4030 = vmatprep.subr.mxu0 0.0
      %4031 = vmatpush1.msra.mxu0 %v917
      %4032 = vmatprep.subr.mxu0 0.0
      %4033 = vmatpush1.msra.mxu0 %v918
      %4034 = vmatprep.subr.mxu0 0.0
      %4035 = vmatpush1.msra.mxu0 %v919
      %4036 = vmatprep.subr.mxu0 0.0
      %4037 = vmatpush1.msra.mxu0 %v920
      %4038 = vmatprep.subr.mxu0 0.0
      %4039 = vmatpush1.msra.mxu0 %v921
      %4040 = vmatprep.subr.mxu0 0.0
      %4041 = vmatpush1.msra.mxu0 %v922
      %4042 = vmatprep.subr.mxu0 0.0
      %4043 = vmatpush1.msra.mxu0 %v923
      %4044 = vmatprep.subr.mxu0 0.0
      %4045 = vmatpush1.msra.mxu0 %v924
      %4046 = vmatprep.subr.mxu0 0.0
      %4047 = vmatpush1.msra.mxu0 %v925
      %4048 = vmatprep.subr.mxu0 0.0
      %4049 = vmatpush1.msra.mxu0 %v926
      %4050 = vmatprep.subr.mxu0 0.0
      %4051 = vmatpush1.msra.mxu0 %v927
      %4052 = vmatprep.subr.mxu0 0.0
      %4053 = vmatpush1.msra.mxu0 %v928
      %4054 = vmatprep.subr.mxu0 0.0
      %4055 = vmatpush1.msra.mxu0 %v929
      %4056 = vmatprep.subr.mxu0 0.0
      %4057 = vmatpush1.msra.mxu0 %v930
      %4058 = vmatprep.subr.mxu0 0.0
      %4059 = vmatpush1.msra.mxu0 0.0
      %4060 = vmatprep.subr.mxu0 0.0
      %4061 = vmatpush1.msra.mxu0 0.0
      %4062 = vmatprep.subr.mxu0 0.0
      %4063 = vmatpush1.msra.mxu0 0.0
      %4064 = vmatprep.subr.mxu0 0.0
      %4065 = vmatpush1.msra.mxu0 0.0
      %4066 = vmatprep.subr.mxu0 0.0
      %4067 = vmatpush1.msra.mxu0 0.0
      %4068 = vmatprep.subr.mxu0 0.0
      %4069 = vmatpush1.msra.mxu0 0.0
      %4070 = vmatprep.subr.mxu0 0.0
      %4071 = vmatpush1.msra.mxu0 0.0
      %4072 = vmatprep.subr.mxu0 0.0
      %4073 = vmatpush1.msra.mxu0 0.0
      %4074 = vmatprep.subr.mxu0 0.0
      %4075 = vmatpush1.msra.mxu0 0.0
      %4076 = vmatprep.subr.mxu0 0.0
      %4077 = vmatpush1.msra.mxu0 0.0
      %4078 = vmatprep.subr.mxu0 0.0
      %4079 = vmatpush1.msra.mxu0 0.0
      %4080 = vmatprep.subr.mxu0 0.0
      %4081 = vmatpush1.msra.mxu0 0.0
      %4082 = vmatprep.subr.mxu0 0.0
      %4083 = vmatpush1.msra.mxu0 0.0
      %4084 = vmatprep.subr.mxu0 0.0
      %4085 = vmatpush1.msra.mxu0 0.0
      %4086 = vmatprep.subr.mxu0 0.0
      %4087 = vmatpush1.msra.mxu0 0.0
      %4088 = vmatprep.subr.mxu0 0.0
      %4089 = vmatpush1.msra.mxu0 0.0
      %4090 = vmatprep.mubr.f32.mxu0 0.0
      %4091 = vmatmul.mubr.f32.gmra.mrb[0].mxu0 %v4018
      %v4092 = vpop.f32.mrb[0].mxu0
      %v4093 = vadd.f32 %v1513, %v4092
      %v4094 = vpop.f32.mrb[0].mxu0
      %4095 = vmatprep.mubr.f32.mxu0 0.0
      %4096 = vmatmul.mubr.f32.gmra.mrb[0].mxu0 %v4019
      %v4097 = vpop.f32.mrb[0].mxu0
      %v4098 = vadd.f32 %v1513, %v4097
      %v4099 = vpop.f32.mrb[0].mxu0
      %4100 = vmatprep.mubr.f32.mxu0 0.0
      %4101 = vmatmul.mubr.f32.gmra.mrb[0].mxu0 %v4020
      %v4102 = vpop.f32.mrb[0].mxu0
      %v4103 = vadd.f32 %v1513, %v4102
      %v4104 = vpop.f32.mrb[0].mxu0
      %4105 = vmatprep.mubr.f32.mxu0 0.0
      %4106 = vmatmul.mubr.f32.gmra.mrb[0].mxu0 %v4021
      %v4107 = vpop.f32.mrb[0].mxu0
      %v4108 = vadd.f32 %v1513, %v4107
      %v4109 = vpop.f32.mrb[0].mxu0
      %4110 = vmatprep.mubr.f32.mxu0 0.0
      %4111 = vmatmul.mubr.f32.gmra.mrb[0].mxu0 %v4022
      %v4112 = vpop.f32.mrb[0].mxu0
      %v4113 = vadd.f32 %v1513, %v4112
      %v4114 = vpop.f32.mrb[0].mxu0
      %4115 = vmatprep.mubr.f32.mxu0 0.0
      %4116 = vmatmul.mubr.f32.gmra.mrb[0].mxu0 %v4023
      %v4117 = vpop.f32.mrb[0].mxu0
      %v4118 = vadd.f32 %v1513, %v4117
      %v4119 = vpop.f32.mrb[0].mxu0
      %4120 = vmatprep.mubr.f32.mxu0 0.0
      %4121 = vmatmul.mubr.f32.gmra.mrb[0].mxu0 %v4024
      %v4122 = vpop.f32.mrb[0].mxu0
      %v4123 = vadd.f32 %v1513, %v4122
      %v4124 = vpop.f32.mrb[0].mxu0
      %4125 = vmatprep.mubr.f32.mxu0 0.0
      %4126 = vmatmul.mubr.f32.gmra.mrb[0].mxu0 %v4025
      %v4127 = vpop.f32.mrb[0].mxu0
      %v4128 = vadd.f32 %v1513, %v4127
      %v4129 = vpop.f32.mrb[0].mxu0
      %4130 = vdwg.mxu0
      %v4131 = vld [vmem:[#allocation3] sm:$0xff]
      %v4132 = vld [vmem:[#allocation3 + $0x8] sm:$0xff]
      %v4133 = vld [vmem:[#allocation3 + $0x10] sm:$0xff]
      %v4134 = vld [vmem:[#allocation3 + $0x18] sm:$0xff]
      %v4135 = vld [vmem:[#allocation3 + $0x20] sm:$0xff]
      %v4136 = vld [vmem:[#allocation3 + $0x28] sm:$0xff]
      %v4137 = vld [vmem:[#allocation3 + $0x30] sm:$0xff]
      %v4138 = vld [vmem:[#allocation3 + $0x38] sm:$0xff]
      %v4139 = vmul.f32 %v4131, 0.99
      %v4140 = vmul.f32 %v4132, 0.99
      %v4141 = vmul.f32 %v4133, 0.99
      %v4142 = vmul.f32 %v4134, 0.99
      %v4143 = vmul.f32 %v4135, 0.99
      %v4144 = vmul.f32 %v4136, 0.99
      %v4145 = vmul.f32 %v4137, 0.99
      %v4146 = vmul.f32 %v4138, 0.99
      %v4147 = vadd.f32 %v4139, %v4093
      %v4148 = vadd.f32 %v4140, %v4098
      %v4149 = vadd.f32 %v4141, %v4103
      %v4150 = vadd.f32 %v4142, %v4108
      %v4151 = vadd.f32 %v4143, %v4113
      %v4152 = vadd.f32 %v4144, %v4118
      %v4153 = vadd.f32 %v4145, %v4123
      %v4154 = vadd.f32 %v4146, %v4128
      %vm4155 = vcmp.ge.f32.partialorder %v4147, 1.0
      %vm4156 = vcmp.ge.f32.partialorder %v4148, 1.0
      %vm4157 = vcmp.ge.f32.partialorder %v4149, 1.0
      %vm4158 = vcmp.ge.f32.partialorder %v4150, 1.0
      %vm4159 = vcmp.ge.f32.partialorder %v4151, 1.0
      %vm4160 = vcmp.ge.f32.partialorder %v4152, 1.0
      %vm4161 = vcmp.ge.f32.partialorder %v4153, 1.0
      %vm4162 = vcmp.ge.f32.partialorder %v4154, 1.0
      %v4163 = vsel %vm4155, 1, 0
      %v4164 = vsel %vm4156, 1, 0
      %v4165 = vsel %vm4157, 1, 0
      %v4166 = vsel %vm4158, 1, 0
      %v4167 = vsel %vm4159, 1, 0
      %v4168 = vsel %vm4160, 1, 0
      %v4169 = vsel %vm4161, 1, 0
      %v4170 = vsel %vm4162, 1, 0
      %v4171 = vcvt.s32.f32 %v4163
      %v4172 = vcvt.s32.f32 %v4164
      %v4173 = vcvt.s32.f32 %v4165
      %v4174 = vcvt.s32.f32 %v4166
      %v4175 = vcvt.s32.f32 %v4167
      %v4176 = vcvt.s32.f32 %v4168
      %v4177 = vcvt.s32.f32 %v4169
      %v4178 = vcvt.s32.f32 %v4170
      %v4179 = vsub.f32 %v4147, %v4171
      %v4180 = vsub.f32 %v4148, %v4172
      %v4181 = vsub.f32 %v4149, %v4173
      %v4182 = vsub.f32 %v4150, %v4174
      %v4183 = vsub.f32 %v4151, %v4175
      %v4184 = vsub.f32 %v4152, %v4176
      %v4185 = vsub.f32 %v4153, %v4177
      %v4186 = vsub.f32 %v4154, %v4178
      %4187 = vst.msk [vmem:[#allocation3] sm:$0xff] %vm690, %v4179
      %4188 = vst.msk [vmem:[#allocation3 + $0x8] sm:$0xff] %vm690, %v4180
      %4189 = vst.msk [vmem:[#allocation3 + $0x10] sm:$0xff] %vm690, %v4181
      %4190 = vst.msk [vmem:[#allocation3 + $0x18] sm:$0xff] %vm690, %v4182
      %4191 = vst.msk [vmem:[#allocation3 + $0x20] sm:$0xff] %vm690, %v4183
      %4192 = vst.msk [vmem:[#allocation3 + $0x28] sm:$0xff] %vm690, %v4184
      %4193 = vst.msk [vmem:[#allocation3 + $0x30] sm:$0xff] %vm690, %v4185
      %4194 = vst.msk [vmem:[#allocation3 + $0x38] sm:$0xff] %vm690, %v4186
      %v4202 = vrot.slane %v4171, 7
      %v4203 = vrot.slane %v4172, 7
      %v4204 = vsel %vm417, %v4202, %v4203
      %v4205 = vrot.slane %v4173, 7
      %v4206 = vsel %vm417, %v4203, %v4205
      %v4207 = vrot.slane %v4174, 7
      %v4208 = vsel %vm417, %v4205, %v4207
      %v4209 = vrot.slane %v4175, 7
      %v4210 = vsel %vm417, %v4207, %v4209
      %v4211 = vrot.slane %v4176, 7
      %v4212 = vsel %vm417, %v4209, %v4211
      %v4213 = vrot.slane %v4177, 7
      %v4214 = vsel %vm417, %v4211, %v4213
      %v4222 = vsel %vm417, 0.0, %v4202
      %v4223 = vmul.f32 %v4222, %v340
      %v4224 = vmul.f32 %v4204, %v341
      %v4225 = vmul.f32 %v4206, %v342
      %v4226 = vmul.f32 %v4208, %v343
      %v4227 = vmul.f32 %v4210, %v344
      %v4228 = vmul.f32 %v4212, %v345
      %v4229 = vmul.f32 %v4214, %v346
      %v4231 = vrot.slane %v4171, 1
      %v4232 = vrot.slane %v4172, 1
      %v4233 = vsel %vm386, %v4231, %v4232
      %v4234 = vrot.slane %v4173, 1
      %v4235 = vsel %vm386, %v4232, %v4234
      %v4236 = vrot.slane %v4174, 1
      %v4237 = vsel %vm386, %v4234, %v4236
      %v4238 = vrot.slane %v4175, 1
      %v4239 = vsel %vm386, %v4236, %v4238
      %v4240 = vrot.slane %v4176, 1
      %v4241 = vsel %vm386, %v4238, %v4240
      %v4242 = vrot.slane %v4177, 1
      %v4243 = vsel %vm386, %v4240, %v4242
      %v4244 = vrot.slane %v4178, 1
      %v4245 = vsel %vm386, %v4242, %v4244
      %v4254 = vsel %vm386, 0.0, %v4231
      %v4255 = vmul.f32 %v4254, %v363
      %v4256 = vmul.f32 %v4233, %v364
      %v4257 = vmul.f32 %v4235, %v365
      %v4258 = vmul.f32 %v4237, %v366
      %v4259 = vmul.f32 %v4239, %v367
      %v4260 = vmul.f32 %v4241, %v368
      %v4261 = vmul.f32 %v4243, %v369
      %v4262 = vmul.f32 %v4245, %v370
      %v4263 = vrot.slane %v4178, 7
      %v4264 = vsel %vm417, %v4213, %v4263
      %v4266 = vmul.f32 %v4222, %v339
      %v4267 = vmul.f32 %v4204, %v340
      %v4268 = vmul.f32 %v4206, %v341
      %v4269 = vmul.f32 %v4208, %v342
      %v4270 = vmul.f32 %v4210, %v343
      %v4271 = vmul.f32 %v4212, %v344
      %v4272 = vmul.f32 %v4214, %v345
      %v4273 = vmul.f32 %v4264, %v346
      %v4275 = vsel %vm386, %v4244, 0.0
      %v4276 = vmul.f32 %v4233, %v363
      %v4277 = vmul.f32 %v4235, %v364
      %v4278 = vmul.f32 %v4237, %v365
      %v4279 = vmul.f32 %v4239, %v366
      %v4280 = vmul.f32 %v4241, %v367
      %v4281 = vmul.f32 %v4243, %v368
      %v4282 = vmul.f32 %v4245, %v369
      %v4283 = vmul.f32 %v4275, %v370
      %v4285 = vsel %vm417, %v4263, 0.0
      %v4286 = vmul.f32 %v4204, %v339
      %v4287 = vmul.f32 %v4206, %v340
      %v4288 = vmul.f32 %v4208, %v341
      %v4289 = vmul.f32 %v4210, %v342
      %v4290 = vmul.f32 %v4212, %v343
      %v4291 = vmul.f32 %v4214, %v344
      %v4292 = vmul.f32 %v4264, %v345
      %v4293 = vmul.f32 %v4285, %v346
      %v4294 = vmul.f32 %v4235, %v363
      %v4295 = vmul.f32 %v4237, %v364
      %v4296 = vmul.f32 %v4239, %v365
      %v4297 = vmul.f32 %v4241, %v366
      %v4298 = vmul.f32 %v4243, %v367
      %v4299 = vmul.f32 %v4245, %v368
      %v4300 = vmul.f32 %v4275, %v369
      %4301 = vrot.lane.b32.xlu0 %v4171, 16
      %v4302 = vpop.permute.xlu0 %4301
      %4303 = vrot.lane.b32.xlu0 %v4172, 16
      %v4304 = vpop.permute.xlu0 %4303
      %4305 = vrot.lane.b32.xlu0 %v4173, 16
      %v4306 = vpop.permute.xlu0 %4305
      %4307 = vrot.lane.b32.xlu0 %v4174, 16
      %v4308 = vpop.permute.xlu0 %4307
      %4309 = vrot.lane.b32.xlu0 %v4175, 16
      %v4310 = vpop.permute.xlu0 %4309
      %4311 = vrot.lane.b32.xlu0 %v4176, 16
      %v4312 = vpop.permute.xlu0 %4311
      %4313 = vrot.lane.b32.xlu0 %v4177, 16
      %v4314 = vpop.permute.xlu0 %4313
      %4330 = vrot.lane.b32.xlu0 %v4255, 32
      %v4331 = vpop.permute.xlu0 %4330
      %4332 = vrot.lane.b32.xlu0 %v4256, 32
      %v4333 = vpop.permute.xlu0 %4332
      %4334 = vrot.lane.b32.xlu0 %v4257, 32
      %v4335 = vpop.permute.xlu0 %4334
      %4336 = vrot.lane.b32.xlu0 %v4258, 32
      %v4337 = vpop.permute.xlu0 %4336
      %4338 = vrot.lane.b32.xlu0 %v4259, 32
      %v4339 = vpop.permute.xlu0 %4338
      %4340 = vrot.lane.b32.xlu0 %v4260, 32
      %v4341 = vpop.permute.xlu0 %4340
      %4342 = vrot.lane.b32.xlu0 %v4261, 32
      %v4343 = vpop.permute.xlu0 %4342
      %4344 = vrot.lane.b32.xlu0 %v4262, 32
      %v4345 = vpop.permute.xlu0 %4344
      %4362 = vrot.lane.b32.xlu0 %v4266, 48
      %v4363 = vpop.permute.xlu0 %4362
      %4364 = vrot.lane.b32.xlu0 %v4267, 48
      %v4365 = vpop.permute.xlu0 %4364
      %4366 = vrot.lane.b32.xlu0 %v4268, 48
      %v4367 = vpop.permute.xlu0 %4366
      %4368 = vrot.lane.b32.xlu0 %v4269, 48
      %v4369 = vpop.permute.xlu0 %4368
      %4370 = vrot.lane.b32.xlu0 %v4270, 48
      %v4371 = vpop.permute.xlu0 %4370
      %4372 = vrot.lane.b32.xlu0 %v4271, 48
      %v4373 = vpop.permute.xlu0 %4372
      %4374 = vrot.lane.b32.xlu0 %v4272, 48
      %v4375 = vpop.permute.xlu0 %4374
      %4376 = vrot.lane.b32.xlu0 %v4273, 48
      %v4377 = vpop.permute.xlu0 %4376
      %4386 = vrot.lane.b32.xlu0 %v4171, 64
      %v4387 = vpop.permute.xlu0 %4386
      %4388 = vrot.lane.b32.xlu0 %v4172, 64
      %v4389 = vpop.permute.xlu0 %4388
      %4390 = vrot.lane.b32.xlu0 %v4173, 64
      %v4391 = vpop.permute.xlu0 %4390
      %4392 = vrot.lane.b32.xlu0 %v4174, 64
      %v4393 = vpop.permute.xlu0 %4392
      %4394 = vrot.lane.b32.xlu0 %v4175, 64
      %v4395 = vpop.permute.xlu0 %4394
      %4396 = vrot.lane.b32.xlu0 %v4176, 64
      %v4397 = vpop.permute.xlu0 %4396
      %4398 = vrot.lane.b32.xlu0 %v4177, 64
      %v4399 = vpop.permute.xlu0 %4398
      %4400 = vrot.lane.b32.xlu0 %v4178, 64
      %v4401 = vpop.permute.xlu0 %4400
      %4418 = vrot.lane.b32.xlu0 %v4276, 80
      %v4419 = vpop.permute.xlu0 %4418
      %4420 = vrot.lane.b32.xlu0 %v4277, 80
      %v4421 = vpop.permute.xlu0 %4420
      %4422 = vrot.lane.b32.xlu0 %v4278, 80
      %v4423 = vpop.permute.xlu0 %4422
      %4424 = vrot.lane.b32.xlu0 %v4279, 80
      %v4425 = vpop.permute.xlu0 %4424
      %4426 = vrot.lane.b32.xlu0 %v4280, 80
      %v4427 = vpop.permute.xlu0 %4426
      %4428 = vrot.lane.b32.xlu0 %v4281, 80
      %v4429 = vpop.permute.xlu0 %4428
      %4430 = vrot.lane.b32.xlu0 %v4282, 80
      %v4431 = vpop.permute.xlu0 %4430
      %4432 = vrot.lane.b32.xlu0 %v4283, 80
      %v4433 = vpop.permute.xlu0 %4432
      %4450 = vrot.lane.b32.xlu0 %v4286, 96
      %v4451 = vpop.permute.xlu0 %4450
      %4452 = vrot.lane.b32.xlu0 %v4287, 96
      %v4453 = vpop.permute.xlu0 %4452
      %4454 = vrot.lane.b32.xlu0 %v4288, 96
      %v4455 = vpop.permute.xlu0 %4454
      %4456 = vrot.lane.b32.xlu0 %v4289, 96
      %v4457 = vpop.permute.xlu0 %4456
      %4458 = vrot.lane.b32.xlu0 %v4290, 96
      %v4459 = vpop.permute.xlu0 %4458
      %4460 = vrot.lane.b32.xlu0 %v4291, 96
      %v4461 = vpop.permute.xlu0 %4460
      %4462 = vrot.lane.b32.xlu0 %v4292, 96
      %v4463 = vpop.permute.xlu0 %4462
      %4464 = vrot.lane.b32.xlu0 %v4293, 96
      %v4465 = vpop.permute.xlu0 %4464
      %4474 = vrot.lane.b32.xlu0 %v4172, 112
      %v4475 = vpop.permute.xlu0 %4474
      %4476 = vrot.lane.b32.xlu0 %v4173, 112
      %v4477 = vpop.permute.xlu0 %4476
      %4478 = vrot.lane.b32.xlu0 %v4174, 112
      %v4479 = vpop.permute.xlu0 %4478
      %4480 = vrot.lane.b32.xlu0 %v4175, 112
      %v4481 = vpop.permute.xlu0 %4480
      %4482 = vrot.lane.b32.xlu0 %v4176, 112
      %v4483 = vpop.permute.xlu0 %4482
      %4484 = vrot.lane.b32.xlu0 %v4177, 112
      %v4485 = vpop.permute.xlu0 %4484
      %4486 = vrot.lane.b32.xlu0 %v4178, 112
      %v4487 = vpop.permute.xlu0 %4486
      %v4495 = vsel %vm690, %v4223, %v4302
      %v4496 = vsel %vm690, %v4224, %v4304
      %v4497 = vsel %vm690, %v4225, %v4306
      %v4498 = vsel %vm690, %v4226, %v4308
      %v4499 = vsel %vm690, %v4227, %v4310
      %v4500 = vsel %vm690, %v4228, %v4312
      %v4501 = vsel %vm690, %v4229, %v4314
      %v4502 = vsel %vm699, %v1984, %v4331
      %v4503 = vsel %vm699, %v4495, %v4333
      %v4504 = vsel %vm699, %v4496, %v4335
      %v4505 = vsel %vm699, %v4497, %v4337
      %v4506 = vsel %vm699, %v4498, %v4339
      %v4507 = vsel %vm699, %v4499, %v4341
      %v4508 = vsel %vm699, %v4500, %v4343
      %v4509 = vsel %vm699, %v4501, %v4345
      %v4510 = vsel %vm708, %v4502, %v4363
      %v4511 = vsel %vm708, %v4503, %v4365
      %v4512 = vsel %vm708, %v4504, %v4367
      %v4513 = vsel %vm708, %v4505, %v4369
      %v4514 = vsel %vm708, %v4506, %v4371
      %v4515 = vsel %vm708, %v4507, %v4373
      %v4516 = vsel %vm708, %v4508, %v4375
      %v4517 = vsel %vm708, %v4509, %v4377
      %v4518 = vsel %vm717, %v4510, %v4387
      %v4519 = vsel %vm717, %v4511, %v4389
      %v4520 = vsel %vm717, %v4512, %v4391
      %v4521 = vsel %vm717, %v4513, %v4393
      %v4522 = vsel %vm717, %v4514, %v4395
      %v4523 = vsel %vm717, %v4515, %v4397
      %v4524 = vsel %vm717, %v4516, %v4399
      %v4525 = vsel %vm717, %v4517, %v4401
      %v4526 = vsel %vm726, %v4518, %v4419
      %v4527 = vsel %vm726, %v4519, %v4421
      %v4528 = vsel %vm726, %v4520, %v4423
      %v4529 = vsel %vm726, %v4521, %v4425
      %v4530 = vsel %vm726, %v4522, %v4427
      %v4531 = vsel %vm726, %v4523, %v4429
      %v4532 = vsel %vm726, %v4524, %v4431
      %v4533 = vsel %vm726, %v4525, %v4433
      %v4534 = vsel %vm735, %v4526, %v4451
      %v4535 = vsel %vm735, %v4527, %v4453
      %v4536 = vsel %vm735, %v4528, %v4455
      %v4537 = vsel %vm735, %v4529, %v4457
      %v4538 = vsel %vm735, %v4530, %v4459
      %v4539 = vsel %vm735, %v4531, %v4461
      %v4540 = vsel %vm735, %v4532, %v4463
      %v4541 = vsel %vm735, %v4533, %v4465
      %v4542 = vsel %vm744, %v4534, %v4475
      %v4543 = vsel %vm744, %v4535, %v4477
      %v4544 = vsel %vm744, %v4536, %v4479
      %v4545 = vsel %vm744, %v4537, %v4481
      %v4546 = vsel %vm744, %v4538, %v4483
      %v4547 = vsel %vm744, %v4539, %v4485
      %v4548 = vsel %vm744, %v4540, %v4487
      %v4549 = vsel %vm744, %v4541, %v667
      %v4551 = vsel %vm690, %v4294, 0
      %v4554 = vsel %vm690, %v4295, 0
      %v4557 = vsel %vm690, %v4296, 0
      %v4560 = vsel %vm690, %v4297, 0
      %v4563 = vsel %vm690, %v4298, 0
      %v4566 = vsel %vm690, %v4299, 0
      %v4569 = vsel %vm690, %v4300, 0
      %4571 = vmatprep.subr.mxu0 0.0
      %4572 = vmatpush1.msra.mxu0 %v932
      %4573 = vmatprep.subr.mxu0 0.0
      %4574 = vmatpush1.msra.mxu0 %v933
      %4575 = vmatprep.subr.mxu0 0.0
      %4576 = vmatpush1.msra.mxu0 %v934
      %4577 = vmatprep.subr.mxu0 0.0
      %4578 = vmatpush1.msra.mxu0 %v935
      %4579 = vmatprep.subr.mxu0 0.0
      %4580 = vmatpush1.msra.mxu0 %v936
      %4581 = vmatprep.subr.mxu0 0.0
      %4582 = vmatpush1.msra.mxu0 %v937
      %4583 = vmatprep.subr.mxu0 0.0
      %4584 = vmatpush1.msra.mxu0 %v938
      %4585 = vmatprep.subr.mxu0 0.0
      %4586 = vmatpush1.msra.mxu0 %v939
      %4587 = vmatprep.subr.mxu0 0.0
      %4588 = vmatpush1.msra.mxu0 %v940
      %4589 = vmatprep.subr.mxu0 0.0
      %4590 = vmatpush1.msra.mxu0 %v941
      %4591 = vmatprep.subr.mxu0 0.0
      %4592 = vmatpush1.msra.mxu0 %v942
      %4593 = vmatprep.subr.mxu0 0.0
      %4594 = vmatpush1.msra.mxu0 %v943
      %4595 = vmatprep.subr.mxu0 0.0
      %4596 = vmatpush1.msra.mxu0 %v944
      %4597 = vmatprep.subr.mxu0 0.0
      %4598 = vmatpush1.msra.mxu0 %v945
      %4599 = vmatprep.subr.mxu0 0.0
      %4600 = vmatpush1.msra.mxu0 %v946
      %4601 = vmatprep.subr.mxu0 0.0
      %4602 = vmatpush1.msra.mxu0 %v947
      %4603 = vmatprep.subr.mxu0 0.0
      %4604 = vmatpush1.msra.mxu0 %v948
      %4605 = vmatprep.subr.mxu0 0.0
      %4606 = vmatpush1.msra.mxu0 %v949
      %4607 = vmatprep.subr.mxu0 0.0
      %4608 = vmatpush1.msra.mxu0 0.0
      %4609 = vmatprep.subr.mxu0 0.0
      %4610 = vmatpush1.msra.mxu0 0.0
      %4611 = vmatprep.subr.mxu0 0.0
      %4612 = vmatpush1.msra.mxu0 0.0
      %4613 = vmatprep.subr.mxu0 0.0
      %4614 = vmatpush1.msra.mxu0 0.0
      %4615 = vmatprep.subr.mxu0 0.0
      %4616 = vmatpush1.msra.mxu0 0.0
      %4617 = vmatprep.subr.mxu0 0.0
      %4618 = vmatpush1.msra.mxu0 0.0
      %4619 = vmatprep.subr.mxu0 0.0
      %4620 = vmatpush1.msra.mxu0 0.0
      %4621 = vmatprep.subr.mxu0 0.0
      %4622 = vmatpush1.msra.mxu0 0.0
      %4623 = vmatprep.subr.mxu0 0.0
      %4624 = vmatpush1.msra.mxu0 0.0
      %4625 = vmatprep.subr.mxu0 0.0
      %4626 = vmatpush1.msra.mxu0 0.0
      %4627 = vmatprep.subr.mxu0 0.0
      %4628 = vmatpush1.msra.mxu0 0.0
      %4629 = vmatprep.subr.mxu0 0.0
      %4630 = vmatpush1.msra.mxu0 0.0
      %4631 = vmatprep.subr.mxu0 0.0
      %4632 = vmatpush1.msra.mxu0 0.0
      %4633 = vmatprep.subr.mxu0 0.0
      %4634 = vmatpush1.msra.mxu0 0.0
      %4635 = vmatprep.mubr.f32.mxu0 %v4551
      %4636 = vmatmul.mubr.f32.gmra.mrb[0].mxu0 %v4542
      %v4637 = vpop.f32.mrb[0].mxu0
      %v4638 = vadd.f32 %v2044, %v4637
      %v4639 = vpop.f32.mrb[0].mxu0
      %4640 = vmatprep.mubr.f32.mxu0 %v4554
      %4641 = vmatmul.mubr.f32.gmra.mrb[0].mxu0 %v4543
      %v4642 = vpop.f32.mrb[0].mxu0
      %v4643 = vadd.f32 %v2044, %v4642
      %v4644 = vpop.f32.mrb[0].mxu0
      %4645 = vmatprep.mubr.f32.mxu0 %v4557
      %4646 = vmatmul.mubr.f32.gmra.mrb[0].mxu0 %v4544
      %v4647 = vpop.f32.mrb[0].mxu0
      %v4648 = vadd.f32 %v2044, %v4647
      %v4649 = vpop.f32.mrb[0].mxu0
      %4650 = vmatprep.mubr.f32.mxu0 %v4560
      %4651 = vmatmul.mubr.f32.gmra.mrb[0].mxu0 %v4545
      %v4652 = vpop.f32.mrb[0].mxu0
      %v4653 = vadd.f32 %v2044, %v4652
      %v4654 = vpop.f32.mrb[0].mxu0
      %4655 = vmatprep.mubr.f32.mxu0 %v4563
      %4656 = vmatmul.mubr.f32.gmra.mrb[0].mxu0 %v4546
      %v4657 = vpop.f32.mrb[0].mxu0
      %v4658 = vadd.f32 %v2044, %v4657
      %v4659 = vpop.f32.mrb[0].mxu0
      %4660 = vmatprep.mubr.f32.mxu0 %v4566
      %4661 = vmatmul.mubr.f32.gmra.mrb[0].mxu0 %v4547
      %v4662 = vpop.f32.mrb[0].mxu0
      %v4663 = vadd.f32 %v2044, %v4662
      %v4664 = vpop.f32.mrb[0].mxu0
      %4665 = vmatprep.mubr.f32.mxu0 %v4569
      %4666 = vmatmul.mubr.f32.gmra.mrb[0].mxu0 %v4548
      %v4667 = vpop.f32.mrb[0].mxu0
      %v4668 = vadd.f32 %v2044, %v4667
      %v4669 = vpop.f32.mrb[0].mxu0
      %4670 = vmatprep.mubr.f32.mxu0 %v2067
      %4671 = vmatmul.mubr.f32.gmra.mrb[0].mxu0 %v4549
      %v4672 = vpop.f32.mrb[0].mxu0
      %v4673 = vadd.f32 %v2044, %v4672
      %v4674 = vpop.f32.mrb[0].mxu0
      %4675 = vdwg.mxu0
      %v4676 = vld [vmem:[#allocation4] sm:$0xff]
      %v4677 = vld [vmem:[#allocation4 + $0x8] sm:$0xff]
      %v4678 = vld [vmem:[#allocation4 + $0x10] sm:$0xff]
      %v4679 = vld [vmem:[#allocation4 + $0x18] sm:$0xff]
      %v4680 = vld [vmem:[#allocation4 + $0x20] sm:$0xff]
      %v4681 = vld [vmem:[#allocation4 + $0x28] sm:$0xff]
      %v4682 = vld [vmem:[#allocation4 + $0x30] sm:$0xff]
      %v4683 = vld [vmem:[#allocation4 + $0x38] sm:$0xff]
      %v4684 = vmul.f32 %v4676, 0.99
      %v4685 = vmul.f32 %v4677, 0.99
      %v4686 = vmul.f32 %v4678, 0.99
      %v4687 = vmul.f32 %v4679, 0.99
      %v4688 = vmul.f32 %v4680, 0.99
      %v4689 = vmul.f32 %v4681, 0.99
      %v4690 = vmul.f32 %v4682, 0.99
      %v4691 = vmul.f32 %v4683, 0.99
      %v4692 = vadd.f32 %v4684, %v4638
      %v4693 = vadd.f32 %v4685, %v4643
      %v4694 = vadd.f32 %v4686, %v4648
      %v4695 = vadd.f32 %v4687, %v4653
      %v4696 = vadd.f32 %v4688, %v4658
      %v4697 = vadd.f32 %v4689, %v4663
      %v4698 = vadd.f32 %v4690, %v4668
      %v4699 = vadd.f32 %v4691, %v4673
      %vm4700 = vcmp.ge.f32.partialorder %v4692, 1.0
      %vm4701 = vcmp.ge.f32.partialorder %v4693, 1.0
      %vm4702 = vcmp.ge.f32.partialorder %v4694, 1.0
      %vm4703 = vcmp.ge.f32.partialorder %v4695, 1.0
      %vm4704 = vcmp.ge.f32.partialorder %v4696, 1.0
      %vm4705 = vcmp.ge.f32.partialorder %v4697, 1.0
      %vm4706 = vcmp.ge.f32.partialorder %v4698, 1.0
      %vm4707 = vcmp.ge.f32.partialorder %v4699, 1.0
      %v4708 = vsel %vm4700, 1, 0
      %v4709 = vsel %vm4701, 1, 0
      %v4710 = vsel %vm4702, 1, 0
      %v4711 = vsel %vm4703, 1, 0
      %v4712 = vsel %vm4704, 1, 0
      %v4713 = vsel %vm4705, 1, 0
      %v4714 = vsel %vm4706, 1, 0
      %v4715 = vsel %vm4707, 1, 0
      %v4716 = vcvt.s32.f32 %v4708
      %v4717 = vcvt.s32.f32 %v4709
      %v4718 = vcvt.s32.f32 %v4710
      %v4719 = vcvt.s32.f32 %v4711
      %v4720 = vcvt.s32.f32 %v4712
      %v4721 = vcvt.s32.f32 %v4713
      %v4722 = vcvt.s32.f32 %v4714
      %v4723 = vcvt.s32.f32 %v4715
      %v4724 = vsub.f32 %v4692, %v4716
      %v4725 = vsub.f32 %v4693, %v4717
      %v4726 = vsub.f32 %v4694, %v4718
      %v4727 = vsub.f32 %v4695, %v4719
      %v4728 = vsub.f32 %v4696, %v4720
      %v4729 = vsub.f32 %v4697, %v4721
      %v4730 = vsub.f32 %v4698, %v4722
      %v4731 = vsub.f32 %v4699, %v4723
      %4732 = vst.msk [vmem:[#allocation4] sm:$0xff] %vm690, %v4724
      %4733 = vst.msk [vmem:[#allocation4 + $0x8] sm:$0xff] %vm690, %v4725
      %4734 = vst.msk [vmem:[#allocation4 + $0x10] sm:$0xff] %vm690, %v4726
      %4735 = vst.msk [vmem:[#allocation4 + $0x18] sm:$0xff] %vm690, %v4727
      %4736 = vst.msk [vmem:[#allocation4 + $0x20] sm:$0xff] %vm690, %v4728
      %4737 = vst.msk [vmem:[#allocation4 + $0x28] sm:$0xff] %vm690, %v4729
      %4738 = vst.msk [vmem:[#allocation4 + $0x30] sm:$0xff] %vm690, %v4730
      %4739 = vst.msk [vmem:[#allocation4 + $0x38] sm:$0xff] %vm690, %v4731
      %4740 = vst.msk [vmem:[#allocation5] sm:$0xff] %vm690, %v4716
      %4741 = vst.msk [vmem:[#allocation5 + $0x8] sm:$0xff] %vm690, %v4717
      %4742 = vst.msk [vmem:[#allocation5 + $0x10] sm:$0xff] %vm690, %v4718
      %4743 = vst.msk [vmem:[#allocation5 + $0x18] sm:$0xff] %vm690, %v4719
      %4744 = vst.msk [vmem:[#allocation5 + $0x20] sm:$0xff] %vm690, %v4720
      %4745 = vst.msk [vmem:[#allocation5 + $0x28] sm:$0xff] %vm690, %v4721
      %4746 = vst.msk [vmem:[#allocation5 + $0x30] sm:$0xff] %vm690, %v4722
      %4747 = vst.msk [vmem:[#allocation5 + $0x38] sm:$0xff] %vm690, %v4723
      %v4748 = vld [vmem:[#allocation6] sm:$0xff]
      %v4749 = vld [vmem:[#allocation6 + $0x8] sm:$0xff]
      %v4750 = vld [vmem:[#allocation6 + $0x10] sm:$0xff]
      %v4751 = vld [vmem:[#allocation6 + $0x18] sm:$0xff]
      %v4752 = vld [vmem:[#allocation6 + $0x20] sm:$0xff]
      %v4753 = vld [vmem:[#allocation6 + $0x28] sm:$0xff]
      %v4754 = vld [vmem:[#allocation6 + $0x30] sm:$0xff]
      %v4755 = vld [vmem:[#allocation6 + $0x38] sm:$0xff]
      %v4756 = vadd.f32 %v4748, %v4716
      %v4757 = vadd.f32 %v4749, %v4717
      %v4758 = vadd.f32 %v4750, %v4718
      %v4759 = vadd.f32 %v4751, %v4719
      %v4760 = vadd.f32 %v4752, %v4720
      %v4761 = vadd.f32 %v4753, %v4721
      %v4762 = vadd.f32 %v4754, %v4722
      %v4763 = vadd.f32 %v4755, %v4723
      %4764 = vst.msk [vmem:[#allocation6] sm:$0xff] %vm690, %v4756
      %4765 = vst.msk [vmem:[#allocation6 + $0x8] sm:$0xff] %vm690, %v4757
      %4766 = vst.msk [vmem:[#allocation6 + $0x10] sm:$0xff] %vm690, %v4758
      %4767 = vst.msk [vmem:[#allocation6 + $0x18] sm:$0xff] %vm690, %v4759
      %4768 = vst.msk [vmem:[#allocation6 + $0x20] sm:$0xff] %vm690, %v4760
      %4769 = vst.msk [vmem:[#allocation6 + $0x28] sm:$0xff] %vm690, %v4761
      %4770 = vst.msk [vmem:[#allocation6 + $0x30] sm:$0xff] %vm690, %v4762
      %4771 = vst.msk [vmem:[#allocation6 + $0x38] sm:$0xff] %vm690, %v4763
      %v4772 = vld [vmem:[#allocation5] sm:$0xff]
      %v4773 = vld [vmem:[#allocation5 + $0x8] sm:$0xff]
      %v4774 = vld [vmem:[#allocation5 + $0x10] sm:$0xff]
      %v4775 = vld [vmem:[#allocation5 + $0x18] sm:$0xff]
      %v4776 = vld [vmem:[#allocation5 + $0x20] sm:$0xff]
      %v4777 = vld [vmem:[#allocation5 + $0x28] sm:$0xff]
      %v4778 = vld [vmem:[#allocation5 + $0x30] sm:$0xff]
      %v4779 = vld [vmem:[#allocation5 + $0x38] sm:$0xff]
      %v4788 = vrot.slane %v4772, 1
      %v4789 = vrot.slane %v4773, 1
      %v4790 = vsel %vm386, %v4788, %v4789
      %v4791 = vrot.slane %v4774, 1
      %v4792 = vsel %vm386, %v4789, %v4791
      %v4793 = vrot.slane %v4775, 1
      %v4794 = vsel %vm386, %v4791, %v4793
      %v4795 = vrot.slane %v4776, 1
      %v4796 = vsel %vm386, %v4793, %v4795
      %v4797 = vrot.slane %v4777, 1
      %v4798 = vsel %vm386, %v4795, %v4797
      %v4799 = vrot.slane %v4778, 1
      %v4800 = vsel %vm386, %v4797, %v4799
      %v4801 = vrot.slane %v4779, 1
      %v4802 = vsel %vm386, %v4799, %v4801
      %v4811 = vsel %vm386, %v4801, 0.0
      %v4812 = vmul.f32 %v4790, %v363
      %v4813 = vmul.f32 %v4792, %v364
      %v4814 = vmul.f32 %v4794, %v365
      %v4815 = vmul.f32 %v4796, %v366
      %v4816 = vmul.f32 %v4798, %v367
      %v4817 = vmul.f32 %v4800, %v368
      %v4818 = vmul.f32 %v4802, %v369
      %v4819 = vmul.f32 %v4811, %v370
      %v4820 = vmul.f32 %v4792, %v363
      %v4821 = vmul.f32 %v4794, %v364
      %v4822 = vmul.f32 %v4796, %v365
      %v4823 = vmul.f32 %v4798, %v366
      %v4824 = vmul.f32 %v4800, %v367
      %v4825 = vmul.f32 %v4802, %v368
      %v4826 = vmul.f32 %v4811, %v369
      %4835 = vrot.lane.b32.xlu0 %v4812, 16
      %v4836 = vpop.permute.xlu0 %4835
      %4837 = vrot.lane.b32.xlu0 %v4813, 16
      %v4838 = vpop.permute.xlu0 %4837
      %4839 = vrot.lane.b32.xlu0 %v4814, 16
      %v4840 = vpop.permute.xlu0 %4839
      %4841 = vrot.lane.b32.xlu0 %v4815, 16
      %v4842 = vpop.permute.xlu0 %4841
      %4843 = vrot.lane.b32.xlu0 %v4816, 16
      %v4844 = vpop.permute.xlu0 %4843
      %4845 = vrot.lane.b32.xlu0 %v4817, 16
      %v4846 = vpop.permute.xlu0 %4845
      %4847 = vrot.lane.b32.xlu0 %v4818, 16
      %v4848 = vpop.permute.xlu0 %4847
      %4849 = vrot.lane.b32.xlu0 %v4819, 16
      %v4850 = vpop.permute.xlu0 %4849
      %4859 = vrot.lane.b32.xlu0 %v4773, 32
      %v4860 = vpop.permute.xlu0 %4859
      %4861 = vrot.lane.b32.xlu0 %v4774, 32
      %v4862 = vpop.permute.xlu0 %4861
      %4863 = vrot.lane.b32.xlu0 %v4775, 32
      %v4864 = vpop.permute.xlu0 %4863
      %4865 = vrot.lane.b32.xlu0 %v4776, 32
      %v4866 = vpop.permute.xlu0 %4865
      %4867 = vrot.lane.b32.xlu0 %v4777, 32
      %v4868 = vpop.permute.xlu0 %4867
      %4869 = vrot.lane.b32.xlu0 %v4778, 32
      %v4870 = vpop.permute.xlu0 %4869
      %4871 = vrot.lane.b32.xlu0 %v4779, 32
      %v4872 = vpop.permute.xlu0 %4871
      %4887 = vrot.lane.b32.xlu0 %v4820, 48
      %v4888 = vpop.permute.xlu0 %4887
      %4889 = vrot.lane.b32.xlu0 %v4821, 48
      %v4890 = vpop.permute.xlu0 %4889
      %4891 = vrot.lane.b32.xlu0 %v4822, 48
      %v4892 = vpop.permute.xlu0 %4891
      %4893 = vrot.lane.b32.xlu0 %v4823, 48
      %v4894 = vpop.permute.xlu0 %4893
      %4895 = vrot.lane.b32.xlu0 %v4824, 48
      %v4896 = vpop.permute.xlu0 %4895
      %4897 = vrot.lane.b32.xlu0 %v4825, 48
      %v4898 = vpop.permute.xlu0 %4897
      %4899 = vrot.lane.b32.xlu0 %v4826, 48
      %v4900 = vpop.permute.xlu0 %4899
      %v4908 = vsel %vm690, %v4772, %v4836
      %v4909 = vsel %vm690, %v4773, %v4838
      %v4910 = vsel %vm690, %v4774, %v4840
      %v4911 = vsel %vm690, %v4775, %v4842
      %v4912 = vsel %vm690, %v4776, %v4844
      %v4913 = vsel %vm690, %v4777, %v4846
      %v4914 = vsel %vm690, %v4778, %v4848
      %v4915 = vsel %vm690, %v4779, %v4850
      %v4916 = vsel %vm699, %v4908, %v4860
      %v4917 = vsel %vm699, %v4909, %v4862
      %v4918 = vsel %vm699, %v4910, %v4864
      %v4919 = vsel %vm699, %v4911, %v4866
      %v4920 = vsel %vm699, %v4912, %v4868
      %v4921 = vsel %vm699, %v4913, %v4870
      %v4922 = vsel %vm699, %v4914, %v4872
      %v4923 = vsel %vm699, %v4915, %v1093
      %v4924 = vsel %vm708, %v4916, %v4888
      %v4925 = vsel %vm708, %v4917, %v4890
      %v4926 = vsel %vm708, %v4918, %v4892
      %v4927 = vsel %vm708, %v4919, %v4894
      %v4928 = vsel %vm708, %v4920, %v4896
      %v4929 = vsel %vm708, %v4921, %v4898
      %v4930 = vsel %vm708, %v4922, %v4900
      %v4931 = vsel %vm708, %v4923, %v1125
      %v4933 = vsel %vm717, %v4924, 0
      %v4936 = vsel %vm717, %v4925, 0
      %v4939 = vsel %vm717, %v4926, 0
      %v4942 = vsel %vm717, %v4927, 0
      %v4945 = vsel %vm717, %v4928, 0
      %v4948 = vsel %vm717, %v4929, 0
      %v4951 = vsel %vm717, %v4930, 0
      %v4954 = vsel %vm717, %v4931, 0
      %4956 = vmatprep.subr.mxu0 0.0
      %4957 = vmatpush1.msra.mxu0 %v907
      %4958 = vmatprep.subr.mxu0 0.0
      %4959 = vmatpush1.msra.mxu0 %v908
      %4960 = vmatprep.subr.mxu0 0.0
      %4961 = vmatpush1.msra.mxu0 %v909
      %4962 = vmatprep.subr.mxu0 0.0
      %4963 = vmatpush1.msra.mxu0 %v910
      %4964 = vmatprep.subr.mxu0 0.0
      %4965 = vmatpush1.msra.mxu0 %v911
      %4966 = vmatprep.subr.mxu0 0.0
      %4967 = vmatpush1.msra.mxu0 %v912
      %4968 = vmatprep.subr.mxu0 0.0
      %4969 = vmatpush1.msra.mxu0 %v913
      %4970 = vmatprep.subr.mxu0 0.0
      %4971 = vmatpush1.msra.mxu0 %v914
      %4972 = vmatprep.subr.mxu0 0.0
      %4973 = vmatpush1.msra.mxu0 0.0
      %4974 = vmatprep.subr.mxu0 0.0
      %4975 = vmatpush1.msra.mxu0 0.0
      %4976 = vmatprep.subr.mxu0 0.0
      %4977 = vmatpush1.msra.mxu0 0.0
      %4978 = vmatprep.subr.mxu0 0.0
      %4979 = vmatpush1.msra.mxu0 0.0
      %4980 = vmatprep.subr.mxu0 0.0
      %4981 = vmatpush1.msra.mxu0 0.0
      %4982 = vmatprep.subr.mxu0 0.0
      %4983 = vmatpush1.msra.mxu0 0.0
      %4984 = vmatprep.subr.mxu0 0.0
      %4985 = vmatpush1.msra.mxu0 0.0
      %4986 = vmatprep.subr.mxu0 0.0
      %4987 = vmatpush1.msra.mxu0 0.0
      %4988 = vmatprep.subr.mxu0 0.0
      %4989 = vmatpush1.msra.mxu0 0.0
      %4990 = vmatprep.subr.mxu0 0.0
      %4991 = vmatpush1.msra.mxu0 0.0
      %4992 = vmatprep.subr.mxu0 0.0
      %4993 = vmatpush1.msra.mxu0 0.0
      %4994 = vmatprep.subr.mxu0 0.0
      %4995 = vmatpush1.msra.mxu0 0.0
      %4996 = vmatprep.subr.mxu0 0.0
      %4997 = vmatpush1.msra.mxu0 0.0
      %4998 = vmatprep.subr.mxu0 0.0
      %4999 = vmatpush1.msra.mxu0 0.0
      %5000 = vmatprep.subr.mxu0 0.0
      %5001 = vmatpush1.msra.mxu0 0.0
      %5002 = vmatprep.subr.mxu0 0.0
      %5003 = vmatpush1.msra.mxu0 0.0
      %5004 = vmatprep.subr.mxu0 0.0
      %5005 = vmatpush1.msra.mxu0 0.0
      %5006 = vmatprep.subr.mxu0 0.0
      %5007 = vmatpush1.msra.mxu0 0.0
      %5008 = vmatprep.subr.mxu0 0.0
      %5009 = vmatpush1.msra.mxu0 0.0
      %5010 = vmatprep.subr.mxu0 0.0
      %5011 = vmatpush1.msra.mxu0 0.0
      %5012 = vmatprep.subr.mxu0 0.0
      %5013 = vmatpush1.msra.mxu0 0.0
      %5014 = vmatprep.subr.mxu0 0.0
      %5015 = vmatpush1.msra.mxu0 0.0
      %5016 = vmatprep.subr.mxu0 0.0
      %5017 = vmatpush1.msra.mxu0 0.0
      %5018 = vmatprep.subr.mxu0 0.0
      %5019 = vmatpush1.msra.mxu0 0.0
      %5020 = vmatprep.mubr.f32.mxu0 0.0
      %5021 = vmatmul.mubr.f32.gmra.mrb[0].mxu0 %v4933
      %v5022 = vpop.f32.mrb[0].mxu0
      %v5023 = vadd.f32 %v869, %v5022
      %v5024 = vpop.f32.mrb[0].mxu0
      %5025 = vmatprep.mubr.f32.mxu0 0.0
      %5026 = vmatmul.mubr.f32.gmra.mrb[0].mxu0 %v4936
      %v5027 = vpop.f32.mrb[0].mxu0
      %v5028 = vadd.f32 %v874, %v5027
      %v5029 = vpop.f32.mrb[0].mxu0
      %5030 = vmatprep.mubr.f32.mxu0 0.0
      %5031 = vmatmul.mubr.f32.gmra.mrb[0].mxu0 %v4939
      %v5032 = vpop.f32.mrb[0].mxu0
      %v5033 = vadd.f32 %v879, %v5032
      %v5034 = vpop.f32.mrb[0].mxu0
      %5035 = vmatprep.mubr.f32.mxu0 0.0
      %5036 = vmatmul.mubr.f32.gmra.mrb[0].mxu0 %v4942
      %v5037 = vpop.f32.mrb[0].mxu0
      %v5038 = vadd.f32 %v884, %v5037
      %v5039 = vpop.f32.mrb[0].mxu0
      %5040 = vmatprep.mubr.f32.mxu0 0.0
      %5041 = vmatmul.mubr.f32.gmra.mrb[0].mxu0 %v4945
      %v5042 = vpop.f32.mrb[0].mxu0
      %v5043 = vadd.f32 %v889, %v5042
      %v5044 = vpop.f32.mrb[0].mxu0
      %5045 = vmatprep.mubr.f32.mxu0 0.0
      %5046 = vmatmul.mubr.f32.gmra.mrb[0].mxu0 %v4948
      %v5047 = vpop.f32.mrb[0].mxu0
      %v5048 = vadd.f32 %v894, %v5047
      %v5049 = vpop.f32.mrb[0].mxu0
      %5050 = vmatprep.mubr.f32.mxu0 0.0
      %5051 = vmatmul.mubr.f32.gmra.mrb[0].mxu0 %v4951
      %v5052 = vpop.f32.mrb[0].mxu0
      %v5053 = vadd.f32 %v899, %v5052
      %v5054 = vpop.f32.mrb[0].mxu0
      %5055 = vmatprep.mubr.f32.mxu0 0.0
      %5056 = vmatmul.mubr.f32.gmra.mrb[0].mxu0 %v4954
      %v5057 = vpop.f32.mrb[0].mxu0
      %v5058 = vadd.f32 %v904, %v5057
      %v5059 = vpop.f32.mrb[0].mxu0
      %5060 = vdwg.mxu0
      %v5061 = vld [vmem:[#allocation2] sm:$0xff]
      %v5062 = vld [vmem:[#allocation2 + $0x8] sm:$0xff]
      %v5063 = vld [vmem:[#allocation2 + $0x10] sm:$0xff]
      %v5064 = vld [vmem:[#allocation2 + $0x18] sm:$0xff]
      %v5065 = vld [vmem:[#allocation2 + $0x20] sm:$0xff]
      %v5066 = vld [vmem:[#allocation2 + $0x28] sm:$0xff]
      %v5067 = vld [vmem:[#allocation2 + $0x30] sm:$0xff]
      %v5068 = vld [vmem:[#allocation2 + $0x38] sm:$0xff]
      %v5069 = vmul.f32 %v5061, 0.99
      %v5070 = vmul.f32 %v5062, 0.99
      %v5071 = vmul.f32 %v5063, 0.99
      %v5072 = vmul.f32 %v5064, 0.99
      %v5073 = vmul.f32 %v5065, 0.99
      %v5074 = vmul.f32 %v5066, 0.99
      %v5075 = vmul.f32 %v5067, 0.99
      %v5076 = vmul.f32 %v5068, 0.99
      %v5077 = vadd.f32 %v5069, %v5023
      %v5078 = vadd.f32 %v5070, %v5028
      %v5079 = vadd.f32 %v5071, %v5033
      %v5080 = vadd.f32 %v5072, %v5038
      %v5081 = vadd.f32 %v5073, %v5043
      %v5082 = vadd.f32 %v5074, %v5048
      %v5083 = vadd.f32 %v5075, %v5053
      %v5084 = vadd.f32 %v5076, %v5058
      %vm5085 = vcmp.ge.f32.partialorder %v5077, 1.0
      %vm5086 = vcmp.ge.f32.partialorder %v5078, 1.0
      %vm5087 = vcmp.ge.f32.partialorder %v5079, 1.0
      %vm5088 = vcmp.ge.f32.partialorder %v5080, 1.0
      %vm5089 = vcmp.ge.f32.partialorder %v5081, 1.0
      %vm5090 = vcmp.ge.f32.partialorder %v5082, 1.0
      %vm5091 = vcmp.ge.f32.partialorder %v5083, 1.0
      %vm5092 = vcmp.ge.f32.partialorder %v5084, 1.0
      %v5093 = vsel %vm5085, 1, 0
      %v5094 = vsel %vm5086, 1, 0
      %v5095 = vsel %vm5087, 1, 0
      %v5096 = vsel %vm5088, 1, 0
      %v5097 = vsel %vm5089, 1, 0
      %v5098 = vsel %vm5090, 1, 0
      %v5099 = vsel %vm5091, 1, 0
      %v5100 = vsel %vm5092, 1, 0
      %v5101 = vcvt.s32.f32 %v5093
      %v5102 = vcvt.s32.f32 %v5094
      %v5103 = vcvt.s32.f32 %v5095
      %v5104 = vcvt.s32.f32 %v5096
      %v5105 = vcvt.s32.f32 %v5097
      %v5106 = vcvt.s32.f32 %v5098
      %v5107 = vcvt.s32.f32 %v5099
      %v5108 = vcvt.s32.f32 %v5100
      %v5109 = vsub.f32 %v5077, %v5101
      %v5110 = vsub.f32 %v5078, %v5102
      %v5111 = vsub.f32 %v5079, %v5103
      %v5112 = vsub.f32 %v5080, %v5104
      %v5113 = vsub.f32 %v5081, %v5105
      %v5114 = vsub.f32 %v5082, %v5106
      %v5115 = vsub.f32 %v5083, %v5107
      %v5116 = vsub.f32 %v5084, %v5108
      %5117 = vst.msk [vmem:[#allocation2] sm:$0xff] %vm699, %v5109
      %5118 = vst.msk [vmem:[#allocation2 + $0x8] sm:$0xff] %vm699, %v5110
      %5119 = vst.msk [vmem:[#allocation2 + $0x10] sm:$0xff] %vm699, %v5111
      %5120 = vst.msk [vmem:[#allocation2 + $0x18] sm:$0xff] %vm699, %v5112
      %5121 = vst.msk [vmem:[#allocation2 + $0x20] sm:$0xff] %vm699, %v5113
      %5122 = vst.msk [vmem:[#allocation2 + $0x28] sm:$0xff] %vm699, %v5114
      %5123 = vst.msk [vmem:[#allocation2 + $0x30] sm:$0xff] %vm699, %v5115
      %5124 = vst.msk [vmem:[#allocation2 + $0x38] sm:$0xff] %vm699, %v5116
      %v5133 = vrot.slane %v5101, 7
      %v5134 = vrot.slane %v5102, 7
      %v5135 = vsel %vm417, %v5133, %v5134
      %v5136 = vrot.slane %v5103, 7
      %v5137 = vsel %vm417, %v5134, %v5136
      %v5138 = vrot.slane %v5104, 7
      %v5139 = vsel %vm417, %v5136, %v5138
      %v5140 = vrot.slane %v5105, 7
      %v5141 = vsel %vm417, %v5138, %v5140
      %v5142 = vrot.slane %v5106, 7
      %v5143 = vsel %vm417, %v5140, %v5142
      %v5144 = vrot.slane %v5107, 7
      %v5145 = vsel %vm417, %v5142, %v5144
      %v5146 = vrot.slane %v5108, 7
      %v5147 = vsel %vm417, %v5144, %v5146
      %v5156 = vsel %vm417, 0.0, %v5133
      %v5157 = vmul.f32 %v5156, %v339
      %v5158 = vmul.f32 %v5135, %v340
      %v5159 = vmul.f32 %v5137, %v341
      %v5160 = vmul.f32 %v5139, %v342
      %v5161 = vmul.f32 %v5141, %v343
      %v5162 = vmul.f32 %v5143, %v344
      %v5163 = vmul.f32 %v5145, %v345
      %v5164 = vmul.f32 %v5147, %v346
      %v5165 = vmul.f32 %v5156, %v340
      %v5166 = vmul.f32 %v5135, %v341
      %v5167 = vmul.f32 %v5137, %v342
      %v5168 = vmul.f32 %v5139, %v343
      %v5169 = vmul.f32 %v5141, %v344
      %v5170 = vmul.f32 %v5143, %v345
      %v5171 = vmul.f32 %v5145, %v346
      %5180 = vrot.lane.b32.xlu0 %v5157, 32
      %v5181 = vpop.permute.xlu0 %5180
      %5182 = vrot.lane.b32.xlu0 %v5158, 32
      %v5183 = vpop.permute.xlu0 %5182
      %5184 = vrot.lane.b32.xlu0 %v5159, 32
      %v5185 = vpop.permute.xlu0 %5184
      %5186 = vrot.lane.b32.xlu0 %v5160, 32
      %v5187 = vpop.permute.xlu0 %5186
      %5188 = vrot.lane.b32.xlu0 %v5161, 32
      %v5189 = vpop.permute.xlu0 %5188
      %5190 = vrot.lane.b32.xlu0 %v5162, 32
      %v5191 = vpop.permute.xlu0 %5190
      %5192 = vrot.lane.b32.xlu0 %v5163, 32
      %v5193 = vpop.permute.xlu0 %5192
      %5194 = vrot.lane.b32.xlu0 %v5164, 32
      %v5195 = vpop.permute.xlu0 %5194
      %5204 = vrot.lane.b32.xlu0 %v5101, 64
      %v5205 = vpop.permute.xlu0 %5204
      %5206 = vrot.lane.b32.xlu0 %v5102, 64
      %v5207 = vpop.permute.xlu0 %5206
      %5208 = vrot.lane.b32.xlu0 %v5103, 64
      %v5209 = vpop.permute.xlu0 %5208
      %5210 = vrot.lane.b32.xlu0 %v5104, 64
      %v5211 = vpop.permute.xlu0 %5210
      %5212 = vrot.lane.b32.xlu0 %v5105, 64
      %v5213 = vpop.permute.xlu0 %5212
      %5214 = vrot.lane.b32.xlu0 %v5106, 64
      %v5215 = vpop.permute.xlu0 %5214
      %5216 = vrot.lane.b32.xlu0 %v5107, 64
      %v5217 = vpop.permute.xlu0 %5216
      %5232 = vrot.lane.b32.xlu0 %v5165, 96
      %v5233 = vpop.permute.xlu0 %5232
      %5234 = vrot.lane.b32.xlu0 %v5166, 96
      %v5235 = vpop.permute.xlu0 %5234
      %5236 = vrot.lane.b32.xlu0 %v5167, 96
      %v5237 = vpop.permute.xlu0 %5236
      %5238 = vrot.lane.b32.xlu0 %v5168, 96
      %v5239 = vpop.permute.xlu0 %5238
      %5240 = vrot.lane.b32.xlu0 %v5169, 96
      %v5241 = vpop.permute.xlu0 %5240
      %5242 = vrot.lane.b32.xlu0 %v5170, 96
      %v5243 = vpop.permute.xlu0 %5242
      %5244 = vrot.lane.b32.xlu0 %v5171, 96
      %v5245 = vpop.permute.xlu0 %5244
      %v5253 = vsel %vm699, %v5101, %v5181
      %v5254 = vsel %vm699, %v5102, %v5183
      %v5255 = vsel %vm699, %v5103, %v5185
      %v5256 = vsel %vm699, %v5104, %v5187
      %v5257 = vsel %vm699, %v5105, %v5189
      %v5258 = vsel %vm699, %v5106, %v5191
      %v5259 = vsel %vm699, %v5107, %v5193
      %v5260 = vsel %vm699, %v5108, %v5195
      %v5261 = vsel %vm717, %v5253, %v1431
      %v5262 = vsel %vm717, %v5254, %v5205
      %v5263 = vsel %vm717, %v5255, %v5207
      %v5264 = vsel %vm717, %v5256, %v5209
      %v5265 = vsel %vm717, %v5257, %v5211
      %v5266 = vsel %vm717, %v5258, %v5213
      %v5267 = vsel %vm717, %v5259, %v5215
      %v5268 = vsel %vm717, %v5260, %v5217
      %v5269 = vsel %vm735, %v5261, %v1462
      %v5270 = vsel %vm735, %v5262, %v5233
      %v5271 = vsel %vm735, %v5263, %v5235
      %v5272 = vsel %vm735, %v5264, %v5237
      %v5273 = vsel %vm735, %v5265, %v5239
      %v5274 = vsel %vm735, %v5266, %v5241
      %v5275 = vsel %vm735, %v5267, %v5243
      %v5276 = vsel %vm735, %v5268, %v5245
      %5277 = vmatprep.subr.mxu0 0.0
      %5278 = vmatpush1.msra.mxu0 %v915
      %5279 = vmatprep.subr.mxu0 0.0
      %5280 = vmatpush1.msra.mxu0 %v916
      %5281 = vmatprep.subr.mxu0 0.0
      %5282 = vmatpush1.msra.mxu0 %v917
      %5283 = vmatprep.subr.mxu0 0.0
      %5284 = vmatpush1.msra.mxu0 %v918
      %5285 = vmatprep.subr.mxu0 0.0
      %5286 = vmatpush1.msra.mxu0 %v919
      %5287 = vmatprep.subr.mxu0 0.0
      %5288 = vmatpush1.msra.mxu0 %v920
      %5289 = vmatprep.subr.mxu0 0.0
      %5290 = vmatpush1.msra.mxu0 %v921
      %5291 = vmatprep.subr.mxu0 0.0
      %5292 = vmatpush1.msra.mxu0 %v922
      %5293 = vmatprep.subr.mxu0 0.0
      %5294 = vmatpush1.msra.mxu0 %v923
      %5295 = vmatprep.subr.mxu0 0.0
      %5296 = vmatpush1.msra.mxu0 %v924
      %5297 = vmatprep.subr.mxu0 0.0
      %5298 = vmatpush1.msra.mxu0 %v925
      %5299 = vmatprep.subr.mxu0 0.0
      %5300 = vmatpush1.msra.mxu0 %v926
      %5301 = vmatprep.subr.mxu0 0.0
      %5302 = vmatpush1.msra.mxu0 %v927
      %5303 = vmatprep.subr.mxu0 0.0
      %5304 = vmatpush1.msra.mxu0 %v928
      %5305 = vmatprep.subr.mxu0 0.0
      %5306 = vmatpush1.msra.mxu0 %v929
      %5307 = vmatprep.subr.mxu0 0.0
      %5308 = vmatpush1.msra.mxu0 %v930
      %5309 = vmatprep.subr.mxu0 0.0
      %5310 = vmatpush1.msra.mxu0 0.0
      %5311 = vmatprep.subr.mxu0 0.0
      %5312 = vmatpush1.msra.mxu0 0.0
      %5313 = vmatprep.subr.mxu0 0.0
      %5314 = vmatpush1.msra.mxu0 0.0
      %5315 = vmatprep.subr.mxu0 0.0
      %5316 = vmatpush1.msra.mxu0 0.0
      %5317 = vmatprep.subr.mxu0 0.0
      %5318 = vmatpush1.msra.mxu0 0.0
      %5319 = vmatprep.subr.mxu0 0.0
      %5320 = vmatpush1.msra.mxu0 0.0
      %5321 = vmatprep.subr.mxu0 0.0
      %5322 = vmatpush1.msra.mxu0 0.0
      %5323 = vmatprep.subr.mxu0 0.0
      %5324 = vmatpush1.msra.mxu0 0.0
      %5325 = vmatprep.subr.mxu0 0.0
      %5326 = vmatpush1.msra.mxu0 0.0
      %5327 = vmatprep.subr.mxu0 0.0
      %5328 = vmatpush1.msra.mxu0 0.0
      %5329 = vmatprep.subr.mxu0 0.0
      %5330 = vmatpush1.msra.mxu0 0.0
      %5331 = vmatprep.subr.mxu0 0.0
      %5332 = vmatpush1.msra.mxu0 0.0
      %5333 = vmatprep.subr.mxu0 0.0
      %5334 = vmatpush1.msra.mxu0 0.0
      %5335 = vmatprep.subr.mxu0 0.0
      %5336 = vmatpush1.msra.mxu0 0.0
      %5337 = vmatprep.subr.mxu0 0.0
      %5338 = vmatpush1.msra.mxu0 0.0
      %5339 = vmatprep.subr.mxu0 0.0
      %5340 = vmatpush1.msra.mxu0 0.0
      %5341 = vmatprep.mubr.f32.mxu0 0.0
      %5342 = vmatmul.mubr.f32.gmra.mrb[0].mxu0 %v5269
      %v5343 = vpop.f32.mrb[0].mxu0
      %v5344 = vadd.f32 %v1513, %v5343
      %v5345 = vpop.f32.mrb[0].mxu0
      %5346 = vmatprep.mubr.f32.mxu0 0.0
      %5347 = vmatmul.mubr.f32.gmra.mrb[0].mxu0 %v5270
      %v5348 = vpop.f32.mrb[0].mxu0
      %v5349 = vadd.f32 %v1513, %v5348
      %v5350 = vpop.f32.mrb[0].mxu0
      %5351 = vmatprep.mubr.f32.mxu0 0.0
      %5352 = vmatmul.mubr.f32.gmra.mrb[0].mxu0 %v5271
      %v5353 = vpop.f32.mrb[0].mxu0
      %v5354 = vadd.f32 %v1513, %v5353
      %v5355 = vpop.f32.mrb[0].mxu0
      %5356 = vmatprep.mubr.f32.mxu0 0.0
      %5357 = vmatmul.mubr.f32.gmra.mrb[0].mxu0 %v5272
      %v5358 = vpop.f32.mrb[0].mxu0
      %v5359 = vadd.f32 %v1513, %v5358
      %v5360 = vpop.f32.mrb[0].mxu0
      %5361 = vmatprep.mubr.f32.mxu0 0.0
      %5362 = vmatmul.mubr.f32.gmra.mrb[0].mxu0 %v5273
      %v5363 = vpop.f32.mrb[0].mxu0
      %v5364 = vadd.f32 %v1513, %v5363
      %v5365 = vpop.f32.mrb[0].mxu0
      %5366 = vmatprep.mubr.f32.mxu0 0.0
      %5367 = vmatmul.mubr.f32.gmra.mrb[0].mxu0 %v5274
      %v5368 = vpop.f32.mrb[0].mxu0
      %v5369 = vadd.f32 %v1513, %v5368
      %v5370 = vpop.f32.mrb[0].mxu0
      %5371 = vmatprep.mubr.f32.mxu0 0.0
      %5372 = vmatmul.mubr.f32.gmra.mrb[0].mxu0 %v5275
      %v5373 = vpop.f32.mrb[0].mxu0
      %v5374 = vadd.f32 %v1513, %v5373
      %v5375 = vpop.f32.mrb[0].mxu0
      %5376 = vmatprep.mubr.f32.mxu0 0.0
      %5377 = vmatmul.mubr.f32.gmra.mrb[0].mxu0 %v5276
      %v5378 = vpop.f32.mrb[0].mxu0
      %v5379 = vadd.f32 %v1513, %v5378
      %v5380 = vpop.f32.mrb[0].mxu0
      %5381 = vdwg.mxu0
      %v5382 = vld [vmem:[#allocation3] sm:$0xff]
      %v5383 = vld [vmem:[#allocation3 + $0x8] sm:$0xff]
      %v5384 = vld [vmem:[#allocation3 + $0x10] sm:$0xff]
      %v5385 = vld [vmem:[#allocation3 + $0x18] sm:$0xff]
      %v5386 = vld [vmem:[#allocation3 + $0x20] sm:$0xff]
      %v5387 = vld [vmem:[#allocation3 + $0x28] sm:$0xff]
      %v5388 = vld [vmem:[#allocation3 + $0x30] sm:$0xff]
      %v5389 = vld [vmem:[#allocation3 + $0x38] sm:$0xff]
      %v5390 = vmul.f32 %v5382, 0.99
      %v5391 = vmul.f32 %v5383, 0.99
      %v5392 = vmul.f32 %v5384, 0.99
      %v5393 = vmul.f32 %v5385, 0.99
      %v5394 = vmul.f32 %v5386, 0.99
      %v5395 = vmul.f32 %v5387, 0.99
      %v5396 = vmul.f32 %v5388, 0.99
      %v5397 = vmul.f32 %v5389, 0.99
      %v5398 = vadd.f32 %v5390, %v5344
      %v5399 = vadd.f32 %v5391, %v5349
      %v5400 = vadd.f32 %v5392, %v5354
      %v5401 = vadd.f32 %v5393, %v5359
      %v5402 = vadd.f32 %v5394, %v5364
      %v5403 = vadd.f32 %v5395, %v5369
      %v5404 = vadd.f32 %v5396, %v5374
      %v5405 = vadd.f32 %v5397, %v5379
      %vm5406 = vcmp.ge.f32.partialorder %v5398, 1.0
      %vm5407 = vcmp.ge.f32.partialorder %v5399, 1.0
      %vm5408 = vcmp.ge.f32.partialorder %v5400, 1.0
      %vm5409 = vcmp.ge.f32.partialorder %v5401, 1.0
      %vm5410 = vcmp.ge.f32.partialorder %v5402, 1.0
      %vm5411 = vcmp.ge.f32.partialorder %v5403, 1.0
      %vm5412 = vcmp.ge.f32.partialorder %v5404, 1.0
      %vm5413 = vcmp.ge.f32.partialorder %v5405, 1.0
      %v5414 = vsel %vm5406, 1, 0
      %v5415 = vsel %vm5407, 1, 0
      %v5416 = vsel %vm5408, 1, 0
      %v5417 = vsel %vm5409, 1, 0
      %v5418 = vsel %vm5410, 1, 0
      %v5419 = vsel %vm5411, 1, 0
      %v5420 = vsel %vm5412, 1, 0
      %v5421 = vsel %vm5413, 1, 0
      %v5422 = vcvt.s32.f32 %v5414
      %v5423 = vcvt.s32.f32 %v5415
      %v5424 = vcvt.s32.f32 %v5416
      %v5425 = vcvt.s32.f32 %v5417
      %v5426 = vcvt.s32.f32 %v5418
      %v5427 = vcvt.s32.f32 %v5419
      %v5428 = vcvt.s32.f32 %v5420
      %v5429 = vcvt.s32.f32 %v5421
      %v5430 = vsub.f32 %v5398, %v5422
      %v5431 = vsub.f32 %v5399, %v5423
      %v5432 = vsub.f32 %v5400, %v5424
      %v5433 = vsub.f32 %v5401, %v5425
      %v5434 = vsub.f32 %v5402, %v5426
      %v5435 = vsub.f32 %v5403, %v5427
      %v5436 = vsub.f32 %v5404, %v5428
      %v5437 = vsub.f32 %v5405, %v5429
      %5438 = vst.msk [vmem:[#allocation3] sm:$0xff] %vm690, %v5430
      %5439 = vst.msk [vmem:[#allocation3 + $0x8] sm:$0xff] %vm690, %v5431
      %5440 = vst.msk [vmem:[#allocation3 + $0x10] sm:$0xff] %vm690, %v5432
      %5441 = vst.msk [vmem:[#allocation3 + $0x18] sm:$0xff] %vm690, %v5433
      %5442 = vst.msk [vmem:[#allocation3 + $0x20] sm:$0xff] %vm690, %v5434
      %5443 = vst.msk [vmem:[#allocation3 + $0x28] sm:$0xff] %vm690, %v5435
      %5444 = vst.msk [vmem:[#allocation3 + $0x30] sm:$0xff] %vm690, %v5436
      %5445 = vst.msk [vmem:[#allocation3 + $0x38] sm:$0xff] %vm690, %v5437
      %v5453 = vrot.slane %v5422, 7
      %v5454 = vrot.slane %v5423, 7
      %v5455 = vsel %vm417, %v5453, %v5454
      %v5456 = vrot.slane %v5424, 7
      %v5457 = vsel %vm417, %v5454, %v5456
      %v5458 = vrot.slane %v5425, 7
      %v5459 = vsel %vm417, %v5456, %v5458
      %v5460 = vrot.slane %v5426, 7
      %v5461 = vsel %vm417, %v5458, %v5460
      %v5462 = vrot.slane %v5427, 7
      %v5463 = vsel %vm417, %v5460, %v5462
      %v5464 = vrot.slane %v5428, 7
      %v5465 = vsel %vm417, %v5462, %v5464
      %v5473 = vsel %vm417, 0.0, %v5453
      %v5474 = vmul.f32 %v5473, %v340
      %v5475 = vmul.f32 %v5455, %v341
      %v5476 = vmul.f32 %v5457, %v342
      %v5477 = vmul.f32 %v5459, %v343
      %v5478 = vmul.f32 %v5461, %v344
      %v5479 = vmul.f32 %v5463, %v345
      %v5480 = vmul.f32 %v5465, %v346
      %v5482 = vrot.slane %v5422, 1
      %v5483 = vrot.slane %v5423, 1
      %v5484 = vsel %vm386, %v5482, %v5483
      %v5485 = vrot.slane %v5424, 1
      %v5486 = vsel %vm386, %v5483, %v5485
      %v5487 = vrot.slane %v5425, 1
      %v5488 = vsel %vm386, %v5485, %v5487
      %v5489 = vrot.slane %v5426, 1
      %v5490 = vsel %vm386, %v5487, %v5489
      %v5491 = vrot.slane %v5427, 1
      %v5492 = vsel %vm386, %v5489, %v5491
      %v5493 = vrot.slane %v5428, 1
      %v5494 = vsel %vm386, %v5491, %v5493
      %v5495 = vrot.slane %v5429, 1
      %v5496 = vsel %vm386, %v5493, %v5495
      %v5505 = vsel %vm386, 0.0, %v5482
      %v5506 = vmul.f32 %v5505, %v363
      %v5507 = vmul.f32 %v5484, %v364
      %v5508 = vmul.f32 %v5486, %v365
      %v5509 = vmul.f32 %v5488, %v366
      %v5510 = vmul.f32 %v5490, %v367
      %v5511 = vmul.f32 %v5492, %v368
      %v5512 = vmul.f32 %v5494, %v369
      %v5513 = vmul.f32 %v5496, %v370
      %v5514 = vrot.slane %v5429, 7
      %v5515 = vsel %vm417, %v5464, %v5514
      %v5517 = vmul.f32 %v5473, %v339
      %v5518 = vmul.f32 %v5455, %v340
      %v5519 = vmul.f32 %v5457, %v341
      %v5520 = vmul.f32 %v5459, %v342
      %v5521 = vmul.f32 %v5461, %v343
      %v5522 = vmul.f32 %v5463, %v344
      %v5523 = vmul.f32 %v5465, %v345
      %v5524 = vmul.f32 %v5515, %v346
      %v5526 = vsel %vm386, %v5495, 0.0
      %v5527 = vmul.f32 %v5484, %v363
      %v5528 = vmul.f32 %v5486, %v364
      %v5529 = vmul.f32 %v5488, %v365
      %v5530 = vmul.f32 %v5490, %v366
      %v5531 = vmul.f32 %v5492, %v367
      %v5532 = vmul.f32 %v5494, %v368
      %v5533 = vmul.f32 %v5496, %v369
      %v5534 = vmul.f32 %v5526, %v370
      %v5536 = vsel %vm417, %v5514, 0.0
      %v5537 = vmul.f32 %v5455, %v339
      %v5538 = vmul.f32 %v5457, %v340
      %v5539 = vmul.f32 %v5459, %v341
      %v5540 = vmul.f32 %v5461, %v342
      %v5541 = vmul.f32 %v5463, %v343
      %v5542 = vmul.f32 %v5465, %v344
      %v5543 = vmul.f32 %v5515, %v345
      %v5544 = vmul.f32 %v5536, %v346
      %v5545 = vmul.f32 %v5486, %v363
      %v5546 = vmul.f32 %v5488, %v364
      %v5547 = vmul.f32 %v5490, %v365
      %v5548 = vmul.f32 %v5492, %v366
      %v5549 = vmul.f32 %v5494, %v367
      %v5550 = vmul.f32 %v5496, %v368
      %v5551 = vmul.f32 %v5526, %v369
      %5552 = vrot.lane.b32.xlu0 %v5422, 16
      %v5553 = vpop.permute.xlu0 %5552
      %5554 = vrot.lane.b32.xlu0 %v5423, 16
      %v5555 = vpop.permute.xlu0 %5554
      %5556 = vrot.lane.b32.xlu0 %v5424, 16
      %v5557 = vpop.permute.xlu0 %5556
      %5558 = vrot.lane.b32.xlu0 %v5425, 16
      %v5559 = vpop.permute.xlu0 %5558
      %5560 = vrot.lane.b32.xlu0 %v5426, 16
      %v5561 = vpop.permute.xlu0 %5560
      %5562 = vrot.lane.b32.xlu0 %v5427, 16
      %v5563 = vpop.permute.xlu0 %5562
      %5564 = vrot.lane.b32.xlu0 %v5428, 16
      %v5565 = vpop.permute.xlu0 %5564
      %5581 = vrot.lane.b32.xlu0 %v5506, 32
      %v5582 = vpop.permute.xlu0 %5581
      %5583 = vrot.lane.b32.xlu0 %v5507, 32
      %v5584 = vpop.permute.xlu0 %5583
      %5585 = vrot.lane.b32.xlu0 %v5508, 32
      %v5586 = vpop.permute.xlu0 %5585
      %5587 = vrot.lane.b32.xlu0 %v5509, 32
      %v5588 = vpop.permute.xlu0 %5587
      %5589 = vrot.lane.b32.xlu0 %v5510, 32
      %v5590 = vpop.permute.xlu0 %5589
      %5591 = vrot.lane.b32.xlu0 %v5511, 32
      %v5592 = vpop.permute.xlu0 %5591
      %5593 = vrot.lane.b32.xlu0 %v5512, 32
      %v5594 = vpop.permute.xlu0 %5593
      %5595 = vrot.lane.b32.xlu0 %v5513, 32
      %v5596 = vpop.permute.xlu0 %5595
      %5613 = vrot.lane.b32.xlu0 %v5517, 48
      %v5614 = vpop.permute.xlu0 %5613
      %5615 = vrot.lane.b32.xlu0 %v5518, 48
      %v5616 = vpop.permute.xlu0 %5615
      %5617 = vrot.lane.b32.xlu0 %v5519, 48
      %v5618 = vpop.permute.xlu0 %5617
      %5619 = vrot.lane.b32.xlu0 %v5520, 48
      %v5620 = vpop.permute.xlu0 %5619
      %5621 = vrot.lane.b32.xlu0 %v5521, 48
      %v5622 = vpop.permute.xlu0 %5621
      %5623 = vrot.lane.b32.xlu0 %v5522, 48
      %v5624 = vpop.permute.xlu0 %5623
      %5625 = vrot.lane.b32.xlu0 %v5523, 48
      %v5626 = vpop.permute.xlu0 %5625
      %5627 = vrot.lane.b32.xlu0 %v5524, 48
      %v5628 = vpop.permute.xlu0 %5627
      %5637 = vrot.lane.b32.xlu0 %v5422, 64
      %v5638 = vpop.permute.xlu0 %5637
      %5639 = vrot.lane.b32.xlu0 %v5423, 64
      %v5640 = vpop.permute.xlu0 %5639
      %5641 = vrot.lane.b32.xlu0 %v5424, 64
      %v5642 = vpop.permute.xlu0 %5641
      %5643 = vrot.lane.b32.xlu0 %v5425, 64
      %v5644 = vpop.permute.xlu0 %5643
      %5645 = vrot.lane.b32.xlu0 %v5426, 64
      %v5646 = vpop.permute.xlu0 %5645
      %5647 = vrot.lane.b32.xlu0 %v5427, 64
      %v5648 = vpop.permute.xlu0 %5647
      %5649 = vrot.lane.b32.xlu0 %v5428, 64
      %v5650 = vpop.permute.xlu0 %5649
      %5651 = vrot.lane.b32.xlu0 %v5429, 64
      %v5652 = vpop.permute.xlu0 %5651
      %5669 = vrot.lane.b32.xlu0 %v5527, 80
      %v5670 = vpop.permute.xlu0 %5669
      %5671 = vrot.lane.b32.xlu0 %v5528, 80
      %v5672 = vpop.permute.xlu0 %5671
      %5673 = vrot.lane.b32.xlu0 %v5529, 80
      %v5674 = vpop.permute.xlu0 %5673
      %5675 = vrot.lane.b32.xlu0 %v5530, 80
      %v5676 = vpop.permute.xlu0 %5675
      %5677 = vrot.lane.b32.xlu0 %v5531, 80
      %v5678 = vpop.permute.xlu0 %5677
      %5679 = vrot.lane.b32.xlu0 %v5532, 80
      %v5680 = vpop.permute.xlu0 %5679
      %5681 = vrot.lane.b32.xlu0 %v5533, 80
      %v5682 = vpop.permute.xlu0 %5681
      %5683 = vrot.lane.b32.xlu0 %v5534, 80
      %v5684 = vpop.permute.xlu0 %5683
      %5701 = vrot.lane.b32.xlu0 %v5537, 96
      %v5702 = vpop.permute.xlu0 %5701
      %5703 = vrot.lane.b32.xlu0 %v5538, 96
      %v5704 = vpop.permute.xlu0 %5703
      %5705 = vrot.lane.b32.xlu0 %v5539, 96
      %v5706 = vpop.permute.xlu0 %5705
      %5707 = vrot.lane.b32.xlu0 %v5540, 96
      %v5708 = vpop.permute.xlu0 %5707
      %5709 = vrot.lane.b32.xlu0 %v5541, 96
      %v5710 = vpop.permute.xlu0 %5709
      %5711 = vrot.lane.b32.xlu0 %v5542, 96
      %v5712 = vpop.permute.xlu0 %5711
      %5713 = vrot.lane.b32.xlu0 %v5543, 96
      %v5714 = vpop.permute.xlu0 %5713
      %5715 = vrot.lane.b32.xlu0 %v5544, 96
      %v5716 = vpop.permute.xlu0 %5715
      %5725 = vrot.lane.b32.xlu0 %v5423, 112
      %v5726 = vpop.permute.xlu0 %5725
      %5727 = vrot.lane.b32.xlu0 %v5424, 112
      %v5728 = vpop.permute.xlu0 %5727
      %5729 = vrot.lane.b32.xlu0 %v5425, 112
      %v5730 = vpop.permute.xlu0 %5729
      %5731 = vrot.lane.b32.xlu0 %v5426, 112
      %v5732 = vpop.permute.xlu0 %5731
      %5733 = vrot.lane.b32.xlu0 %v5427, 112
      %v5734 = vpop.permute.xlu0 %5733
      %5735 = vrot.lane.b32.xlu0 %v5428, 112
      %v5736 = vpop.permute.xlu0 %5735
      %5737 = vrot.lane.b32.xlu0 %v5429, 112
      %v5738 = vpop.permute.xlu0 %5737
      %v5746 = vsel %vm690, %v5474, %v5553
      %v5747 = vsel %vm690, %v5475, %v5555
      %v5748 = vsel %vm690, %v5476, %v5557
      %v5749 = vsel %vm690, %v5477, %v5559
      %v5750 = vsel %vm690, %v5478, %v5561
      %v5751 = vsel %vm690, %v5479, %v5563
      %v5752 = vsel %vm690, %v5480, %v5565
      %v5753 = vsel %vm699, %v1984, %v5582
      %v5754 = vsel %vm699, %v5746, %v5584
      %v5755 = vsel %vm699, %v5747, %v5586
      %v5756 = vsel %vm699, %v5748, %v5588
      %v5757 = vsel %vm699, %v5749, %v5590
      %v5758 = vsel %vm699, %v5750, %v5592
      %v5759 = vsel %vm699, %v5751, %v5594
      %v5760 = vsel %vm699, %v5752, %v5596
      %v5761 = vsel %vm708, %v5753, %v5614
      %v5762 = vsel %vm708, %v5754, %v5616
      %v5763 = vsel %vm708, %v5755, %v5618
      %v5764 = vsel %vm708, %v5756, %v5620
      %v5765 = vsel %vm708, %v5757, %v5622
      %v5766 = vsel %vm708, %v5758, %v5624
      %v5767 = vsel %vm708, %v5759, %v5626
      %v5768 = vsel %vm708, %v5760, %v5628
      %v5769 = vsel %vm717, %v5761, %v5638
      %v5770 = vsel %vm717, %v5762, %v5640
      %v5771 = vsel %vm717, %v5763, %v5642
      %v5772 = vsel %vm717, %v5764, %v5644
      %v5773 = vsel %vm717, %v5765, %v5646
      %v5774 = vsel %vm717, %v5766, %v5648
      %v5775 = vsel %vm717, %v5767, %v5650
      %v5776 = vsel %vm717, %v5768, %v5652
      %v5777 = vsel %vm726, %v5769, %v5670
      %v5778 = vsel %vm726, %v5770, %v5672
      %v5779 = vsel %vm726, %v5771, %v5674
      %v5780 = vsel %vm726, %v5772, %v5676
      %v5781 = vsel %vm726, %v5773, %v5678
      %v5782 = vsel %vm726, %v5774, %v5680
      %v5783 = vsel %vm726, %v5775, %v5682
      %v5784 = vsel %vm726, %v5776, %v5684
      %v5785 = vsel %vm735, %v5777, %v5702
      %v5786 = vsel %vm735, %v5778, %v5704
      %v5787 = vsel %vm735, %v5779, %v5706
      %v5788 = vsel %vm735, %v5780, %v5708
      %v5789 = vsel %vm735, %v5781, %v5710
      %v5790 = vsel %vm735, %v5782, %v5712
      %v5791 = vsel %vm735, %v5783, %v5714
      %v5792 = vsel %vm735, %v5784, %v5716
      %v5793 = vsel %vm744, %v5785, %v5726
      %v5794 = vsel %vm744, %v5786, %v5728
      %v5795 = vsel %vm744, %v5787, %v5730
      %v5796 = vsel %vm744, %v5788, %v5732
      %v5797 = vsel %vm744, %v5789, %v5734
      %v5798 = vsel %vm744, %v5790, %v5736
      %v5799 = vsel %vm744, %v5791, %v5738
      %v5800 = vsel %vm744, %v5792, %v667
      %v5802 = vsel %vm690, %v5545, 0
      %v5805 = vsel %vm690, %v5546, 0
      %v5808 = vsel %vm690, %v5547, 0
      %v5811 = vsel %vm690, %v5548, 0
      %v5814 = vsel %vm690, %v5549, 0
      %v5817 = vsel %vm690, %v5550, 0
      %v5820 = vsel %vm690, %v5551, 0
      %5822 = vmatprep.subr.mxu0 0.0
      %5823 = vmatpush1.msra.mxu0 %v932
      %5824 = vmatprep.subr.mxu0 0.0
      %5825 = vmatpush1.msra.mxu0 %v933
      %5826 = vmatprep.subr.mxu0 0.0
      %5827 = vmatpush1.msra.mxu0 %v934
      %5828 = vmatprep.subr.mxu0 0.0
      %5829 = vmatpush1.msra.mxu0 %v935
      %5830 = vmatprep.subr.mxu0 0.0
      %5831 = vmatpush1.msra.mxu0 %v936
      %5832 = vmatprep.subr.mxu0 0.0
      %5833 = vmatpush1.msra.mxu0 %v937
      %5834 = vmatprep.subr.mxu0 0.0
      %5835 = vmatpush1.msra.mxu0 %v938
      %5836 = vmatprep.subr.mxu0 0.0
      %5837 = vmatpush1.msra.mxu0 %v939
      %5838 = vmatprep.subr.mxu0 0.0
      %5839 = vmatpush1.msra.mxu0 %v940
      %5840 = vmatprep.subr.mxu0 0.0
      %5841 = vmatpush1.msra.mxu0 %v941
      %5842 = vmatprep.subr.mxu0 0.0
      %5843 = vmatpush1.msra.mxu0 %v942
      %5844 = vmatprep.subr.mxu0 0.0
      %5845 = vmatpush1.msra.mxu0 %v943
      %5846 = vmatprep.subr.mxu0 0.0
      %5847 = vmatpush1.msra.mxu0 %v944
      %5848 = vmatprep.subr.mxu0 0.0
      %5849 = vmatpush1.msra.mxu0 %v945
      %5850 = vmatprep.subr.mxu0 0.0
      %5851 = vmatpush1.msra.mxu0 %v946
      %5852 = vmatprep.subr.mxu0 0.0
      %5853 = vmatpush1.msra.mxu0 %v947
      %5854 = vmatprep.subr.mxu0 0.0
      %5855 = vmatpush1.msra.mxu0 %v948
      %5856 = vmatprep.subr.mxu0 0.0
      %5857 = vmatpush1.msra.mxu0 %v949
      %5858 = vmatprep.subr.mxu0 0.0
      %5859 = vmatpush1.msra.mxu0 0.0
      %5860 = vmatprep.subr.mxu0 0.0
      %5861 = vmatpush1.msra.mxu0 0.0
      %5862 = vmatprep.subr.mxu0 0.0
      %5863 = vmatpush1.msra.mxu0 0.0
      %5864 = vmatprep.subr.mxu0 0.0
      %5865 = vmatpush1.msra.mxu0 0.0
      %5866 = vmatprep.subr.mxu0 0.0
      %5867 = vmatpush1.msra.mxu0 0.0
      %5868 = vmatprep.subr.mxu0 0.0
      %5869 = vmatpush1.msra.mxu0 0.0
      %5870 = vmatprep.subr.mxu0 0.0
      %5871 = vmatpush1.msra.mxu0 0.0
      %5872 = vmatprep.subr.mxu0 0.0
      %5873 = vmatpush1.msra.mxu0 0.0
      %5874 = vmatprep.subr.mxu0 0.0
      %5875 = vmatpush1.msra.mxu0 0.0
      %5876 = vmatprep.subr.mxu0 0.0
      %5877 = vmatpush1.msra.mxu0 0.0
      %5878 = vmatprep.subr.mxu0 0.0
      %5879 = vmatpush1.msra.mxu0 0.0
      %5880 = vmatprep.subr.mxu0 0.0
      %5881 = vmatpush1.msra.mxu0 0.0
      %5882 = vmatprep.subr.mxu0 0.0
      %5883 = vmatpush1.msra.mxu0 0.0
      %5884 = vmatprep.subr.mxu0 0.0
      %5885 = vmatpush1.msra.mxu0 0.0
      %5886 = vmatprep.mubr.f32.mxu0 %v5802
      %5887 = vmatmul.mubr.f32.gmra.mrb[0].mxu0 %v5793
      %v5888 = vpop.f32.mrb[0].mxu0
      %v5889 = vadd.f32 %v2044, %v5888
      %v5890 = vpop.f32.mrb[0].mxu0
      %5891 = vmatprep.mubr.f32.mxu0 %v5805
      %5892 = vmatmul.mubr.f32.gmra.mrb[0].mxu0 %v5794
      %v5893 = vpop.f32.mrb[0].mxu0
      %v5894 = vadd.f32 %v2044, %v5893
      %v5895 = vpop.f32.mrb[0].mxu0
      %5896 = vmatprep.mubr.f32.mxu0 %v5808
      %5897 = vmatmul.mubr.f32.gmra.mrb[0].mxu0 %v5795
      %v5898 = vpop.f32.mrb[0].mxu0
      %v5899 = vadd.f32 %v2044, %v5898
      %v5900 = vpop.f32.mrb[0].mxu0
      %5901 = vmatprep.mubr.f32.mxu0 %v5811
      %5902 = vmatmul.mubr.f32.gmra.mrb[0].mxu0 %v5796
      %v5903 = vpop.f32.mrb[0].mxu0
      %v5904 = vadd.f32 %v2044, %v5903
      %v5905 = vpop.f32.mrb[0].mxu0
      %5906 = vmatprep.mubr.f32.mxu0 %v5814
      %5907 = vmatmul.mubr.f32.gmra.mrb[0].mxu0 %v5797
      %v5908 = vpop.f32.mrb[0].mxu0
      %v5909 = vadd.f32 %v2044, %v5908
      %v5910 = vpop.f32.mrb[0].mxu0
      %5911 = vmatprep.mubr.f32.mxu0 %v5817
      %5912 = vmatmul.mubr.f32.gmra.mrb[0].mxu0 %v5798
      %v5913 = vpop.f32.mrb[0].mxu0
      %v5914 = vadd.f32 %v2044, %v5913
      %v5915 = vpop.f32.mrb[0].mxu0
      %5916 = vmatprep.mubr.f32.mxu0 %v5820
      %5917 = vmatmul.mubr.f32.gmra.mrb[0].mxu0 %v5799
      %v5918 = vpop.f32.mrb[0].mxu0
      %v5919 = vadd.f32 %v2044, %v5918
      %v5920 = vpop.f32.mrb[0].mxu0
      %5921 = vmatprep.mubr.f32.mxu0 %v2067
      %5922 = vmatmul.mubr.f32.gmra.mrb[0].mxu0 %v5800
      %v5923 = vpop.f32.mrb[0].mxu0
      %v5924 = vadd.f32 %v2044, %v5923
      %v5925 = vpop.f32.mrb[0].mxu0
      %5926 = vdwg.mxu0
      %v5927 = vld [vmem:[#allocation4] sm:$0xff]
      %v5928 = vld [vmem:[#allocation4 + $0x8] sm:$0xff]
      %v5929 = vld [vmem:[#allocation4 + $0x10] sm:$0xff]
      %v5930 = vld [vmem:[#allocation4 + $0x18] sm:$0xff]
      %v5931 = vld [vmem:[#allocation4 + $0x20] sm:$0xff]
      %v5932 = vld [vmem:[#allocation4 + $0x28] sm:$0xff]
      %v5933 = vld [vmem:[#allocation4 + $0x30] sm:$0xff]
      %v5934 = vld [vmem:[#allocation4 + $0x38] sm:$0xff]
      %v5935 = vmul.f32 %v5927, 0.99
      %v5936 = vmul.f32 %v5928, 0.99
      %v5937 = vmul.f32 %v5929, 0.99
      %v5938 = vmul.f32 %v5930, 0.99
      %v5939 = vmul.f32 %v5931, 0.99
      %v5940 = vmul.f32 %v5932, 0.99
      %v5941 = vmul.f32 %v5933, 0.99
      %v5942 = vmul.f32 %v5934, 0.99
      %v5943 = vadd.f32 %v5935, %v5889
      %v5944 = vadd.f32 %v5936, %v5894
      %v5945 = vadd.f32 %v5937, %v5899
      %v5946 = vadd.f32 %v5938, %v5904
      %v5947 = vadd.f32 %v5939, %v5909
      %v5948 = vadd.f32 %v5940, %v5914
      %v5949 = vadd.f32 %v5941, %v5919
      %v5950 = vadd.f32 %v5942, %v5924
      %vm5951 = vcmp.ge.f32.partialorder %v5943, 1.0
      %vm5952 = vcmp.ge.f32.partialorder %v5944, 1.0
      %vm5953 = vcmp.ge.f32.partialorder %v5945, 1.0
      %vm5954 = vcmp.ge.f32.partialorder %v5946, 1.0
      %vm5955 = vcmp.ge.f32.partialorder %v5947, 1.0
      %vm5956 = vcmp.ge.f32.partialorder %v5948, 1.0
      %vm5957 = vcmp.ge.f32.partialorder %v5949, 1.0
      %vm5958 = vcmp.ge.f32.partialorder %v5950, 1.0
      %v5959 = vsel %vm5951, 1, 0
      %v5960 = vsel %vm5952, 1, 0
      %v5961 = vsel %vm5953, 1, 0
      %v5962 = vsel %vm5954, 1, 0
      %v5963 = vsel %vm5955, 1, 0
      %v5964 = vsel %vm5956, 1, 0
      %v5965 = vsel %vm5957, 1, 0
      %v5966 = vsel %vm5958, 1, 0
      %v5967 = vcvt.s32.f32 %v5959
      %v5968 = vcvt.s32.f32 %v5960
      %v5969 = vcvt.s32.f32 %v5961
      %v5970 = vcvt.s32.f32 %v5962
      %v5971 = vcvt.s32.f32 %v5963
      %v5972 = vcvt.s32.f32 %v5964
      %v5973 = vcvt.s32.f32 %v5965
      %v5974 = vcvt.s32.f32 %v5966
      %v5975 = vsub.f32 %v5943, %v5967
      %v5976 = vsub.f32 %v5944, %v5968
      %v5977 = vsub.f32 %v5945, %v5969
      %v5978 = vsub.f32 %v5946, %v5970
      %v5979 = vsub.f32 %v5947, %v5971
      %v5980 = vsub.f32 %v5948, %v5972
      %v5981 = vsub.f32 %v5949, %v5973
      %v5982 = vsub.f32 %v5950, %v5974
      %5983 = vst.msk [vmem:[#allocation4] sm:$0xff] %vm690, %v5975
      %5984 = vst.msk [vmem:[#allocation4 + $0x8] sm:$0xff] %vm690, %v5976
      %5985 = vst.msk [vmem:[#allocation4 + $0x10] sm:$0xff] %vm690, %v5977
      %5986 = vst.msk [vmem:[#allocation4 + $0x18] sm:$0xff] %vm690, %v5978
      %5987 = vst.msk [vmem:[#allocation4 + $0x20] sm:$0xff] %vm690, %v5979
      %5988 = vst.msk [vmem:[#allocation4 + $0x28] sm:$0xff] %vm690, %v5980
      %5989 = vst.msk [vmem:[#allocation4 + $0x30] sm:$0xff] %vm690, %v5981
      %5990 = vst.msk [vmem:[#allocation4 + $0x38] sm:$0xff] %vm690, %v5982
      %5991 = vst.msk [vmem:[#allocation5] sm:$0xff] %vm690, %v5967
      %5992 = vst.msk [vmem:[#allocation5 + $0x8] sm:$0xff] %vm690, %v5968
      %5993 = vst.msk [vmem:[#allocation5 + $0x10] sm:$0xff] %vm690, %v5969
      %5994 = vst.msk [vmem:[#allocation5 + $0x18] sm:$0xff] %vm690, %v5970
      %5995 = vst.msk [vmem:[#allocation5 + $0x20] sm:$0xff] %vm690, %v5971
      %5996 = vst.msk [vmem:[#allocation5 + $0x28] sm:$0xff] %vm690, %v5972
      %5997 = vst.msk [vmem:[#allocation5 + $0x30] sm:$0xff] %vm690, %v5973
      %5998 = vst.msk [vmem:[#allocation5 + $0x38] sm:$0xff] %vm690, %v5974
      %v5999 = vld [vmem:[#allocation6] sm:$0xff]
      %v6000 = vld [vmem:[#allocation6 + $0x8] sm:$0xff]
      %v6001 = vld [vmem:[#allocation6 + $0x10] sm:$0xff]
      %v6002 = vld [vmem:[#allocation6 + $0x18] sm:$0xff]
      %v6003 = vld [vmem:[#allocation6 + $0x20] sm:$0xff]
      %v6004 = vld [vmem:[#allocation6 + $0x28] sm:$0xff]
      %v6005 = vld [vmem:[#allocation6 + $0x30] sm:$0xff]
      %v6006 = vld [vmem:[#allocation6 + $0x38] sm:$0xff]
      %v6007 = vadd.f32 %v5999, %v5967
      %v6008 = vadd.f32 %v6000, %v5968
      %v6009 = vadd.f32 %v6001, %v5969
      %v6010 = vadd.f32 %v6002, %v5970
      %v6011 = vadd.f32 %v6003, %v5971
      %v6012 = vadd.f32 %v6004, %v5972
      %v6013 = vadd.f32 %v6005, %v5973
      %v6014 = vadd.f32 %v6006, %v5974
      %6015 = vst.msk [vmem:[#allocation6] sm:$0xff] %vm690, %v6007
      %6016 = vst.msk [vmem:[#allocation6 + $0x8] sm:$0xff] %vm690, %v6008
      %6017 = vst.msk [vmem:[#allocation6 + $0x10] sm:$0xff] %vm690, %v6009
      %6018 = vst.msk [vmem:[#allocation6 + $0x18] sm:$0xff] %vm690, %v6010
      %6019 = vst.msk [vmem:[#allocation6 + $0x20] sm:$0xff] %vm690, %v6011
      %6020 = vst.msk [vmem:[#allocation6 + $0x28] sm:$0xff] %vm690, %v6012
      %6021 = vst.msk [vmem:[#allocation6 + $0x30] sm:$0xff] %vm690, %v6013
      %6022 = vst.msk [vmem:[#allocation6 + $0x38] sm:$0xff] %vm690, %v6014
      %v6023 = vld [vmem:[#allocation6] sm:$0xff]
      %v6024 = vld [vmem:[#allocation6 + $0x8] sm:$0xff]
      %v6025 = vld [vmem:[#allocation6 + $0x10] sm:$0xff]
      %v6026 = vld [vmem:[#allocation6 + $0x18] sm:$0xff]
      %v6027 = vld [vmem:[#allocation6 + $0x20] sm:$0xff]
      %v6028 = vld [vmem:[#allocation6 + $0x28] sm:$0xff]
      %v6029 = vld [vmem:[#allocation6 + $0x30] sm:$0xff]
      %v6030 = vld [vmem:[#allocation6 + $0x38] sm:$0xff]
      %v6031 = vmul.f32 %v6023, 0.25
      %v6032 = vmul.f32 %v6024, 0.25
      %v6033 = vmul.f32 %v6025, 0.25
      %v6034 = vmul.f32 %v6026, 0.25
      %v6035 = vmul.f32 %v6027, 0.25
      %v6036 = vmul.f32 %v6028, 0.25
      %v6037 = vmul.f32 %v6029, 0.25
      %v6038 = vmul.f32 %v6030, 0.25
      %6039 = vst.msk [vmem:[%s305] sm:$0xff] %vm690, %v6031
      %6040 = vst.msk [vmem:[%s305 + $0x8] sm:$0xff] %vm690, %v6032
      %6041 = vst.msk [vmem:[%s305 + $0x10] sm:$0xff] %vm690, %v6033
      %6042 = vst.msk [vmem:[%s305 + $0x18] sm:$0xff] %vm690, %v6034
      %6043 = vst.msk [vmem:[%s305 + $0x20] sm:$0xff] %vm690, %v6035
      %6044 = vst.msk [vmem:[%s305 + $0x28] sm:$0xff] %vm690, %v6036
      %6045 = vst.msk [vmem:[%s305 + $0x30] sm:$0xff] %vm690, %v6037
      %6046 = vst.msk [vmem:[%s305 + $0x38] sm:$0xff] %vm690, %v6038
      %p6047 = scmp.lt.s32.totalorder %s19, 1
      %s6048 = scalar_select %p6047, %s19, 1
      %s6049 = smul.addr %s6048, 8
      %s6050 = smul.addr %s6049, 8
      %s6051 = scalar_lea.vmem %s8, %s6050
      // Predicated region
      $region53: #{mpis_neuro_forward.3} parent=51 // pred_check
        %p6052 = pneg %p210
      $region54: #{mpis_neuro_forward.3} parent=51 // pred_check_branch
        %6054 = sbr.rel (%p6052) target = $region56
      $region55: #{mpis_neuro_forward.3} parent=51 // pred_region
        _
      $region56: #{mpis_neuro_forward.3} parent=51 // pred_fallthru
        _
    $region52: #{mpis_neuro_forward.3} parent=5 // pred_fallthru
      _
    %p6055 = scmp.le.s32.totalorder 2, %s14
    // Predicated region
    $region57: #{mpis_neuro_forward.3} parent=5 // pred_check
      %p6056 = pneg %p6055
    $region58: #{mpis_neuro_forward.3} parent=5 // pred_check_branch
      %6058 = sbr.rel (%p6056) target = $region60
    $region59: #{mpis_neuro_forward.3} parent=5 // pred_region
      %s6059 = ssub.s32 %s14, 2
      // Predicated region
      $region61: #{mpis_neuro_forward.3} parent=59 // pred_check
        %p6060 = pneg %p216
      $region62: #{mpis_neuro_forward.3} parent=59 // pred_check_branch
        %6062 = sbr.rel (%p6060) target = $region64
      $region63: #{mpis_neuro_forward.3} parent=59 // pred_region
        %p6063 = scmp.lt.s32.totalorder %s20, 1
        %s6064 = scalar_select %p6063, %s20, 1
        %s6065 = smul.addr %s6064, 8
        %s6066 = smul.addr %s6065, 8
        %s6067 = scalar_lea.vmem %s8, %s6066
      $region64: #{mpis_neuro_forward.3} parent=59 // pred_fallthru
        _
    $region60: #{mpis_neuro_forward.3} parent=5 // pred_fallthru
      _
  $region6: #{mpis_neuro_forward.3} parent=0 // loop_footer
    %s18 = sadd.s32 1, %s14
  $region7: #{mpis_neuro_forward.3} parent=0 // loop_footer_branch
    %13 = sbr.rel target = $region3
  $region8: #{mpis_neuro_forward.3} parent=0 // loop_exit
    _

</llo_original>
